<compile_context>
chip_gen: v7x
topology: tpu7x:2x2x1
jax: 0.10.0
libtpu: 0.0.40
codegen_flags: <defaults>
</compile_context>

<pallas_src>
import jax
import jax.numpy as jnp
from jax import lax
from jax.experimental import pallas as pl
from jax.experimental.pallas import tpu as pltpu

# ----------------------------- config ---------------------------------------
B, H, S, D, P = 2, 4, 128, 128, 128      # batch, heads, seq, dim_model, predict_dim
TOP_RATE = 0.1
K = round(TOP_RATE * S)                  # = 13 top-k edges per node
RS = 32                                  # top-k strip rows (keeps per-pass carries in vregs)
N_STRIPS = S // RS
LN_EPS = 1e-5

USE_BF16_MATMUL = False                  # v6e/v7x: set True for ~5-10% (small numeric deviation)
_KEY_NEG_INF = jnp.iinfo(jnp.int32).min  # knock-out value for selected keys


def _mxu(a, w):
    if USE_BF16_MATMUL:
        a = a.astype(jnp.bfloat16)
        w = w.astype(jnp.bfloat16)
    return jnp.dot(a, w, preferred_element_type=jnp.float32)


# --------------------------- fused kernel ------------------------------------
def fused_kernel(len_ref,                                   # SMEM scalar prefetch: (B,) int32
                 att_ref, hid_ref,                          # (1,H,S,S), (1,S,D)
                 w_nt_ref, b_nt_ref,                        # (D,P), (1,P)
                 w_self_ref, w_neigh_ref, b_sage_ref,       # (P,P), (P,P), (1,P)
                 w_fc_ref, b_fc_ref, gamma_ref, beta_ref,   # (P,P), (1,P), (1,P), (1,P)
                 out_ref):                                  # (1,1,P)
    b = pl.program_id(0)
    length = len_ref[b]                                     # scalar int32

    # ---- node_trans: Linear(D -> P) on all S nodes (one MXU dot) ------------
    h = _mxu(hid_ref[0], w_nt_ref[...]) + b_nt_ref[...]     # (S, P)

    w_self = w_self_ref[...]
    w_neigh = w_neigh_ref[...]
    b_sage = b_sage_ref[...]

    # tie-break-to-lowest-index encoding stuffed into the low 7 bits of the key
    rev_lane = jnp.int32(S - 1) - lax.broadcasted_iota(jnp.int32, (RS, S), 1)   # (RS, S)

    pooled = jnp.zeros((1, P), jnp.float32)

    for strip in range(N_STRIPS):                           # 4 strips of 32 rows, unrolled
        r0 = strip * RS

        # sum over heads (NOT mean): positive-monotone, never changes top-k or the >0 test
        d = att_ref[0, 0, r0:r0 + RS, :]
        for hh in range(1, H):
            d = d + att_ref[0, hh, r0:r0 + RS, :]           # (RS, S) f32

        # ---- single order-preserving int32 key per element --------------------
        bits = lax.bitcast_convert_type(d, jnp.int32)
        mono = bits ^ ((bits >> 31) & jnp.int32(0x7FFFFFFF))   # f32 order == signed int32 order
        key = (mono & jnp.int32(-128)) | rev_lane               # keys distinct within each row
        # TODO(synk): low-7-mantissa-bit quantization: values within ~2^-17 rel. are tied
        # (broken toward the lower column, matching torch.topk) and 0 < v < 1.8e-43 tests as <= 0.

        # ---- K passes: ONE cross-lane reduce each, fully unrolled --------------
        A = jnp.zeros((RS, S), jnp.float32)
        no_pos = None
        for j in range(K):
            max_key = jnp.max(key, axis=-1, keepdims=True)      # (RS,1) single XLU reduce
            bucket = max_key & jnp.int32(-128)                  # value part of the winning key
            if j == 0:
                no_pos = bucket <= 0                            # row max <= 0 -> keep all K
            keep = jnp.logical_or(bucket > 0, no_pos)           # (RS,1)
            onehot = key == max_key                             # (RS,S), exactly one hit per row
            A = jnp.where(jnp.logical_and(onehot, keep), 1.0, A)
            key = jnp.where(onehot, jnp.int32(_KEY_NEG_INF), key)   # knock out for next pass

        # ---- exact 'mean' aggregation (deg >= 1 always) -------------------------
        deg = jnp.sum(A, axis=-1, keepdims=True)                # (RS,1)
        A = A * (1.0 / deg)                                     # exact divide on a tiny tile

        # ---- SAGEConv('mean'): two accumulating dots, no (S,2P) concat ----------
        neigh = _mxu(A, h)                                      # (RS, P) mean of neighbor feats
        hnew = _mxu(h[r0:r0 + RS, :], w_self) + _mxu(neigh, w_neigh) + b_sage

        # ---- dgl.sum_nodes contribution of this strip (mask rows >= length) -----
        rows = r0 + lax.broadcasted_iota(jnp.int32, (RS, 1), 0)
        rmask = (rows < length).astype(jnp.float32)
        pooled = pooled + jnp.sum(hnew * rmask, axis=0, keepdims=True)   # (1, P)

    pooled = pooled * (1.0 / jnp.maximum(length, 1).astype(jnp.float32))

    # ---- head: tanh -> (dropout=id) -> fc -> LayerNorm --------------------------
    x = jnp.tanh(pooled)
    y = _mxu(x, w_fc_ref[...]) + b_fc_ref[...]
    mu = jnp.mean(y, axis=-1, keepdims=True)
    var = jnp.mean((y - mu) ** 2, axis=-1, keepdims=True)
    out_ref[0] = (y - mu) * lax.rsqrt(var + LN_EPS) * gamma_ref[...] + beta_ref[...]


# ------------------------------ forward --------------------------------------
def forward(params, hidden_state, attention, lengths):
    grid_spec = pltpu.PrefetchScalarGridSpec(
        num_scalar_prefetch=1,             # lengths -> SMEM
        grid=(B,),
        in_specs=[
            pl.BlockSpec((1, H, S, S), lambda b, L: (b, 0, 0, 0)),   # attention
            pl.BlockSpec((1, S, D),    lambda b, L: (b, 0, 0)),      # hidden_state
            pl.BlockSpec((D, P),       lambda b, L: (0, 0)),         # w_nt
            pl.BlockSpec((1, P),       lambda b, L: (0, 0)),         # b_nt
            pl.BlockSpec((P, P),       lambda b, L: (0, 0)),         # w_self
            pl.BlockSpec((P, P),       lambda b, L: (0, 0)),         # w_neigh
            pl.BlockSpec((1, P),       lambda b, L: (0, 0)),         # b_sage
            pl.BlockSpec((P, P),       lambda b, L: (0, 0)),         # w_fc
            pl.BlockSpec((1, P),       lambda b, L: (0, 0)),         # b_fc
            pl.BlockSpec((1, P),       lambda b, L: (0, 0)),         # gamma
            pl.BlockSpec((1, P),       lambda b, L: (0, 0)),         # beta
        ],
        out_specs=pl.BlockSpec((1, 1, P), lambda b, L: (b, 0, 0)),
    )
    out = pl.pallas_call(
        fused_kernel,
        out_shape=jax.ShapeDtypeStruct((B, 1, P), jnp.float32),
        grid_spec=grid_spec,
        compiler_params=pltpu.CompilerParams(
            dimension_semantics=("parallel",)),   # one sample per TensorCore on v7x megacore
    )(lengths, attention, hidden_state,           # <-- order matches in_specs (compile fix)
      params["w_nt"], params["b_nt"],
      params["w_self"], params["w_neigh"], params["b_sage"],
      params["w_fc"], params["b_fc"], params["gamma"], params["beta"])
    return out[:, 0, :]                                                 # (B, P)


# --------------------------- parameter init ----------------------------------
def init_params(key):
    ks = jax.random.split(key, 6)
    s = 0.05
    return {
        # node_trans: Linear(D -> P), weight stored pre-transposed as (D, P)
        "w_nt":    s * jax.random.normal(ks[0], (D, P), jnp.float32),
        "b_nt":    s * jax.random.normal(ks[1], (1, P), jnp.float32),
        # SAGEConv(P, P, 'mean'): fc_self / fc_neigh weights (pre-transposed), single bias
        "w_self":  s * jax.random.normal(ks[2], (P, P), jnp.float32),
        "w_neigh": s * jax.random.normal(ks[3], (P, P), jnp.float32),
        "b_sage":  s * jax.random.normal(ks[4], (1, P), jnp.float32),
        # fc: Linear(P -> P)
        "w_fc":    s * jax.random.normal(ks[5], (P, P), jnp.float32),
        "b_fc":    jnp.zeros((1, P), jnp.float32),
        # LayerNorm(P): default PyTorch init
        "gamma":   jnp.ones((1, P), jnp.float32),
        "beta":    jnp.zeros((1, P), jnp.float32),
    }


if __name__ == "__main__":
    key = jax.random.PRNGKey(0)
    k1, k2, k3 = jax.random.split(key, 3)
    hidden_state = jax.random.normal(k1, (B, S, D), jnp.float32)
    attention = jax.random.normal(k2, (B, H, S, S), jnp.float32)
    # lengths == S so every top-k source index is a valid node (the only regime in which
    # the reference DGL code does not error out).
    lengths = jnp.full((B,), S, dtype=jnp.int32)
    # TODO(synk): lengths < S would let top-k edges reference padded nodes (same as the
    # reference's undefined behavior); only the sum-pool length mask is applied here.

    params = init_params(k3)
    fwd = jax.jit(forward)
    out = fwd(params, hidden_state, attention, lengths)
    jax.block_until_ready(out)
    assert out.shape == (B, P)
    print("KERNEL_OK")
</pallas_src>

<mosaic_0001>
module attributes {stable_mosaic.version = 11 : i64} {
  func.func @fused_kernel(%arg0: i32, %arg1: memref<2xi32, #tpu.memory_space<smem>>, %arg2: memref<1x4x128x128xf32, #tpu.memory_space<vmem>>, %arg3: memref<1x128x128xf32, #tpu.memory_space<vmem>>, %arg4: memref<128x128xf32, #tpu.memory_space<vmem>>, %arg5: memref<1x128xf32, #tpu.memory_space<vmem>>, %arg6: memref<128x128xf32, #tpu.memory_space<vmem>>, %arg7: memref<128x128xf32, #tpu.memory_space<vmem>>, %arg8: memref<1x128xf32, #tpu.memory_space<vmem>>, %arg9: memref<128x128xf32, #tpu.memory_space<vmem>>, %arg10: memref<1x128xf32, #tpu.memory_space<vmem>>, %arg11: memref<1x128xf32, #tpu.memory_space<vmem>>, %arg12: memref<1x128xf32, #tpu.memory_space<vmem>>, %arg13: memref<1x1x128xf32, #tpu.memory_space<vmem>>) attributes {dimension_semantics = [#tpu.dimension_semantics<parallel>], iteration_bounds = array<i64: 2>, scalar_prefetch = 1 : i64, scratch_operands = 0 : i64, tpu.core_type = #tpu.core_type<tc>, window_params = [{transform_indices = @transform_0, window_bounds = array<i64: 1, 4, 128, 128>}, {transform_indices = @transform_1, window_bounds = array<i64: 1, 128, 128>}, {pipeline_mode = #tpu.pipeline_mode<synchronous>, transform_indices = @transform_2, window_bounds = array<i64: 128, 128>}, {pipeline_mode = #tpu.pipeline_mode<synchronous>, transform_indices = @transform_3, window_bounds = array<i64: 1, 128>}, {pipeline_mode = #tpu.pipeline_mode<synchronous>, transform_indices = @transform_4, window_bounds = array<i64: 128, 128>}, {pipeline_mode = #tpu.pipeline_mode<synchronous>, transform_indices = @transform_5, window_bounds = array<i64: 128, 128>}, {pipeline_mode = #tpu.pipeline_mode<synchronous>, transform_indices = @transform_6, window_bounds = array<i64: 1, 128>}, {pipeline_mode = #tpu.pipeline_mode<synchronous>, transform_indices = @transform_7, window_bounds = array<i64: 128, 128>}, {pipeline_mode = #tpu.pipeline_mode<synchronous>, transform_indices = @transform_8, window_bounds = array<i64: 1, 128>}, {pipeline_mode = #tpu.pipeline_mode<synchronous>, transform_indices = @transform_9, window_bounds = array<i64: 1, 128>}, {pipeline_mode = #tpu.pipeline_mode<synchronous>, transform_indices = @transform_10, window_bounds = array<i64: 1, 128>}, {transform_indices = @transform_11, window_bounds = array<i64: 1, 1, 128>}]} {
    %0 = arith.index_cast %arg0 : i32 to index
    %1 = memref.load %arg1[%0] : memref<2xi32, #tpu.memory_space<smem>>
    %c0 = arith.constant 0 : index
    %c0_0 = arith.constant 0 : index
    %c0_1 = arith.constant 0 : index
    %2 = vector.load %arg3[%c0, %c0_0, %c0_1] : memref<1x128x128xf32, #tpu.memory_space<vmem>>, vector<1x128x128xf32>
    %3 = vector.shape_cast %2 : vector<1x128x128xf32> to vector<128x128xf32>
    %c0_2 = arith.constant 0 : index
    %c0_3 = arith.constant 0 : index
    %4 = vector.load %arg4[%c0_2, %c0_3] : memref<128x128xf32, #tpu.memory_space<vmem>>, vector<128x128xf32>
    %cst = arith.constant dense<0.000000e+00> : vector<128x128xf32>
    %5 = tpu.matmul %3, %4, %cst {dimension_numbers = #tpu.dot_dimension_numbers<[1], [0], [0], [1], [0, 0, 1, 1], [], []>} : vector<128x128xf32>, vector<128x128xf32>, vector<128x128xf32> -> vector<128x128xf32>
    %c0_4 = arith.constant 0 : index
    %c0_5 = arith.constant 0 : index
    %6 = vector.load %arg5[%c0_4, %c0_5] : memref<1x128xf32, #tpu.memory_space<vmem>>, vector<1x128xf32>
    %7 = vector.broadcast %6 : vector<1x128xf32> to vector<128x128xf32>
    %8 = arith.addf %5, %7 : vector<128x128xf32>
    %c0_6 = arith.constant 0 : index
    %c0_7 = arith.constant 0 : index
    %9 = vector.load %arg6[%c0_6, %c0_7] : memref<128x128xf32, #tpu.memory_space<vmem>>, vector<128x128xf32>
    %c0_8 = arith.constant 0 : index
    %c0_9 = arith.constant 0 : index
    %10 = vector.load %arg7[%c0_8, %c0_9] : memref<128x128xf32, #tpu.memory_space<vmem>>, vector<128x128xf32>
    %c0_10 = arith.constant 0 : index
    %c0_11 = arith.constant 0 : index
    %11 = vector.load %arg8[%c0_10, %c0_11] : memref<1x128xf32, #tpu.memory_space<vmem>>, vector<1x128xf32>
    %12 = tpu.iota {dimensions = array<i32: 1>} : vector<32x128xi32>
    %c127_i32 = arith.constant 127 : i32
    %13 = vector.broadcast %c127_i32 : i32 to vector<32x128xi32>
    %14 = arith.subi %13, %12 : vector<32x128xi32>
    %cst_12 = arith.constant 0.000000e+00 : f32
    %15 = vector.broadcast %cst_12 : f32 to vector<1x128xf32>
    %c0_13 = arith.constant 0 : index
    %c0_14 = arith.constant 0 : index
    %c0_15 = arith.constant 0 : index
    %c0_16 = arith.constant 0 : index
    %16 = vector.load %arg2[%c0_13, %c0_14, %c0_15, %c0_16] : memref<1x4x128x128xf32, #tpu.memory_space<vmem>>, vector<1x1x32x128xf32>
    %17 = vector.shape_cast %16 : vector<1x1x32x128xf32> to vector<32x128xf32>
    %c0_17 = arith.constant 0 : index
    %c1 = arith.constant 1 : index
    %c0_18 = arith.constant 0 : index
    %c0_19 = arith.constant 0 : index
    %18 = vector.load %arg2[%c0_17, %c1, %c0_18, %c0_19] : memref<1x4x128x128xf32, #tpu.memory_space<vmem>>, vector<1x1x32x128xf32>
    %19 = vector.shape_cast %18 : vector<1x1x32x128xf32> to vector<32x128xf32>
    %20 = arith.addf %17, %19 : vector<32x128xf32>
    %c0_20 = arith.constant 0 : index
    %c2 = arith.constant 2 : index
    %c0_21 = arith.constant 0 : index
    %c0_22 = arith.constant 0 : index
    %21 = vector.load %arg2[%c0_20, %c2, %c0_21, %c0_22] : memref<1x4x128x128xf32, #tpu.memory_space<vmem>>, vector<1x1x32x128xf32>
    %22 = vector.shape_cast %21 : vector<1x1x32x128xf32> to vector<32x128xf32>
    %23 = arith.addf %20, %22 : vector<32x128xf32>
    %c0_23 = arith.constant 0 : index
    %c3 = arith.constant 3 : index
    %c0_24 = arith.constant 0 : index
    %c0_25 = arith.constant 0 : index
    %24 = vector.load %arg2[%c0_23, %c3, %c0_24, %c0_25] : memref<1x4x128x128xf32, #tpu.memory_space<vmem>>, vector<1x1x32x128xf32>
    %25 = vector.shape_cast %24 : vector<1x1x32x128xf32> to vector<32x128xf32>
    %26 = arith.addf %23, %25 : vector<32x128xf32>
    %27 = tpu.bitcast %26 : vector<32x128xf32> -> vector<32x128xi32>
    %c31_i32 = arith.constant 31 : i32
    %28 = vector.broadcast %c31_i32 : i32 to vector<32x128xi32>
    %29 = arith.shrsi %27, %28 : vector<32x128xi32>
    %c2147483647_i32 = arith.constant 2147483647 : i32
    %30 = vector.broadcast %c2147483647_i32 : i32 to vector<32x128xi32>
    %31 = arith.andi %29, %30 : vector<32x128xi32>
    %32 = arith.xori %27, %31 : vector<32x128xi32>
    %c-128_i32 = arith.constant -128 : i32
    %33 = vector.broadcast %c-128_i32 : i32 to vector<32x128xi32>
    %34 = arith.andi %32, %33 : vector<32x128xi32>
    %35 = arith.ori %34, %14 : vector<32x128xi32>
    %cst_26 = arith.constant 0.000000e+00 : f32
    %36 = vector.broadcast %cst_26 : f32 to vector<32x128xf32>
    %cst_27 = arith.constant dense<-2147483648> : vector<32xi32>
    %37 = vector.multi_reduction <maxsi>, %35, %cst_27 [1] : vector<32x128xi32> to vector<32xi32>
    %38 = vector.shape_cast %37 : vector<32xi32> to vector<32x1xi32>
    %c-128_i32_28 = arith.constant -128 : i32
    %39 = vector.broadcast %c-128_i32_28 : i32 to vector<32x1xi32>
    %40 = arith.andi %38, %39 : vector<32x1xi32>
    %c0_i32 = arith.constant 0 : i32
    %41 = vector.broadcast %c0_i32 : i32 to vector<32x1xi32>
    %42 = arith.cmpi sle, %40, %41 : vector<32x1xi32>
    %c0_i32_29 = arith.constant 0 : i32
    %43 = vector.broadcast %c0_i32_29 : i32 to vector<32x1xi32>
    %44 = arith.cmpi sgt, %40, %43 : vector<32x1xi32>
    %45 = arith.ori %44, %42 : vector<32x1xi1>
    %46 = vector.broadcast %38 : vector<32x1xi32> to vector<32x128xi32>
    %47 = arith.cmpi eq, %35, %46 : vector<32x128xi32>
    %48 = vector.broadcast %45 : vector<32x1xi1> to vector<32x128xi1>
    %49 = arith.andi %47, %48 : vector<32x128xi1>
    %cst_30 = arith.constant 1.000000e+00 : f32
    %50 = vector.broadcast %cst_30 : f32 to vector<32x128xf32>
    %51 = arith.select %49, %50, %36 : vector<32x128xi1>, vector<32x128xf32>
    %c-2147483648_i32 = arith.constant -2147483648 : i32
    %52 = vector.broadcast %c-2147483648_i32 : i32 to vector<32x128xi32>
    %53 = arith.select %47, %52, %35 : vector<32x128xi1>, vector<32x128xi32>
    %cst_31 = arith.constant dense<-2147483648> : vector<32xi32>
    %54 = vector.multi_reduction <maxsi>, %53, %cst_31 [1] : vector<32x128xi32> to vector<32xi32>
    %55 = vector.shape_cast %54 : vector<32xi32> to vector<32x1xi32>
    %c-128_i32_32 = arith.constant -128 : i32
    %56 = vector.broadcast %c-128_i32_32 : i32 to vector<32x1xi32>
    %57 = arith.andi %55, %56 : vector<32x1xi32>
    %c0_i32_33 = arith.constant 0 : i32
    %58 = vector.broadcast %c0_i32_33 : i32 to vector<32x1xi32>
    %59 = arith.cmpi sgt, %57, %58 : vector<32x1xi32>
    %60 = arith.ori %59, %42 : vector<32x1xi1>
    %61 = vector.broadcast %55 : vector<32x1xi32> to vector<32x128xi32>
    %62 = arith.cmpi eq, %53, %61 : vector<32x128xi32>
    %63 = vector.broadcast %60 : vector<32x1xi1> to vector<32x128xi1>
    %64 = arith.andi %62, %63 : vector<32x128xi1>
    %cst_34 = arith.constant 1.000000e+00 : f32
    %65 = vector.broadcast %cst_34 : f32 to vector<32x128xf32>
    %66 = arith.select %64, %65, %51 : vector<32x128xi1>, vector<32x128xf32>
    %c-2147483648_i32_35 = arith.constant -2147483648 : i32
    %67 = vector.broadcast %c-2147483648_i32_35 : i32 to vector<32x128xi32>
    %68 = arith.select %62, %67, %53 : vector<32x128xi1>, vector<32x128xi32>
    %cst_36 = arith.constant dense<-2147483648> : vector<32xi32>
    %69 = vector.multi_reduction <maxsi>, %68, %cst_36 [1] : vector<32x128xi32> to vector<32xi32>
    %70 = vector.shape_cast %69 : vector<32xi32> to vector<32x1xi32>
    %c-128_i32_37 = arith.constant -128 : i32
    %71 = vector.broadcast %c-128_i32_37 : i32 to vector<32x1xi32>
    %72 = arith.andi %70, %71 : vector<32x1xi32>
    %c0_i32_38 = arith.constant 0 : i32
    %73 = vector.broadcast %c0_i32_38 : i32 to vector<32x1xi32>
    %74 = arith.cmpi sgt, %72, %73 : vector<32x1xi32>
    %75 = arith.ori %74, %42 : vector<32x1xi1>
    %76 = vector.broadcast %70 : vector<32x1xi32> to vector<32x128xi32>
    %77 = arith.cmpi eq, %68, %76 : vector<32x128xi32>
    %78 = vector.broadcast %75 : vector<32x1xi1> to vector<32x128xi1>
    %79 = arith.andi %77, %78 : vector<32x128xi1>
    %cst_39 = arith.constant 1.000000e+00 : f32
    %80 = vector.broadcast %cst_39 : f32 to vector<32x128xf32>
    %81 = arith.select %79, %80, %66 : vector<32x128xi1>, vector<32x128xf32>
    %c-2147483648_i32_40 = arith.constant -2147483648 : i32
    %82 = vector.broadcast %c-2147483648_i32_40 : i32 to vector<32x128xi32>
    %83 = arith.select %77, %82, %68 : vector<32x128xi1>, vector<32x128xi32>
    %cst_41 = arith.constant dense<-2147483648> : vector<32xi32>
    %84 = vector.multi_reduction <maxsi>, %83, %cst_41 [1] : vector<32x128xi32> to vector<32xi32>
    %85 = vector.shape_cast %84 : vector<32xi32> to vector<32x1xi32>
    %c-128_i32_42 = arith.constant -128 : i32
    %86 = vector.broadcast %c-128_i32_42 : i32 to vector<32x1xi32>
    %87 = arith.andi %85, %86 : vector<32x1xi32>
    %c0_i32_43 = arith.constant 0 : i32
    %88 = vector.broadcast %c0_i32_43 : i32 to vector<32x1xi32>
    %89 = arith.cmpi sgt, %87, %88 : vector<32x1xi32>
    %90 = arith.ori %89, %42 : vector<32x1xi1>
    %91 = vector.broadcast %85 : vector<32x1xi32> to vector<32x128xi32>
    %92 = arith.cmpi eq, %83, %91 : vector<32x128xi32>
    %93 = vector.broadcast %90 : vector<32x1xi1> to vector<32x128xi1>
    %94 = arith.andi %92, %93 : vector<32x128xi1>
    %cst_44 = arith.constant 1.000000e+00 : f32
    %95 = vector.broadcast %cst_44 : f32 to vector<32x128xf32>
    %96 = arith.select %94, %95, %81 : vector<32x128xi1>, vector<32x128xf32>
    %c-2147483648_i32_45 = arith.constant -2147483648 : i32
    %97 = vector.broadcast %c-2147483648_i32_45 : i32 to vector<32x128xi32>
    %98 = arith.select %92, %97, %83 : vector<32x128xi1>, vector<32x128xi32>
    %cst_46 = arith.constant dense<-2147483648> : vector<32xi32>
    %99 = vector.multi_reduction <maxsi>, %98, %cst_46 [1] : vector<32x128xi32> to vector<32xi32>
    %100 = vector.shape_cast %99 : vector<32xi32> to vector<32x1xi32>
    %c-128_i32_47 = arith.constant -128 : i32
    %101 = vector.broadcast %c-128_i32_47 : i32 to vector<32x1xi32>
    %102 = arith.andi %100, %101 : vector<32x1xi32>
    %c0_i32_48 = arith.constant 0 : i32
    %103 = vector.broadcast %c0_i32_48 : i32 to vector<32x1xi32>
    %104 = arith.cmpi sgt, %102, %103 : vector<32x1xi32>
    %105 = arith.ori %104, %42 : vector<32x1xi1>
    %106 = vector.broadcast %100 : vector<32x1xi32> to vector<32x128xi32>
    %107 = arith.cmpi eq, %98, %106 : vector<32x128xi32>
    %108 = vector.broadcast %105 : vector<32x1xi1> to vector<32x128xi1>
    %109 = arith.andi %107, %108 : vector<32x128xi1>
    %cst_49 = arith.constant 1.000000e+00 : f32
    %110 = vector.broadcast %cst_49 : f32 to vector<32x128xf32>
    %111 = arith.select %109, %110, %96 : vector<32x128xi1>, vector<32x128xf32>
    %c-2147483648_i32_50 = arith.constant -2147483648 : i32
    %112 = vector.broadcast %c-2147483648_i32_50 : i32 to vector<32x128xi32>
    %113 = arith.select %107, %112, %98 : vector<32x128xi1>, vector<32x128xi32>
    %cst_51 = arith.constant dense<-2147483648> : vector<32xi32>
    %114 = vector.multi_reduction <maxsi>, %113, %cst_51 [1] : vector<32x128xi32> to vector<32xi32>
    %115 = vector.shape_cast %114 : vector<32xi32> to vector<32x1xi32>
    %c-128_i32_52 = arith.constant -128 : i32
    %116 = vector.broadcast %c-128_i32_52 : i32 to vector<32x1xi32>
    %117 = arith.andi %115, %116 : vector<32x1xi32>
    %c0_i32_53 = arith.constant 0 : i32
    %118 = vector.broadcast %c0_i32_53 : i32 to vector<32x1xi32>
    %119 = arith.cmpi sgt, %117, %118 : vector<32x1xi32>
    %120 = arith.ori %119, %42 : vector<32x1xi1>
    %121 = vector.broadcast %115 : vector<32x1xi32> to vector<32x128xi32>
    %122 = arith.cmpi eq, %113, %121 : vector<32x128xi32>
    %123 = vector.broadcast %120 : vector<32x1xi1> to vector<32x128xi1>
    %124 = arith.andi %122, %123 : vector<32x128xi1>
    %cst_54 = arith.constant 1.000000e+00 : f32
    %125 = vector.broadcast %cst_54 : f32 to vector<32x128xf32>
    %126 = arith.select %124, %125, %111 : vector<32x128xi1>, vector<32x128xf32>
    %c-2147483648_i32_55 = arith.constant -2147483648 : i32
    %127 = vector.broadcast %c-2147483648_i32_55 : i32 to vector<32x128xi32>
    %128 = arith.select %122, %127, %113 : vector<32x128xi1>, vector<32x128xi32>
    %cst_56 = arith.constant dense<-2147483648> : vector<32xi32>
    %129 = vector.multi_reduction <maxsi>, %128, %cst_56 [1] : vector<32x128xi32> to vector<32xi32>
    %130 = vector.shape_cast %129 : vector<32xi32> to vector<32x1xi32>
    %c-128_i32_57 = arith.constant -128 : i32
    %131 = vector.broadcast %c-128_i32_57 : i32 to vector<32x1xi32>
    %132 = arith.andi %130, %131 : vector<32x1xi32>
    %c0_i32_58 = arith.constant 0 : i32
    %133 = vector.broadcast %c0_i32_58 : i32 to vector<32x1xi32>
    %134 = arith.cmpi sgt, %132, %133 : vector<32x1xi32>
    %135 = arith.ori %134, %42 : vector<32x1xi1>
    %136 = vector.broadcast %130 : vector<32x1xi32> to vector<32x128xi32>
    %137 = arith.cmpi eq, %128, %136 : vector<32x128xi32>
    %138 = vector.broadcast %135 : vector<32x1xi1> to vector<32x128xi1>
    %139 = arith.andi %137, %138 : vector<32x128xi1>
    %cst_59 = arith.constant 1.000000e+00 : f32
    %140 = vector.broadcast %cst_59 : f32 to vector<32x128xf32>
    %141 = arith.select %139, %140, %126 : vector<32x128xi1>, vector<32x128xf32>
    %c-2147483648_i32_60 = arith.constant -2147483648 : i32
    %142 = vector.broadcast %c-2147483648_i32_60 : i32 to vector<32x128xi32>
    %143 = arith.select %137, %142, %128 : vector<32x128xi1>, vector<32x128xi32>
    %cst_61 = arith.constant dense<-2147483648> : vector<32xi32>
    %144 = vector.multi_reduction <maxsi>, %143, %cst_61 [1] : vector<32x128xi32> to vector<32xi32>
    %145 = vector.shape_cast %144 : vector<32xi32> to vector<32x1xi32>
    %c-128_i32_62 = arith.constant -128 : i32
    %146 = vector.broadcast %c-128_i32_62 : i32 to vector<32x1xi32>
    %147 = arith.andi %145, %146 : vector<32x1xi32>
    %c0_i32_63 = arith.constant 0 : i32
    %148 = vector.broadcast %c0_i32_63 : i32 to vector<32x1xi32>
    %149 = arith.cmpi sgt, %147, %148 : vector<32x1xi32>
    %150 = arith.ori %149, %42 : vector<32x1xi1>
    %151 = vector.broadcast %145 : vector<32x1xi32> to vector<32x128xi32>
    %152 = arith.cmpi eq, %143, %151 : vector<32x128xi32>
    %153 = vector.broadcast %150 : vector<32x1xi1> to vector<32x128xi1>
    %154 = arith.andi %152, %153 : vector<32x128xi1>
    %cst_64 = arith.constant 1.000000e+00 : f32
    %155 = vector.broadcast %cst_64 : f32 to vector<32x128xf32>
    %156 = arith.select %154, %155, %141 : vector<32x128xi1>, vector<32x128xf32>
    %c-2147483648_i32_65 = arith.constant -2147483648 : i32
    %157 = vector.broadcast %c-2147483648_i32_65 : i32 to vector<32x128xi32>
    %158 = arith.select %152, %157, %143 : vector<32x128xi1>, vector<32x128xi32>
    %cst_66 = arith.constant dense<-2147483648> : vector<32xi32>
    %159 = vector.multi_reduction <maxsi>, %158, %cst_66 [1] : vector<32x128xi32> to vector<32xi32>
    %160 = vector.shape_cast %159 : vector<32xi32> to vector<32x1xi32>
    %c-128_i32_67 = arith.constant -128 : i32
    %161 = vector.broadcast %c-128_i32_67 : i32 to vector<32x1xi32>
    %162 = arith.andi %160, %161 : vector<32x1xi32>
    %c0_i32_68 = arith.constant 0 : i32
    %163 = vector.broadcast %c0_i32_68 : i32 to vector<32x1xi32>
    %164 = arith.cmpi sgt, %162, %163 : vector<32x1xi32>
    %165 = arith.ori %164, %42 : vector<32x1xi1>
    %166 = vector.broadcast %160 : vector<32x1xi32> to vector<32x128xi32>
    %167 = arith.cmpi eq, %158, %166 : vector<32x128xi32>
    %168 = vector.broadcast %165 : vector<32x1xi1> to vector<32x128xi1>
    %169 = arith.andi %167, %168 : vector<32x128xi1>
    %cst_69 = arith.constant 1.000000e+00 : f32
    %170 = vector.broadcast %cst_69 : f32 to vector<32x128xf32>
    %171 = arith.select %169, %170, %156 : vector<32x128xi1>, vector<32x128xf32>
    %c-2147483648_i32_70 = arith.constant -2147483648 : i32
    %172 = vector.broadcast %c-2147483648_i32_70 : i32 to vector<32x128xi32>
    %173 = arith.select %167, %172, %158 : vector<32x128xi1>, vector<32x128xi32>
    %cst_71 = arith.constant dense<-2147483648> : vector<32xi32>
    %174 = vector.multi_reduction <maxsi>, %173, %cst_71 [1] : vector<32x128xi32> to vector<32xi32>
    %175 = vector.shape_cast %174 : vector<32xi32> to vector<32x1xi32>
    %c-128_i32_72 = arith.constant -128 : i32
    %176 = vector.broadcast %c-128_i32_72 : i32 to vector<32x1xi32>
    %177 = arith.andi %175, %176 : vector<32x1xi32>
    %c0_i32_73 = arith.constant 0 : i32
    %178 = vector.broadcast %c0_i32_73 : i32 to vector<32x1xi32>
    %179 = arith.cmpi sgt, %177, %178 : vector<32x1xi32>
    %180 = arith.ori %179, %42 : vector<32x1xi1>
    %181 = vector.broadcast %175 : vector<32x1xi32> to vector<32x128xi32>
    %182 = arith.cmpi eq, %173, %181 : vector<32x128xi32>
    %183 = vector.broadcast %180 : vector<32x1xi1> to vector<32x128xi1>
    %184 = arith.andi %182, %183 : vector<32x128xi1>
    %cst_74 = arith.constant 1.000000e+00 : f32
    %185 = vector.broadcast %cst_74 : f32 to vector<32x128xf32>
    %186 = arith.select %184, %185, %171 : vector<32x128xi1>, vector<32x128xf32>
    %c-2147483648_i32_75 = arith.constant -2147483648 : i32
    %187 = vector.broadcast %c-2147483648_i32_75 : i32 to vector<32x128xi32>
    %188 = arith.select %182, %187, %173 : vector<32x128xi1>, vector<32x128xi32>
    %cst_76 = arith.constant dense<-2147483648> : vector<32xi32>
    %189 = vector.multi_reduction <maxsi>, %188, %cst_76 [1] : vector<32x128xi32> to vector<32xi32>
    %190 = vector.shape_cast %189 : vector<32xi32> to vector<32x1xi32>
    %c-128_i32_77 = arith.constant -128 : i32
    %191 = vector.broadcast %c-128_i32_77 : i32 to vector<32x1xi32>
    %192 = arith.andi %190, %191 : vector<32x1xi32>
    %c0_i32_78 = arith.constant 0 : i32
    %193 = vector.broadcast %c0_i32_78 : i32 to vector<32x1xi32>
    %194 = arith.cmpi sgt, %192, %193 : vector<32x1xi32>
    %195 = arith.ori %194, %42 : vector<32x1xi1>
    %196 = vector.broadcast %190 : vector<32x1xi32> to vector<32x128xi32>
    %197 = arith.cmpi eq, %188, %196 : vector<32x128xi32>
    %198 = vector.broadcast %195 : vector<32x1xi1> to vector<32x128xi1>
    %199 = arith.andi %197, %198 : vector<32x128xi1>
    %cst_79 = arith.constant 1.000000e+00 : f32
    %200 = vector.broadcast %cst_79 : f32 to vector<32x128xf32>
    %201 = arith.select %199, %200, %186 : vector<32x128xi1>, vector<32x128xf32>
    %c-2147483648_i32_80 = arith.constant -2147483648 : i32
    %202 = vector.broadcast %c-2147483648_i32_80 : i32 to vector<32x128xi32>
    %203 = arith.select %197, %202, %188 : vector<32x128xi1>, vector<32x128xi32>
    %cst_81 = arith.constant dense<-2147483648> : vector<32xi32>
    %204 = vector.multi_reduction <maxsi>, %203, %cst_81 [1] : vector<32x128xi32> to vector<32xi32>
    %205 = vector.shape_cast %204 : vector<32xi32> to vector<32x1xi32>
    %c-128_i32_82 = arith.constant -128 : i32
    %206 = vector.broadcast %c-128_i32_82 : i32 to vector<32x1xi32>
    %207 = arith.andi %205, %206 : vector<32x1xi32>
    %c0_i32_83 = arith.constant 0 : i32
    %208 = vector.broadcast %c0_i32_83 : i32 to vector<32x1xi32>
    %209 = arith.cmpi sgt, %207, %208 : vector<32x1xi32>
    %210 = arith.ori %209, %42 : vector<32x1xi1>
    %211 = vector.broadcast %205 : vector<32x1xi32> to vector<32x128xi32>
    %212 = arith.cmpi eq, %203, %211 : vector<32x128xi32>
    %213 = vector.broadcast %210 : vector<32x1xi1> to vector<32x128xi1>
    %214 = arith.andi %212, %213 : vector<32x128xi1>
    %cst_84 = arith.constant 1.000000e+00 : f32
    %215 = vector.broadcast %cst_84 : f32 to vector<32x128xf32>
    %216 = arith.select %214, %215, %201 : vector<32x128xi1>, vector<32x128xf32>
    %c-2147483648_i32_85 = arith.constant -2147483648 : i32
    %217 = vector.broadcast %c-2147483648_i32_85 : i32 to vector<32x128xi32>
    %218 = arith.select %212, %217, %203 : vector<32x128xi1>, vector<32x128xi32>
    %cst_86 = arith.constant dense<-2147483648> : vector<32xi32>
    %219 = vector.multi_reduction <maxsi>, %218, %cst_86 [1] : vector<32x128xi32> to vector<32xi32>
    %220 = vector.shape_cast %219 : vector<32xi32> to vector<32x1xi32>
    %c-128_i32_87 = arith.constant -128 : i32
    %221 = vector.broadcast %c-128_i32_87 : i32 to vector<32x1xi32>
    %222 = arith.andi %220, %221 : vector<32x1xi32>
    %c0_i32_88 = arith.constant 0 : i32
    %223 = vector.broadcast %c0_i32_88 : i32 to vector<32x1xi32>
    %224 = arith.cmpi sgt, %222, %223 : vector<32x1xi32>
    %225 = arith.ori %224, %42 : vector<32x1xi1>
    %226 = vector.broadcast %220 : vector<32x1xi32> to vector<32x128xi32>
    %227 = arith.cmpi eq, %218, %226 : vector<32x128xi32>
    %228 = vector.broadcast %225 : vector<32x1xi1> to vector<32x128xi1>
    %229 = arith.andi %227, %228 : vector<32x128xi1>
    %cst_89 = arith.constant 1.000000e+00 : f32
    %230 = vector.broadcast %cst_89 : f32 to vector<32x128xf32>
    %231 = arith.select %229, %230, %216 : vector<32x128xi1>, vector<32x128xf32>
    %cst_90 = arith.constant dense<0.000000e+00> : vector<32xf32>
    %232 = vector.multi_reduction <add>, %231, %cst_90 [1] : vector<32x128xf32> to vector<32xf32>
    %233 = vector.shape_cast %232 : vector<32xf32> to vector<32x1xf32>
    %cst_91 = arith.constant 1.000000e+00 : f32
    %234 = vector.broadcast %cst_91 : f32 to vector<32x1xf32>
    %235 = arith.divf %234, %233 : vector<32x1xf32>
    %236 = vector.broadcast %235 : vector<32x1xf32> to vector<32x128xf32>
    %237 = arith.mulf %231, %236 : vector<32x128xf32>
    %cst_92 = arith.constant dense<0.000000e+00> : vector<32x128xf32>
    %238 = tpu.matmul %237, %8, %cst_92 {dimension_numbers = #tpu.dot_dimension_numbers<[1], [0], [0], [1], [0, 0, 1, 1], [], []>} : vector<32x128xf32>, vector<128x128xf32>, vector<32x128xf32> -> vector<32x128xf32>
    %239 = vector.extract_strided_slice %8 {offsets = [0, 0], sizes = [32, 128], strides = [1, 1]} : vector<128x128xf32> to vector<32x128xf32>
    %cst_93 = arith.constant dense<0.000000e+00> : vector<32x128xf32>
    %240 = tpu.matmul %239, %9, %cst_93 {dimension_numbers = #tpu.dot_dimension_numbers<[1], [0], [0], [1], [0, 0, 1, 1], [], []>} : vector<32x128xf32>, vector<128x128xf32>, vector<32x128xf32> -> vector<32x128xf32>
    %cst_94 = arith.constant dense<0.000000e+00> : vector<32x128xf32>
    %241 = tpu.matmul %238, %10, %cst_94 {dimension_numbers = #tpu.dot_dimension_numbers<[1], [0], [0], [1], [0, 0, 1, 1], [], []>} : vector<32x128xf32>, vector<128x128xf32>, vector<32x128xf32> -> vector<32x128xf32>
    %242 = arith.addf %240, %241 : vector<32x128xf32>
    %243 = vector.broadcast %11 : vector<1x128xf32> to vector<32x128xf32>
    %244 = arith.addf %242, %243 : vector<32x128xf32>
    %245 = tpu.iota {dimensions = array<i32: 0>} : vector<32x1xi32>
    %c0_i32_95 = arith.constant 0 : i32
    %246 = vector.broadcast %c0_i32_95 : i32 to vector<32x1xi32>
    %247 = arith.addi %246, %245 : vector<32x1xi32>
    %248 = vector.broadcast %1 : i32 to vector<32x1xi32>
    %249 = arith.cmpi slt, %247, %248 : vector<32x1xi32>
    %250 = arith.extui %249 : vector<32x1xi1> to vector<32x1xi32>
    %251 = arith.sitofp %250 : vector<32x1xi32> to vector<32x1xf32>
    %252 = vector.broadcast %251 : vector<32x1xf32> to vector<32x128xf32>
    %253 = arith.mulf %244, %252 : vector<32x128xf32>
    %cst_96 = arith.constant dense<0.000000e+00> : vector<128xf32>
    %254 = vector.multi_reduction <add>, %253, %cst_96 [0] : vector<32x128xf32> to vector<128xf32>
    %255 = vector.shape_cast %254 : vector<128xf32> to vector<1x128xf32>
    %256 = arith.addf %15, %255 : vector<1x128xf32>
    %c0_97 = arith.constant 0 : index
    %c0_98 = arith.constant 0 : index
    %c32 = arith.constant 32 : index
    %c0_99 = arith.constant 0 : index
    %257 = vector.load %arg2[%c0_97, %c0_98, %c32, %c0_99] : memref<1x4x128x128xf32, #tpu.memory_space<vmem>>, vector<1x1x32x128xf32>
    %258 = vector.shape_cast %257 : vector<1x1x32x128xf32> to vector<32x128xf32>
    %c0_100 = arith.constant 0 : index
    %c1_101 = arith.constant 1 : index
    %c32_102 = arith.constant 32 : index
    %c0_103 = arith.constant 0 : index
    %259 = vector.load %arg2[%c0_100, %c1_101, %c32_102, %c0_103] : memref<1x4x128x128xf32, #tpu.memory_space<vmem>>, vector<1x1x32x128xf32>
    %260 = vector.shape_cast %259 : vector<1x1x32x128xf32> to vector<32x128xf32>
    %261 = arith.addf %258, %260 : vector<32x128xf32>
    %c0_104 = arith.constant 0 : index
    %c2_105 = arith.constant 2 : index
    %c32_106 = arith.constant 32 : index
    %c0_107 = arith.constant 0 : index
    %262 = vector.load %arg2[%c0_104, %c2_105, %c32_106, %c0_107] : memref<1x4x128x128xf32, #tpu.memory_space<vmem>>, vector<1x1x32x128xf32>
    %263 = vector.shape_cast %262 : vector<1x1x32x128xf32> to vector<32x128xf32>
    %264 = arith.addf %261, %263 : vector<32x128xf32>
    %c0_108 = arith.constant 0 : index
    %c3_109 = arith.constant 3 : index
    %c32_110 = arith.constant 32 : index
    %c0_111 = arith.constant 0 : index
    %265 = vector.load %arg2[%c0_108, %c3_109, %c32_110, %c0_111] : memref<1x4x128x128xf32, #tpu.memory_space<vmem>>, vector<1x1x32x128xf32>
    %266 = vector.shape_cast %265 : vector<1x1x32x128xf32> to vector<32x128xf32>
    %267 = arith.addf %264, %266 : vector<32x128xf32>
    %268 = tpu.bitcast %267 : vector<32x128xf32> -> vector<32x128xi32>
    %c31_i32_112 = arith.constant 31 : i32
    %269 = vector.broadcast %c31_i32_112 : i32 to vector<32x128xi32>
    %270 = arith.shrsi %268, %269 : vector<32x128xi32>
    %c2147483647_i32_113 = arith.constant 2147483647 : i32
    %271 = vector.broadcast %c2147483647_i32_113 : i32 to vector<32x128xi32>
    %272 = arith.andi %270, %271 : vector<32x128xi32>
    %273 = arith.xori %268, %272 : vector<32x128xi32>
    %c-128_i32_114 = arith.constant -128 : i32
    %274 = vector.broadcast %c-128_i32_114 : i32 to vector<32x128xi32>
    %275 = arith.andi %273, %274 : vector<32x128xi32>
    %276 = arith.ori %275, %14 : vector<32x128xi32>
    %cst_115 = arith.constant 0.000000e+00 : f32
    %277 = vector.broadcast %cst_115 : f32 to vector<32x128xf32>
    %cst_116 = arith.constant dense<-2147483648> : vector<32xi32>
    %278 = vector.multi_reduction <maxsi>, %276, %cst_116 [1] : vector<32x128xi32> to vector<32xi32>
    %279 = vector.shape_cast %278 : vector<32xi32> to vector<32x1xi32>
    %c-128_i32_117 = arith.constant -128 : i32
    %280 = vector.broadcast %c-128_i32_117 : i32 to vector<32x1xi32>
    %281 = arith.andi %279, %280 : vector<32x1xi32>
    %c0_i32_118 = arith.constant 0 : i32
    %282 = vector.broadcast %c0_i32_118 : i32 to vector<32x1xi32>
    %283 = arith.cmpi sle, %281, %282 : vector<32x1xi32>
    %c0_i32_119 = arith.constant 0 : i32
    %284 = vector.broadcast %c0_i32_119 : i32 to vector<32x1xi32>
    %285 = arith.cmpi sgt, %281, %284 : vector<32x1xi32>
    %286 = arith.ori %285, %283 : vector<32x1xi1>
    %287 = vector.broadcast %279 : vector<32x1xi32> to vector<32x128xi32>
    %288 = arith.cmpi eq, %276, %287 : vector<32x128xi32>
    %289 = vector.broadcast %286 : vector<32x1xi1> to vector<32x128xi1>
    %290 = arith.andi %288, %289 : vector<32x128xi1>
    %cst_120 = arith.constant 1.000000e+00 : f32
    %291 = vector.broadcast %cst_120 : f32 to vector<32x128xf32>
    %292 = arith.select %290, %291, %277 : vector<32x128xi1>, vector<32x128xf32>
    %c-2147483648_i32_121 = arith.constant -2147483648 : i32
    %293 = vector.broadcast %c-2147483648_i32_121 : i32 to vector<32x128xi32>
    %294 = arith.select %288, %293, %276 : vector<32x128xi1>, vector<32x128xi32>
    %cst_122 = arith.constant dense<-2147483648> : vector<32xi32>
    %295 = vector.multi_reduction <maxsi>, %294, %cst_122 [1] : vector<32x128xi32> to vector<32xi32>
    %296 = vector.shape_cast %295 : vector<32xi32> to vector<32x1xi32>
    %c-128_i32_123 = arith.constant -128 : i32
    %297 = vector.broadcast %c-128_i32_123 : i32 to vector<32x1xi32>
    %298 = arith.andi %296, %297 : vector<32x1xi32>
    %c0_i32_124 = arith.constant 0 : i32
    %299 = vector.broadcast %c0_i32_124 : i32 to vector<32x1xi32>
    %300 = arith.cmpi sgt, %298, %299 : vector<32x1xi32>
    %301 = arith.ori %300, %283 : vector<32x1xi1>
    %302 = vector.broadcast %296 : vector<32x1xi32> to vector<32x128xi32>
    %303 = arith.cmpi eq, %294, %302 : vector<32x128xi32>
    %304 = vector.broadcast %301 : vector<32x1xi1> to vector<32x128xi1>
    %305 = arith.andi %303, %304 : vector<32x128xi1>
    %cst_125 = arith.constant 1.000000e+00 : f32
    %306 = vector.broadcast %cst_125 : f32 to vector<32x128xf32>
    %307 = arith.select %305, %306, %292 : vector<32x128xi1>, vector<32x128xf32>
    %c-2147483648_i32_126 = arith.constant -2147483648 : i32
    %308 = vector.broadcast %c-2147483648_i32_126 : i32 to vector<32x128xi32>
    %309 = arith.select %303, %308, %294 : vector<32x128xi1>, vector<32x128xi32>
    %cst_127 = arith.constant dense<-2147483648> : vector<32xi32>
    %310 = vector.multi_reduction <maxsi>, %309, %cst_127 [1] : vector<32x128xi32> to vector<32xi32>
    %311 = vector.shape_cast %310 : vector<32xi32> to vector<32x1xi32>
    %c-128_i32_128 = arith.constant -128 : i32
    %312 = vector.broadcast %c-128_i32_128 : i32 to vector<32x1xi32>
    %313 = arith.andi %311, %312 : vector<32x1xi32>
    %c0_i32_129 = arith.constant 0 : i32
    %314 = vector.broadcast %c0_i32_129 : i32 to vector<32x1xi32>
    %315 = arith.cmpi sgt, %313, %314 : vector<32x1xi32>
    %316 = arith.ori %315, %283 : vector<32x1xi1>
    %317 = vector.broadcast %311 : vector<32x1xi32> to vector<32x128xi32>
    %318 = arith.cmpi eq, %309, %317 : vector<32x128xi32>
    %319 = vector.broadcast %316 : vector<32x1xi1> to vector<32x128xi1>
    %320 = arith.andi %318, %319 : vector<32x128xi1>
    %cst_130 = arith.constant 1.000000e+00 : f32
    %321 = vector.broadcast %cst_130 : f32 to vector<32x128xf32>
    %322 = arith.select %320, %321, %307 : vector<32x128xi1>, vector<32x128xf32>
    %c-2147483648_i32_131 = arith.constant -2147483648 : i32
    %323 = vector.broadcast %c-2147483648_i32_131 : i32 to vector<32x128xi32>
    %324 = arith.select %318, %323, %309 : vector<32x128xi1>, vector<32x128xi32>
    %cst_132 = arith.constant dense<-2147483648> : vector<32xi32>
    %325 = vector.multi_reduction <maxsi>, %324, %cst_132 [1] : vector<32x128xi32> to vector<32xi32>
    %326 = vector.shape_cast %325 : vector<32xi32> to vector<32x1xi32>
    %c-128_i32_133 = arith.constant -128 : i32
    %327 = vector.broadcast %c-128_i32_133 : i32 to vector<32x1xi32>
    %328 = arith.andi %326, %327 : vector<32x1xi32>
    %c0_i32_134 = arith.constant 0 : i32
    %329 = vector.broadcast %c0_i32_134 : i32 to vector<32x1xi32>
    %330 = arith.cmpi sgt, %328, %329 : vector<32x1xi32>
    %331 = arith.ori %330, %283 : vector<32x1xi1>
    %332 = vector.broadcast %326 : vector<32x1xi32> to vector<32x128xi32>
    %333 = arith.cmpi eq, %324, %332 : vector<32x128xi32>
    %334 = vector.broadcast %331 : vector<32x1xi1> to vector<32x128xi1>
    %335 = arith.andi %333, %334 : vector<32x128xi1>
    %cst_135 = arith.constant 1.000000e+00 : f32
    %336 = vector.broadcast %cst_135 : f32 to vector<32x128xf32>
    %337 = arith.select %335, %336, %322 : vector<32x128xi1>, vector<32x128xf32>
    %c-2147483648_i32_136 = arith.constant -2147483648 : i32
    %338 = vector.broadcast %c-2147483648_i32_136 : i32 to vector<32x128xi32>
    %339 = arith.select %333, %338, %324 : vector<32x128xi1>, vector<32x128xi32>
    %cst_137 = arith.constant dense<-2147483648> : vector<32xi32>
    %340 = vector.multi_reduction <maxsi>, %339, %cst_137 [1] : vector<32x128xi32> to vector<32xi32>
    %341 = vector.shape_cast %340 : vector<32xi32> to vector<32x1xi32>
    %c-128_i32_138 = arith.constant -128 : i32
    %342 = vector.broadcast %c-128_i32_138 : i32 to vector<32x1xi32>
    %343 = arith.andi %341, %342 : vector<32x1xi32>
    %c0_i32_139 = arith.constant 0 : i32
    %344 = vector.broadcast %c0_i32_139 : i32 to vector<32x1xi32>
    %345 = arith.cmpi sgt, %343, %344 : vector<32x1xi32>
    %346 = arith.ori %345, %283 : vector<32x1xi1>
    %347 = vector.broadcast %341 : vector<32x1xi32> to vector<32x128xi32>
    %348 = arith.cmpi eq, %339, %347 : vector<32x128xi32>
    %349 = vector.broadcast %346 : vector<32x1xi1> to vector<32x128xi1>
    %350 = arith.andi %348, %349 : vector<32x128xi1>
    %cst_140 = arith.constant 1.000000e+00 : f32
    %351 = vector.broadcast %cst_140 : f32 to vector<32x128xf32>
    %352 = arith.select %350, %351, %337 : vector<32x128xi1>, vector<32x128xf32>
    %c-2147483648_i32_141 = arith.constant -2147483648 : i32
    %353 = vector.broadcast %c-2147483648_i32_141 : i32 to vector<32x128xi32>
    %354 = arith.select %348, %353, %339 : vector<32x128xi1>, vector<32x128xi32>
    %cst_142 = arith.constant dense<-2147483648> : vector<32xi32>
    %355 = vector.multi_reduction <maxsi>, %354, %cst_142 [1] : vector<32x128xi32> to vector<32xi32>
    %356 = vector.shape_cast %355 : vector<32xi32> to vector<32x1xi32>
    %c-128_i32_143 = arith.constant -128 : i32
    %357 = vector.broadcast %c-128_i32_143 : i32 to vector<32x1xi32>
    %358 = arith.andi %356, %357 : vector<32x1xi32>
    %c0_i32_144 = arith.constant 0 : i32
    %359 = vector.broadcast %c0_i32_144 : i32 to vector<32x1xi32>
    %360 = arith.cmpi sgt, %358, %359 : vector<32x1xi32>
    %361 = arith.ori %360, %283 : vector<32x1xi1>
    %362 = vector.broadcast %356 : vector<32x1xi32> to vector<32x128xi32>
    %363 = arith.cmpi eq, %354, %362 : vector<32x128xi32>
    %364 = vector.broadcast %361 : vector<32x1xi1> to vector<32x128xi1>
    %365 = arith.andi %363, %364 : vector<32x128xi1>
    %cst_145 = arith.constant 1.000000e+00 : f32
    %366 = vector.broadcast %cst_145 : f32 to vector<32x128xf32>
    %367 = arith.select %365, %366, %352 : vector<32x128xi1>, vector<32x128xf32>
    %c-2147483648_i32_146 = arith.constant -2147483648 : i32
    %368 = vector.broadcast %c-2147483648_i32_146 : i32 to vector<32x128xi32>
    %369 = arith.select %363, %368, %354 : vector<32x128xi1>, vector<32x128xi32>
    %cst_147 = arith.constant dense<-2147483648> : vector<32xi32>
    %370 = vector.multi_reduction <maxsi>, %369, %cst_147 [1] : vector<32x128xi32> to vector<32xi32>
    %371 = vector.shape_cast %370 : vector<32xi32> to vector<32x1xi32>
    %c-128_i32_148 = arith.constant -128 : i32
    %372 = vector.broadcast %c-128_i32_148 : i32 to vector<32x1xi32>
    %373 = arith.andi %371, %372 : vector<32x1xi32>
    %c0_i32_149 = arith.constant 0 : i32
    %374 = vector.broadcast %c0_i32_149 : i32 to vector<32x1xi32>
    %375 = arith.cmpi sgt, %373, %374 : vector<32x1xi32>
    %376 = arith.ori %375, %283 : vector<32x1xi1>
    %377 = vector.broadcast %371 : vector<32x1xi32> to vector<32x128xi32>
    %378 = arith.cmpi eq, %369, %377 : vector<32x128xi32>
    %379 = vector.broadcast %376 : vector<32x1xi1> to vector<32x128xi1>
    %380 = arith.andi %378, %379 : vector<32x128xi1>
    %cst_150 = arith.constant 1.000000e+00 : f32
    %381 = vector.broadcast %cst_150 : f32 to vector<32x128xf32>
    %382 = arith.select %380, %381, %367 : vector<32x128xi1>, vector<32x128xf32>
    %c-2147483648_i32_151 = arith.constant -2147483648 : i32
    %383 = vector.broadcast %c-2147483648_i32_151 : i32 to vector<32x128xi32>
    %384 = arith.select %378, %383, %369 : vector<32x128xi1>, vector<32x128xi32>
    %cst_152 = arith.constant dense<-2147483648> : vector<32xi32>
    %385 = vector.multi_reduction <maxsi>, %384, %cst_152 [1] : vector<32x128xi32> to vector<32xi32>
    %386 = vector.shape_cast %385 : vector<32xi32> to vector<32x1xi32>
    %c-128_i32_153 = arith.constant -128 : i32
    %387 = vector.broadcast %c-128_i32_153 : i32 to vector<32x1xi32>
    %388 = arith.andi %386, %387 : vector<32x1xi32>
    %c0_i32_154 = arith.constant 0 : i32
    %389 = vector.broadcast %c0_i32_154 : i32 to vector<32x1xi32>
    %390 = arith.cmpi sgt, %388, %389 : vector<32x1xi32>
    %391 = arith.ori %390, %283 : vector<32x1xi1>
    %392 = vector.broadcast %386 : vector<32x1xi32> to vector<32x128xi32>
    %393 = arith.cmpi eq, %384, %392 : vector<32x128xi32>
    %394 = vector.broadcast %391 : vector<32x1xi1> to vector<32x128xi1>
    %395 = arith.andi %393, %394 : vector<32x128xi1>
    %cst_155 = arith.constant 1.000000e+00 : f32
    %396 = vector.broadcast %cst_155 : f32 to vector<32x128xf32>
    %397 = arith.select %395, %396, %382 : vector<32x128xi1>, vector<32x128xf32>
    %c-2147483648_i32_156 = arith.constant -2147483648 : i32
    %398 = vector.broadcast %c-2147483648_i32_156 : i32 to vector<32x128xi32>
    %399 = arith.select %393, %398, %384 : vector<32x128xi1>, vector<32x128xi32>
    %cst_157 = arith.constant dense<-2147483648> : vector<32xi32>
    %400 = vector.multi_reduction <maxsi>, %399, %cst_157 [1] : vector<32x128xi32> to vector<32xi32>
    %401 = vector.shape_cast %400 : vector<32xi32> to vector<32x1xi32>
    %c-128_i32_158 = arith.constant -128 : i32
    %402 = vector.broadcast %c-128_i32_158 : i32 to vector<32x1xi32>
    %403 = arith.andi %401, %402 : vector<32x1xi32>
    %c0_i32_159 = arith.constant 0 : i32
    %404 = vector.broadcast %c0_i32_159 : i32 to vector<32x1xi32>
    %405 = arith.cmpi sgt, %403, %404 : vector<32x1xi32>
    %406 = arith.ori %405, %283 : vector<32x1xi1>
    %407 = vector.broadcast %401 : vector<32x1xi32> to vector<32x128xi32>
    %408 = arith.cmpi eq, %399, %407 : vector<32x128xi32>
    %409 = vector.broadcast %406 : vector<32x1xi1> to vector<32x128xi1>
    %410 = arith.andi %408, %409 : vector<32x128xi1>
    %cst_160 = arith.constant 1.000000e+00 : f32
    %411 = vector.broadcast %cst_160 : f32 to vector<32x128xf32>
    %412 = arith.select %410, %411, %397 : vector<32x128xi1>, vector<32x128xf32>
    %c-2147483648_i32_161 = arith.constant -2147483648 : i32
    %413 = vector.broadcast %c-2147483648_i32_161 : i32 to vector<32x128xi32>
    %414 = arith.select %408, %413, %399 : vector<32x128xi1>, vector<32x128xi32>
    %cst_162 = arith.constant dense<-2147483648> : vector<32xi32>
    %415 = vector.multi_reduction <maxsi>, %414, %cst_162 [1] : vector<32x128xi32> to vector<32xi32>
    %416 = vector.shape_cast %415 : vector<32xi32> to vector<32x1xi32>
    %c-128_i32_163 = arith.constant -128 : i32
    %417 = vector.broadcast %c-128_i32_163 : i32 to vector<32x1xi32>
    %418 = arith.andi %416, %417 : vector<32x1xi32>
    %c0_i32_164 = arith.constant 0 : i32
    %419 = vector.broadcast %c0_i32_164 : i32 to vector<32x1xi32>
    %420 = arith.cmpi sgt, %418, %419 : vector<32x1xi32>
    %421 = arith.ori %420, %283 : vector<32x1xi1>
    %422 = vector.broadcast %416 : vector<32x1xi32> to vector<32x128xi32>
    %423 = arith.cmpi eq, %414, %422 : vector<32x128xi32>
    %424 = vector.broadcast %421 : vector<32x1xi1> to vector<32x128xi1>
    %425 = arith.andi %423, %424 : vector<32x128xi1>
    %cst_165 = arith.constant 1.000000e+00 : f32
    %426 = vector.broadcast %cst_165 : f32 to vector<32x128xf32>
    %427 = arith.select %425, %426, %412 : vector<32x128xi1>, vector<32x128xf32>
    %c-2147483648_i32_166 = arith.constant -2147483648 : i32
    %428 = vector.broadcast %c-2147483648_i32_166 : i32 to vector<32x128xi32>
    %429 = arith.select %423, %428, %414 : vector<32x128xi1>, vector<32x128xi32>
    %cst_167 = arith.constant dense<-2147483648> : vector<32xi32>
    %430 = vector.multi_reduction <maxsi>, %429, %cst_167 [1] : vector<32x128xi32> to vector<32xi32>
    %431 = vector.shape_cast %430 : vector<32xi32> to vector<32x1xi32>
    %c-128_i32_168 = arith.constant -128 : i32
    %432 = vector.broadcast %c-128_i32_168 : i32 to vector<32x1xi32>
    %433 = arith.andi %431, %432 : vector<32x1xi32>
    %c0_i32_169 = arith.constant 0 : i32
    %434 = vector.broadcast %c0_i32_169 : i32 to vector<32x1xi32>
    %435 = arith.cmpi sgt, %433, %434 : vector<32x1xi32>
    %436 = arith.ori %435, %283 : vector<32x1xi1>
    %437 = vector.broadcast %431 : vector<32x1xi32> to vector<32x128xi32>
    %438 = arith.cmpi eq, %429, %437 : vector<32x128xi32>
    %439 = vector.broadcast %436 : vector<32x1xi1> to vector<32x128xi1>
    %440 = arith.andi %438, %439 : vector<32x128xi1>
    %cst_170 = arith.constant 1.000000e+00 : f32
    %441 = vector.broadcast %cst_170 : f32 to vector<32x128xf32>
    %442 = arith.select %440, %441, %427 : vector<32x128xi1>, vector<32x128xf32>
    %c-2147483648_i32_171 = arith.constant -2147483648 : i32
    %443 = vector.broadcast %c-2147483648_i32_171 : i32 to vector<32x128xi32>
    %444 = arith.select %438, %443, %429 : vector<32x128xi1>, vector<32x128xi32>
    %cst_172 = arith.constant dense<-2147483648> : vector<32xi32>
    %445 = vector.multi_reduction <maxsi>, %444, %cst_172 [1] : vector<32x128xi32> to vector<32xi32>
    %446 = vector.shape_cast %445 : vector<32xi32> to vector<32x1xi32>
    %c-128_i32_173 = arith.constant -128 : i32
    %447 = vector.broadcast %c-128_i32_173 : i32 to vector<32x1xi32>
    %448 = arith.andi %446, %447 : vector<32x1xi32>
    %c0_i32_174 = arith.constant 0 : i32
    %449 = vector.broadcast %c0_i32_174 : i32 to vector<32x1xi32>
    %450 = arith.cmpi sgt, %448, %449 : vector<32x1xi32>
    %451 = arith.ori %450, %283 : vector<32x1xi1>
    %452 = vector.broadcast %446 : vector<32x1xi32> to vector<32x128xi32>
    %453 = arith.cmpi eq, %444, %452 : vector<32x128xi32>
    %454 = vector.broadcast %451 : vector<32x1xi1> to vector<32x128xi1>
    %455 = arith.andi %453, %454 : vector<32x128xi1>
    %cst_175 = arith.constant 1.000000e+00 : f32
    %456 = vector.broadcast %cst_175 : f32 to vector<32x128xf32>
    %457 = arith.select %455, %456, %442 : vector<32x128xi1>, vector<32x128xf32>
    %c-2147483648_i32_176 = arith.constant -2147483648 : i32
    %458 = vector.broadcast %c-2147483648_i32_176 : i32 to vector<32x128xi32>
    %459 = arith.select %453, %458, %444 : vector<32x128xi1>, vector<32x128xi32>
    %cst_177 = arith.constant dense<-2147483648> : vector<32xi32>
    %460 = vector.multi_reduction <maxsi>, %459, %cst_177 [1] : vector<32x128xi32> to vector<32xi32>
    %461 = vector.shape_cast %460 : vector<32xi32> to vector<32x1xi32>
    %c-128_i32_178 = arith.constant -128 : i32
    %462 = vector.broadcast %c-128_i32_178 : i32 to vector<32x1xi32>
    %463 = arith.andi %461, %462 : vector<32x1xi32>
    %c0_i32_179 = arith.constant 0 : i32
    %464 = vector.broadcast %c0_i32_179 : i32 to vector<32x1xi32>
    %465 = arith.cmpi sgt, %463, %464 : vector<32x1xi32>
    %466 = arith.ori %465, %283 : vector<32x1xi1>
    %467 = vector.broadcast %461 : vector<32x1xi32> to vector<32x128xi32>
    %468 = arith.cmpi eq, %459, %467 : vector<32x128xi32>
    %469 = vector.broadcast %466 : vector<32x1xi1> to vector<32x128xi1>
    %470 = arith.andi %468, %469 : vector<32x128xi1>
    %cst_180 = arith.constant 1.000000e+00 : f32
    %471 = vector.broadcast %cst_180 : f32 to vector<32x128xf32>
    %472 = arith.select %470, %471, %457 : vector<32x128xi1>, vector<32x128xf32>
    %cst_181 = arith.constant dense<0.000000e+00> : vector<32xf32>
    %473 = vector.multi_reduction <add>, %472, %cst_181 [1] : vector<32x128xf32> to vector<32xf32>
    %474 = vector.shape_cast %473 : vector<32xf32> to vector<32x1xf32>
    %cst_182 = arith.constant 1.000000e+00 : f32
    %475 = vector.broadcast %cst_182 : f32 to vector<32x1xf32>
    %476 = arith.divf %475, %474 : vector<32x1xf32>
    %477 = vector.broadcast %476 : vector<32x1xf32> to vector<32x128xf32>
    %478 = arith.mulf %472, %477 : vector<32x128xf32>
    %cst_183 = arith.constant dense<0.000000e+00> : vector<32x128xf32>
    %479 = tpu.matmul %478, %8, %cst_183 {dimension_numbers = #tpu.dot_dimension_numbers<[1], [0], [0], [1], [0, 0, 1, 1], [], []>} : vector<32x128xf32>, vector<128x128xf32>, vector<32x128xf32> -> vector<32x128xf32>
    %480 = vector.extract_strided_slice %8 {offsets = [32, 0], sizes = [32, 128], strides = [1, 1]} : vector<128x128xf32> to vector<32x128xf32>
    %cst_184 = arith.constant dense<0.000000e+00> : vector<32x128xf32>
    %481 = tpu.matmul %480, %9, %cst_184 {dimension_numbers = #tpu.dot_dimension_numbers<[1], [0], [0], [1], [0, 0, 1, 1], [], []>} : vector<32x128xf32>, vector<128x128xf32>, vector<32x128xf32> -> vector<32x128xf32>
    %cst_185 = arith.constant dense<0.000000e+00> : vector<32x128xf32>
    %482 = tpu.matmul %479, %10, %cst_185 {dimension_numbers = #tpu.dot_dimension_numbers<[1], [0], [0], [1], [0, 0, 1, 1], [], []>} : vector<32x128xf32>, vector<128x128xf32>, vector<32x128xf32> -> vector<32x128xf32>
    %483 = arith.addf %481, %482 : vector<32x128xf32>
    %484 = vector.broadcast %11 : vector<1x128xf32> to vector<32x128xf32>
    %485 = arith.addf %483, %484 : vector<32x128xf32>
    %486 = tpu.iota {dimensions = array<i32: 0>} : vector<32x1xi32>
    %c32_i32 = arith.constant 32 : i32
    %487 = vector.broadcast %c32_i32 : i32 to vector<32x1xi32>
    %488 = arith.addi %487, %486 : vector<32x1xi32>
    %489 = vector.broadcast %1 : i32 to vector<32x1xi32>
    %490 = arith.cmpi slt, %488, %489 : vector<32x1xi32>
    %491 = arith.extui %490 : vector<32x1xi1> to vector<32x1xi32>
    %492 = arith.sitofp %491 : vector<32x1xi32> to vector<32x1xf32>
    %493 = vector.broadcast %492 : vector<32x1xf32> to vector<32x128xf32>
    %494 = arith.mulf %485, %493 : vector<32x128xf32>
    %cst_186 = arith.constant dense<0.000000e+00> : vector<128xf32>
    %495 = vector.multi_reduction <add>, %494, %cst_186 [0] : vector<32x128xf32> to vector<128xf32>
    %496 = vector.shape_cast %495 : vector<128xf32> to vector<1x128xf32>
    %497 = arith.addf %256, %496 : vector<1x128xf32>
    %c0_187 = arith.constant 0 : index
    %c0_188 = arith.constant 0 : index
    %c64 = arith.constant 64 : index
    %c0_189 = arith.constant 0 : index
    %498 = vector.load %arg2[%c0_187, %c0_188, %c64, %c0_189] : memref<1x4x128x128xf32, #tpu.memory_space<vmem>>, vector<1x1x32x128xf32>
    %499 = vector.shape_cast %498 : vector<1x1x32x128xf32> to vector<32x128xf32>
    %c0_190 = arith.constant 0 : index
    %c1_191 = arith.constant 1 : index
    %c64_192 = arith.constant 64 : index
    %c0_193 = arith.constant 0 : index
    %500 = vector.load %arg2[%c0_190, %c1_191, %c64_192, %c0_193] : memref<1x4x128x128xf32, #tpu.memory_space<vmem>>, vector<1x1x32x128xf32>
    %501 = vector.shape_cast %500 : vector<1x1x32x128xf32> to vector<32x128xf32>
    %502 = arith.addf %499, %501 : vector<32x128xf32>
    %c0_194 = arith.constant 0 : index
    %c2_195 = arith.constant 2 : index
    %c64_196 = arith.constant 64 : index
    %c0_197 = arith.constant 0 : index
    %503 = vector.load %arg2[%c0_194, %c2_195, %c64_196, %c0_197] : memref<1x4x128x128xf32, #tpu.memory_space<vmem>>, vector<1x1x32x128xf32>
    %504 = vector.shape_cast %503 : vector<1x1x32x128xf32> to vector<32x128xf32>
    %505 = arith.addf %502, %504 : vector<32x128xf32>
    %c0_198 = arith.constant 0 : index
    %c3_199 = arith.constant 3 : index
    %c64_200 = arith.constant 64 : index
    %c0_201 = arith.constant 0 : index
    %506 = vector.load %arg2[%c0_198, %c3_199, %c64_200, %c0_201] : memref<1x4x128x128xf32, #tpu.memory_space<vmem>>, vector<1x1x32x128xf32>
    %507 = vector.shape_cast %506 : vector<1x1x32x128xf32> to vector<32x128xf32>
    %508 = arith.addf %505, %507 : vector<32x128xf32>
    %509 = tpu.bitcast %508 : vector<32x128xf32> -> vector<32x128xi32>
    %c31_i32_202 = arith.constant 31 : i32
    %510 = vector.broadcast %c31_i32_202 : i32 to vector<32x128xi32>
    %511 = arith.shrsi %509, %510 : vector<32x128xi32>
    %c2147483647_i32_203 = arith.constant 2147483647 : i32
    %512 = vector.broadcast %c2147483647_i32_203 : i32 to vector<32x128xi32>
    %513 = arith.andi %511, %512 : vector<32x128xi32>
    %514 = arith.xori %509, %513 : vector<32x128xi32>
    %c-128_i32_204 = arith.constant -128 : i32
    %515 = vector.broadcast %c-128_i32_204 : i32 to vector<32x128xi32>
    %516 = arith.andi %514, %515 : vector<32x128xi32>
    %517 = arith.ori %516, %14 : vector<32x128xi32>
    %cst_205 = arith.constant 0.000000e+00 : f32
    %518 = vector.broadcast %cst_205 : f32 to vector<32x128xf32>
    %cst_206 = arith.constant dense<-2147483648> : vector<32xi32>
    %519 = vector.multi_reduction <maxsi>, %517, %cst_206 [1] : vector<32x128xi32> to vector<32xi32>
    %520 = vector.shape_cast %519 : vector<32xi32> to vector<32x1xi32>
    %c-128_i32_207 = arith.constant -128 : i32
    %521 = vector.broadcast %c-128_i32_207 : i32 to vector<32x1xi32>
    %522 = arith.andi %520, %521 : vector<32x1xi32>
    %c0_i32_208 = arith.constant 0 : i32
    %523 = vector.broadcast %c0_i32_208 : i32 to vector<32x1xi32>
    %524 = arith.cmpi sle, %522, %523 : vector<32x1xi32>
    %c0_i32_209 = arith.constant 0 : i32
    %525 = vector.broadcast %c0_i32_209 : i32 to vector<32x1xi32>
    %526 = arith.cmpi sgt, %522, %525 : vector<32x1xi32>
    %527 = arith.ori %526, %524 : vector<32x1xi1>
    %528 = vector.broadcast %520 : vector<32x1xi32> to vector<32x128xi32>
    %529 = arith.cmpi eq, %517, %528 : vector<32x128xi32>
    %530 = vector.broadcast %527 : vector<32x1xi1> to vector<32x128xi1>
    %531 = arith.andi %529, %530 : vector<32x128xi1>
    %cst_210 = arith.constant 1.000000e+00 : f32
    %532 = vector.broadcast %cst_210 : f32 to vector<32x128xf32>
    %533 = arith.select %531, %532, %518 : vector<32x128xi1>, vector<32x128xf32>
    %c-2147483648_i32_211 = arith.constant -2147483648 : i32
    %534 = vector.broadcast %c-2147483648_i32_211 : i32 to vector<32x128xi32>
    %535 = arith.select %529, %534, %517 : vector<32x128xi1>, vector<32x128xi32>
    %cst_212 = arith.constant dense<-2147483648> : vector<32xi32>
    %536 = vector.multi_reduction <maxsi>, %535, %cst_212 [1] : vector<32x128xi32> to vector<32xi32>
    %537 = vector.shape_cast %536 : vector<32xi32> to vector<32x1xi32>
    %c-128_i32_213 = arith.constant -128 : i32
    %538 = vector.broadcast %c-128_i32_213 : i32 to vector<32x1xi32>
    %539 = arith.andi %537, %538 : vector<32x1xi32>
    %c0_i32_214 = arith.constant 0 : i32
    %540 = vector.broadcast %c0_i32_214 : i32 to vector<32x1xi32>
    %541 = arith.cmpi sgt, %539, %540 : vector<32x1xi32>
    %542 = arith.ori %541, %524 : vector<32x1xi1>
    %543 = vector.broadcast %537 : vector<32x1xi32> to vector<32x128xi32>
    %544 = arith.cmpi eq, %535, %543 : vector<32x128xi32>
    %545 = vector.broadcast %542 : vector<32x1xi1> to vector<32x128xi1>
    %546 = arith.andi %544, %545 : vector<32x128xi1>
    %cst_215 = arith.constant 1.000000e+00 : f32
    %547 = vector.broadcast %cst_215 : f32 to vector<32x128xf32>
    %548 = arith.select %546, %547, %533 : vector<32x128xi1>, vector<32x128xf32>
    %c-2147483648_i32_216 = arith.constant -2147483648 : i32
    %549 = vector.broadcast %c-2147483648_i32_216 : i32 to vector<32x128xi32>
    %550 = arith.select %544, %549, %535 : vector<32x128xi1>, vector<32x128xi32>
    %cst_217 = arith.constant dense<-2147483648> : vector<32xi32>
    %551 = vector.multi_reduction <maxsi>, %550, %cst_217 [1] : vector<32x128xi32> to vector<32xi32>
    %552 = vector.shape_cast %551 : vector<32xi32> to vector<32x1xi32>
    %c-128_i32_218 = arith.constant -128 : i32
    %553 = vector.broadcast %c-128_i32_218 : i32 to vector<32x1xi32>
    %554 = arith.andi %552, %553 : vector<32x1xi32>
    %c0_i32_219 = arith.constant 0 : i32
    %555 = vector.broadcast %c0_i32_219 : i32 to vector<32x1xi32>
    %556 = arith.cmpi sgt, %554, %555 : vector<32x1xi32>
    %557 = arith.ori %556, %524 : vector<32x1xi1>
    %558 = vector.broadcast %552 : vector<32x1xi32> to vector<32x128xi32>
    %559 = arith.cmpi eq, %550, %558 : vector<32x128xi32>
    %560 = vector.broadcast %557 : vector<32x1xi1> to vector<32x128xi1>
    %561 = arith.andi %559, %560 : vector<32x128xi1>
    %cst_220 = arith.constant 1.000000e+00 : f32
    %562 = vector.broadcast %cst_220 : f32 to vector<32x128xf32>
    %563 = arith.select %561, %562, %548 : vector<32x128xi1>, vector<32x128xf32>
    %c-2147483648_i32_221 = arith.constant -2147483648 : i32
    %564 = vector.broadcast %c-2147483648_i32_221 : i32 to vector<32x128xi32>
    %565 = arith.select %559, %564, %550 : vector<32x128xi1>, vector<32x128xi32>
    %cst_222 = arith.constant dense<-2147483648> : vector<32xi32>
    %566 = vector.multi_reduction <maxsi>, %565, %cst_222 [1] : vector<32x128xi32> to vector<32xi32>
    %567 = vector.shape_cast %566 : vector<32xi32> to vector<32x1xi32>
    %c-128_i32_223 = arith.constant -128 : i32
    %568 = vector.broadcast %c-128_i32_223 : i32 to vector<32x1xi32>
    %569 = arith.andi %567, %568 : vector<32x1xi32>
    %c0_i32_224 = arith.constant 0 : i32
    %570 = vector.broadcast %c0_i32_224 : i32 to vector<32x1xi32>
    %571 = arith.cmpi sgt, %569, %570 : vector<32x1xi32>
    %572 = arith.ori %571, %524 : vector<32x1xi1>
    %573 = vector.broadcast %567 : vector<32x1xi32> to vector<32x128xi32>
    %574 = arith.cmpi eq, %565, %573 : vector<32x128xi32>
    %575 = vector.broadcast %572 : vector<32x1xi1> to vector<32x128xi1>
    %576 = arith.andi %574, %575 : vector<32x128xi1>
    %cst_225 = arith.constant 1.000000e+00 : f32
    %577 = vector.broadcast %cst_225 : f32 to vector<32x128xf32>
    %578 = arith.select %576, %577, %563 : vector<32x128xi1>, vector<32x128xf32>
    %c-2147483648_i32_226 = arith.constant -2147483648 : i32
    %579 = vector.broadcast %c-2147483648_i32_226 : i32 to vector<32x128xi32>
    %580 = arith.select %574, %579, %565 : vector<32x128xi1>, vector<32x128xi32>
    %cst_227 = arith.constant dense<-2147483648> : vector<32xi32>
    %581 = vector.multi_reduction <maxsi>, %580, %cst_227 [1] : vector<32x128xi32> to vector<32xi32>
    %582 = vector.shape_cast %581 : vector<32xi32> to vector<32x1xi32>
    %c-128_i32_228 = arith.constant -128 : i32
    %583 = vector.broadcast %c-128_i32_228 : i32 to vector<32x1xi32>
    %584 = arith.andi %582, %583 : vector<32x1xi32>
    %c0_i32_229 = arith.constant 0 : i32
    %585 = vector.broadcast %c0_i32_229 : i32 to vector<32x1xi32>
    %586 = arith.cmpi sgt, %584, %585 : vector<32x1xi32>
    %587 = arith.ori %586, %524 : vector<32x1xi1>
    %588 = vector.broadcast %582 : vector<32x1xi32> to vector<32x128xi32>
    %589 = arith.cmpi eq, %580, %588 : vector<32x128xi32>
    %590 = vector.broadcast %587 : vector<32x1xi1> to vector<32x128xi1>
    %591 = arith.andi %589, %590 : vector<32x128xi1>
    %cst_230 = arith.constant 1.000000e+00 : f32
    %592 = vector.broadcast %cst_230 : f32 to vector<32x128xf32>
    %593 = arith.select %591, %592, %578 : vector<32x128xi1>, vector<32x128xf32>
    %c-2147483648_i32_231 = arith.constant -2147483648 : i32
    %594 = vector.broadcast %c-2147483648_i32_231 : i32 to vector<32x128xi32>
    %595 = arith.select %589, %594, %580 : vector<32x128xi1>, vector<32x128xi32>
    %cst_232 = arith.constant dense<-2147483648> : vector<32xi32>
    %596 = vector.multi_reduction <maxsi>, %595, %cst_232 [1] : vector<32x128xi32> to vector<32xi32>
    %597 = vector.shape_cast %596 : vector<32xi32> to vector<32x1xi32>
    %c-128_i32_233 = arith.constant -128 : i32
    %598 = vector.broadcast %c-128_i32_233 : i32 to vector<32x1xi32>
    %599 = arith.andi %597, %598 : vector<32x1xi32>
    %c0_i32_234 = arith.constant 0 : i32
    %600 = vector.broadcast %c0_i32_234 : i32 to vector<32x1xi32>
    %601 = arith.cmpi sgt, %599, %600 : vector<32x1xi32>
    %602 = arith.ori %601, %524 : vector<32x1xi1>
    %603 = vector.broadcast %597 : vector<32x1xi32> to vector<32x128xi32>
    %604 = arith.cmpi eq, %595, %603 : vector<32x128xi32>
    %605 = vector.broadcast %602 : vector<32x1xi1> to vector<32x128xi1>
    %606 = arith.andi %604, %605 : vector<32x128xi1>
    %cst_235 = arith.constant 1.000000e+00 : f32
    %607 = vector.broadcast %cst_235 : f32 to vector<32x128xf32>
    %608 = arith.select %606, %607, %593 : vector<32x128xi1>, vector<32x128xf32>
    %c-2147483648_i32_236 = arith.constant -2147483648 : i32
    %609 = vector.broadcast %c-2147483648_i32_236 : i32 to vector<32x128xi32>
    %610 = arith.select %604, %609, %595 : vector<32x128xi1>, vector<32x128xi32>
    %cst_237 = arith.constant dense<-2147483648> : vector<32xi32>
    %611 = vector.multi_reduction <maxsi>, %610, %cst_237 [1] : vector<32x128xi32> to vector<32xi32>
    %612 = vector.shape_cast %611 : vector<32xi32> to vector<32x1xi32>
    %c-128_i32_238 = arith.constant -128 : i32
    %613 = vector.broadcast %c-128_i32_238 : i32 to vector<32x1xi32>
    %614 = arith.andi %612, %613 : vector<32x1xi32>
    %c0_i32_239 = arith.constant 0 : i32
    %615 = vector.broadcast %c0_i32_239 : i32 to vector<32x1xi32>
    %616 = arith.cmpi sgt, %614, %615 : vector<32x1xi32>
    %617 = arith.ori %616, %524 : vector<32x1xi1>
    %618 = vector.broadcast %612 : vector<32x1xi32> to vector<32x128xi32>
    %619 = arith.cmpi eq, %610, %618 : vector<32x128xi32>
    %620 = vector.broadcast %617 : vector<32x1xi1> to vector<32x128xi1>
    %621 = arith.andi %619, %620 : vector<32x128xi1>
    %cst_240 = arith.constant 1.000000e+00 : f32
    %622 = vector.broadcast %cst_240 : f32 to vector<32x128xf32>
    %623 = arith.select %621, %622, %608 : vector<32x128xi1>, vector<32x128xf32>
    %c-2147483648_i32_241 = arith.constant -2147483648 : i32
    %624 = vector.broadcast %c-2147483648_i32_241 : i32 to vector<32x128xi32>
    %625 = arith.select %619, %624, %610 : vector<32x128xi1>, vector<32x128xi32>
    %cst_242 = arith.constant dense<-2147483648> : vector<32xi32>
    %626 = vector.multi_reduction <maxsi>, %625, %cst_242 [1] : vector<32x128xi32> to vector<32xi32>
    %627 = vector.shape_cast %626 : vector<32xi32> to vector<32x1xi32>
    %c-128_i32_243 = arith.constant -128 : i32
    %628 = vector.broadcast %c-128_i32_243 : i32 to vector<32x1xi32>
    %629 = arith.andi %627, %628 : vector<32x1xi32>
    %c0_i32_244 = arith.constant 0 : i32
    %630 = vector.broadcast %c0_i32_244 : i32 to vector<32x1xi32>
    %631 = arith.cmpi sgt, %629, %630 : vector<32x1xi32>
    %632 = arith.ori %631, %524 : vector<32x1xi1>
    %633 = vector.broadcast %627 : vector<32x1xi32> to vector<32x128xi32>
    %634 = arith.cmpi eq, %625, %633 : vector<32x128xi32>
    %635 = vector.broadcast %632 : vector<32x1xi1> to vector<32x128xi1>
    %636 = arith.andi %634, %635 : vector<32x128xi1>
    %cst_245 = arith.constant 1.000000e+00 : f32
    %637 = vector.broadcast %cst_245 : f32 to vector<32x128xf32>
    %638 = arith.select %636, %637, %623 : vector<32x128xi1>, vector<32x128xf32>
    %c-2147483648_i32_246 = arith.constant -2147483648 : i32
    %639 = vector.broadcast %c-2147483648_i32_246 : i32 to vector<32x128xi32>
    %640 = arith.select %634, %639, %625 : vector<32x128xi1>, vector<32x128xi32>
    %cst_247 = arith.constant dense<-2147483648> : vector<32xi32>
    %641 = vector.multi_reduction <maxsi>, %640, %cst_247 [1] : vector<32x128xi32> to vector<32xi32>
    %642 = vector.shape_cast %641 : vector<32xi32> to vector<32x1xi32>
    %c-128_i32_248 = arith.constant -128 : i32
    %643 = vector.broadcast %c-128_i32_248 : i32 to vector<32x1xi32>
    %644 = arith.andi %642, %643 : vector<32x1xi32>
    %c0_i32_249 = arith.constant 0 : i32
    %645 = vector.broadcast %c0_i32_249 : i32 to vector<32x1xi32>
    %646 = arith.cmpi sgt, %644, %645 : vector<32x1xi32>
    %647 = arith.ori %646, %524 : vector<32x1xi1>
    %648 = vector.broadcast %642 : vector<32x1xi32> to vector<32x128xi32>
    %649 = arith.cmpi eq, %640, %648 : vector<32x128xi32>
    %650 = vector.broadcast %647 : vector<32x1xi1> to vector<32x128xi1>
    %651 = arith.andi %649, %650 : vector<32x128xi1>
    %cst_250 = arith.constant 1.000000e+00 : f32
    %652 = vector.broadcast %cst_250 : f32 to vector<32x128xf32>
    %653 = arith.select %651, %652, %638 : vector<32x128xi1>, vector<32x128xf32>
    %c-2147483648_i32_251 = arith.constant -2147483648 : i32
    %654 = vector.broadcast %c-2147483648_i32_251 : i32 to vector<32x128xi32>
    %655 = arith.select %649, %654, %640 : vector<32x128xi1>, vector<32x128xi32>
    %cst_252 = arith.constant dense<-2147483648> : vector<32xi32>
    %656 = vector.multi_reduction <maxsi>, %655, %cst_252 [1] : vector<32x128xi32> to vector<32xi32>
    %657 = vector.shape_cast %656 : vector<32xi32> to vector<32x1xi32>
    %c-128_i32_253 = arith.constant -128 : i32
    %658 = vector.broadcast %c-128_i32_253 : i32 to vector<32x1xi32>
    %659 = arith.andi %657, %658 : vector<32x1xi32>
    %c0_i32_254 = arith.constant 0 : i32
    %660 = vector.broadcast %c0_i32_254 : i32 to vector<32x1xi32>
    %661 = arith.cmpi sgt, %659, %660 : vector<32x1xi32>
    %662 = arith.ori %661, %524 : vector<32x1xi1>
    %663 = vector.broadcast %657 : vector<32x1xi32> to vector<32x128xi32>
    %664 = arith.cmpi eq, %655, %663 : vector<32x128xi32>
    %665 = vector.broadcast %662 : vector<32x1xi1> to vector<32x128xi1>
    %666 = arith.andi %664, %665 : vector<32x128xi1>
    %cst_255 = arith.constant 1.000000e+00 : f32
    %667 = vector.broadcast %cst_255 : f32 to vector<32x128xf32>
    %668 = arith.select %666, %667, %653 : vector<32x128xi1>, vector<32x128xf32>
    %c-2147483648_i32_256 = arith.constant -2147483648 : i32
    %669 = vector.broadcast %c-2147483648_i32_256 : i32 to vector<32x128xi32>
    %670 = arith.select %664, %669, %655 : vector<32x128xi1>, vector<32x128xi32>
    %cst_257 = arith.constant dense<-2147483648> : vector<32xi32>
    %671 = vector.multi_reduction <maxsi>, %670, %cst_257 [1] : vector<32x128xi32> to vector<32xi32>
    %672 = vector.shape_cast %671 : vector<32xi32> to vector<32x1xi32>
    %c-128_i32_258 = arith.constant -128 : i32
    %673 = vector.broadcast %c-128_i32_258 : i32 to vector<32x1xi32>
    %674 = arith.andi %672, %673 : vector<32x1xi32>
    %c0_i32_259 = arith.constant 0 : i32
    %675 = vector.broadcast %c0_i32_259 : i32 to vector<32x1xi32>
    %676 = arith.cmpi sgt, %674, %675 : vector<32x1xi32>
    %677 = arith.ori %676, %524 : vector<32x1xi1>
    %678 = vector.broadcast %672 : vector<32x1xi32> to vector<32x128xi32>
    %679 = arith.cmpi eq, %670, %678 : vector<32x128xi32>
    %680 = vector.broadcast %677 : vector<32x1xi1> to vector<32x128xi1>
    %681 = arith.andi %679, %680 : vector<32x128xi1>
    %cst_260 = arith.constant 1.000000e+00 : f32
    %682 = vector.broadcast %cst_260 : f32 to vector<32x128xf32>
    %683 = arith.select %681, %682, %668 : vector<32x128xi1>, vector<32x128xf32>
    %c-2147483648_i32_261 = arith.constant -2147483648 : i32
    %684 = vector.broadcast %c-2147483648_i32_261 : i32 to vector<32x128xi32>
    %685 = arith.select %679, %684, %670 : vector<32x128xi1>, vector<32x128xi32>
    %cst_262 = arith.constant dense<-2147483648> : vector<32xi32>
    %686 = vector.multi_reduction <maxsi>, %685, %cst_262 [1] : vector<32x128xi32> to vector<32xi32>
    %687 = vector.shape_cast %686 : vector<32xi32> to vector<32x1xi32>
    %c-128_i32_263 = arith.constant -128 : i32
    %688 = vector.broadcast %c-128_i32_263 : i32 to vector<32x1xi32>
    %689 = arith.andi %687, %688 : vector<32x1xi32>
    %c0_i32_264 = arith.constant 0 : i32
    %690 = vector.broadcast %c0_i32_264 : i32 to vector<32x1xi32>
    %691 = arith.cmpi sgt, %689, %690 : vector<32x1xi32>
    %692 = arith.ori %691, %524 : vector<32x1xi1>
    %693 = vector.broadcast %687 : vector<32x1xi32> to vector<32x128xi32>
    %694 = arith.cmpi eq, %685, %693 : vector<32x128xi32>
    %695 = vector.broadcast %692 : vector<32x1xi1> to vector<32x128xi1>
    %696 = arith.andi %694, %695 : vector<32x128xi1>
    %cst_265 = arith.constant 1.000000e+00 : f32
    %697 = vector.broadcast %cst_265 : f32 to vector<32x128xf32>
    %698 = arith.select %696, %697, %683 : vector<32x128xi1>, vector<32x128xf32>
    %c-2147483648_i32_266 = arith.constant -2147483648 : i32
    %699 = vector.broadcast %c-2147483648_i32_266 : i32 to vector<32x128xi32>
    %700 = arith.select %694, %699, %685 : vector<32x128xi1>, vector<32x128xi32>
    %cst_267 = arith.constant dense<-2147483648> : vector<32xi32>
    %701 = vector.multi_reduction <maxsi>, %700, %cst_267 [1] : vector<32x128xi32> to vector<32xi32>
    %702 = vector.shape_cast %701 : vector<32xi32> to vector<32x1xi32>
    %c-128_i32_268 = arith.constant -128 : i32
    %703 = vector.broadcast %c-128_i32_268 : i32 to vector<32x1xi32>
    %704 = arith.andi %702, %703 : vector<32x1xi32>
    %c0_i32_269 = arith.constant 0 : i32
    %705 = vector.broadcast %c0_i32_269 : i32 to vector<32x1xi32>
    %706 = arith.cmpi sgt, %704, %705 : vector<32x1xi32>
    %707 = arith.ori %706, %524 : vector<32x1xi1>
    %708 = vector.broadcast %702 : vector<32x1xi32> to vector<32x128xi32>
    %709 = arith.cmpi eq, %700, %708 : vector<32x128xi32>
    %710 = vector.broadcast %707 : vector<32x1xi1> to vector<32x128xi1>
    %711 = arith.andi %709, %710 : vector<32x128xi1>
    %cst_270 = arith.constant 1.000000e+00 : f32
    %712 = vector.broadcast %cst_270 : f32 to vector<32x128xf32>
    %713 = arith.select %711, %712, %698 : vector<32x128xi1>, vector<32x128xf32>
    %cst_271 = arith.constant dense<0.000000e+00> : vector<32xf32>
    %714 = vector.multi_reduction <add>, %713, %cst_271 [1] : vector<32x128xf32> to vector<32xf32>
    %715 = vector.shape_cast %714 : vector<32xf32> to vector<32x1xf32>
    %cst_272 = arith.constant 1.000000e+00 : f32
    %716 = vector.broadcast %cst_272 : f32 to vector<32x1xf32>
    %717 = arith.divf %716, %715 : vector<32x1xf32>
    %718 = vector.broadcast %717 : vector<32x1xf32> to vector<32x128xf32>
    %719 = arith.mulf %713, %718 : vector<32x128xf32>
    %cst_273 = arith.constant dense<0.000000e+00> : vector<32x128xf32>
    %720 = tpu.matmul %719, %8, %cst_273 {dimension_numbers = #tpu.dot_dimension_numbers<[1], [0], [0], [1], [0, 0, 1, 1], [], []>} : vector<32x128xf32>, vector<128x128xf32>, vector<32x128xf32> -> vector<32x128xf32>
    %721 = vector.extract_strided_slice %8 {offsets = [64, 0], sizes = [32, 128], strides = [1, 1]} : vector<128x128xf32> to vector<32x128xf32>
    %cst_274 = arith.constant dense<0.000000e+00> : vector<32x128xf32>
    %722 = tpu.matmul %721, %9, %cst_274 {dimension_numbers = #tpu.dot_dimension_numbers<[1], [0], [0], [1], [0, 0, 1, 1], [], []>} : vector<32x128xf32>, vector<128x128xf32>, vector<32x128xf32> -> vector<32x128xf32>
    %cst_275 = arith.constant dense<0.000000e+00> : vector<32x128xf32>
    %723 = tpu.matmul %720, %10, %cst_275 {dimension_numbers = #tpu.dot_dimension_numbers<[1], [0], [0], [1], [0, 0, 1, 1], [], []>} : vector<32x128xf32>, vector<128x128xf32>, vector<32x128xf32> -> vector<32x128xf32>
    %724 = arith.addf %722, %723 : vector<32x128xf32>
    %725 = vector.broadcast %11 : vector<1x128xf32> to vector<32x128xf32>
    %726 = arith.addf %724, %725 : vector<32x128xf32>
    %727 = tpu.iota {dimensions = array<i32: 0>} : vector<32x1xi32>
    %c64_i32 = arith.constant 64 : i32
    %728 = vector.broadcast %c64_i32 : i32 to vector<32x1xi32>
    %729 = arith.addi %728, %727 : vector<32x1xi32>
    %730 = vector.broadcast %1 : i32 to vector<32x1xi32>
    %731 = arith.cmpi slt, %729, %730 : vector<32x1xi32>
    %732 = arith.extui %731 : vector<32x1xi1> to vector<32x1xi32>
    %733 = arith.sitofp %732 : vector<32x1xi32> to vector<32x1xf32>
    %734 = vector.broadcast %733 : vector<32x1xf32> to vector<32x128xf32>
    %735 = arith.mulf %726, %734 : vector<32x128xf32>
    %cst_276 = arith.constant dense<0.000000e+00> : vector<128xf32>
    %736 = vector.multi_reduction <add>, %735, %cst_276 [0] : vector<32x128xf32> to vector<128xf32>
    %737 = vector.shape_cast %736 : vector<128xf32> to vector<1x128xf32>
    %738 = arith.addf %497, %737 : vector<1x128xf32>
    %c0_277 = arith.constant 0 : index
    %c0_278 = arith.constant 0 : index
    %c96 = arith.constant 96 : index
    %c0_279 = arith.constant 0 : index
    %739 = vector.load %arg2[%c0_277, %c0_278, %c96, %c0_279] : memref<1x4x128x128xf32, #tpu.memory_space<vmem>>, vector<1x1x32x128xf32>
    %740 = vector.shape_cast %739 : vector<1x1x32x128xf32> to vector<32x128xf32>
    %c0_280 = arith.constant 0 : index
    %c1_281 = arith.constant 1 : index
    %c96_282 = arith.constant 96 : index
    %c0_283 = arith.constant 0 : index
    %741 = vector.load %arg2[%c0_280, %c1_281, %c96_282, %c0_283] : memref<1x4x128x128xf32, #tpu.memory_space<vmem>>, vector<1x1x32x128xf32>
    %742 = vector.shape_cast %741 : vector<1x1x32x128xf32> to vector<32x128xf32>
    %743 = arith.addf %740, %742 : vector<32x128xf32>
    %c0_284 = arith.constant 0 : index
    %c2_285 = arith.constant 2 : index
    %c96_286 = arith.constant 96 : index
    %c0_287 = arith.constant 0 : index
    %744 = vector.load %arg2[%c0_284, %c2_285, %c96_286, %c0_287] : memref<1x4x128x128xf32, #tpu.memory_space<vmem>>, vector<1x1x32x128xf32>
    %745 = vector.shape_cast %744 : vector<1x1x32x128xf32> to vector<32x128xf32>
    %746 = arith.addf %743, %745 : vector<32x128xf32>
    %c0_288 = arith.constant 0 : index
    %c3_289 = arith.constant 3 : index
    %c96_290 = arith.constant 96 : index
    %c0_291 = arith.constant 0 : index
    %747 = vector.load %arg2[%c0_288, %c3_289, %c96_290, %c0_291] : memref<1x4x128x128xf32, #tpu.memory_space<vmem>>, vector<1x1x32x128xf32>
    %748 = vector.shape_cast %747 : vector<1x1x32x128xf32> to vector<32x128xf32>
    %749 = arith.addf %746, %748 : vector<32x128xf32>
    %750 = tpu.bitcast %749 : vector<32x128xf32> -> vector<32x128xi32>
    %c31_i32_292 = arith.constant 31 : i32
    %751 = vector.broadcast %c31_i32_292 : i32 to vector<32x128xi32>
    %752 = arith.shrsi %750, %751 : vector<32x128xi32>
    %c2147483647_i32_293 = arith.constant 2147483647 : i32
    %753 = vector.broadcast %c2147483647_i32_293 : i32 to vector<32x128xi32>
    %754 = arith.andi %752, %753 : vector<32x128xi32>
    %755 = arith.xori %750, %754 : vector<32x128xi32>
    %c-128_i32_294 = arith.constant -128 : i32
    %756 = vector.broadcast %c-128_i32_294 : i32 to vector<32x128xi32>
    %757 = arith.andi %755, %756 : vector<32x128xi32>
    %758 = arith.ori %757, %14 : vector<32x128xi32>
    %cst_295 = arith.constant 0.000000e+00 : f32
    %759 = vector.broadcast %cst_295 : f32 to vector<32x128xf32>
    %cst_296 = arith.constant dense<-2147483648> : vector<32xi32>
    %760 = vector.multi_reduction <maxsi>, %758, %cst_296 [1] : vector<32x128xi32> to vector<32xi32>
    %761 = vector.shape_cast %760 : vector<32xi32> to vector<32x1xi32>
    %c-128_i32_297 = arith.constant -128 : i32
    %762 = vector.broadcast %c-128_i32_297 : i32 to vector<32x1xi32>
    %763 = arith.andi %761, %762 : vector<32x1xi32>
    %c0_i32_298 = arith.constant 0 : i32
    %764 = vector.broadcast %c0_i32_298 : i32 to vector<32x1xi32>
    %765 = arith.cmpi sle, %763, %764 : vector<32x1xi32>
    %c0_i32_299 = arith.constant 0 : i32
    %766 = vector.broadcast %c0_i32_299 : i32 to vector<32x1xi32>
    %767 = arith.cmpi sgt, %763, %766 : vector<32x1xi32>
    %768 = arith.ori %767, %765 : vector<32x1xi1>
    %769 = vector.broadcast %761 : vector<32x1xi32> to vector<32x128xi32>
    %770 = arith.cmpi eq, %758, %769 : vector<32x128xi32>
    %771 = vector.broadcast %768 : vector<32x1xi1> to vector<32x128xi1>
    %772 = arith.andi %770, %771 : vector<32x128xi1>
    %cst_300 = arith.constant 1.000000e+00 : f32
    %773 = vector.broadcast %cst_300 : f32 to vector<32x128xf32>
    %774 = arith.select %772, %773, %759 : vector<32x128xi1>, vector<32x128xf32>
    %c-2147483648_i32_301 = arith.constant -2147483648 : i32
    %775 = vector.broadcast %c-2147483648_i32_301 : i32 to vector<32x128xi32>
    %776 = arith.select %770, %775, %758 : vector<32x128xi1>, vector<32x128xi32>
    %cst_302 = arith.constant dense<-2147483648> : vector<32xi32>
    %777 = vector.multi_reduction <maxsi>, %776, %cst_302 [1] : vector<32x128xi32> to vector<32xi32>
    %778 = vector.shape_cast %777 : vector<32xi32> to vector<32x1xi32>
    %c-128_i32_303 = arith.constant -128 : i32
    %779 = vector.broadcast %c-128_i32_303 : i32 to vector<32x1xi32>
    %780 = arith.andi %778, %779 : vector<32x1xi32>
    %c0_i32_304 = arith.constant 0 : i32
    %781 = vector.broadcast %c0_i32_304 : i32 to vector<32x1xi32>
    %782 = arith.cmpi sgt, %780, %781 : vector<32x1xi32>
    %783 = arith.ori %782, %765 : vector<32x1xi1>
    %784 = vector.broadcast %778 : vector<32x1xi32> to vector<32x128xi32>
    %785 = arith.cmpi eq, %776, %784 : vector<32x128xi32>
    %786 = vector.broadcast %783 : vector<32x1xi1> to vector<32x128xi1>
    %787 = arith.andi %785, %786 : vector<32x128xi1>
    %cst_305 = arith.constant 1.000000e+00 : f32
    %788 = vector.broadcast %cst_305 : f32 to vector<32x128xf32>
    %789 = arith.select %787, %788, %774 : vector<32x128xi1>, vector<32x128xf32>
    %c-2147483648_i32_306 = arith.constant -2147483648 : i32
    %790 = vector.broadcast %c-2147483648_i32_306 : i32 to vector<32x128xi32>
    %791 = arith.select %785, %790, %776 : vector<32x128xi1>, vector<32x128xi32>
    %cst_307 = arith.constant dense<-2147483648> : vector<32xi32>
    %792 = vector.multi_reduction <maxsi>, %791, %cst_307 [1] : vector<32x128xi32> to vector<32xi32>
    %793 = vector.shape_cast %792 : vector<32xi32> to vector<32x1xi32>
    %c-128_i32_308 = arith.constant -128 : i32
    %794 = vector.broadcast %c-128_i32_308 : i32 to vector<32x1xi32>
    %795 = arith.andi %793, %794 : vector<32x1xi32>
    %c0_i32_309 = arith.constant 0 : i32
    %796 = vector.broadcast %c0_i32_309 : i32 to vector<32x1xi32>
    %797 = arith.cmpi sgt, %795, %796 : vector<32x1xi32>
    %798 = arith.ori %797, %765 : vector<32x1xi1>
    %799 = vector.broadcast %793 : vector<32x1xi32> to vector<32x128xi32>
    %800 = arith.cmpi eq, %791, %799 : vector<32x128xi32>
    %801 = vector.broadcast %798 : vector<32x1xi1> to vector<32x128xi1>
    %802 = arith.andi %800, %801 : vector<32x128xi1>
    %cst_310 = arith.constant 1.000000e+00 : f32
    %803 = vector.broadcast %cst_310 : f32 to vector<32x128xf32>
    %804 = arith.select %802, %803, %789 : vector<32x128xi1>, vector<32x128xf32>
    %c-2147483648_i32_311 = arith.constant -2147483648 : i32
    %805 = vector.broadcast %c-2147483648_i32_311 : i32 to vector<32x128xi32>
    %806 = arith.select %800, %805, %791 : vector<32x128xi1>, vector<32x128xi32>
    %cst_312 = arith.constant dense<-2147483648> : vector<32xi32>
    %807 = vector.multi_reduction <maxsi>, %806, %cst_312 [1] : vector<32x128xi32> to vector<32xi32>
    %808 = vector.shape_cast %807 : vector<32xi32> to vector<32x1xi32>
    %c-128_i32_313 = arith.constant -128 : i32
    %809 = vector.broadcast %c-128_i32_313 : i32 to vector<32x1xi32>
    %810 = arith.andi %808, %809 : vector<32x1xi32>
    %c0_i32_314 = arith.constant 0 : i32
    %811 = vector.broadcast %c0_i32_314 : i32 to vector<32x1xi32>
    %812 = arith.cmpi sgt, %810, %811 : vector<32x1xi32>
    %813 = arith.ori %812, %765 : vector<32x1xi1>
    %814 = vector.broadcast %808 : vector<32x1xi32> to vector<32x128xi32>
    %815 = arith.cmpi eq, %806, %814 : vector<32x128xi32>
    %816 = vector.broadcast %813 : vector<32x1xi1> to vector<32x128xi1>
    %817 = arith.andi %815, %816 : vector<32x128xi1>
    %cst_315 = arith.constant 1.000000e+00 : f32
    %818 = vector.broadcast %cst_315 : f32 to vector<32x128xf32>
    %819 = arith.select %817, %818, %804 : vector<32x128xi1>, vector<32x128xf32>
    %c-2147483648_i32_316 = arith.constant -2147483648 : i32
    %820 = vector.broadcast %c-2147483648_i32_316 : i32 to vector<32x128xi32>
    %821 = arith.select %815, %820, %806 : vector<32x128xi1>, vector<32x128xi32>
    %cst_317 = arith.constant dense<-2147483648> : vector<32xi32>
    %822 = vector.multi_reduction <maxsi>, %821, %cst_317 [1] : vector<32x128xi32> to vector<32xi32>
    %823 = vector.shape_cast %822 : vector<32xi32> to vector<32x1xi32>
    %c-128_i32_318 = arith.constant -128 : i32
    %824 = vector.broadcast %c-128_i32_318 : i32 to vector<32x1xi32>
    %825 = arith.andi %823, %824 : vector<32x1xi32>
    %c0_i32_319 = arith.constant 0 : i32
    %826 = vector.broadcast %c0_i32_319 : i32 to vector<32x1xi32>
    %827 = arith.cmpi sgt, %825, %826 : vector<32x1xi32>
    %828 = arith.ori %827, %765 : vector<32x1xi1>
    %829 = vector.broadcast %823 : vector<32x1xi32> to vector<32x128xi32>
    %830 = arith.cmpi eq, %821, %829 : vector<32x128xi32>
    %831 = vector.broadcast %828 : vector<32x1xi1> to vector<32x128xi1>
    %832 = arith.andi %830, %831 : vector<32x128xi1>
    %cst_320 = arith.constant 1.000000e+00 : f32
    %833 = vector.broadcast %cst_320 : f32 to vector<32x128xf32>
    %834 = arith.select %832, %833, %819 : vector<32x128xi1>, vector<32x128xf32>
    %c-2147483648_i32_321 = arith.constant -2147483648 : i32
    %835 = vector.broadcast %c-2147483648_i32_321 : i32 to vector<32x128xi32>
    %836 = arith.select %830, %835, %821 : vector<32x128xi1>, vector<32x128xi32>
    %cst_322 = arith.constant dense<-2147483648> : vector<32xi32>
    %837 = vector.multi_reduction <maxsi>, %836, %cst_322 [1] : vector<32x128xi32> to vector<32xi32>
    %838 = vector.shape_cast %837 : vector<32xi32> to vector<32x1xi32>
    %c-128_i32_323 = arith.constant -128 : i32
    %839 = vector.broadcast %c-128_i32_323 : i32 to vector<32x1xi32>
    %840 = arith.andi %838, %839 : vector<32x1xi32>
    %c0_i32_324 = arith.constant 0 : i32
    %841 = vector.broadcast %c0_i32_324 : i32 to vector<32x1xi32>
    %842 = arith.cmpi sgt, %840, %841 : vector<32x1xi32>
    %843 = arith.ori %842, %765 : vector<32x1xi1>
    %844 = vector.broadcast %838 : vector<32x1xi32> to vector<32x128xi32>
    %845 = arith.cmpi eq, %836, %844 : vector<32x128xi32>
    %846 = vector.broadcast %843 : vector<32x1xi1> to vector<32x128xi1>
    %847 = arith.andi %845, %846 : vector<32x128xi1>
    %cst_325 = arith.constant 1.000000e+00 : f32
    %848 = vector.broadcast %cst_325 : f32 to vector<32x128xf32>
    %849 = arith.select %847, %848, %834 : vector<32x128xi1>, vector<32x128xf32>
    %c-2147483648_i32_326 = arith.constant -2147483648 : i32
    %850 = vector.broadcast %c-2147483648_i32_326 : i32 to vector<32x128xi32>
    %851 = arith.select %845, %850, %836 : vector<32x128xi1>, vector<32x128xi32>
    %cst_327 = arith.constant dense<-2147483648> : vector<32xi32>
    %852 = vector.multi_reduction <maxsi>, %851, %cst_327 [1] : vector<32x128xi32> to vector<32xi32>
    %853 = vector.shape_cast %852 : vector<32xi32> to vector<32x1xi32>
    %c-128_i32_328 = arith.constant -128 : i32
    %854 = vector.broadcast %c-128_i32_328 : i32 to vector<32x1xi32>
    %855 = arith.andi %853, %854 : vector<32x1xi32>
    %c0_i32_329 = arith.constant 0 : i32
    %856 = vector.broadcast %c0_i32_329 : i32 to vector<32x1xi32>
    %857 = arith.cmpi sgt, %855, %856 : vector<32x1xi32>
    %858 = arith.ori %857, %765 : vector<32x1xi1>
    %859 = vector.broadcast %853 : vector<32x1xi32> to vector<32x128xi32>
    %860 = arith.cmpi eq, %851, %859 : vector<32x128xi32>
    %861 = vector.broadcast %858 : vector<32x1xi1> to vector<32x128xi1>
    %862 = arith.andi %860, %861 : vector<32x128xi1>
    %cst_330 = arith.constant 1.000000e+00 : f32
    %863 = vector.broadcast %cst_330 : f32 to vector<32x128xf32>
    %864 = arith.select %862, %863, %849 : vector<32x128xi1>, vector<32x128xf32>
    %c-2147483648_i32_331 = arith.constant -2147483648 : i32
    %865 = vector.broadcast %c-2147483648_i32_331 : i32 to vector<32x128xi32>
    %866 = arith.select %860, %865, %851 : vector<32x128xi1>, vector<32x128xi32>
    %cst_332 = arith.constant dense<-2147483648> : vector<32xi32>
    %867 = vector.multi_reduction <maxsi>, %866, %cst_332 [1] : vector<32x128xi32> to vector<32xi32>
    %868 = vector.shape_cast %867 : vector<32xi32> to vector<32x1xi32>
    %c-128_i32_333 = arith.constant -128 : i32
    %869 = vector.broadcast %c-128_i32_333 : i32 to vector<32x1xi32>
    %870 = arith.andi %868, %869 : vector<32x1xi32>
    %c0_i32_334 = arith.constant 0 : i32
    %871 = vector.broadcast %c0_i32_334 : i32 to vector<32x1xi32>
    %872 = arith.cmpi sgt, %870, %871 : vector<32x1xi32>
    %873 = arith.ori %872, %765 : vector<32x1xi1>
    %874 = vector.broadcast %868 : vector<32x1xi32> to vector<32x128xi32>
    %875 = arith.cmpi eq, %866, %874 : vector<32x128xi32>
    %876 = vector.broadcast %873 : vector<32x1xi1> to vector<32x128xi1>
    %877 = arith.andi %875, %876 : vector<32x128xi1>
    %cst_335 = arith.constant 1.000000e+00 : f32
    %878 = vector.broadcast %cst_335 : f32 to vector<32x128xf32>
    %879 = arith.select %877, %878, %864 : vector<32x128xi1>, vector<32x128xf32>
    %c-2147483648_i32_336 = arith.constant -2147483648 : i32
    %880 = vector.broadcast %c-2147483648_i32_336 : i32 to vector<32x128xi32>
    %881 = arith.select %875, %880, %866 : vector<32x128xi1>, vector<32x128xi32>
    %cst_337 = arith.constant dense<-2147483648> : vector<32xi32>
    %882 = vector.multi_reduction <maxsi>, %881, %cst_337 [1] : vector<32x128xi32> to vector<32xi32>
    %883 = vector.shape_cast %882 : vector<32xi32> to vector<32x1xi32>
    %c-128_i32_338 = arith.constant -128 : i32
    %884 = vector.broadcast %c-128_i32_338 : i32 to vector<32x1xi32>
    %885 = arith.andi %883, %884 : vector<32x1xi32>
    %c0_i32_339 = arith.constant 0 : i32
    %886 = vector.broadcast %c0_i32_339 : i32 to vector<32x1xi32>
    %887 = arith.cmpi sgt, %885, %886 : vector<32x1xi32>
    %888 = arith.ori %887, %765 : vector<32x1xi1>
    %889 = vector.broadcast %883 : vector<32x1xi32> to vector<32x128xi32>
    %890 = arith.cmpi eq, %881, %889 : vector<32x128xi32>
    %891 = vector.broadcast %888 : vector<32x1xi1> to vector<32x128xi1>
    %892 = arith.andi %890, %891 : vector<32x128xi1>
    %cst_340 = arith.constant 1.000000e+00 : f32
    %893 = vector.broadcast %cst_340 : f32 to vector<32x128xf32>
    %894 = arith.select %892, %893, %879 : vector<32x128xi1>, vector<32x128xf32>
    %c-2147483648_i32_341 = arith.constant -2147483648 : i32
    %895 = vector.broadcast %c-2147483648_i32_341 : i32 to vector<32x128xi32>
    %896 = arith.select %890, %895, %881 : vector<32x128xi1>, vector<32x128xi32>
    %cst_342 = arith.constant dense<-2147483648> : vector<32xi32>
    %897 = vector.multi_reduction <maxsi>, %896, %cst_342 [1] : vector<32x128xi32> to vector<32xi32>
    %898 = vector.shape_cast %897 : vector<32xi32> to vector<32x1xi32>
    %c-128_i32_343 = arith.constant -128 : i32
    %899 = vector.broadcast %c-128_i32_343 : i32 to vector<32x1xi32>
    %900 = arith.andi %898, %899 : vector<32x1xi32>
    %c0_i32_344 = arith.constant 0 : i32
    %901 = vector.broadcast %c0_i32_344 : i32 to vector<32x1xi32>
    %902 = arith.cmpi sgt, %900, %901 : vector<32x1xi32>
    %903 = arith.ori %902, %765 : vector<32x1xi1>
    %904 = vector.broadcast %898 : vector<32x1xi32> to vector<32x128xi32>
    %905 = arith.cmpi eq, %896, %904 : vector<32x128xi32>
    %906 = vector.broadcast %903 : vector<32x1xi1> to vector<32x128xi1>
    %907 = arith.andi %905, %906 : vector<32x128xi1>
    %cst_345 = arith.constant 1.000000e+00 : f32
    %908 = vector.broadcast %cst_345 : f32 to vector<32x128xf32>
    %909 = arith.select %907, %908, %894 : vector<32x128xi1>, vector<32x128xf32>
    %c-2147483648_i32_346 = arith.constant -2147483648 : i32
    %910 = vector.broadcast %c-2147483648_i32_346 : i32 to vector<32x128xi32>
    %911 = arith.select %905, %910, %896 : vector<32x128xi1>, vector<32x128xi32>
    %cst_347 = arith.constant dense<-2147483648> : vector<32xi32>
    %912 = vector.multi_reduction <maxsi>, %911, %cst_347 [1] : vector<32x128xi32> to vector<32xi32>
    %913 = vector.shape_cast %912 : vector<32xi32> to vector<32x1xi32>
    %c-128_i32_348 = arith.constant -128 : i32
    %914 = vector.broadcast %c-128_i32_348 : i32 to vector<32x1xi32>
    %915 = arith.andi %913, %914 : vector<32x1xi32>
    %c0_i32_349 = arith.constant 0 : i32
    %916 = vector.broadcast %c0_i32_349 : i32 to vector<32x1xi32>
    %917 = arith.cmpi sgt, %915, %916 : vector<32x1xi32>
    %918 = arith.ori %917, %765 : vector<32x1xi1>
    %919 = vector.broadcast %913 : vector<32x1xi32> to vector<32x128xi32>
    %920 = arith.cmpi eq, %911, %919 : vector<32x128xi32>
    %921 = vector.broadcast %918 : vector<32x1xi1> to vector<32x128xi1>
    %922 = arith.andi %920, %921 : vector<32x128xi1>
    %cst_350 = arith.constant 1.000000e+00 : f32
    %923 = vector.broadcast %cst_350 : f32 to vector<32x128xf32>
    %924 = arith.select %922, %923, %909 : vector<32x128xi1>, vector<32x128xf32>
    %c-2147483648_i32_351 = arith.constant -2147483648 : i32
    %925 = vector.broadcast %c-2147483648_i32_351 : i32 to vector<32x128xi32>
    %926 = arith.select %920, %925, %911 : vector<32x128xi1>, vector<32x128xi32>
    %cst_352 = arith.constant dense<-2147483648> : vector<32xi32>
    %927 = vector.multi_reduction <maxsi>, %926, %cst_352 [1] : vector<32x128xi32> to vector<32xi32>
    %928 = vector.shape_cast %927 : vector<32xi32> to vector<32x1xi32>
    %c-128_i32_353 = arith.constant -128 : i32
    %929 = vector.broadcast %c-128_i32_353 : i32 to vector<32x1xi32>
    %930 = arith.andi %928, %929 : vector<32x1xi32>
    %c0_i32_354 = arith.constant 0 : i32
    %931 = vector.broadcast %c0_i32_354 : i32 to vector<32x1xi32>
    %932 = arith.cmpi sgt, %930, %931 : vector<32x1xi32>
    %933 = arith.ori %932, %765 : vector<32x1xi1>
    %934 = vector.broadcast %928 : vector<32x1xi32> to vector<32x128xi32>
    %935 = arith.cmpi eq, %926, %934 : vector<32x128xi32>
    %936 = vector.broadcast %933 : vector<32x1xi1> to vector<32x128xi1>
    %937 = arith.andi %935, %936 : vector<32x128xi1>
    %cst_355 = arith.constant 1.000000e+00 : f32
    %938 = vector.broadcast %cst_355 : f32 to vector<32x128xf32>
    %939 = arith.select %937, %938, %924 : vector<32x128xi1>, vector<32x128xf32>
    %c-2147483648_i32_356 = arith.constant -2147483648 : i32
    %940 = vector.broadcast %c-2147483648_i32_356 : i32 to vector<32x128xi32>
    %941 = arith.select %935, %940, %926 : vector<32x128xi1>, vector<32x128xi32>
    %cst_357 = arith.constant dense<-2147483648> : vector<32xi32>
    %942 = vector.multi_reduction <maxsi>, %941, %cst_357 [1] : vector<32x128xi32> to vector<32xi32>
    %943 = vector.shape_cast %942 : vector<32xi32> to vector<32x1xi32>
    %c-128_i32_358 = arith.constant -128 : i32
    %944 = vector.broadcast %c-128_i32_358 : i32 to vector<32x1xi32>
    %945 = arith.andi %943, %944 : vector<32x1xi32>
    %c0_i32_359 = arith.constant 0 : i32
    %946 = vector.broadcast %c0_i32_359 : i32 to vector<32x1xi32>
    %947 = arith.cmpi sgt, %945, %946 : vector<32x1xi32>
    %948 = arith.ori %947, %765 : vector<32x1xi1>
    %949 = vector.broadcast %943 : vector<32x1xi32> to vector<32x128xi32>
    %950 = arith.cmpi eq, %941, %949 : vector<32x128xi32>
    %951 = vector.broadcast %948 : vector<32x1xi1> to vector<32x128xi1>
    %952 = arith.andi %950, %951 : vector<32x128xi1>
    %cst_360 = arith.constant 1.000000e+00 : f32
    %953 = vector.broadcast %cst_360 : f32 to vector<32x128xf32>
    %954 = arith.select %952, %953, %939 : vector<32x128xi1>, vector<32x128xf32>
    %cst_361 = arith.constant dense<0.000000e+00> : vector<32xf32>
    %955 = vector.multi_reduction <add>, %954, %cst_361 [1] : vector<32x128xf32> to vector<32xf32>
    %956 = vector.shape_cast %955 : vector<32xf32> to vector<32x1xf32>
    %cst_362 = arith.constant 1.000000e+00 : f32
    %957 = vector.broadcast %cst_362 : f32 to vector<32x1xf32>
    %958 = arith.divf %957, %956 : vector<32x1xf32>
    %959 = vector.broadcast %958 : vector<32x1xf32> to vector<32x128xf32>
    %960 = arith.mulf %954, %959 : vector<32x128xf32>
    %cst_363 = arith.constant dense<0.000000e+00> : vector<32x128xf32>
    %961 = tpu.matmul %960, %8, %cst_363 {dimension_numbers = #tpu.dot_dimension_numbers<[1], [0], [0], [1], [0, 0, 1, 1], [], []>} : vector<32x128xf32>, vector<128x128xf32>, vector<32x128xf32> -> vector<32x128xf32>
    %962 = vector.extract_strided_slice %8 {offsets = [96, 0], sizes = [32, 128], strides = [1, 1]} : vector<128x128xf32> to vector<32x128xf32>
    %cst_364 = arith.constant dense<0.000000e+00> : vector<32x128xf32>
    %963 = tpu.matmul %962, %9, %cst_364 {dimension_numbers = #tpu.dot_dimension_numbers<[1], [0], [0], [1], [0, 0, 1, 1], [], []>} : vector<32x128xf32>, vector<128x128xf32>, vector<32x128xf32> -> vector<32x128xf32>
    %cst_365 = arith.constant dense<0.000000e+00> : vector<32x128xf32>
    %964 = tpu.matmul %961, %10, %cst_365 {dimension_numbers = #tpu.dot_dimension_numbers<[1], [0], [0], [1], [0, 0, 1, 1], [], []>} : vector<32x128xf32>, vector<128x128xf32>, vector<32x128xf32> -> vector<32x128xf32>
    %965 = arith.addf %963, %964 : vector<32x128xf32>
    %966 = vector.broadcast %11 : vector<1x128xf32> to vector<32x128xf32>
    %967 = arith.addf %965, %966 : vector<32x128xf32>
    %968 = tpu.iota {dimensions = array<i32: 0>} : vector<32x1xi32>
    %c96_i32 = arith.constant 96 : i32
    %969 = vector.broadcast %c96_i32 : i32 to vector<32x1xi32>
    %970 = arith.addi %969, %968 : vector<32x1xi32>
    %971 = vector.broadcast %1 : i32 to vector<32x1xi32>
    %972 = arith.cmpi slt, %970, %971 : vector<32x1xi32>
    %973 = arith.extui %972 : vector<32x1xi1> to vector<32x1xi32>
    %974 = arith.sitofp %973 : vector<32x1xi32> to vector<32x1xf32>
    %975 = vector.broadcast %974 : vector<32x1xf32> to vector<32x128xf32>
    %976 = arith.mulf %967, %975 : vector<32x128xf32>
    %cst_366 = arith.constant dense<0.000000e+00> : vector<128xf32>
    %977 = vector.multi_reduction <add>, %976, %cst_366 [0] : vector<32x128xf32> to vector<128xf32>
    %978 = vector.shape_cast %977 : vector<128xf32> to vector<1x128xf32>
    %979 = arith.addf %738, %978 : vector<1x128xf32>
    %c1_i32 = arith.constant 1 : i32
    %980 = arith.maxsi %1, %c1_i32 : i32
    %981 = arith.sitofp %980 : i32 to f32
    %cst_367 = arith.constant 1.000000e+00 : f32
    %982 = arith.divf %cst_367, %981 : f32
    %983 = vector.broadcast %982 : f32 to vector<1x128xf32>
    %984 = arith.mulf %979, %983 : vector<1x128xf32>
    %985 = math.tanh %984 : vector<1x128xf32>
    %c0_368 = arith.constant 0 : index
    %c0_369 = arith.constant 0 : index
    %986 = vector.load %arg9[%c0_368, %c0_369] : memref<128x128xf32, #tpu.memory_space<vmem>>, vector<128x128xf32>
    %cst_370 = arith.constant dense<0.000000e+00> : vector<1x128xf32>
    %987 = tpu.matmul %985, %986, %cst_370 {dimension_numbers = #tpu.dot_dimension_numbers<[1], [0], [0], [1], [0, 0, 1, 1], [], []>} : vector<1x128xf32>, vector<128x128xf32>, vector<1x128xf32> -> vector<1x128xf32>
    %c0_371 = arith.constant 0 : index
    %c0_372 = arith.constant 0 : index
    %988 = vector.load %arg10[%c0_371, %c0_372] : memref<1x128xf32, #tpu.memory_space<vmem>>, vector<1x128xf32>
    %989 = arith.addf %987, %988 : vector<1x128xf32>
    %cst_373 = arith.constant dense<0.000000e+00> : vector<1xf32>
    %990 = vector.multi_reduction <add>, %989, %cst_373 [1] : vector<1x128xf32> to vector<1xf32>
    %991 = vector.shape_cast %990 : vector<1xf32> to vector<1x1xf32>
    %cst_374 = arith.constant 1.280000e+02 : f32
    %992 = vector.broadcast %cst_374 : f32 to vector<1x1xf32>
    %993 = arith.divf %991, %992 : vector<1x1xf32>
    %994 = vector.broadcast %993 : vector<1x1xf32> to vector<1x128xf32>
    %995 = arith.subf %989, %994 : vector<1x128xf32>
    %996 = arith.mulf %995, %995 : vector<1x128xf32>
    %cst_375 = arith.constant dense<0.000000e+00> : vector<1xf32>
    %997 = vector.multi_reduction <add>, %996, %cst_375 [1] : vector<1x128xf32> to vector<1xf32>
    %998 = vector.shape_cast %997 : vector<1xf32> to vector<1x1xf32>
    %cst_376 = arith.constant 1.280000e+02 : f32
    %999 = vector.broadcast %cst_376 : f32 to vector<1x1xf32>
    %1000 = arith.divf %998, %999 : vector<1x1xf32>
    %1001 = vector.broadcast %993 : vector<1x1xf32> to vector<1x128xf32>
    %1002 = arith.subf %989, %1001 : vector<1x128xf32>
    %cst_377 = arith.constant 9.99999974E-6 : f32
    %1003 = vector.broadcast %cst_377 : f32 to vector<1x1xf32>
    %1004 = arith.addf %1000, %1003 : vector<1x1xf32>
    %1005 = math.rsqrt %1004 : vector<1x1xf32>
    %1006 = vector.broadcast %1005 : vector<1x1xf32> to vector<1x128xf32>
    %1007 = arith.mulf %1002, %1006 : vector<1x128xf32>
    %c0_378 = arith.constant 0 : index
    %c0_379 = arith.constant 0 : index
    %1008 = vector.load %arg11[%c0_378, %c0_379] : memref<1x128xf32, #tpu.memory_space<vmem>>, vector<1x128xf32>
    %1009 = arith.mulf %1007, %1008 : vector<1x128xf32>
    %c0_380 = arith.constant 0 : index
    %c0_381 = arith.constant 0 : index
    %1010 = vector.load %arg12[%c0_380, %c0_381] : memref<1x128xf32, #tpu.memory_space<vmem>>, vector<1x128xf32>
    %1011 = arith.addf %1009, %1010 : vector<1x128xf32>
    %c0_382 = arith.constant 0 : index
    %c0_383 = arith.constant 0 : index
    %c0_384 = arith.constant 0 : index
    %1012 = vector.load %arg13[%c0_382, %c0_383, %c0_384] : memref<1x1x128xf32, #tpu.memory_space<vmem>>, vector<1x1x128xf32>
    %1013 = vector.shape_cast %1012 : vector<1x1x128xf32> to vector<1x128xf32>
    %1014 = vector.shape_cast %1011 : vector<1x128xf32> to vector<1x1x128xf32>
    tpu.vector_store %arg13[%c0_382, %c0_383, %c0_384], %1014 {strides = array<i32>} : memref<1x1x128xf32, #tpu.memory_space<vmem>>, vector<1x1x128xf32>,
    return
  }
  func.func @transform_0(%arg0: i32, %arg1: memref<2xi32, #tpu.memory_space<smem>>) -> (i32, i32, i32, i32) {
    %c0_i32 = arith.constant 0 : i32
    %c0_i32_0 = arith.constant 0 : i32
    %c0_i32_1 = arith.constant 0 : i32
    %c0_i32_2 = arith.constant 0 : i32
    return %arg0, %c0_i32, %c0_i32_0, %c0_i32_1 : i32, i32, i32, i32
  }
  func.func @transform_1(%arg0: i32, %arg1: memref<2xi32, #tpu.memory_space<smem>>) -> (i32, i32, i32) {
    %c0_i32 = arith.constant 0 : i32
    %c0_i32_0 = arith.constant 0 : i32
    %c0_i32_1 = arith.constant 0 : i32
    return %arg0, %c0_i32, %c0_i32_0 : i32, i32, i32
  }
  func.func @transform_2(%arg0: i32, %arg1: memref<2xi32, #tpu.memory_space<smem>>) -> (i32, i32) {
    %c0_i32 = arith.constant 0 : i32
    %c0_i32_0 = arith.constant 0 : i32
    %c0_i32_1 = arith.constant 0 : i32
    return %c0_i32, %c0_i32_0 : i32, i32
  }
  func.func @transform_3(%arg0: i32, %arg1: memref<2xi32, #tpu.memory_space<smem>>) -> (i32, i32) {
    %c0_i32 = arith.constant 0 : i32
    %c0_i32_0 = arith.constant 0 : i32
    %c0_i32_1 = arith.constant 0 : i32
    return %c0_i32, %c0_i32_0 : i32, i32
  }
  func.func @transform_4(%arg0: i32, %arg1: memref<2xi32, #tpu.memory_space<smem>>) -> (i32, i32) {
    %c0_i32 = arith.constant 0 : i32
    %c0_i32_0 = arith.constant 0 : i32
    %c0_i32_1 = arith.constant 0 : i32
    return %c0_i32, %c0_i32_0 : i32, i32
  }
  func.func @transform_5(%arg0: i32, %arg1: memref<2xi32, #tpu.memory_space<smem>>) -> (i32, i32) {
    %c0_i32 = arith.constant 0 : i32
    %c0_i32_0 = arith.constant 0 : i32
    %c0_i32_1 = arith.constant 0 : i32
    return %c0_i32, %c0_i32_0 : i32, i32
  }
  func.func @transform_6(%arg0: i32, %arg1: memref<2xi32, #tpu.memory_space<smem>>) -> (i32, i32) {
    %c0_i32 = arith.constant 0 : i32
    %c0_i32_0 = arith.constant 0 : i32
    %c0_i32_1 = arith.constant 0 : i32
    return %c0_i32, %c0_i32_0 : i32, i32
  }
  func.func @transform_7(%arg0: i32, %arg1: memref<2xi32, #tpu.memory_space<smem>>) -> (i32, i32) {
    %c0_i32 = arith.constant 0 : i32
    %c0_i32_0 = arith.constant 0 : i32
    %c0_i32_1 = arith.constant 0 : i32
    return %c0_i32, %c0_i32_0 : i32, i32
  }
  func.func @transform_8(%arg0: i32, %arg1: memref<2xi32, #tpu.memory_space<smem>>) -> (i32, i32) {
    %c0_i32 = arith.constant 0 : i32
    %c0_i32_0 = arith.constant 0 : i32
    %c0_i32_1 = arith.constant 0 : i32
    return %c0_i32, %c0_i32_0 : i32, i32
  }
  func.func @transform_9(%arg0: i32, %arg1: memref<2xi32, #tpu.memory_space<smem>>) -> (i32, i32) {
    %c0_i32 = arith.constant 0 : i32
    %c0_i32_0 = arith.constant 0 : i32
    %c0_i32_1 = arith.constant 0 : i32
    return %c0_i32, %c0_i32_0 : i32, i32
  }
  func.func @transform_10(%arg0: i32, %arg1: memref<2xi32, #tpu.memory_space<smem>>) -> (i32, i32) {
    %c0_i32 = arith.constant 0 : i32
    %c0_i32_0 = arith.constant 0 : i32
    %c0_i32_1 = arith.constant 0 : i32
    return %c0_i32, %c0_i32_0 : i32, i32
  }
  func.func @transform_11(%arg0: i32, %arg1: memref<2xi32, #tpu.memory_space<smem>>) -> (i32, i32, i32) {
    %c0_i32 = arith.constant 0 : i32
    %c0_i32_0 = arith.constant 0 : i32
    %c0_i32_1 = arith.constant 0 : i32
    return %arg0, %c0_i32, %c0_i32_0 : i32, i32, i32
  }
}

</mosaic_0001>

<llo_original>
// kernel: forward.1
$region0: #{forward.1}
  #allocation0 [shape = 'u32[]', space=smem, size = 0x4, offset = 0x4, fixed_abs, tag = 'smem constant byte address 0x4 - core index']
  #allocation1 [shape = 'u32[144,128]{1,0:T(1,128)}', space=vmem, size = 0x12000, scoped, tag = 'internal scratch']
  #allocation2 [shape = 's32[1]{0}', space=sflag, size = 0x4, scoped, tag = 'scoped memory for forward.1']
  #allocation3 [shape = 'u8[512]{0}', space=smem, size = 0x200, scoped, tag = 'prefetched SMEM operand 0']
  %s0 = inlined_call_operand.vmem [shape: s32[2], index: 0, kind: input, shape index: {}]
  %s1 = inlined_call_operand.hbm [shape: f32[2,4,128,128], index: 1, kind: input, shape index: {}]
  %s2 = inlined_call_operand.hbm [shape: f32[2,128,128], index: 2, kind: input, shape index: {}]
  %s3 = inlined_call_operand.hbm [shape: f32[128,128], index: 3, kind: input, shape index: {}]
  %s4 = inlined_call_operand.vmem [shape: f32[1,128], index: 4, kind: input, shape index: {}]
  %s5 = inlined_call_operand.hbm [shape: f32[128,128], index: 5, kind: input, shape index: {}]
  %s6 = inlined_call_operand.hbm [shape: f32[128,128], index: 6, kind: input, shape index: {}]
  %s7 = inlined_call_operand.vmem [shape: f32[1,128], index: 7, kind: input, shape index: {}]
  %s8 = inlined_call_operand.hbm [shape: f32[128,128], index: 8, kind: input, shape index: {}]
  %s9 = inlined_call_operand.hbm [shape: f32[1,128], index: 9, kind: input, shape index: {}]
  %s10 = inlined_call_operand.vmem [shape: f32[1,128], index: 10, kind: input, shape index: {}]
  %s11 = inlined_call_operand.vmem [shape: f32[1,128], index: 11, kind: input, shape index: {}]
  %s12 = inlined_call_operand.hbm [shape: f32[2,1,128], index: 12, kind: output, shape index: {}]
  %s13 = sld [smem:[#allocation0]]
  $region105: #{forward.1} parent=0
    _
  %s15 = ssub.s32 1, %s13
  %s16 = scalar_select 0, %s15, %s13
  %s17 = sshll.u32 %s0, 4
  %s18 = int_to_ptr.vmem [resolvable:$true] %s17
  %20 = dma.vmem_to_smem %s18, 16, [#allocation3], [#allocation2]
  %21 = dma.done [#allocation2], 16
  %22 = sfence
  $region1: #{forward.1} parent=0
    #allocation4 [shape = 'u8[524288]{0}', space=vmem, size = 0x80000, scoped, tag = 'input window, operand 1']
    #allocation5 [shape = 's32[2]{0}', space=sflag, size = 0x8, scoped, tag = 'scoped memory for forward.1']
    #allocation6 [shape = 's32[2]{0}', space=sflag, size = 0x8, scoped, tag = 'scoped memory for forward.1']
    #allocation7 [shape = 'u8[131072]{0}', space=vmem, size = 0x20000, scoped, tag = 'input window, operand 2']
    #allocation8 [shape = 's32[2]{0}', space=sflag, size = 0x8, scoped, tag = 'scoped memory for forward.1']
    #allocation9 [shape = 'u8[65536]{0}', space=vmem, size = 0x10000, scoped, tag = 'input window, operand 3, single buffered']
    #allocation10 [shape = 'u8[65536]{0}', space=vmem, size = 0x10000, scoped, tag = 'input window, operand 5, single buffered']
    #allocation11 [shape = 's32[1]{0}', space=sflag, size = 0x4, scoped, tag = 'scoped memory for forward.1']
    #allocation12 [shape = 'u8[65536]{0}', space=vmem, size = 0x10000, scoped, tag = 'input window, operand 6, single buffered']
    #allocation13 [shape = 'u8[65536]{0}', space=vmem, size = 0x10000, scoped, tag = 'input window, operand 8, single buffered']
    #allocation14 [shape = 's32[1]{0}', space=sflag, size = 0x4, scoped, tag = 'scoped memory for forward.1']
    #allocation15 [shape = 'u8[512]{0}', space=vmem, size = 0x400, scoped, tag = 'input window, operand 9, single buffered']
    #allocation16 [shape = 'u8[1024]{0}', space=vmem, size = 0x400, scoped, tag = 'output window, operand 0']
    %23 = vsyncpa [#allocation5], 0
    %s24 = scalar_lea.sflag [#allocation5], 1
    %25 = vsyncpa %s24, 0
    %26 = vsyncpa [#allocation8], 0
    %s27 = scalar_lea.sflag [#allocation8], 1
    %28 = vsyncpa %s27, 0
    %29 = vsyncpa [#allocation11], 0
    %30 = vsyncpa [#allocation14], 0
    %31 = vsyncpa [#allocation6], 0
    %s32 = scalar_lea.sflag [#allocation6], 1
    %33 = vsyncpa %s32, 0
    loop: start=0, step=1, limit=4
    $region2: #{forward.1} parent=1 // loop_pre_header
      _
    $region3: #{forward.1} parent=1 // loop_header
      %s35 = sphi 0, %s39
      %p36 = scmp.ge.s32.totalorder %s35, 4
      %s45 = sphi 0, %s47
      %s48 = sphi 0, %s45
      %s49 = sphi 0, %s48
      %s65 = sphi 0, %s49
      %s71 = sphi 0, %s73
      %s74 = sphi 0, %s71
      %s75 = sphi 0, %s74
      %s91 = sphi 0, %s75
      %s95 = sphi 0, %s95
      %s97 = sphi 0, %s95
      %s98 = sphi 0, %s97
      %s112 = sphi 0, %s98
      %s116 = sphi 0, %s116
      %s118 = sphi 0, %s116
      %s119 = sphi 0, %s118
      %s133 = sphi 0, %s119
      %s137 = sphi 0, %s137
      %s139 = sphi 0, %s137
      %s140 = sphi 0, %s139
      %s154 = sphi 0, %s140
      %s158 = sphi 0, %s158
      %s160 = sphi 0, %s158
      %s161 = sphi 0, %s160
      %s175 = sphi 0, %s161
      %s179 = sphi 0, %s179
      %s181 = sphi 0, %s179
      %s182 = sphi 0, %s181
      %s196 = sphi 0, %s182
      %s200 = sphi 0, %s200
      %s202 = sphi 0, %s200
      %s203 = sphi 0, %s202
      %s217 = sphi 0, %s203
      %s221 = sphi 0, %s221
      %s223 = sphi 0, %s221
      %s224 = sphi 0, %s223
      %s238 = sphi 0, %s224
      %s242 = sphi 0, %s242
      %s244 = sphi 0, %s242
      %s245 = sphi 0, %s244
      %s259 = sphi 0, %s245
      %s263 = sphi 0, %s263
      %s265 = sphi 0, %s263
      %s266 = sphi 0, %s265
      %s280 = sphi 0, %s266
      %s286 = sphi 0, %s288
      %s289 = sphi 0, %s286
      %s290 = sphi 0, %s289
      %s306 = sphi 0, %s290
    $region4: #{forward.1} parent=1 // loop_header_branch
      %38 = sbr.rel (%p36) target = $region8
    $region5: #{forward.1} parent=1 // loop_body
      %s40 = ssub.s32 %s35, 1
      %s41 = ssub.s32 %s35, 2
      %s42 = sadd.s32 %s35, 1
      %s43 = ssub.s32 %s35, %s42
      %p44 = scmp.eq.s32.totalorder %s43, 0
      %s46 = sadd.s32 %s45, 1
      %s47 = scalar_select %p44, %s45, %s46
      %p50 = pneg %p44
      %p51 = scmp.eq.s32.totalorder %s35, 1
      %p52 = por %p50, %p51
      %p53 = scmp.ne.s32.totalorder %s45, %s48
      %p54 = scmp.eq.s32.totalorder %s35, 0
      %p55 = por %p53, %p54
      %p56 = scmp.ne.s32.totalorder %s45, %s48
      %p57 = scmp.eq.s32.totalorder %s40, 1
      %p58 = por %p56, %p57
      %p59 = scmp.ne.s32.totalorder %s48, %s49
      %p60 = scmp.eq.s32.totalorder %s40, 0
      %p61 = por %p59, %p60
      %p62 = scmp.ne.s32.totalorder %s48, %s49
      %p63 = scmp.eq.s32.totalorder %s41, 1
      %p64 = por %p62, %p63
      %p66 = scmp.ne.s32.totalorder %s49, %s65
      %p67 = scmp.eq.s32.totalorder %s41, 0
      %p68 = por %p66, %p67
      %s69 = ssub.s32 %s35, %s42
      %p70 = scmp.eq.s32.totalorder %s69, 0
      %s72 = sadd.s32 %s71, 1
      %s73 = scalar_select %p70, %s71, %s72
      %p76 = pneg %p70
      %p77 = scmp.eq.s32.totalorder %s35, 1
      %p78 = por %p76, %p77
      %p79 = scmp.ne.s32.totalorder %s71, %s74
      %p80 = scmp.eq.s32.totalorder %s35, 0
      %p81 = por %p79, %p80
      %p82 = scmp.ne.s32.totalorder %s71, %s74
      %p83 = scmp.eq.s32.totalorder %s40, 1
      %p84 = por %p82, %p83
      %p85 = scmp.ne.s32.totalorder %s74, %s75
      %p86 = scmp.eq.s32.totalorder %s40, 0
      %p87 = por %p85, %p86
      %p88 = scmp.ne.s32.totalorder %s74, %s75
      %p89 = scmp.eq.s32.totalorder %s41, 1
      %p90 = por %p88, %p89
      %p92 = scmp.ne.s32.totalorder %s75, %s91
      %p93 = scmp.eq.s32.totalorder %s41, 0
      %p94 = por %p92, %p93
      %s96 = sadd.s32 %s95, 1
      %p99 = scmp.eq.s32.totalorder %s35, 1
      %p100 = scmp.ne.s32.totalorder %s95, %s97
      %p101 = scmp.eq.s32.totalorder %s35, 0
      %p102 = por %p100, %p101
      %p103 = scmp.ne.s32.totalorder %s95, %s97
      %p104 = scmp.eq.s32.totalorder %s40, 1
      %p105 = por %p103, %p104
      %p106 = scmp.ne.s32.totalorder %s97, %s98
      %p107 = scmp.eq.s32.totalorder %s40, 0
      %p108 = por %p106, %p107
      %p109 = scmp.ne.s32.totalorder %s97, %s98
      %p110 = scmp.eq.s32.totalorder %s41, 1
      %p111 = por %p109, %p110
      %p113 = scmp.ne.s32.totalorder %s98, %s112
      %p114 = scmp.eq.s32.totalorder %s41, 0
      %p115 = por %p113, %p114
      %s117 = sadd.s32 %s116, 1
      %p120 = scmp.eq.s32.totalorder %s35, 1
      %p121 = scmp.ne.s32.totalorder %s116, %s118
      %p122 = scmp.eq.s32.totalorder %s35, 0
      %p123 = por %p121, %p122
      %p124 = scmp.ne.s32.totalorder %s116, %s118
      %p125 = scmp.eq.s32.totalorder %s40, 1
      %p126 = por %p124, %p125
      %p127 = scmp.ne.s32.totalorder %s118, %s119
      %p128 = scmp.eq.s32.totalorder %s40, 0
      %p129 = por %p127, %p128
      %p130 = scmp.ne.s32.totalorder %s118, %s119
      %p131 = scmp.eq.s32.totalorder %s41, 1
      %p132 = por %p130, %p131
      %p134 = scmp.ne.s32.totalorder %s119, %s133
      %p135 = scmp.eq.s32.totalorder %s41, 0
      %p136 = por %p134, %p135
      %s138 = sadd.s32 %s137, 1
      %p141 = scmp.eq.s32.totalorder %s35, 1
      %p142 = scmp.ne.s32.totalorder %s137, %s139
      %p143 = scmp.eq.s32.totalorder %s35, 0
      %p144 = por %p142, %p143
      %p145 = scmp.ne.s32.totalorder %s137, %s139
      %p146 = scmp.eq.s32.totalorder %s40, 1
      %p147 = por %p145, %p146
      %p148 = scmp.ne.s32.totalorder %s139, %s140
      %p149 = scmp.eq.s32.totalorder %s40, 0
      %p150 = por %p148, %p149
      %p151 = scmp.ne.s32.totalorder %s139, %s140
      %p152 = scmp.eq.s32.totalorder %s41, 1
      %p153 = por %p151, %p152
      %p155 = scmp.ne.s32.totalorder %s140, %s154
      %p156 = scmp.eq.s32.totalorder %s41, 0
      %p157 = por %p155, %p156
      %s159 = sadd.s32 %s158, 1
      %p162 = scmp.eq.s32.totalorder %s35, 1
      %p163 = scmp.ne.s32.totalorder %s158, %s160
      %p164 = scmp.eq.s32.totalorder %s35, 0
      %p165 = por %p163, %p164
      %p166 = scmp.ne.s32.totalorder %s158, %s160
      %p167 = scmp.eq.s32.totalorder %s40, 1
      %p168 = por %p166, %p167
      %p169 = scmp.ne.s32.totalorder %s160, %s161
      %p170 = scmp.eq.s32.totalorder %s40, 0
      %p171 = por %p169, %p170
      %p172 = scmp.ne.s32.totalorder %s160, %s161
      %p173 = scmp.eq.s32.totalorder %s41, 1
      %p174 = por %p172, %p173
      %p176 = scmp.ne.s32.totalorder %s161, %s175
      %p177 = scmp.eq.s32.totalorder %s41, 0
      %p178 = por %p176, %p177
      %s180 = sadd.s32 %s179, 1
      %p183 = scmp.eq.s32.totalorder %s35, 1
      %p184 = scmp.ne.s32.totalorder %s179, %s181
      %p185 = scmp.eq.s32.totalorder %s35, 0
      %p186 = por %p184, %p185
      %p187 = scmp.ne.s32.totalorder %s179, %s181
      %p188 = scmp.eq.s32.totalorder %s40, 1
      %p189 = por %p187, %p188
      %p190 = scmp.ne.s32.totalorder %s181, %s182
      %p191 = scmp.eq.s32.totalorder %s40, 0
      %p192 = por %p190, %p191
      %p193 = scmp.ne.s32.totalorder %s181, %s182
      %p194 = scmp.eq.s32.totalorder %s41, 1
      %p195 = por %p193, %p194
      %p197 = scmp.ne.s32.totalorder %s182, %s196
      %p198 = scmp.eq.s32.totalorder %s41, 0
      %p199 = por %p197, %p198
      %s201 = sadd.s32 %s200, 1
      %p204 = scmp.eq.s32.totalorder %s35, 1
      %p205 = scmp.ne.s32.totalorder %s200, %s202
      %p206 = scmp.eq.s32.totalorder %s35, 0
      %p207 = por %p205, %p206
      %p208 = scmp.ne.s32.totalorder %s200, %s202
      %p209 = scmp.eq.s32.totalorder %s40, 1
      %p210 = por %p208, %p209
      %p211 = scmp.ne.s32.totalorder %s202, %s203
      %p212 = scmp.eq.s32.totalorder %s40, 0
      %p213 = por %p211, %p212
      %p214 = scmp.ne.s32.totalorder %s202, %s203
      %p215 = scmp.eq.s32.totalorder %s41, 1
      %p216 = por %p214, %p215
      %p218 = scmp.ne.s32.totalorder %s203, %s217
      %p219 = scmp.eq.s32.totalorder %s41, 0
      %p220 = por %p218, %p219
      %s222 = sadd.s32 %s221, 1
      %p225 = scmp.eq.s32.totalorder %s35, 1
      %p226 = scmp.ne.s32.totalorder %s221, %s223
      %p227 = scmp.eq.s32.totalorder %s35, 0
      %p228 = por %p226, %p227
      %p229 = scmp.ne.s32.totalorder %s221, %s223
      %p230 = scmp.eq.s32.totalorder %s40, 1
      %p231 = por %p229, %p230
      %p232 = scmp.ne.s32.totalorder %s223, %s224
      %p233 = scmp.eq.s32.totalorder %s40, 0
      %p234 = por %p232, %p233
      %p235 = scmp.ne.s32.totalorder %s223, %s224
      %p236 = scmp.eq.s32.totalorder %s41, 1
      %p237 = por %p235, %p236
      %p239 = scmp.ne.s32.totalorder %s224, %s238
      %p240 = scmp.eq.s32.totalorder %s41, 0
      %p241 = por %p239, %p240
      %s243 = sadd.s32 %s242, 1
      %p246 = scmp.eq.s32.totalorder %s35, 1
      %p247 = scmp.ne.s32.totalorder %s242, %s244
      %p248 = scmp.eq.s32.totalorder %s35, 0
      %p249 = por %p247, %p248
      %p250 = scmp.ne.s32.totalorder %s242, %s244
      %p251 = scmp.eq.s32.totalorder %s40, 1
      %p252 = por %p250, %p251
      %p253 = scmp.ne.s32.totalorder %s244, %s245
      %p254 = scmp.eq.s32.totalorder %s40, 0
      %p255 = por %p253, %p254
      %p256 = scmp.ne.s32.totalorder %s244, %s245
      %p257 = scmp.eq.s32.totalorder %s41, 1
      %p258 = por %p256, %p257
      %p260 = scmp.ne.s32.totalorder %s245, %s259
      %p261 = scmp.eq.s32.totalorder %s41, 0
      %p262 = por %p260, %p261
      %s264 = sadd.s32 %s263, 1
      %p267 = scmp.eq.s32.totalorder %s35, 1
      %p268 = scmp.ne.s32.totalorder %s263, %s265
      %p269 = scmp.eq.s32.totalorder %s35, 0
      %p270 = por %p268, %p269
      %p271 = scmp.ne.s32.totalorder %s263, %s265
      %p272 = scmp.eq.s32.totalorder %s40, 1
      %p273 = por %p271, %p272
      %p274 = scmp.ne.s32.totalorder %s265, %s266
      %p275 = scmp.eq.s32.totalorder %s40, 0
      %p276 = por %p274, %p275
      %p277 = scmp.ne.s32.totalorder %s265, %s266
      %p278 = scmp.eq.s32.totalorder %s41, 1
      %p279 = por %p277, %p278
      %p281 = scmp.ne.s32.totalorder %s266, %s280
      %p282 = scmp.eq.s32.totalorder %s41, 0
      %p283 = por %p281, %p282
      %s284 = ssub.s32 %s35, %s42
      %p285 = scmp.eq.s32.totalorder %s284, 0
      %s287 = sadd.s32 %s286, 1
      %s288 = scalar_select %p285, %s286, %s287
      %p291 = pneg %p285
      %p292 = scmp.eq.s32.totalorder %s35, 1
      %p293 = por %p291, %p292
      %p294 = scmp.ne.s32.totalorder %s286, %s289
      %p295 = scmp.eq.s32.totalorder %s35, 0
      %p296 = por %p294, %p295
      %p297 = scmp.ne.s32.totalorder %s286, %s289
      %p298 = scmp.eq.s32.totalorder %s40, 1
      %p299 = por %p297, %p298
      %p300 = scmp.ne.s32.totalorder %s289, %s290
      %p301 = scmp.eq.s32.totalorder %s40, 0
      %p302 = por %p300, %p301
      %p303 = scmp.ne.s32.totalorder %s289, %s290
      %p304 = scmp.eq.s32.totalorder %s41, 1
      %p305 = por %p303, %p304
      %p307 = scmp.ne.s32.totalorder %s290, %s306
      %p308 = scmp.eq.s32.totalorder %s41, 0
      %p309 = por %p307, %p308
      %p310 = scmp.le.s32.totalorder 1, %s35
      %p311 = scmp.lt.s32.totalorder %s35, 3
      %p312 = pnand %p310, %p311
      %p313 = pneg %p312
      // Predicated region
      $region9: #{forward.1} parent=5 // pred_check
        _
      $region10: #{forward.1} parent=5 // pred_check_branch
        %315 = sbr.rel (%p312) target = $region12
      $region11: #{forward.1} parent=5 // pred_region
        %s316 = ssub.s32 %s35, 1
        // Predicated region
        $region13: #{forward.1} parent=11 // pred_check
          %p317 = pneg %p108
        $region14: #{forward.1} parent=11 // pred_check_branch
          %319 = sbr.rel (%p317) target = $region16
        $region15: #{forward.1} parent=11 // pred_region
          %s321 = ssub.s32 2048, 2048
          %322 = vsyncadd [#allocation8], %s321
          %s323 = sshll.u32 [#allocation9], 4
          %s324 = int_to_ptr.vmem [resolvable:$true] %s323
          %329 = dma.hbm_to_vmem [thread:$0]  %s3, 2048, %s324, [#allocation8], 128, 128, 8
        $region16: #{forward.1} parent=11 // pred_fallthru
          _
        // Predicated region
        $region17: #{forward.1} parent=11 // pred_check
          %p330 = pneg %p129
        $region18: #{forward.1} parent=11 // pred_check_branch
          %332 = sbr.rel (%p330) target = $region20
        $region19: #{forward.1} parent=11 // pred_region
          _
        $region20: #{forward.1} parent=11 // pred_fallthru
          _
        // Predicated region
        $region21: #{forward.1} parent=11 // pred_check
          %p333 = pneg %p150
        $region22: #{forward.1} parent=11 // pred_check_branch
          %335 = sbr.rel (%p333) target = $region24
        $region23: #{forward.1} parent=11 // pred_region
          %s337 = ssub.s32 2048, 2048
          %338 = vsyncadd [#allocation11], %s337
          %s339 = sshll.u32 [#allocation10], 4
          %s340 = int_to_ptr.vmem [resolvable:$true] %s339
          %345 = dma.hbm_to_vmem [thread:$0]  %s5, 2048, %s340, [#allocation11], 128, 128, 8
        $region24: #{forward.1} parent=11 // pred_fallthru
          _
        // Predicated region
        $region25: #{forward.1} parent=11 // pred_check
          %p346 = pneg %p171
        $region26: #{forward.1} parent=11 // pred_check_branch
          %348 = sbr.rel (%p346) target = $region28
        $region27: #{forward.1} parent=11 // pred_region
          %s350 = ssub.s32 2048, 2048
          %351 = vsyncadd [#allocation11], %s350
          %s352 = sshll.u32 [#allocation12], 4
          %s353 = int_to_ptr.vmem [resolvable:$true] %s352
          %358 = dma.hbm_to_vmem [thread:$0]  %s6, 2048, %s353, [#allocation11], 128, 128, 8
        $region28: #{forward.1} parent=11 // pred_fallthru
          _
        // Predicated region
        $region29: #{forward.1} parent=11 // pred_check
          %p359 = pneg %p192
        $region30: #{forward.1} parent=11 // pred_check_branch
          %361 = sbr.rel (%p359) target = $region32
        $region31: #{forward.1} parent=11 // pred_region
          _
        $region32: #{forward.1} parent=11 // pred_fallthru
          _
        // Predicated region
        $region33: #{forward.1} parent=11 // pred_check
          %p362 = pneg %p213
        $region34: #{forward.1} parent=11 // pred_check_branch
          %364 = sbr.rel (%p362) target = $region36
        $region35: #{forward.1} parent=11 // pred_region
          %s366 = ssub.s32 2048, 2048
          %367 = vsyncadd [#allocation14], %s366
          %s368 = sshll.u32 [#allocation13], 4
          %s369 = int_to_ptr.vmem [resolvable:$true] %s368
          %374 = dma.hbm_to_vmem [thread:$0]  %s8, 2048, %s369, [#allocation14], 128, 128, 8
        $region36: #{forward.1} parent=11 // pred_fallthru
          _
        // Predicated region
        $region37: #{forward.1} parent=11 // pred_check
          %p375 = pneg %p234
        $region38: #{forward.1} parent=11 // pred_check_branch
          %377 = sbr.rel (%p375) target = $region40
        $region39: #{forward.1} parent=11 // pred_region
          %s379 = ssub.s32 16, 16
          %380 = vsyncadd [#allocation14], %s379
          %s382 = sshll.u32 [#allocation15], 4
          %s383 = int_to_ptr.vmem [resolvable:$true] %s382
          %385 = dma.hbm_to_vmem [thread:$0]  %s9, 16, %s383, [#allocation14]
        $region40: #{forward.1} parent=11 // pred_fallthru
          _
        // Predicated region
        $region41: #{forward.1} parent=11 // pred_check
          %p386 = pneg %p255
        $region42: #{forward.1} parent=11 // pred_check_branch
          %388 = sbr.rel (%p386) target = $region44
        $region43: #{forward.1} parent=11 // pred_region
          _
        $region44: #{forward.1} parent=11 // pred_fallthru
          _
        // Predicated region
        $region45: #{forward.1} parent=11 // pred_check
          %p389 = pneg %p276
        $region46: #{forward.1} parent=11 // pred_check_branch
          %391 = sbr.rel (%p389) target = $region48
        $region47: #{forward.1} parent=11 // pred_region
          _
        $region48: #{forward.1} parent=11 // pred_fallthru
          _
      $region12: #{forward.1} parent=5 // pred_fallthru
        _
      %p392 = scmp.lt.s32.totalorder %s35, 2
      // Predicated region
      $region49: #{forward.1} parent=5 // pred_check
        %p393 = pneg %p392
      $region50: #{forward.1} parent=5 // pred_check_branch
        %395 = sbr.rel (%p393) target = $region52
      $region51: #{forward.1} parent=5 // pred_region
        // Predicated region
        $region53: #{forward.1} parent=51 // pred_check
          %p396 = pneg %p55
        $region54: #{forward.1} parent=51 // pred_check_branch
          %398 = sbr.rel (%p396) target = $region56
        $region55: #{forward.1} parent=51 // pred_region
          %s399 = sand.u32 %s45, 1
          %s400 = scalar_lea.sflag [#allocation5], %s399
          %s401 = sand.u32 %s45, 1
          %s402 = smul.addr %s401, 512
          %s403 = scalar_lea.vmem [#allocation4], %s402
          %s405 = ssub.s32 8192, 8192
          %406 = vsyncadd %s400, %s405
          %s407 = smul.addr %s35, 64
          %s408 = smul.addr %s407, 128
          %s409 = scalar_lea.hbm %s1, %s408
          %s410 = sshll.u32 %s403, 4
          %s411 = int_to_ptr.vmem [resolvable:$true] %s410
          %416 = dma.hbm_to_vmem [thread:$0]  %s409, 8192, %s411, %s400, 128, 128, 8
        $region56: #{forward.1} parent=51 // pred_fallthru
          _
        // Predicated region
        $region57: #{forward.1} parent=51 // pred_check
          %p417 = pneg %p81
        $region58: #{forward.1} parent=51 // pred_check_branch
          %419 = sbr.rel (%p417) target = $region60
        $region59: #{forward.1} parent=51 // pred_region
          %s420 = sand.u32 %s35, 1
          %s421 = scalar_lea.sflag [#allocation8], %s420
          %s422 = sand.u32 %s71, 1
          %s423 = smul.addr %s422, 128
          %s424 = scalar_lea.vmem [#allocation7], %s423
          %s426 = ssub.s32 2048, 2048
          %427 = vsyncadd %s421, %s426
          %s428 = smul.addr %s35, 16
          %s429 = smul.addr %s428, 128
          %s430 = scalar_lea.hbm %s2, %s429
          %s431 = sshll.u32 %s424, 4
          %s432 = int_to_ptr.vmem [resolvable:$true] %s431
          %437 = dma.hbm_to_vmem [thread:$0]  %s430, 2048, %s432, %s421, 128, 128, 8
        $region60: #{forward.1} parent=51 // pred_fallthru
          _
      $region52: #{forward.1} parent=5 // pred_fallthru
        _
      %p438 = scmp.le.s32.totalorder 1, %s35
      %p439 = scmp.lt.s32.totalorder %s35, 3
      %p440 = pnand %p438, %p439
      %p441 = pneg %p440
      // Predicated region
      $region61: #{forward.1} parent=5 // pred_check
        _
      $region62: #{forward.1} parent=5 // pred_check_branch
        %443 = sbr.rel (%p440) target = $region64
      $region63: #{forward.1} parent=5 // pred_region
        %s444 = ssub.s32 %s35, 1
        %s445 = sand.u32 %s48, 1
        %s446 = scalar_lea.sflag [#allocation5], %s445
        %s447 = sand.u32 %s48, 1
        %s448 = smul.addr %s447, 512
        %s449 = scalar_lea.vmem [#allocation4], %s448
        // Predicated region
        $region65: #{forward.1} parent=63 // pred_check
          %p450 = pneg %p61
        $region66: #{forward.1} parent=63 // pred_check_branch
          %452 = sbr.rel (%p450) target = $region68
        $region67: #{forward.1} parent=63 // pred_region
          %453 = dma.done %s446, 8192
        $region68: #{forward.1} parent=63 // pred_fallthru
          _
        %s454 = sand.u32 %s40, 1
        %s455 = scalar_lea.sflag [#allocation8], %s454
        %s456 = sand.u32 %s74, 1
        %s457 = smul.addr %s456, 128
        %s458 = scalar_lea.vmem [#allocation7], %s457
        // Predicated region
        $region69: #{forward.1} parent=63 // pred_check
          %p459 = pneg %p87
        $region70: #{forward.1} parent=63 // pred_check_branch
          %461 = sbr.rel (%p459) target = $region72
        $region71: #{forward.1} parent=63 // pred_region
          %462 = dma.done %s455, 2048
        $region72: #{forward.1} parent=63 // pred_fallthru
          _
        // Predicated region
        $region73: #{forward.1} parent=63 // pred_check
          %p463 = pneg %p108
        $region74: #{forward.1} parent=63 // pred_check_branch
          %465 = sbr.rel (%p463) target = $region76
        $region75: #{forward.1} parent=63 // pred_region
          %466 = dma.done [#allocation8], 2048
        $region76: #{forward.1} parent=63 // pred_fallthru
          _
        // Predicated region
        $region77: #{forward.1} parent=63 // pred_check
          %p467 = pneg %p150
        $region78: #{forward.1} parent=63 // pred_check_branch
          %469 = sbr.rel (%p467) target = $region80
        $region79: #{forward.1} parent=63 // pred_region
          %470 = dma.done [#allocation11], 2048
        $region80: #{forward.1} parent=63 // pred_fallthru
          _
        // Predicated region
        $region81: #{forward.1} parent=63 // pred_check
          %p471 = pneg %p171
        $region82: #{forward.1} parent=63 // pred_check_branch
          %473 = sbr.rel (%p471) target = $region84
        $region83: #{forward.1} parent=63 // pred_region
          %474 = dma.done [#allocation11], 2048
        $region84: #{forward.1} parent=63 // pred_fallthru
          _
        // Predicated region
        $region85: #{forward.1} parent=63 // pred_check
          %p475 = pneg %p213
        $region86: #{forward.1} parent=63 // pred_check_branch
          %477 = sbr.rel (%p475) target = $region88
        $region87: #{forward.1} parent=63 // pred_region
          %478 = dma.done [#allocation14], 2048
        $region88: #{forward.1} parent=63 // pred_fallthru
          _
        // Predicated region
        $region89: #{forward.1} parent=63 // pred_check
          %p479 = pneg %p234
        $region90: #{forward.1} parent=63 // pred_check_branch
          %481 = sbr.rel (%p479) target = $region92
        $region91: #{forward.1} parent=63 // pred_region
          %482 = dma.done [#allocation14], 16
        $region92: #{forward.1} parent=63 // pred_fallthru
          _
        %s483 = sand.u32 %s48, 1
        %s484 = scalar_lea.sflag [#allocation5], %s483
        %s485 = sand.u32 %s48, 1
        %s486 = smul.addr %s485, 512
        %s487 = scalar_lea.vmem [#allocation4], %s486
        %p488 = pneg %p61
        %p489 = pneg %p58
        %s490 = sand.u32 %s40, 1
        %s491 = scalar_lea.sflag [#allocation8], %s490
        %s492 = sand.u32 %s74, 1
        %s493 = smul.addr %s492, 128
        %s494 = scalar_lea.vmem [#allocation7], %s493
        %p495 = pneg %p87
        %p496 = pneg %p84
        %p497 = pneg %p108
        %p498 = pneg %p105
        %p499 = pneg %p129
        %p500 = pneg %p126
        %p501 = pneg %p150
        %p502 = pneg %p147
        %p503 = pneg %p171
        %p504 = pneg %p168
        %p505 = pneg %p192
        %p506 = pneg %p189
        %p507 = pneg %p213
        %p508 = pneg %p210
        %p509 = pneg %p234
        %p510 = pneg %p231
        %p511 = pneg %p255
        %p512 = pneg %p252
        %p513 = pneg %p276
        %p514 = pneg %p273
        %p515 = pneg %p302
        %p516 = pneg %p299
        %s517 = sand.u32 %s289, 1
        %s518 = scalar_lea.sflag [#allocation6], %s517
        %s519 = sand.u32 %s289, 1
        %s520 = scalar_lea.vmem [#allocation16], %s519
        %s521 = sld [smem:[#allocation3 + %s40]]
        %v522 = vld [vmem:[%s458] sm:$0xff]
        %v523 = vld [vmem:[%s458 + $0x8] sm:$0xff]
        %v524 = vld [vmem:[%s458 + $0x10] sm:$0xff]
        %v525 = vld [vmem:[%s458 + $0x18] sm:$0xff]
        %v526 = vld [vmem:[%s458 + $0x20] sm:$0xff]
        %v527 = vld [vmem:[%s458 + $0x28] sm:$0xff]
        %v528 = vld [vmem:[%s458 + $0x30] sm:$0xff]
        %v529 = vld [vmem:[%s458 + $0x38] sm:$0xff]
        %v530 = vld [vmem:[%s458 + $0x40] sm:$0xff]
        %v531 = vld [vmem:[%s458 + $0x48] sm:$0xff]
        %v532 = vld [vmem:[%s458 + $0x50] sm:$0xff]
        %v533 = vld [vmem:[%s458 + $0x58] sm:$0xff]
        %v534 = vld [vmem:[%s458 + $0x60] sm:$0xff]
        %v535 = vld [vmem:[%s458 + $0x68] sm:$0xff]
        %v536 = vld [vmem:[%s458 + $0x70] sm:$0xff]
        %v537 = vld [vmem:[%s458 + $0x78] sm:$0xff]
        %v538 = vld [vmem:[#allocation9] sm:$0xff]
        %v539 = vld [vmem:[#allocation9 + $0x8] sm:$0xff]
        %v540 = vld [vmem:[#allocation9 + $0x10] sm:$0xff]
        %v541 = vld [vmem:[#allocation9 + $0x18] sm:$0xff]
        %v542 = vld [vmem:[#allocation9 + $0x20] sm:$0xff]
        %v543 = vld [vmem:[#allocation9 + $0x28] sm:$0xff]
        %v544 = vld [vmem:[#allocation9 + $0x30] sm:$0xff]
        %v545 = vld [vmem:[#allocation9 + $0x38] sm:$0xff]
        %v546 = vld [vmem:[#allocation9 + $0x40] sm:$0xff]
        %v547 = vld [vmem:[#allocation9 + $0x48] sm:$0xff]
        %v548 = vld [vmem:[#allocation9 + $0x50] sm:$0xff]
        %v549 = vld [vmem:[#allocation9 + $0x58] sm:$0xff]
        %v550 = vld [vmem:[#allocation9 + $0x60] sm:$0xff]
        %v551 = vld [vmem:[#allocation9 + $0x68] sm:$0xff]
        %v552 = vld [vmem:[#allocation9 + $0x70] sm:$0xff]
        %v553 = vld [vmem:[#allocation9 + $0x78] sm:$0xff]
        %v554 = vld [vmem:[%s4] sm:$0x1]
        %v556 = vlaneseq
        %v557 = vshrl.u32 %v556, 7
        %v558 = vsub.s32 0, %v557
        %v559 = vrot.slane %v554, %v558
        %561 = vmatprep.subr.mxu0 0.0
        %562 = vmatpush1.msra.mxu0 %v538
        %563 = vmatprep.subr.mxu0 0.0
        %564 = vmatpush1.msra.mxu0 %v539
        %565 = vmatprep.subr.mxu0 0.0
        %566 = vmatpush1.msra.mxu0 %v540
        %567 = vmatprep.subr.mxu0 0.0
        %568 = vmatpush1.msra.mxu0 %v541
        %569 = vmatprep.subr.mxu0 0.0
        %570 = vmatpush1.msra.mxu0 %v542
        %571 = vmatprep.subr.mxu0 0.0
        %572 = vmatpush1.msra.mxu0 %v543
        %573 = vmatprep.subr.mxu0 0.0
        %574 = vmatpush1.msra.mxu0 %v544
        %575 = vmatprep.subr.mxu0 0.0
        %576 = vmatpush1.msra.mxu0 %v545
        %577 = vmatprep.subr.mxu0 0.0
        %578 = vmatpush1.msra.mxu0 %v546
        %579 = vmatprep.subr.mxu0 0.0
        %580 = vmatpush1.msra.mxu0 %v547
        %581 = vmatprep.subr.mxu0 0.0
        %582 = vmatpush1.msra.mxu0 %v548
        %583 = vmatprep.subr.mxu0 0.0
        %584 = vmatpush1.msra.mxu0 %v549
        %585 = vmatprep.subr.mxu0 0.0
        %586 = vmatpush1.msra.mxu0 %v550
        %587 = vmatprep.subr.mxu0 0.0
        %588 = vmatpush1.msra.mxu0 %v551
        %589 = vmatprep.subr.mxu0 0.0
        %590 = vmatpush1.msra.mxu0 %v552
        %591 = vmatprep.subr.mxu0 0.0
        %592 = vmatpush1.msra.mxu0 %v553
        %593 = vmatprep.subr.mxu0 0.0
        %594 = vmatpush1.msra.mxu0 0.0
        %595 = vmatprep.subr.mxu0 0.0
        %596 = vmatpush1.msra.mxu0 0.0
        %597 = vmatprep.subr.mxu0 0.0
        %598 = vmatpush1.msra.mxu0 0.0
        %599 = vmatprep.subr.mxu0 0.0
        %600 = vmatpush1.msra.mxu0 0.0
        %601 = vmatprep.subr.mxu0 0.0
        %602 = vmatpush1.msra.mxu0 0.0
        %603 = vmatprep.subr.mxu0 0.0
        %604 = vmatpush1.msra.mxu0 0.0
        %605 = vmatprep.subr.mxu0 0.0
        %606 = vmatpush1.msra.mxu0 0.0
        %607 = vmatprep.subr.mxu0 0.0
        %608 = vmatpush1.msra.mxu0 0.0
        %609 = vmatprep.subr.mxu0 0.0
        %610 = vmatpush1.msra.mxu0 0.0
        %611 = vmatprep.subr.mxu0 0.0
        %612 = vmatpush1.msra.mxu0 0.0
        %613 = vmatprep.subr.mxu0 0.0
        %614 = vmatpush1.msra.mxu0 0.0
        %615 = vmatprep.subr.mxu0 0.0
        %616 = vmatpush1.msra.mxu0 0.0
        %617 = vmatprep.subr.mxu0 0.0
        %618 = vmatpush1.msra.mxu0 0.0
        %619 = vmatprep.subr.mxu0 0.0
        %620 = vmatpush1.msra.mxu0 0.0
        %621 = vmatprep.subr.mxu0 0.0
        %622 = vmatpush1.msra.mxu0 0.0
        %623 = vmatprep.subr.mxu0 0.0
        %624 = vmatpush1.msra.mxu0 0.0
        %625 = vmatprep.mubr.f32.mxu0 0.0
        %626 = vmatmul.mubr.f32.gmra.mrb[0].mxu0 %v522
        %v627 = vpop.f32.mrb[0].mxu0
        %v628 = vadd.f32 %v559, %v627
        %v629 = vpop.f32.mrb[0].mxu0
        %630 = vmatprep.mubr.f32.mxu0 0.0
        %631 = vmatmul.mubr.f32.gmra.mrb[0].mxu0 %v523
        %v632 = vpop.f32.mrb[0].mxu0
        %v633 = vadd.f32 %v559, %v632
        %v634 = vpop.f32.mrb[0].mxu0
        %635 = vmatprep.mubr.f32.mxu0 0.0
        %636 = vmatmul.mubr.f32.gmra.mrb[0].mxu0 %v524
        %v637 = vpop.f32.mrb[0].mxu0
        %v638 = vadd.f32 %v559, %v637
        %v639 = vpop.f32.mrb[0].mxu0
        %640 = vmatprep.mubr.f32.mxu0 0.0
        %641 = vmatmul.mubr.f32.gmra.mrb[0].mxu0 %v525
        %v642 = vpop.f32.mrb[0].mxu0
        %v643 = vadd.f32 %v559, %v642
        %v644 = vpop.f32.mrb[0].mxu0
        %645 = vmatprep.mubr.f32.mxu0 0.0
        %646 = vmatmul.mubr.f32.gmra.mrb[0].mxu0 %v526
        %v647 = vpop.f32.mrb[0].mxu0
        %v648 = vadd.f32 %v559, %v647
        %v649 = vpop.f32.mrb[0].mxu0
        %650 = vmatprep.mubr.f32.mxu0 0.0
        %651 = vmatmul.mubr.f32.gmra.mrb[0].mxu0 %v527
        %v652 = vpop.f32.mrb[0].mxu0
        %v653 = vadd.f32 %v559, %v652
        %v654 = vpop.f32.mrb[0].mxu0
        %655 = vmatprep.mubr.f32.mxu0 0.0
        %656 = vmatmul.mubr.f32.gmra.mrb[0].mxu0 %v528
        %v657 = vpop.f32.mrb[0].mxu0
        %v658 = vadd.f32 %v559, %v657
        %v659 = vpop.f32.mrb[0].mxu0
        %660 = vmatprep.mubr.f32.mxu0 0.0
        %661 = vmatmul.mubr.f32.gmra.mrb[0].mxu0 %v529
        %v662 = vpop.f32.mrb[0].mxu0
        %v663 = vadd.f32 %v559, %v662
        %v664 = vpop.f32.mrb[0].mxu0
        %665 = vmatprep.mubr.f32.mxu0 0.0
        %666 = vmatmul.mubr.f32.gmra.mrb[0].mxu0 %v530
        %v667 = vpop.f32.mrb[0].mxu0
        %v668 = vadd.f32 %v559, %v667
        %v669 = vpop.f32.mrb[0].mxu0
        %670 = vmatprep.mubr.f32.mxu0 0.0
        %671 = vmatmul.mubr.f32.gmra.mrb[0].mxu0 %v531
        %v672 = vpop.f32.mrb[0].mxu0
        %v673 = vadd.f32 %v559, %v672
        %v674 = vpop.f32.mrb[0].mxu0
        %675 = vmatprep.mubr.f32.mxu0 0.0
        %676 = vmatmul.mubr.f32.gmra.mrb[0].mxu0 %v532
        %v677 = vpop.f32.mrb[0].mxu0
        %v678 = vadd.f32 %v559, %v677
        %v679 = vpop.f32.mrb[0].mxu0
        %680 = vmatprep.mubr.f32.mxu0 0.0
        %681 = vmatmul.mubr.f32.gmra.mrb[0].mxu0 %v533
        %v682 = vpop.f32.mrb[0].mxu0
        %v683 = vadd.f32 %v559, %v682
        %v684 = vpop.f32.mrb[0].mxu0
        %685 = vmatprep.mubr.f32.mxu0 0.0
        %686 = vmatmul.mubr.f32.gmra.mrb[0].mxu0 %v534
        %v687 = vpop.f32.mrb[0].mxu0
        %v688 = vadd.f32 %v559, %v687
        %v689 = vpop.f32.mrb[0].mxu0
        %690 = vmatprep.mubr.f32.mxu0 0.0
        %691 = vmatmul.mubr.f32.gmra.mrb[0].mxu0 %v535
        %v692 = vpop.f32.mrb[0].mxu0
        %v693 = vadd.f32 %v559, %v692
        %v694 = vpop.f32.mrb[0].mxu0
        %695 = vmatprep.mubr.f32.mxu0 0.0
        %696 = vmatmul.mubr.f32.gmra.mrb[0].mxu0 %v536
        %v697 = vpop.f32.mrb[0].mxu0
        %v698 = vadd.f32 %v559, %v697
        %v699 = vpop.f32.mrb[0].mxu0
        %700 = vmatprep.mubr.f32.mxu0 0.0
        %701 = vmatmul.mubr.f32.gmra.mrb[0].mxu0 %v537
        %v702 = vpop.f32.mrb[0].mxu0
        %v703 = vadd.f32 %v559, %v702
        %v704 = vpop.f32.mrb[0].mxu0
        %705 = vdwg.mxu0
        %v706 = vld [vmem:[#allocation10] sm:$0xff]
        %v707 = vld [vmem:[#allocation10 + $0x8] sm:$0xff]
        %v708 = vld [vmem:[#allocation10 + $0x10] sm:$0xff]
        %v709 = vld [vmem:[#allocation10 + $0x18] sm:$0xff]
        %v710 = vld [vmem:[#allocation10 + $0x20] sm:$0xff]
        %v711 = vld [vmem:[#allocation10 + $0x28] sm:$0xff]
        %v712 = vld [vmem:[#allocation10 + $0x30] sm:$0xff]
        %v713 = vld [vmem:[#allocation10 + $0x38] sm:$0xff]
        %v714 = vld [vmem:[#allocation10 + $0x40] sm:$0xff]
        %v715 = vld [vmem:[#allocation10 + $0x48] sm:$0xff]
        %v716 = vld [vmem:[#allocation10 + $0x50] sm:$0xff]
        %v717 = vld [vmem:[#allocation10 + $0x58] sm:$0xff]
        %v718 = vld [vmem:[#allocation10 + $0x60] sm:$0xff]
        %v719 = vld [vmem:[#allocation10 + $0x68] sm:$0xff]
        %v720 = vld [vmem:[#allocation10 + $0x70] sm:$0xff]
        %v721 = vld [vmem:[#allocation10 + $0x78] sm:$0xff]
        %v722 = vld [vmem:[#allocation12] sm:$0xff]
        %v723 = vld [vmem:[#allocation12 + $0x8] sm:$0xff]
        %v724 = vld [vmem:[#allocation12 + $0x10] sm:$0xff]
        %v725 = vld [vmem:[#allocation12 + $0x18] sm:$0xff]
        %v726 = vld [vmem:[#allocation12 + $0x20] sm:$0xff]
        %v727 = vld [vmem:[#allocation12 + $0x28] sm:$0xff]
        %v728 = vld [vmem:[#allocation12 + $0x30] sm:$0xff]
        %v729 = vld [vmem:[#allocation12 + $0x38] sm:$0xff]
        %v730 = vld [vmem:[#allocation12 + $0x40] sm:$0xff]
        %v731 = vld [vmem:[#allocation12 + $0x48] sm:$0xff]
        %v732 = vld [vmem:[#allocation12 + $0x50] sm:$0xff]
        %v733 = vld [vmem:[#allocation12 + $0x58] sm:$0xff]
        %v734 = vld [vmem:[#allocation12 + $0x60] sm:$0xff]
        %v735 = vld [vmem:[#allocation12 + $0x68] sm:$0xff]
        %v736 = vld [vmem:[#allocation12 + $0x70] sm:$0xff]
        %v737 = vld [vmem:[#allocation12 + $0x78] sm:$0xff]
        %v738 = vld [vmem:[%s7] sm:$0x1]
        %v739 = vlaneseq
        %v740 = vand.u32 %v739, 127
        %v741 = vsub.s32 127, %v740
        %v742 = vld [vmem:[%s449] sm:$0xff]
        %v743 = vld [vmem:[%s449 + $0x8] sm:$0xff]
        %v744 = vld [vmem:[%s449 + $0x10] sm:$0xff]
        %v745 = vld [vmem:[%s449 + $0x18] sm:$0xff]
        %s746 = scalar_lea.vmem %s449, 128 [#allocation4]
        %v747 = vld [vmem:[%s746] sm:$0xff]
        %v748 = vld [vmem:[%s746 + $0x8] sm:$0xff]
        %v749 = vld [vmem:[%s746 + $0x10] sm:$0xff]
        %v750 = vld [vmem:[%s746 + $0x18] sm:$0xff]
        %v751 = vadd.f32 %v742, %v747
        %v752 = vadd.f32 %v743, %v748
        %v753 = vadd.f32 %v744, %v749
        %v754 = vadd.f32 %v745, %v750
        %s755 = scalar_lea.vmem %s449, 256 [#allocation4]
        %v756 = vld [vmem:[%s755] sm:$0xff]
        %v757 = vld [vmem:[%s755 + $0x8] sm:$0xff]
        %v758 = vld [vmem:[%s755 + $0x10] sm:$0xff]
        %v759 = vld [vmem:[%s755 + $0x18] sm:$0xff]
        %v760 = vadd.f32 %v751, %v756
        %v761 = vadd.f32 %v752, %v757
        %v762 = vadd.f32 %v753, %v758
        %v763 = vadd.f32 %v754, %v759
        %s764 = scalar_lea.vmem %s449, 384 [#allocation4]
        %v765 = vld [vmem:[%s764] sm:$0xff]
        %v766 = vld [vmem:[%s764 + $0x8] sm:$0xff]
        %v767 = vld [vmem:[%s764 + $0x10] sm:$0xff]
        %v768 = vld [vmem:[%s764 + $0x18] sm:$0xff]
        %v769 = vadd.f32 %v760, %v765
        %v770 = vadd.f32 %v761, %v766
        %v771 = vadd.f32 %v762, %v767
        %v772 = vadd.f32 %v763, %v768
        %v777 = vshra.s32 %v769, 31
        %v778 = vshra.s32 %v770, 31
        %v779 = vshra.s32 %v771, 31
        %v780 = vshra.s32 %v772, 31
        %v781 = vand.u32 %v777, 2147483647
        %v782 = vand.u32 %v778, 2147483647
        %v783 = vand.u32 %v779, 2147483647
        %v784 = vand.u32 %v780, 2147483647
        %v785 = vxor.u32 %v769, %v781
        %v786 = vxor.u32 %v770, %v782
        %v787 = vxor.u32 %v771, %v783
        %v788 = vxor.u32 %v772, %v784
        %v789 = vand.u32 %v785, 4294967168
        %v790 = vand.u32 %v786, 4294967168
        %v791 = vand.u32 %v787, 4294967168
        %v792 = vand.u32 %v788, 4294967168
        %v793 = vor.u32 %v789, %v741
        %v794 = vor.u32 %v790, %v741
        %v795 = vor.u32 %v791, %v741
        %v796 = vor.u32 %v792, %v741
        %v797 = vand.u32 %v793, 65535
        %v798 = vshra.s32 %v793, 16
        %v799 = vcvt.s32.f32 %v797
        %v800 = vcvt.s32.f32 %v798
        %801 = vmax.xlane.f32.xlu0 %v800
        %v802 = vpop.xlane.xlu0 %801
        %vm803 = vcmp.eq.f32.partialorder %v800, %v802
        %v804 = vsel %vm803, %v799, -inf
        %805 = vmax.xlane.f32.xlu0 %v804
        %v806 = vpop.xlane.xlu0 %805
        %v807 = vcvt.f32.s32 %v806
        %v808 = vcvt.f32.s32 %v802
        %v809 = vshll.u32 %v808, 16
        %v810 = vadd.s32 %v809, %v807
        %v811 = vand.u32 %v794, 65535
        %v812 = vshra.s32 %v794, 16
        %v813 = vcvt.s32.f32 %v811
        %v814 = vcvt.s32.f32 %v812
        %815 = vmax.xlane.f32.xlu0 %v814
        %v816 = vpop.xlane.xlu0 %815
        %vm817 = vcmp.eq.f32.partialorder %v814, %v816
        %v818 = vsel %vm817, %v813, -inf
        %819 = vmax.xlane.f32.xlu0 %v818
        %v820 = vpop.xlane.xlu0 %819
        %v821 = vcvt.f32.s32 %v820
        %v822 = vcvt.f32.s32 %v816
        %v823 = vshll.u32 %v822, 16
        %v824 = vadd.s32 %v823, %v821
        %v825 = vand.u32 %v795, 65535
        %v826 = vshra.s32 %v795, 16
        %v827 = vcvt.s32.f32 %v825
        %v828 = vcvt.s32.f32 %v826
        %829 = vmax.xlane.f32.xlu0 %v828
        %v830 = vpop.xlane.xlu0 %829
        %vm831 = vcmp.eq.f32.partialorder %v828, %v830
        %v832 = vsel %vm831, %v827, -inf
        %833 = vmax.xlane.f32.xlu0 %v832
        %v834 = vpop.xlane.xlu0 %833
        %v835 = vcvt.f32.s32 %v834
        %v836 = vcvt.f32.s32 %v830
        %v837 = vshll.u32 %v836, 16
        %v838 = vadd.s32 %v837, %v835
        %v839 = vand.u32 %v796, 65535
        %v840 = vshra.s32 %v796, 16
        %v841 = vcvt.s32.f32 %v839
        %v842 = vcvt.s32.f32 %v840
        %843 = vmax.xlane.f32.xlu0 %v842
        %v844 = vpop.xlane.xlu0 %843
        %vm845 = vcmp.eq.f32.partialorder %v842, %v844
        %v846 = vsel %vm845, %v841, -inf
        %847 = vmax.xlane.f32.xlu0 %v846
        %v848 = vpop.xlane.xlu0 %847
        %v849 = vcvt.f32.s32 %v848
        %v850 = vcvt.f32.s32 %v844
        %v851 = vshll.u32 %v850, 16
        %v852 = vadd.s32 %v851, %v849
        %v853 = vand.u32 %v810, 4294967168
        %v854 = vand.u32 %v824, 4294967168
        %v855 = vand.u32 %v838, 4294967168
        %v856 = vand.u32 %v852, 4294967168
        %vm857 = vcmp.le.s32.totalorder %v853, 0
        %vm858 = vcmp.le.s32.totalorder %v854, 0
        %vm859 = vcmp.le.s32.totalorder %v855, 0
        %vm860 = vcmp.le.s32.totalorder %v856, 0
        %vm861 = vcmp.gt.s32.totalorder %v853, 0
        %vm862 = vcmp.gt.s32.totalorder %v854, 0
        %vm863 = vcmp.gt.s32.totalorder %v855, 0
        %vm864 = vcmp.gt.s32.totalorder %v856, 0
        %vm865 = vmor %vm861, %vm857
        %vm866 = vmor %vm862, %vm858
        %vm867 = vmor %vm863, %vm859
        %vm868 = vmor %vm864, %vm860
        %vm869 = vcmp.eq.s32.totalorder %v793, %v810
        %vm870 = vcmp.eq.s32.totalorder %v794, %v824
        %vm871 = vcmp.eq.s32.totalorder %v795, %v838
        %vm872 = vcmp.eq.s32.totalorder %v796, %v852
        %v873 = vsel %vm865, 1, 0
        %v874 = vsel %vm866, 1, 0
        %v875 = vsel %vm867, 1, 0
        %v876 = vsel %vm868, 1, 0
        %vm877 = vcmp.eq.s32.totalorder %v873, 1
        %vm878 = vcmp.eq.s32.totalorder %v874, 1
        %vm879 = vcmp.eq.s32.totalorder %v875, 1
        %vm880 = vcmp.eq.s32.totalorder %v876, 1
        %vm881 = vmand %vm869, %vm877
        %vm882 = vmand %vm870, %vm878
        %vm883 = vmand %vm871, %vm879
        %vm884 = vmand %vm872, %vm880
        %v885 = vsel %vm881, 1.0, 0.0
        %v886 = vsel %vm882, 1.0, 0.0
        %v887 = vsel %vm883, 1.0, 0.0
        %v888 = vsel %vm884, 1.0, 0.0
        %v889 = vsel %vm869, 2147483648, %v793
        %v890 = vsel %vm870, 2147483648, %v794
        %v891 = vsel %vm871, 2147483648, %v795
        %v892 = vsel %vm872, 2147483648, %v796
        %v893 = vand.u32 %v889, 65535
        %v894 = vshra.s32 %v889, 16
        %v895 = vcvt.s32.f32 %v893
        %v896 = vcvt.s32.f32 %v894
        %897 = vmax.xlane.f32.xlu0 %v896
        %v898 = vpop.xlane.xlu0 %897
        %vm899 = vcmp.eq.f32.partialorder %v896, %v898
        %v900 = vsel %vm899, %v895, -inf
        %901 = vmax.xlane.f32.xlu0 %v900
        %v902 = vpop.xlane.xlu0 %901
        %v903 = vcvt.f32.s32 %v902
        %v904 = vcvt.f32.s32 %v898
        %v905 = vshll.u32 %v904, 16
        %v906 = vadd.s32 %v905, %v903
        %v907 = vand.u32 %v890, 65535
        %v908 = vshra.s32 %v890, 16
        %v909 = vcvt.s32.f32 %v907
        %v910 = vcvt.s32.f32 %v908
        %911 = vmax.xlane.f32.xlu0 %v910
        %v912 = vpop.xlane.xlu0 %911
        %vm913 = vcmp.eq.f32.partialorder %v910, %v912
        %v914 = vsel %vm913, %v909, -inf
        %915 = vmax.xlane.f32.xlu0 %v914
        %v916 = vpop.xlane.xlu0 %915
        %v917 = vcvt.f32.s32 %v916
        %v918 = vcvt.f32.s32 %v912
        %v919 = vshll.u32 %v918, 16
        %v920 = vadd.s32 %v919, %v917
        %v921 = vand.u32 %v891, 65535
        %v922 = vshra.s32 %v891, 16
        %v923 = vcvt.s32.f32 %v921
        %v924 = vcvt.s32.f32 %v922
        %925 = vmax.xlane.f32.xlu0 %v924
        %v926 = vpop.xlane.xlu0 %925
        %vm927 = vcmp.eq.f32.partialorder %v924, %v926
        %v928 = vsel %vm927, %v923, -inf
        %929 = vmax.xlane.f32.xlu0 %v928
        %v930 = vpop.xlane.xlu0 %929
        %v931 = vcvt.f32.s32 %v930
        %v932 = vcvt.f32.s32 %v926
        %v933 = vshll.u32 %v932, 16
        %v934 = vadd.s32 %v933, %v931
        %v935 = vand.u32 %v892, 65535
        %v936 = vshra.s32 %v892, 16
        %v937 = vcvt.s32.f32 %v935
        %v938 = vcvt.s32.f32 %v936
        %939 = vmax.xlane.f32.xlu0 %v938
        %v940 = vpop.xlane.xlu0 %939
        %vm941 = vcmp.eq.f32.partialorder %v938, %v940
        %v942 = vsel %vm941, %v937, -inf
        %943 = vmax.xlane.f32.xlu0 %v942
        %v944 = vpop.xlane.xlu0 %943
        %v945 = vcvt.f32.s32 %v944
        %v946 = vcvt.f32.s32 %v940
        %v947 = vshll.u32 %v946, 16
        %v948 = vadd.s32 %v947, %v945
        %v949 = vand.u32 %v906, 4294967168
        %v950 = vand.u32 %v920, 4294967168
        %v951 = vand.u32 %v934, 4294967168
        %v952 = vand.u32 %v948, 4294967168
        %vm953 = vcmp.gt.s32.totalorder %v949, 0
        %vm954 = vcmp.gt.s32.totalorder %v950, 0
        %vm955 = vcmp.gt.s32.totalorder %v951, 0
        %vm956 = vcmp.gt.s32.totalorder %v952, 0
        %vm957 = vmor %vm953, %vm857
        %vm958 = vmor %vm954, %vm858
        %vm959 = vmor %vm955, %vm859
        %vm960 = vmor %vm956, %vm860
        %vm961 = vcmp.eq.s32.totalorder %v889, %v906
        %vm962 = vcmp.eq.s32.totalorder %v890, %v920
        %vm963 = vcmp.eq.s32.totalorder %v891, %v934
        %vm964 = vcmp.eq.s32.totalorder %v892, %v948
        %v965 = vsel %vm957, 1, 0
        %v966 = vsel %vm958, 1, 0
        %v967 = vsel %vm959, 1, 0
        %v968 = vsel %vm960, 1, 0
        %vm969 = vcmp.eq.s32.totalorder %v965, 1
        %vm970 = vcmp.eq.s32.totalorder %v966, 1
        %vm971 = vcmp.eq.s32.totalorder %v967, 1
        %vm972 = vcmp.eq.s32.totalorder %v968, 1
        %vm973 = vmand %vm961, %vm969
        %vm974 = vmand %vm962, %vm970
        %vm975 = vmand %vm963, %vm971
        %vm976 = vmand %vm964, %vm972
        %v977 = vsel %vm973, 1.0, %v885
        %v978 = vsel %vm974, 1.0, %v886
        %v979 = vsel %vm975, 1.0, %v887
        %v980 = vsel %vm976, 1.0, %v888
        %v981 = vsel %vm961, 2147483648, %v889
        %v982 = vsel %vm962, 2147483648, %v890
        %v983 = vsel %vm963, 2147483648, %v891
        %v984 = vsel %vm964, 2147483648, %v892
        %v985 = vand.u32 %v981, 65535
        %v986 = vshra.s32 %v981, 16
        %v987 = vcvt.s32.f32 %v985
        %v988 = vcvt.s32.f32 %v986
        %989 = vmax.xlane.f32.xlu0 %v988
        %v990 = vpop.xlane.xlu0 %989
        %vm991 = vcmp.eq.f32.partialorder %v988, %v990
        %v992 = vsel %vm991, %v987, -inf
        %993 = vmax.xlane.f32.xlu0 %v992
        %v994 = vpop.xlane.xlu0 %993
        %v995 = vcvt.f32.s32 %v994
        %v996 = vcvt.f32.s32 %v990
        %v997 = vshll.u32 %v996, 16
        %v998 = vadd.s32 %v997, %v995
        %v999 = vand.u32 %v982, 65535
        %v1000 = vshra.s32 %v982, 16
        %v1001 = vcvt.s32.f32 %v999
        %v1002 = vcvt.s32.f32 %v1000
        %1003 = vmax.xlane.f32.xlu0 %v1002
        %v1004 = vpop.xlane.xlu0 %1003
        %vm1005 = vcmp.eq.f32.partialorder %v1002, %v1004
        %v1006 = vsel %vm1005, %v1001, -inf
        %1007 = vmax.xlane.f32.xlu0 %v1006
        %v1008 = vpop.xlane.xlu0 %1007
        %v1009 = vcvt.f32.s32 %v1008
        %v1010 = vcvt.f32.s32 %v1004
        %v1011 = vshll.u32 %v1010, 16
        %v1012 = vadd.s32 %v1011, %v1009
        %v1013 = vand.u32 %v983, 65535
        %v1014 = vshra.s32 %v983, 16
        %v1015 = vcvt.s32.f32 %v1013
        %v1016 = vcvt.s32.f32 %v1014
        %1017 = vmax.xlane.f32.xlu0 %v1016
        %v1018 = vpop.xlane.xlu0 %1017
        %vm1019 = vcmp.eq.f32.partialorder %v1016, %v1018
        %v1020 = vsel %vm1019, %v1015, -inf
        %1021 = vmax.xlane.f32.xlu0 %v1020
        %v1022 = vpop.xlane.xlu0 %1021
        %v1023 = vcvt.f32.s32 %v1022
        %v1024 = vcvt.f32.s32 %v1018
        %v1025 = vshll.u32 %v1024, 16
        %v1026 = vadd.s32 %v1025, %v1023
        %v1027 = vand.u32 %v984, 65535
        %v1028 = vshra.s32 %v984, 16
        %v1029 = vcvt.s32.f32 %v1027
        %v1030 = vcvt.s32.f32 %v1028
        %1031 = vmax.xlane.f32.xlu0 %v1030
        %v1032 = vpop.xlane.xlu0 %1031
        %vm1033 = vcmp.eq.f32.partialorder %v1030, %v1032
        %v1034 = vsel %vm1033, %v1029, -inf
        %1035 = vmax.xlane.f32.xlu0 %v1034
        %v1036 = vpop.xlane.xlu0 %1035
        %v1037 = vcvt.f32.s32 %v1036
        %v1038 = vcvt.f32.s32 %v1032
        %v1039 = vshll.u32 %v1038, 16
        %v1040 = vadd.s32 %v1039, %v1037
        %v1041 = vand.u32 %v998, 4294967168
        %v1042 = vand.u32 %v1012, 4294967168
        %v1043 = vand.u32 %v1026, 4294967168
        %v1044 = vand.u32 %v1040, 4294967168
        %vm1045 = vcmp.gt.s32.totalorder %v1041, 0
        %vm1046 = vcmp.gt.s32.totalorder %v1042, 0
        %vm1047 = vcmp.gt.s32.totalorder %v1043, 0
        %vm1048 = vcmp.gt.s32.totalorder %v1044, 0
        %vm1049 = vmor %vm1045, %vm857
        %vm1050 = vmor %vm1046, %vm858
        %vm1051 = vmor %vm1047, %vm859
        %vm1052 = vmor %vm1048, %vm860
        %vm1053 = vcmp.eq.s32.totalorder %v981, %v998
        %vm1054 = vcmp.eq.s32.totalorder %v982, %v1012
        %vm1055 = vcmp.eq.s32.totalorder %v983, %v1026
        %vm1056 = vcmp.eq.s32.totalorder %v984, %v1040
        %v1057 = vsel %vm1049, 1, 0
        %v1058 = vsel %vm1050, 1, 0
        %v1059 = vsel %vm1051, 1, 0
        %v1060 = vsel %vm1052, 1, 0
        %vm1061 = vcmp.eq.s32.totalorder %v1057, 1
        %vm1062 = vcmp.eq.s32.totalorder %v1058, 1
        %vm1063 = vcmp.eq.s32.totalorder %v1059, 1
        %vm1064 = vcmp.eq.s32.totalorder %v1060, 1
        %vm1065 = vmand %vm1053, %vm1061
        %vm1066 = vmand %vm1054, %vm1062
        %vm1067 = vmand %vm1055, %vm1063
        %vm1068 = vmand %vm1056, %vm1064
        %v1069 = vsel %vm1065, 1.0, %v977
        %v1070 = vsel %vm1066, 1.0, %v978
        %v1071 = vsel %vm1067, 1.0, %v979
        %v1072 = vsel %vm1068, 1.0, %v980
        %v1073 = vsel %vm1053, 2147483648, %v981
        %v1074 = vsel %vm1054, 2147483648, %v982
        %v1075 = vsel %vm1055, 2147483648, %v983
        %v1076 = vsel %vm1056, 2147483648, %v984
        %v1077 = vand.u32 %v1073, 65535
        %v1078 = vshra.s32 %v1073, 16
        %v1079 = vcvt.s32.f32 %v1077
        %v1080 = vcvt.s32.f32 %v1078
        %1081 = vmax.xlane.f32.xlu0 %v1080
        %v1082 = vpop.xlane.xlu0 %1081
        %vm1083 = vcmp.eq.f32.partialorder %v1080, %v1082
        %v1084 = vsel %vm1083, %v1079, -inf
        %1085 = vmax.xlane.f32.xlu0 %v1084
        %v1086 = vpop.xlane.xlu0 %1085
        %v1087 = vcvt.f32.s32 %v1086
        %v1088 = vcvt.f32.s32 %v1082
        %v1089 = vshll.u32 %v1088, 16
        %v1090 = vadd.s32 %v1089, %v1087
        %v1091 = vand.u32 %v1074, 65535
        %v1092 = vshra.s32 %v1074, 16
        %v1093 = vcvt.s32.f32 %v1091
        %v1094 = vcvt.s32.f32 %v1092
        %1095 = vmax.xlane.f32.xlu0 %v1094
        %v1096 = vpop.xlane.xlu0 %1095
        %vm1097 = vcmp.eq.f32.partialorder %v1094, %v1096
        %v1098 = vsel %vm1097, %v1093, -inf
        %1099 = vmax.xlane.f32.xlu0 %v1098
        %v1100 = vpop.xlane.xlu0 %1099
        %v1101 = vcvt.f32.s32 %v1100
        %v1102 = vcvt.f32.s32 %v1096
        %v1103 = vshll.u32 %v1102, 16
        %v1104 = vadd.s32 %v1103, %v1101
        %v1105 = vand.u32 %v1075, 65535
        %v1106 = vshra.s32 %v1075, 16
        %v1107 = vcvt.s32.f32 %v1105
        %v1108 = vcvt.s32.f32 %v1106
        %1109 = vmax.xlane.f32.xlu0 %v1108
        %v1110 = vpop.xlane.xlu0 %1109
        %vm1111 = vcmp.eq.f32.partialorder %v1108, %v1110
        %v1112 = vsel %vm1111, %v1107, -inf
        %1113 = vmax.xlane.f32.xlu0 %v1112
        %v1114 = vpop.xlane.xlu0 %1113
        %v1115 = vcvt.f32.s32 %v1114
        %v1116 = vcvt.f32.s32 %v1110
        %v1117 = vshll.u32 %v1116, 16
        %v1118 = vadd.s32 %v1117, %v1115
        %v1119 = vand.u32 %v1076, 65535
        %v1120 = vshra.s32 %v1076, 16
        %v1121 = vcvt.s32.f32 %v1119
        %v1122 = vcvt.s32.f32 %v1120
        %1123 = vmax.xlane.f32.xlu0 %v1122
        %v1124 = vpop.xlane.xlu0 %1123
        %vm1125 = vcmp.eq.f32.partialorder %v1122, %v1124
        %v1126 = vsel %vm1125, %v1121, -inf
        %1127 = vmax.xlane.f32.xlu0 %v1126
        %v1128 = vpop.xlane.xlu0 %1127
        %v1129 = vcvt.f32.s32 %v1128
        %v1130 = vcvt.f32.s32 %v1124
        %v1131 = vshll.u32 %v1130, 16
        %v1132 = vadd.s32 %v1131, %v1129
        %v1133 = vand.u32 %v1090, 4294967168
        %v1134 = vand.u32 %v1104, 4294967168
        %v1135 = vand.u32 %v1118, 4294967168
        %v1136 = vand.u32 %v1132, 4294967168
        %vm1137 = vcmp.gt.s32.totalorder %v1133, 0
        %vm1138 = vcmp.gt.s32.totalorder %v1134, 0
        %vm1139 = vcmp.gt.s32.totalorder %v1135, 0
        %vm1140 = vcmp.gt.s32.totalorder %v1136, 0
        %vm1141 = vmor %vm1137, %vm857
        %vm1142 = vmor %vm1138, %vm858
        %vm1143 = vmor %vm1139, %vm859
        %vm1144 = vmor %vm1140, %vm860
        %vm1145 = vcmp.eq.s32.totalorder %v1073, %v1090
        %vm1146 = vcmp.eq.s32.totalorder %v1074, %v1104
        %vm1147 = vcmp.eq.s32.totalorder %v1075, %v1118
        %vm1148 = vcmp.eq.s32.totalorder %v1076, %v1132
        %v1149 = vsel %vm1141, 1, 0
        %v1150 = vsel %vm1142, 1, 0
        %v1151 = vsel %vm1143, 1, 0
        %v1152 = vsel %vm1144, 1, 0
        %vm1153 = vcmp.eq.s32.totalorder %v1149, 1
        %vm1154 = vcmp.eq.s32.totalorder %v1150, 1
        %vm1155 = vcmp.eq.s32.totalorder %v1151, 1
        %vm1156 = vcmp.eq.s32.totalorder %v1152, 1
        %vm1157 = vmand %vm1145, %vm1153
        %vm1158 = vmand %vm1146, %vm1154
        %vm1159 = vmand %vm1147, %vm1155
        %vm1160 = vmand %vm1148, %vm1156
        %v1161 = vsel %vm1157, 1.0, %v1069
        %v1162 = vsel %vm1158, 1.0, %v1070
        %v1163 = vsel %vm1159, 1.0, %v1071
        %v1164 = vsel %vm1160, 1.0, %v1072
        %v1165 = vsel %vm1145, 2147483648, %v1073
        %v1166 = vsel %vm1146, 2147483648, %v1074
        %v1167 = vsel %vm1147, 2147483648, %v1075
        %v1168 = vsel %vm1148, 2147483648, %v1076
        %v1169 = vand.u32 %v1165, 65535
        %v1170 = vshra.s32 %v1165, 16
        %v1171 = vcvt.s32.f32 %v1169
        %v1172 = vcvt.s32.f32 %v1170
        %1173 = vmax.xlane.f32.xlu0 %v1172
        %v1174 = vpop.xlane.xlu0 %1173
        %vm1175 = vcmp.eq.f32.partialorder %v1172, %v1174
        %v1176 = vsel %vm1175, %v1171, -inf
        %1177 = vmax.xlane.f32.xlu0 %v1176
        %v1178 = vpop.xlane.xlu0 %1177
        %v1179 = vcvt.f32.s32 %v1178
        %v1180 = vcvt.f32.s32 %v1174
        %v1181 = vshll.u32 %v1180, 16
        %v1182 = vadd.s32 %v1181, %v1179
        %v1183 = vand.u32 %v1166, 65535
        %v1184 = vshra.s32 %v1166, 16
        %v1185 = vcvt.s32.f32 %v1183
        %v1186 = vcvt.s32.f32 %v1184
        %1187 = vmax.xlane.f32.xlu0 %v1186
        %v1188 = vpop.xlane.xlu0 %1187
        %vm1189 = vcmp.eq.f32.partialorder %v1186, %v1188
        %v1190 = vsel %vm1189, %v1185, -inf
        %1191 = vmax.xlane.f32.xlu0 %v1190
        %v1192 = vpop.xlane.xlu0 %1191
        %v1193 = vcvt.f32.s32 %v1192
        %v1194 = vcvt.f32.s32 %v1188
        %v1195 = vshll.u32 %v1194, 16
        %v1196 = vadd.s32 %v1195, %v1193
        %v1197 = vand.u32 %v1167, 65535
        %v1198 = vshra.s32 %v1167, 16
        %v1199 = vcvt.s32.f32 %v1197
        %v1200 = vcvt.s32.f32 %v1198
        %1201 = vmax.xlane.f32.xlu0 %v1200
        %v1202 = vpop.xlane.xlu0 %1201
        %vm1203 = vcmp.eq.f32.partialorder %v1200, %v1202
        %v1204 = vsel %vm1203, %v1199, -inf
        %1205 = vmax.xlane.f32.xlu0 %v1204
        %v1206 = vpop.xlane.xlu0 %1205
        %v1207 = vcvt.f32.s32 %v1206
        %v1208 = vcvt.f32.s32 %v1202
        %v1209 = vshll.u32 %v1208, 16
        %v1210 = vadd.s32 %v1209, %v1207
        %v1211 = vand.u32 %v1168, 65535
        %v1212 = vshra.s32 %v1168, 16
        %v1213 = vcvt.s32.f32 %v1211
        %v1214 = vcvt.s32.f32 %v1212
        %1215 = vmax.xlane.f32.xlu0 %v1214
        %v1216 = vpop.xlane.xlu0 %1215
        %vm1217 = vcmp.eq.f32.partialorder %v1214, %v1216
        %v1218 = vsel %vm1217, %v1213, -inf
        %1219 = vmax.xlane.f32.xlu0 %v1218
        %v1220 = vpop.xlane.xlu0 %1219
        %v1221 = vcvt.f32.s32 %v1220
        %v1222 = vcvt.f32.s32 %v1216
        %v1223 = vshll.u32 %v1222, 16
        %v1224 = vadd.s32 %v1223, %v1221
        %v1225 = vand.u32 %v1182, 4294967168
        %v1226 = vand.u32 %v1196, 4294967168
        %v1227 = vand.u32 %v1210, 4294967168
        %v1228 = vand.u32 %v1224, 4294967168
        %vm1229 = vcmp.gt.s32.totalorder %v1225, 0
        %vm1230 = vcmp.gt.s32.totalorder %v1226, 0
        %vm1231 = vcmp.gt.s32.totalorder %v1227, 0
        %vm1232 = vcmp.gt.s32.totalorder %v1228, 0
        %vm1233 = vmor %vm1229, %vm857
        %vm1234 = vmor %vm1230, %vm858
        %vm1235 = vmor %vm1231, %vm859
        %vm1236 = vmor %vm1232, %vm860
        %vm1237 = vcmp.eq.s32.totalorder %v1165, %v1182
        %vm1238 = vcmp.eq.s32.totalorder %v1166, %v1196
        %vm1239 = vcmp.eq.s32.totalorder %v1167, %v1210
        %vm1240 = vcmp.eq.s32.totalorder %v1168, %v1224
        %v1241 = vsel %vm1233, 1, 0
        %v1242 = vsel %vm1234, 1, 0
        %v1243 = vsel %vm1235, 1, 0
        %v1244 = vsel %vm1236, 1, 0
        %vm1245 = vcmp.eq.s32.totalorder %v1241, 1
        %vm1246 = vcmp.eq.s32.totalorder %v1242, 1
        %vm1247 = vcmp.eq.s32.totalorder %v1243, 1
        %vm1248 = vcmp.eq.s32.totalorder %v1244, 1
        %vm1249 = vmand %vm1237, %vm1245
        %vm1250 = vmand %vm1238, %vm1246
        %vm1251 = vmand %vm1239, %vm1247
        %vm1252 = vmand %vm1240, %vm1248
        %v1253 = vsel %vm1249, 1.0, %v1161
        %v1254 = vsel %vm1250, 1.0, %v1162
        %v1255 = vsel %vm1251, 1.0, %v1163
        %v1256 = vsel %vm1252, 1.0, %v1164
        %v1257 = vsel %vm1237, 2147483648, %v1165
        %v1258 = vsel %vm1238, 2147483648, %v1166
        %v1259 = vsel %vm1239, 2147483648, %v1167
        %v1260 = vsel %vm1240, 2147483648, %v1168
        %v1261 = vand.u32 %v1257, 65535
        %v1262 = vshra.s32 %v1257, 16
        %v1263 = vcvt.s32.f32 %v1261
        %v1264 = vcvt.s32.f32 %v1262
        %1265 = vmax.xlane.f32.xlu0 %v1264
        %v1266 = vpop.xlane.xlu0 %1265
        %vm1267 = vcmp.eq.f32.partialorder %v1264, %v1266
        %v1268 = vsel %vm1267, %v1263, -inf
        %1269 = vmax.xlane.f32.xlu0 %v1268
        %v1270 = vpop.xlane.xlu0 %1269
        %v1271 = vcvt.f32.s32 %v1270
        %v1272 = vcvt.f32.s32 %v1266
        %v1273 = vshll.u32 %v1272, 16
        %v1274 = vadd.s32 %v1273, %v1271
        %v1275 = vand.u32 %v1258, 65535
        %v1276 = vshra.s32 %v1258, 16
        %v1277 = vcvt.s32.f32 %v1275
        %v1278 = vcvt.s32.f32 %v1276
        %1279 = vmax.xlane.f32.xlu0 %v1278
        %v1280 = vpop.xlane.xlu0 %1279
        %vm1281 = vcmp.eq.f32.partialorder %v1278, %v1280
        %v1282 = vsel %vm1281, %v1277, -inf
        %1283 = vmax.xlane.f32.xlu0 %v1282
        %v1284 = vpop.xlane.xlu0 %1283
        %v1285 = vcvt.f32.s32 %v1284
        %v1286 = vcvt.f32.s32 %v1280
        %v1287 = vshll.u32 %v1286, 16
        %v1288 = vadd.s32 %v1287, %v1285
        %v1289 = vand.u32 %v1259, 65535
        %v1290 = vshra.s32 %v1259, 16
        %v1291 = vcvt.s32.f32 %v1289
        %v1292 = vcvt.s32.f32 %v1290
        %1293 = vmax.xlane.f32.xlu0 %v1292
        %v1294 = vpop.xlane.xlu0 %1293
        %vm1295 = vcmp.eq.f32.partialorder %v1292, %v1294
        %v1296 = vsel %vm1295, %v1291, -inf
        %1297 = vmax.xlane.f32.xlu0 %v1296
        %v1298 = vpop.xlane.xlu0 %1297
        %v1299 = vcvt.f32.s32 %v1298
        %v1300 = vcvt.f32.s32 %v1294
        %v1301 = vshll.u32 %v1300, 16
        %v1302 = vadd.s32 %v1301, %v1299
        %v1303 = vand.u32 %v1260, 65535
        %v1304 = vshra.s32 %v1260, 16
        %v1305 = vcvt.s32.f32 %v1303
        %v1306 = vcvt.s32.f32 %v1304
        %1307 = vmax.xlane.f32.xlu0 %v1306
        %v1308 = vpop.xlane.xlu0 %1307
        %vm1309 = vcmp.eq.f32.partialorder %v1306, %v1308
        %v1310 = vsel %vm1309, %v1305, -inf
        %1311 = vmax.xlane.f32.xlu0 %v1310
        %v1312 = vpop.xlane.xlu0 %1311
        %v1313 = vcvt.f32.s32 %v1312
        %v1314 = vcvt.f32.s32 %v1308
        %v1315 = vshll.u32 %v1314, 16
        %v1316 = vadd.s32 %v1315, %v1313
        %v1317 = vand.u32 %v1274, 4294967168
        %v1318 = vand.u32 %v1288, 4294967168
        %v1319 = vand.u32 %v1302, 4294967168
        %v1320 = vand.u32 %v1316, 4294967168
        %vm1321 = vcmp.gt.s32.totalorder %v1317, 0
        %vm1322 = vcmp.gt.s32.totalorder %v1318, 0
        %vm1323 = vcmp.gt.s32.totalorder %v1319, 0
        %vm1324 = vcmp.gt.s32.totalorder %v1320, 0
        %vm1325 = vmor %vm1321, %vm857
        %vm1326 = vmor %vm1322, %vm858
        %vm1327 = vmor %vm1323, %vm859
        %vm1328 = vmor %vm1324, %vm860
        %vm1329 = vcmp.eq.s32.totalorder %v1257, %v1274
        %vm1330 = vcmp.eq.s32.totalorder %v1258, %v1288
        %vm1331 = vcmp.eq.s32.totalorder %v1259, %v1302
        %vm1332 = vcmp.eq.s32.totalorder %v1260, %v1316
        %v1333 = vsel %vm1325, 1, 0
        %v1334 = vsel %vm1326, 1, 0
        %v1335 = vsel %vm1327, 1, 0
        %v1336 = vsel %vm1328, 1, 0
        %vm1337 = vcmp.eq.s32.totalorder %v1333, 1
        %vm1338 = vcmp.eq.s32.totalorder %v1334, 1
        %vm1339 = vcmp.eq.s32.totalorder %v1335, 1
        %vm1340 = vcmp.eq.s32.totalorder %v1336, 1
        %vm1341 = vmand %vm1329, %vm1337
        %vm1342 = vmand %vm1330, %vm1338
        %vm1343 = vmand %vm1331, %vm1339
        %vm1344 = vmand %vm1332, %vm1340
        %v1345 = vsel %vm1341, 1.0, %v1253
        %v1346 = vsel %vm1342, 1.0, %v1254
        %v1347 = vsel %vm1343, 1.0, %v1255
        %v1348 = vsel %vm1344, 1.0, %v1256
        %v1349 = vsel %vm1329, 2147483648, %v1257
        %v1350 = vsel %vm1330, 2147483648, %v1258
        %v1351 = vsel %vm1331, 2147483648, %v1259
        %v1352 = vsel %vm1332, 2147483648, %v1260
        %v1353 = vand.u32 %v1349, 65535
        %v1354 = vshra.s32 %v1349, 16
        %v1355 = vcvt.s32.f32 %v1353
        %v1356 = vcvt.s32.f32 %v1354
        %1357 = vmax.xlane.f32.xlu0 %v1356
        %v1358 = vpop.xlane.xlu0 %1357
        %vm1359 = vcmp.eq.f32.partialorder %v1356, %v1358
        %v1360 = vsel %vm1359, %v1355, -inf
        %1361 = vmax.xlane.f32.xlu0 %v1360
        %v1362 = vpop.xlane.xlu0 %1361
        %v1363 = vcvt.f32.s32 %v1362
        %v1364 = vcvt.f32.s32 %v1358
        %v1365 = vshll.u32 %v1364, 16
        %v1366 = vadd.s32 %v1365, %v1363
        %v1367 = vand.u32 %v1350, 65535
        %v1368 = vshra.s32 %v1350, 16
        %v1369 = vcvt.s32.f32 %v1367
        %v1370 = vcvt.s32.f32 %v1368
        %1371 = vmax.xlane.f32.xlu0 %v1370
        %v1372 = vpop.xlane.xlu0 %1371
        %vm1373 = vcmp.eq.f32.partialorder %v1370, %v1372
        %v1374 = vsel %vm1373, %v1369, -inf
        %1375 = vmax.xlane.f32.xlu0 %v1374
        %v1376 = vpop.xlane.xlu0 %1375
        %v1377 = vcvt.f32.s32 %v1376
        %v1378 = vcvt.f32.s32 %v1372
        %v1379 = vshll.u32 %v1378, 16
        %v1380 = vadd.s32 %v1379, %v1377
        %v1381 = vand.u32 %v1351, 65535
        %v1382 = vshra.s32 %v1351, 16
        %v1383 = vcvt.s32.f32 %v1381
        %v1384 = vcvt.s32.f32 %v1382
        %1385 = vmax.xlane.f32.xlu0 %v1384
        %v1386 = vpop.xlane.xlu0 %1385
        %vm1387 = vcmp.eq.f32.partialorder %v1384, %v1386
        %v1388 = vsel %vm1387, %v1383, -inf
        %1389 = vmax.xlane.f32.xlu0 %v1388
        %v1390 = vpop.xlane.xlu0 %1389
        %v1391 = vcvt.f32.s32 %v1390
        %v1392 = vcvt.f32.s32 %v1386
        %v1393 = vshll.u32 %v1392, 16
        %v1394 = vadd.s32 %v1393, %v1391
        %v1395 = vand.u32 %v1352, 65535
        %v1396 = vshra.s32 %v1352, 16
        %v1397 = vcvt.s32.f32 %v1395
        %v1398 = vcvt.s32.f32 %v1396
        %1399 = vmax.xlane.f32.xlu0 %v1398
        %v1400 = vpop.xlane.xlu0 %1399
        %vm1401 = vcmp.eq.f32.partialorder %v1398, %v1400
        %v1402 = vsel %vm1401, %v1397, -inf
        %1403 = vmax.xlane.f32.xlu0 %v1402
        %v1404 = vpop.xlane.xlu0 %1403
        %v1405 = vcvt.f32.s32 %v1404
        %v1406 = vcvt.f32.s32 %v1400
        %v1407 = vshll.u32 %v1406, 16
        %v1408 = vadd.s32 %v1407, %v1405
        %v1409 = vand.u32 %v1366, 4294967168
        %v1410 = vand.u32 %v1380, 4294967168
        %v1411 = vand.u32 %v1394, 4294967168
        %v1412 = vand.u32 %v1408, 4294967168
        %vm1413 = vcmp.gt.s32.totalorder %v1409, 0
        %vm1414 = vcmp.gt.s32.totalorder %v1410, 0
        %vm1415 = vcmp.gt.s32.totalorder %v1411, 0
        %vm1416 = vcmp.gt.s32.totalorder %v1412, 0
        %vm1417 = vmor %vm1413, %vm857
        %vm1418 = vmor %vm1414, %vm858
        %vm1419 = vmor %vm1415, %vm859
        %vm1420 = vmor %vm1416, %vm860
        %vm1421 = vcmp.eq.s32.totalorder %v1349, %v1366
        %vm1422 = vcmp.eq.s32.totalorder %v1350, %v1380
        %vm1423 = vcmp.eq.s32.totalorder %v1351, %v1394
        %vm1424 = vcmp.eq.s32.totalorder %v1352, %v1408
        %v1425 = vsel %vm1417, 1, 0
        %v1426 = vsel %vm1418, 1, 0
        %v1427 = vsel %vm1419, 1, 0
        %v1428 = vsel %vm1420, 1, 0
        %vm1429 = vcmp.eq.s32.totalorder %v1425, 1
        %vm1430 = vcmp.eq.s32.totalorder %v1426, 1
        %vm1431 = vcmp.eq.s32.totalorder %v1427, 1
        %vm1432 = vcmp.eq.s32.totalorder %v1428, 1
        %vm1433 = vmand %vm1421, %vm1429
        %vm1434 = vmand %vm1422, %vm1430
        %vm1435 = vmand %vm1423, %vm1431
        %vm1436 = vmand %vm1424, %vm1432
        %v1437 = vsel %vm1433, 1.0, %v1345
        %v1438 = vsel %vm1434, 1.0, %v1346
        %v1439 = vsel %vm1435, 1.0, %v1347
        %v1440 = vsel %vm1436, 1.0, %v1348
        %v1441 = vsel %vm1421, 2147483648, %v1349
        %v1442 = vsel %vm1422, 2147483648, %v1350
        %v1443 = vsel %vm1423, 2147483648, %v1351
        %v1444 = vsel %vm1424, 2147483648, %v1352
        %v1445 = vand.u32 %v1441, 65535
        %v1446 = vshra.s32 %v1441, 16
        %v1447 = vcvt.s32.f32 %v1445
        %v1448 = vcvt.s32.f32 %v1446
        %1449 = vmax.xlane.f32.xlu0 %v1448
        %v1450 = vpop.xlane.xlu0 %1449
        %vm1451 = vcmp.eq.f32.partialorder %v1448, %v1450
        %v1452 = vsel %vm1451, %v1447, -inf
        %1453 = vmax.xlane.f32.xlu0 %v1452
        %v1454 = vpop.xlane.xlu0 %1453
        %v1455 = vcvt.f32.s32 %v1454
        %v1456 = vcvt.f32.s32 %v1450
        %v1457 = vshll.u32 %v1456, 16
        %v1458 = vadd.s32 %v1457, %v1455
        %v1459 = vand.u32 %v1442, 65535
        %v1460 = vshra.s32 %v1442, 16
        %v1461 = vcvt.s32.f32 %v1459
        %v1462 = vcvt.s32.f32 %v1460
        %1463 = vmax.xlane.f32.xlu0 %v1462
        %v1464 = vpop.xlane.xlu0 %1463
        %vm1465 = vcmp.eq.f32.partialorder %v1462, %v1464
        %v1466 = vsel %vm1465, %v1461, -inf
        %1467 = vmax.xlane.f32.xlu0 %v1466
        %v1468 = vpop.xlane.xlu0 %1467
        %v1469 = vcvt.f32.s32 %v1468
        %v1470 = vcvt.f32.s32 %v1464
        %v1471 = vshll.u32 %v1470, 16
        %v1472 = vadd.s32 %v1471, %v1469
        %v1473 = vand.u32 %v1443, 65535
        %v1474 = vshra.s32 %v1443, 16
        %v1475 = vcvt.s32.f32 %v1473
        %v1476 = vcvt.s32.f32 %v1474
        %1477 = vmax.xlane.f32.xlu0 %v1476
        %v1478 = vpop.xlane.xlu0 %1477
        %vm1479 = vcmp.eq.f32.partialorder %v1476, %v1478
        %v1480 = vsel %vm1479, %v1475, -inf
        %1481 = vmax.xlane.f32.xlu0 %v1480
        %v1482 = vpop.xlane.xlu0 %1481
        %v1483 = vcvt.f32.s32 %v1482
        %v1484 = vcvt.f32.s32 %v1478
        %v1485 = vshll.u32 %v1484, 16
        %v1486 = vadd.s32 %v1485, %v1483
        %v1487 = vand.u32 %v1444, 65535
        %v1488 = vshra.s32 %v1444, 16
        %v1489 = vcvt.s32.f32 %v1487
        %v1490 = vcvt.s32.f32 %v1488
        %1491 = vmax.xlane.f32.xlu0 %v1490
        %v1492 = vpop.xlane.xlu0 %1491
        %vm1493 = vcmp.eq.f32.partialorder %v1490, %v1492
        %v1494 = vsel %vm1493, %v1489, -inf
        %1495 = vmax.xlane.f32.xlu0 %v1494
        %v1496 = vpop.xlane.xlu0 %1495
        %v1497 = vcvt.f32.s32 %v1496
        %v1498 = vcvt.f32.s32 %v1492
        %v1499 = vshll.u32 %v1498, 16
        %v1500 = vadd.s32 %v1499, %v1497
        %v1501 = vand.u32 %v1458, 4294967168
        %v1502 = vand.u32 %v1472, 4294967168
        %v1503 = vand.u32 %v1486, 4294967168
        %v1504 = vand.u32 %v1500, 4294967168
        %vm1505 = vcmp.gt.s32.totalorder %v1501, 0
        %vm1506 = vcmp.gt.s32.totalorder %v1502, 0
        %vm1507 = vcmp.gt.s32.totalorder %v1503, 0
        %vm1508 = vcmp.gt.s32.totalorder %v1504, 0
        %vm1509 = vmor %vm1505, %vm857
        %vm1510 = vmor %vm1506, %vm858
        %vm1511 = vmor %vm1507, %vm859
        %vm1512 = vmor %vm1508, %vm860
        %vm1513 = vcmp.eq.s32.totalorder %v1441, %v1458
        %vm1514 = vcmp.eq.s32.totalorder %v1442, %v1472
        %vm1515 = vcmp.eq.s32.totalorder %v1443, %v1486
        %vm1516 = vcmp.eq.s32.totalorder %v1444, %v1500
        %v1517 = vsel %vm1509, 1, 0
        %v1518 = vsel %vm1510, 1, 0
        %v1519 = vsel %vm1511, 1, 0
        %v1520 = vsel %vm1512, 1, 0
        %vm1521 = vcmp.eq.s32.totalorder %v1517, 1
        %vm1522 = vcmp.eq.s32.totalorder %v1518, 1
        %vm1523 = vcmp.eq.s32.totalorder %v1519, 1
        %vm1524 = vcmp.eq.s32.totalorder %v1520, 1
        %vm1525 = vmand %vm1513, %vm1521
        %vm1526 = vmand %vm1514, %vm1522
        %vm1527 = vmand %vm1515, %vm1523
        %vm1528 = vmand %vm1516, %vm1524
        %v1529 = vsel %vm1525, 1.0, %v1437
        %v1530 = vsel %vm1526, 1.0, %v1438
        %v1531 = vsel %vm1527, 1.0, %v1439
        %v1532 = vsel %vm1528, 1.0, %v1440
        %v1533 = vsel %vm1513, 2147483648, %v1441
        %v1534 = vsel %vm1514, 2147483648, %v1442
        %v1535 = vsel %vm1515, 2147483648, %v1443
        %v1536 = vsel %vm1516, 2147483648, %v1444
        %v1537 = vand.u32 %v1533, 65535
        %v1538 = vshra.s32 %v1533, 16
        %v1539 = vcvt.s32.f32 %v1537
        %v1540 = vcvt.s32.f32 %v1538
        %1541 = vmax.xlane.f32.xlu0 %v1540
        %v1542 = vpop.xlane.xlu0 %1541
        %vm1543 = vcmp.eq.f32.partialorder %v1540, %v1542
        %v1544 = vsel %vm1543, %v1539, -inf
        %1545 = vmax.xlane.f32.xlu0 %v1544
        %v1546 = vpop.xlane.xlu0 %1545
        %v1547 = vcvt.f32.s32 %v1546
        %v1548 = vcvt.f32.s32 %v1542
        %v1549 = vshll.u32 %v1548, 16
        %v1550 = vadd.s32 %v1549, %v1547
        %v1551 = vand.u32 %v1534, 65535
        %v1552 = vshra.s32 %v1534, 16
        %v1553 = vcvt.s32.f32 %v1551
        %v1554 = vcvt.s32.f32 %v1552
        %1555 = vmax.xlane.f32.xlu0 %v1554
        %v1556 = vpop.xlane.xlu0 %1555
        %vm1557 = vcmp.eq.f32.partialorder %v1554, %v1556
        %v1558 = vsel %vm1557, %v1553, -inf
        %1559 = vmax.xlane.f32.xlu0 %v1558
        %v1560 = vpop.xlane.xlu0 %1559
        %v1561 = vcvt.f32.s32 %v1560
        %v1562 = vcvt.f32.s32 %v1556
        %v1563 = vshll.u32 %v1562, 16
        %v1564 = vadd.s32 %v1563, %v1561
        %v1565 = vand.u32 %v1535, 65535
        %v1566 = vshra.s32 %v1535, 16
        %v1567 = vcvt.s32.f32 %v1565
        %v1568 = vcvt.s32.f32 %v1566
        %1569 = vmax.xlane.f32.xlu0 %v1568
        %v1570 = vpop.xlane.xlu0 %1569
        %vm1571 = vcmp.eq.f32.partialorder %v1568, %v1570
        %v1572 = vsel %vm1571, %v1567, -inf
        %1573 = vmax.xlane.f32.xlu0 %v1572
        %v1574 = vpop.xlane.xlu0 %1573
        %v1575 = vcvt.f32.s32 %v1574
        %v1576 = vcvt.f32.s32 %v1570
        %v1577 = vshll.u32 %v1576, 16
        %v1578 = vadd.s32 %v1577, %v1575
        %v1579 = vand.u32 %v1536, 65535
        %v1580 = vshra.s32 %v1536, 16
        %v1581 = vcvt.s32.f32 %v1579
        %v1582 = vcvt.s32.f32 %v1580
        %1583 = vmax.xlane.f32.xlu0 %v1582
        %v1584 = vpop.xlane.xlu0 %1583
        %vm1585 = vcmp.eq.f32.partialorder %v1582, %v1584
        %v1586 = vsel %vm1585, %v1581, -inf
        %1587 = vmax.xlane.f32.xlu0 %v1586
        %v1588 = vpop.xlane.xlu0 %1587
        %v1589 = vcvt.f32.s32 %v1588
        %v1590 = vcvt.f32.s32 %v1584
        %v1591 = vshll.u32 %v1590, 16
        %v1592 = vadd.s32 %v1591, %v1589
        %v1593 = vand.u32 %v1550, 4294967168
        %v1594 = vand.u32 %v1564, 4294967168
        %v1595 = vand.u32 %v1578, 4294967168
        %v1596 = vand.u32 %v1592, 4294967168
        %vm1597 = vcmp.gt.s32.totalorder %v1593, 0
        %vm1598 = vcmp.gt.s32.totalorder %v1594, 0
        %vm1599 = vcmp.gt.s32.totalorder %v1595, 0
        %vm1600 = vcmp.gt.s32.totalorder %v1596, 0
        %vm1601 = vmor %vm1597, %vm857
        %vm1602 = vmor %vm1598, %vm858
        %vm1603 = vmor %vm1599, %vm859
        %vm1604 = vmor %vm1600, %vm860
        %vm1605 = vcmp.eq.s32.totalorder %v1533, %v1550
        %vm1606 = vcmp.eq.s32.totalorder %v1534, %v1564
        %vm1607 = vcmp.eq.s32.totalorder %v1535, %v1578
        %vm1608 = vcmp.eq.s32.totalorder %v1536, %v1592
        %v1609 = vsel %vm1601, 1, 0
        %v1610 = vsel %vm1602, 1, 0
        %v1611 = vsel %vm1603, 1, 0
        %v1612 = vsel %vm1604, 1, 0
        %vm1613 = vcmp.eq.s32.totalorder %v1609, 1
        %vm1614 = vcmp.eq.s32.totalorder %v1610, 1
        %vm1615 = vcmp.eq.s32.totalorder %v1611, 1
        %vm1616 = vcmp.eq.s32.totalorder %v1612, 1
        %vm1617 = vmand %vm1605, %vm1613
        %vm1618 = vmand %vm1606, %vm1614
        %vm1619 = vmand %vm1607, %vm1615
        %vm1620 = vmand %vm1608, %vm1616
        %v1621 = vsel %vm1617, 1.0, %v1529
        %v1622 = vsel %vm1618, 1.0, %v1530
        %v1623 = vsel %vm1619, 1.0, %v1531
        %v1624 = vsel %vm1620, 1.0, %v1532
        %v1625 = vsel %vm1605, 2147483648, %v1533
        %v1626 = vsel %vm1606, 2147483648, %v1534
        %v1627 = vsel %vm1607, 2147483648, %v1535
        %v1628 = vsel %vm1608, 2147483648, %v1536
        %v1629 = vand.u32 %v1625, 65535
        %v1630 = vshra.s32 %v1625, 16
        %v1631 = vcvt.s32.f32 %v1629
        %v1632 = vcvt.s32.f32 %v1630
        %1633 = vmax.xlane.f32.xlu0 %v1632
        %v1634 = vpop.xlane.xlu0 %1633
        %vm1635 = vcmp.eq.f32.partialorder %v1632, %v1634
        %v1636 = vsel %vm1635, %v1631, -inf
        %1637 = vmax.xlane.f32.xlu0 %v1636
        %v1638 = vpop.xlane.xlu0 %1637
        %v1639 = vcvt.f32.s32 %v1638
        %v1640 = vcvt.f32.s32 %v1634
        %v1641 = vshll.u32 %v1640, 16
        %v1642 = vadd.s32 %v1641, %v1639
        %v1643 = vand.u32 %v1626, 65535
        %v1644 = vshra.s32 %v1626, 16
        %v1645 = vcvt.s32.f32 %v1643
        %v1646 = vcvt.s32.f32 %v1644
        %1647 = vmax.xlane.f32.xlu0 %v1646
        %v1648 = vpop.xlane.xlu0 %1647
        %vm1649 = vcmp.eq.f32.partialorder %v1646, %v1648
        %v1650 = vsel %vm1649, %v1645, -inf
        %1651 = vmax.xlane.f32.xlu0 %v1650
        %v1652 = vpop.xlane.xlu0 %1651
        %v1653 = vcvt.f32.s32 %v1652
        %v1654 = vcvt.f32.s32 %v1648
        %v1655 = vshll.u32 %v1654, 16
        %v1656 = vadd.s32 %v1655, %v1653
        %v1657 = vand.u32 %v1627, 65535
        %v1658 = vshra.s32 %v1627, 16
        %v1659 = vcvt.s32.f32 %v1657
        %v1660 = vcvt.s32.f32 %v1658
        %1661 = vmax.xlane.f32.xlu0 %v1660
        %v1662 = vpop.xlane.xlu0 %1661
        %vm1663 = vcmp.eq.f32.partialorder %v1660, %v1662
        %v1664 = vsel %vm1663, %v1659, -inf
        %1665 = vmax.xlane.f32.xlu0 %v1664
        %v1666 = vpop.xlane.xlu0 %1665
        %v1667 = vcvt.f32.s32 %v1666
        %v1668 = vcvt.f32.s32 %v1662
        %v1669 = vshll.u32 %v1668, 16
        %v1670 = vadd.s32 %v1669, %v1667
        %v1671 = vand.u32 %v1628, 65535
        %v1672 = vshra.s32 %v1628, 16
        %v1673 = vcvt.s32.f32 %v1671
        %v1674 = vcvt.s32.f32 %v1672
        %1675 = vmax.xlane.f32.xlu0 %v1674
        %v1676 = vpop.xlane.xlu0 %1675
        %vm1677 = vcmp.eq.f32.partialorder %v1674, %v1676
        %v1678 = vsel %vm1677, %v1673, -inf
        %1679 = vmax.xlane.f32.xlu0 %v1678
        %v1680 = vpop.xlane.xlu0 %1679
        %v1681 = vcvt.f32.s32 %v1680
        %v1682 = vcvt.f32.s32 %v1676
        %v1683 = vshll.u32 %v1682, 16
        %v1684 = vadd.s32 %v1683, %v1681
        %v1685 = vand.u32 %v1642, 4294967168
        %v1686 = vand.u32 %v1656, 4294967168
        %v1687 = vand.u32 %v1670, 4294967168
        %v1688 = vand.u32 %v1684, 4294967168
        %vm1689 = vcmp.gt.s32.totalorder %v1685, 0
        %vm1690 = vcmp.gt.s32.totalorder %v1686, 0
        %vm1691 = vcmp.gt.s32.totalorder %v1687, 0
        %vm1692 = vcmp.gt.s32.totalorder %v1688, 0
        %vm1693 = vmor %vm1689, %vm857
        %vm1694 = vmor %vm1690, %vm858
        %vm1695 = vmor %vm1691, %vm859
        %vm1696 = vmor %vm1692, %vm860
        %vm1697 = vcmp.eq.s32.totalorder %v1625, %v1642
        %vm1698 = vcmp.eq.s32.totalorder %v1626, %v1656
        %vm1699 = vcmp.eq.s32.totalorder %v1627, %v1670
        %vm1700 = vcmp.eq.s32.totalorder %v1628, %v1684
        %v1701 = vsel %vm1693, 1, 0
        %v1702 = vsel %vm1694, 1, 0
        %v1703 = vsel %vm1695, 1, 0
        %v1704 = vsel %vm1696, 1, 0
        %vm1705 = vcmp.eq.s32.totalorder %v1701, 1
        %vm1706 = vcmp.eq.s32.totalorder %v1702, 1
        %vm1707 = vcmp.eq.s32.totalorder %v1703, 1
        %vm1708 = vcmp.eq.s32.totalorder %v1704, 1
        %vm1709 = vmand %vm1697, %vm1705
        %vm1710 = vmand %vm1698, %vm1706
        %vm1711 = vmand %vm1699, %vm1707
        %vm1712 = vmand %vm1700, %vm1708
        %v1713 = vsel %vm1709, 1.0, %v1621
        %v1714 = vsel %vm1710, 1.0, %v1622
        %v1715 = vsel %vm1711, 1.0, %v1623
        %v1716 = vsel %vm1712, 1.0, %v1624
        %v1717 = vsel %vm1697, 2147483648, %v1625
        %v1718 = vsel %vm1698, 2147483648, %v1626
        %v1719 = vsel %vm1699, 2147483648, %v1627
        %v1720 = vsel %vm1700, 2147483648, %v1628
        %v1721 = vand.u32 %v1717, 65535
        %v1722 = vshra.s32 %v1717, 16
        %v1723 = vcvt.s32.f32 %v1721
        %v1724 = vcvt.s32.f32 %v1722
        %1725 = vmax.xlane.f32.xlu0 %v1724
        %v1726 = vpop.xlane.xlu0 %1725
        %vm1727 = vcmp.eq.f32.partialorder %v1724, %v1726
        %v1728 = vsel %vm1727, %v1723, -inf
        %1729 = vmax.xlane.f32.xlu0 %v1728
        %v1730 = vpop.xlane.xlu0 %1729
        %v1731 = vcvt.f32.s32 %v1730
        %v1732 = vcvt.f32.s32 %v1726
        %v1733 = vshll.u32 %v1732, 16
        %v1734 = vadd.s32 %v1733, %v1731
        %v1735 = vand.u32 %v1718, 65535
        %v1736 = vshra.s32 %v1718, 16
        %v1737 = vcvt.s32.f32 %v1735
        %v1738 = vcvt.s32.f32 %v1736
        %1739 = vmax.xlane.f32.xlu0 %v1738
        %v1740 = vpop.xlane.xlu0 %1739
        %vm1741 = vcmp.eq.f32.partialorder %v1738, %v1740
        %v1742 = vsel %vm1741, %v1737, -inf
        %1743 = vmax.xlane.f32.xlu0 %v1742
        %v1744 = vpop.xlane.xlu0 %1743
        %v1745 = vcvt.f32.s32 %v1744
        %v1746 = vcvt.f32.s32 %v1740
        %v1747 = vshll.u32 %v1746, 16
        %v1748 = vadd.s32 %v1747, %v1745
        %v1749 = vand.u32 %v1719, 65535
        %v1750 = vshra.s32 %v1719, 16
        %v1751 = vcvt.s32.f32 %v1749
        %v1752 = vcvt.s32.f32 %v1750
        %1753 = vmax.xlane.f32.xlu0 %v1752
        %v1754 = vpop.xlane.xlu0 %1753
        %vm1755 = vcmp.eq.f32.partialorder %v1752, %v1754
        %v1756 = vsel %vm1755, %v1751, -inf
        %1757 = vmax.xlane.f32.xlu0 %v1756
        %v1758 = vpop.xlane.xlu0 %1757
        %v1759 = vcvt.f32.s32 %v1758
        %v1760 = vcvt.f32.s32 %v1754
        %v1761 = vshll.u32 %v1760, 16
        %v1762 = vadd.s32 %v1761, %v1759
        %v1763 = vand.u32 %v1720, 65535
        %v1764 = vshra.s32 %v1720, 16
        %v1765 = vcvt.s32.f32 %v1763
        %v1766 = vcvt.s32.f32 %v1764
        %1767 = vmax.xlane.f32.xlu0 %v1766
        %v1768 = vpop.xlane.xlu0 %1767
        %vm1769 = vcmp.eq.f32.partialorder %v1766, %v1768
        %v1770 = vsel %vm1769, %v1765, -inf
        %1771 = vmax.xlane.f32.xlu0 %v1770
        %v1772 = vpop.xlane.xlu0 %1771
        %v1773 = vcvt.f32.s32 %v1772
        %v1774 = vcvt.f32.s32 %v1768
        %v1775 = vshll.u32 %v1774, 16
        %v1776 = vadd.s32 %v1775, %v1773
        %v1777 = vand.u32 %v1734, 4294967168
        %v1778 = vand.u32 %v1748, 4294967168
        %v1779 = vand.u32 %v1762, 4294967168
        %v1780 = vand.u32 %v1776, 4294967168
        %vm1781 = vcmp.gt.s32.totalorder %v1777, 0
        %vm1782 = vcmp.gt.s32.totalorder %v1778, 0
        %vm1783 = vcmp.gt.s32.totalorder %v1779, 0
        %vm1784 = vcmp.gt.s32.totalorder %v1780, 0
        %vm1785 = vmor %vm1781, %vm857
        %vm1786 = vmor %vm1782, %vm858
        %vm1787 = vmor %vm1783, %vm859
        %vm1788 = vmor %vm1784, %vm860
        %vm1789 = vcmp.eq.s32.totalorder %v1717, %v1734
        %vm1790 = vcmp.eq.s32.totalorder %v1718, %v1748
        %vm1791 = vcmp.eq.s32.totalorder %v1719, %v1762
        %vm1792 = vcmp.eq.s32.totalorder %v1720, %v1776
        %v1793 = vsel %vm1785, 1, 0
        %v1794 = vsel %vm1786, 1, 0
        %v1795 = vsel %vm1787, 1, 0
        %v1796 = vsel %vm1788, 1, 0
        %vm1797 = vcmp.eq.s32.totalorder %v1793, 1
        %vm1798 = vcmp.eq.s32.totalorder %v1794, 1
        %vm1799 = vcmp.eq.s32.totalorder %v1795, 1
        %vm1800 = vcmp.eq.s32.totalorder %v1796, 1
        %vm1801 = vmand %vm1789, %vm1797
        %vm1802 = vmand %vm1790, %vm1798
        %vm1803 = vmand %vm1791, %vm1799
        %vm1804 = vmand %vm1792, %vm1800
        %v1805 = vsel %vm1801, 1.0, %v1713
        %v1806 = vsel %vm1802, 1.0, %v1714
        %v1807 = vsel %vm1803, 1.0, %v1715
        %v1808 = vsel %vm1804, 1.0, %v1716
        %v1809 = vsel %vm1789, 2147483648, %v1717
        %v1810 = vsel %vm1790, 2147483648, %v1718
        %v1811 = vsel %vm1791, 2147483648, %v1719
        %v1812 = vsel %vm1792, 2147483648, %v1720
        %v1813 = vand.u32 %v1809, 65535
        %v1814 = vshra.s32 %v1809, 16
        %v1815 = vcvt.s32.f32 %v1813
        %v1816 = vcvt.s32.f32 %v1814
        %1817 = vmax.xlane.f32.xlu0 %v1816
        %v1818 = vpop.xlane.xlu0 %1817
        %vm1819 = vcmp.eq.f32.partialorder %v1816, %v1818
        %v1820 = vsel %vm1819, %v1815, -inf
        %1821 = vmax.xlane.f32.xlu0 %v1820
        %v1822 = vpop.xlane.xlu0 %1821
        %v1823 = vcvt.f32.s32 %v1822
        %v1824 = vcvt.f32.s32 %v1818
        %v1825 = vshll.u32 %v1824, 16
        %v1826 = vadd.s32 %v1825, %v1823
        %v1827 = vand.u32 %v1810, 65535
        %v1828 = vshra.s32 %v1810, 16
        %v1829 = vcvt.s32.f32 %v1827
        %v1830 = vcvt.s32.f32 %v1828
        %1831 = vmax.xlane.f32.xlu0 %v1830
        %v1832 = vpop.xlane.xlu0 %1831
        %vm1833 = vcmp.eq.f32.partialorder %v1830, %v1832
        %v1834 = vsel %vm1833, %v1829, -inf
        %1835 = vmax.xlane.f32.xlu0 %v1834
        %v1836 = vpop.xlane.xlu0 %1835
        %v1837 = vcvt.f32.s32 %v1836
        %v1838 = vcvt.f32.s32 %v1832
        %v1839 = vshll.u32 %v1838, 16
        %v1840 = vadd.s32 %v1839, %v1837
        %v1841 = vand.u32 %v1811, 65535
        %v1842 = vshra.s32 %v1811, 16
        %v1843 = vcvt.s32.f32 %v1841
        %v1844 = vcvt.s32.f32 %v1842
        %1845 = vmax.xlane.f32.xlu0 %v1844
        %v1846 = vpop.xlane.xlu0 %1845
        %vm1847 = vcmp.eq.f32.partialorder %v1844, %v1846
        %v1848 = vsel %vm1847, %v1843, -inf
        %1849 = vmax.xlane.f32.xlu0 %v1848
        %v1850 = vpop.xlane.xlu0 %1849
        %v1851 = vcvt.f32.s32 %v1850
        %v1852 = vcvt.f32.s32 %v1846
        %v1853 = vshll.u32 %v1852, 16
        %v1854 = vadd.s32 %v1853, %v1851
        %v1855 = vand.u32 %v1812, 65535
        %v1856 = vshra.s32 %v1812, 16
        %v1857 = vcvt.s32.f32 %v1855
        %v1858 = vcvt.s32.f32 %v1856
        %1859 = vmax.xlane.f32.xlu0 %v1858
        %v1860 = vpop.xlane.xlu0 %1859
        %vm1861 = vcmp.eq.f32.partialorder %v1858, %v1860
        %v1862 = vsel %vm1861, %v1857, -inf
        %1863 = vmax.xlane.f32.xlu0 %v1862
        %v1864 = vpop.xlane.xlu0 %1863
        %v1865 = vcvt.f32.s32 %v1864
        %v1866 = vcvt.f32.s32 %v1860
        %v1867 = vshll.u32 %v1866, 16
        %v1868 = vadd.s32 %v1867, %v1865
        %v1869 = vand.u32 %v1826, 4294967168
        %v1870 = vand.u32 %v1840, 4294967168
        %v1871 = vand.u32 %v1854, 4294967168
        %v1872 = vand.u32 %v1868, 4294967168
        %vm1873 = vcmp.gt.s32.totalorder %v1869, 0
        %vm1874 = vcmp.gt.s32.totalorder %v1870, 0
        %vm1875 = vcmp.gt.s32.totalorder %v1871, 0
        %vm1876 = vcmp.gt.s32.totalorder %v1872, 0
        %vm1877 = vmor %vm1873, %vm857
        %vm1878 = vmor %vm1874, %vm858
        %vm1879 = vmor %vm1875, %vm859
        %vm1880 = vmor %vm1876, %vm860
        %vm1881 = vcmp.eq.s32.totalorder %v1809, %v1826
        %vm1882 = vcmp.eq.s32.totalorder %v1810, %v1840
        %vm1883 = vcmp.eq.s32.totalorder %v1811, %v1854
        %vm1884 = vcmp.eq.s32.totalorder %v1812, %v1868
        %v1885 = vsel %vm1877, 1, 0
        %v1886 = vsel %vm1878, 1, 0
        %v1887 = vsel %vm1879, 1, 0
        %v1888 = vsel %vm1880, 1, 0
        %vm1889 = vcmp.eq.s32.totalorder %v1885, 1
        %vm1890 = vcmp.eq.s32.totalorder %v1886, 1
        %vm1891 = vcmp.eq.s32.totalorder %v1887, 1
        %vm1892 = vcmp.eq.s32.totalorder %v1888, 1
        %vm1893 = vmand %vm1881, %vm1889
        %vm1894 = vmand %vm1882, %vm1890
        %vm1895 = vmand %vm1883, %vm1891
        %vm1896 = vmand %vm1884, %vm1892
        %v1897 = vsel %vm1893, 1.0, %v1805
        %v1898 = vsel %vm1894, 1.0, %v1806
        %v1899 = vsel %vm1895, 1.0, %v1807
        %v1900 = vsel %vm1896, 1.0, %v1808
        %v1901 = vsel %vm1881, 2147483648, %v1809
        %v1902 = vsel %vm1882, 2147483648, %v1810
        %v1903 = vsel %vm1883, 2147483648, %v1811
        %v1904 = vsel %vm1884, 2147483648, %v1812
        %v1905 = vand.u32 %v1901, 65535
        %v1906 = vshra.s32 %v1901, 16
        %v1907 = vcvt.s32.f32 %v1905
        %v1908 = vcvt.s32.f32 %v1906
        %1909 = vmax.xlane.f32.xlu0 %v1908
        %v1910 = vpop.xlane.xlu0 %1909
        %vm1911 = vcmp.eq.f32.partialorder %v1908, %v1910
        %v1912 = vsel %vm1911, %v1907, -inf
        %1913 = vmax.xlane.f32.xlu0 %v1912
        %v1914 = vpop.xlane.xlu0 %1913
        %v1915 = vcvt.f32.s32 %v1914
        %v1916 = vcvt.f32.s32 %v1910
        %v1917 = vshll.u32 %v1916, 16
        %v1918 = vadd.s32 %v1917, %v1915
        %v1919 = vand.u32 %v1902, 65535
        %v1920 = vshra.s32 %v1902, 16
        %v1921 = vcvt.s32.f32 %v1919
        %v1922 = vcvt.s32.f32 %v1920
        %1923 = vmax.xlane.f32.xlu0 %v1922
        %v1924 = vpop.xlane.xlu0 %1923
        %vm1925 = vcmp.eq.f32.partialorder %v1922, %v1924
        %v1926 = vsel %vm1925, %v1921, -inf
        %1927 = vmax.xlane.f32.xlu0 %v1926
        %v1928 = vpop.xlane.xlu0 %1927
        %v1929 = vcvt.f32.s32 %v1928
        %v1930 = vcvt.f32.s32 %v1924
        %v1931 = vshll.u32 %v1930, 16
        %v1932 = vadd.s32 %v1931, %v1929
        %v1933 = vand.u32 %v1903, 65535
        %v1934 = vshra.s32 %v1903, 16
        %v1935 = vcvt.s32.f32 %v1933
        %v1936 = vcvt.s32.f32 %v1934
        %1937 = vmax.xlane.f32.xlu0 %v1936
        %v1938 = vpop.xlane.xlu0 %1937
        %vm1939 = vcmp.eq.f32.partialorder %v1936, %v1938
        %v1940 = vsel %vm1939, %v1935, -inf
        %1941 = vmax.xlane.f32.xlu0 %v1940
        %v1942 = vpop.xlane.xlu0 %1941
        %v1943 = vcvt.f32.s32 %v1942
        %v1944 = vcvt.f32.s32 %v1938
        %v1945 = vshll.u32 %v1944, 16
        %v1946 = vadd.s32 %v1945, %v1943
        %v1947 = vand.u32 %v1904, 65535
        %v1948 = vshra.s32 %v1904, 16
        %v1949 = vcvt.s32.f32 %v1947
        %v1950 = vcvt.s32.f32 %v1948
        %1951 = vmax.xlane.f32.xlu0 %v1950
        %v1952 = vpop.xlane.xlu0 %1951
        %vm1953 = vcmp.eq.f32.partialorder %v1950, %v1952
        %v1954 = vsel %vm1953, %v1949, -inf
        %1955 = vmax.xlane.f32.xlu0 %v1954
        %v1956 = vpop.xlane.xlu0 %1955
        %v1957 = vcvt.f32.s32 %v1956
        %v1958 = vcvt.f32.s32 %v1952
        %v1959 = vshll.u32 %v1958, 16
        %v1960 = vadd.s32 %v1959, %v1957
        %v1961 = vand.u32 %v1918, 4294967168
        %v1962 = vand.u32 %v1932, 4294967168
        %v1963 = vand.u32 %v1946, 4294967168
        %v1964 = vand.u32 %v1960, 4294967168
        %vm1965 = vcmp.gt.s32.totalorder %v1961, 0
        %vm1966 = vcmp.gt.s32.totalorder %v1962, 0
        %vm1967 = vcmp.gt.s32.totalorder %v1963, 0
        %vm1968 = vcmp.gt.s32.totalorder %v1964, 0
        %vm1969 = vmor %vm1965, %vm857
        %vm1970 = vmor %vm1966, %vm858
        %vm1971 = vmor %vm1967, %vm859
        %vm1972 = vmor %vm1968, %vm860
        %vm1973 = vcmp.eq.s32.totalorder %v1901, %v1918
        %vm1974 = vcmp.eq.s32.totalorder %v1902, %v1932
        %vm1975 = vcmp.eq.s32.totalorder %v1903, %v1946
        %vm1976 = vcmp.eq.s32.totalorder %v1904, %v1960
        %v1977 = vsel %vm1969, 1, 0
        %v1978 = vsel %vm1970, 1, 0
        %v1979 = vsel %vm1971, 1, 0
        %v1980 = vsel %vm1972, 1, 0
        %vm1981 = vcmp.eq.s32.totalorder %v1977, 1
        %vm1982 = vcmp.eq.s32.totalorder %v1978, 1
        %vm1983 = vcmp.eq.s32.totalorder %v1979, 1
        %vm1984 = vcmp.eq.s32.totalorder %v1980, 1
        %vm1985 = vmand %vm1973, %vm1981
        %vm1986 = vmand %vm1974, %vm1982
        %vm1987 = vmand %vm1975, %vm1983
        %vm1988 = vmand %vm1976, %vm1984
        %v1989 = vsel %vm1985, 1.0, %v1897
        %v1990 = vsel %vm1986, 1.0, %v1898
        %v1991 = vsel %vm1987, 1.0, %v1899
        %v1992 = vsel %vm1988, 1.0, %v1900
        %1993 = vadd.xlane.f32.xlu0 %v1989
        %v1994 = vpop.xlane.xlu0 %1993
        %1995 = vadd.xlane.f32.xlu0 %v1990
        %v1996 = vpop.xlane.xlu0 %1995
        %1997 = vadd.xlane.f32.xlu0 %v1991
        %v1998 = vpop.xlane.xlu0 %1997
        %1999 = vadd.xlane.f32.xlu0 %v1992
        %v2000 = vpop.xlane.xlu0 %1999
        %v2001 = vrcp.pop %v1994
        %v2002 = vmul.f32 1.0, %v2001
        %v2003 = vrcp.pop %v1996
        %v2004 = vmul.f32 1.0, %v2003
        %v2005 = vrcp.pop %v1998
        %v2006 = vmul.f32 1.0, %v2005
        %v2007 = vrcp.pop %v2000
        %v2008 = vmul.f32 1.0, %v2007
        %v2009 = vmul.f32 %v1989, %v2002
        %v2010 = vmul.f32 %v1990, %v2004
        %v2011 = vmul.f32 %v1991, %v2006
        %v2012 = vmul.f32 %v1992, %v2008
        %2013 = vmatprep.subr.mxu0 0.0
        %2014 = vmatpush1.msra.mxu0 %v628
        %2015 = vmatprep.subr.mxu0 0.0
        %2016 = vmatpush1.msra.mxu0 %v633
        %2017 = vmatprep.subr.mxu0 0.0
        %2018 = vmatpush1.msra.mxu0 %v638
        %2019 = vmatprep.subr.mxu0 0.0
        %2020 = vmatpush1.msra.mxu0 %v643
        %2021 = vmatprep.subr.mxu0 0.0
        %2022 = vmatpush1.msra.mxu0 %v648
        %2023 = vmatprep.subr.mxu0 0.0
        %2024 = vmatpush1.msra.mxu0 %v653
        %2025 = vmatprep.subr.mxu0 0.0
        %2026 = vmatpush1.msra.mxu0 %v658
        %2027 = vmatprep.subr.mxu0 0.0
        %2028 = vmatpush1.msra.mxu0 %v663
        %2029 = vmatprep.subr.mxu0 0.0
        %2030 = vmatpush1.msra.mxu0 %v668
        %2031 = vmatprep.subr.mxu0 0.0
        %2032 = vmatpush1.msra.mxu0 %v673
        %2033 = vmatprep.subr.mxu0 0.0
        %2034 = vmatpush1.msra.mxu0 %v678
        %2035 = vmatprep.subr.mxu0 0.0
        %2036 = vmatpush1.msra.mxu0 %v683
        %2037 = vmatprep.subr.mxu0 0.0
        %2038 = vmatpush1.msra.mxu0 %v688
        %2039 = vmatprep.subr.mxu0 0.0
        %2040 = vmatpush1.msra.mxu0 %v693
        %2041 = vmatprep.subr.mxu0 0.0
        %2042 = vmatpush1.msra.mxu0 %v698
        %2043 = vmatprep.subr.mxu0 0.0
        %2044 = vmatpush1.msra.mxu0 %v703
        %2045 = vmatprep.subr.mxu0 0.0
        %2046 = vmatpush1.msra.mxu0 0.0
        %2047 = vmatprep.subr.mxu0 0.0
        %2048 = vmatpush1.msra.mxu0 0.0
        %2049 = vmatprep.subr.mxu0 0.0
        %2050 = vmatpush1.msra.mxu0 0.0
        %2051 = vmatprep.subr.mxu0 0.0
        %2052 = vmatpush1.msra.mxu0 0.0
        %2053 = vmatprep.subr.mxu0 0.0
        %2054 = vmatpush1.msra.mxu0 0.0
        %2055 = vmatprep.subr.mxu0 0.0
        %2056 = vmatpush1.msra.mxu0 0.0
        %2057 = vmatprep.subr.mxu0 0.0
        %2058 = vmatpush1.msra.mxu0 0.0
        %2059 = vmatprep.subr.mxu0 0.0
        %2060 = vmatpush1.msra.mxu0 0.0
        %2061 = vmatprep.subr.mxu0 0.0
        %2062 = vmatpush1.msra.mxu0 0.0
        %2063 = vmatprep.subr.mxu0 0.0
        %2064 = vmatpush1.msra.mxu0 0.0
        %2065 = vmatprep.subr.mxu0 0.0
        %2066 = vmatpush1.msra.mxu0 0.0
        %2067 = vmatprep.subr.mxu0 0.0
        %2068 = vmatpush1.msra.mxu0 0.0
        %2069 = vmatprep.subr.mxu0 0.0
        %2070 = vmatpush1.msra.mxu0 0.0
        %2071 = vmatprep.subr.mxu0 0.0
        %2072 = vmatpush1.msra.mxu0 0.0
        %2073 = vmatprep.subr.mxu0 0.0
        %2074 = vmatpush1.msra.mxu0 0.0
        %2075 = vmatprep.subr.mxu0 0.0
        %2076 = vmatpush1.msra.mxu0 0.0
        %2077 = vmatprep.mubr.f32.mxu0 0.0
        %2078 = vmatmul.mubr.f32.gmra.mrb[0].mxu0 %v2009
        %v2079 = vpop.f32.mrb[0].mxu0
        %v2080 = vadd.f32 0.0, %v2079
        %v2081 = vpop.f32.mrb[0].mxu0
        %2082 = vmatprep.mubr.f32.mxu0 0.0
        %2083 = vmatmul.mubr.f32.gmra.mrb[0].mxu0 %v2010
        %v2084 = vpop.f32.mrb[0].mxu0
        %v2085 = vadd.f32 0.0, %v2084
        %v2086 = vpop.f32.mrb[0].mxu0
        %2087 = vmatprep.mubr.f32.mxu0 0.0
        %2088 = vmatmul.mubr.f32.gmra.mrb[0].mxu0 %v2011
        %v2089 = vpop.f32.mrb[0].mxu0
        %v2090 = vadd.f32 0.0, %v2089
        %v2091 = vpop.f32.mrb[0].mxu0
        %2092 = vmatprep.mubr.f32.mxu0 0.0
        %2093 = vmatmul.mubr.f32.gmra.mrb[0].mxu0 %v2012
        %v2094 = vpop.f32.mrb[0].mxu0
        %v2095 = vadd.f32 0.0, %v2094
        %v2096 = vpop.f32.mrb[0].mxu0
        %2097 = vdwg.mxu0
        %2098 = vmatprep.subr.mxu0 0.0
        %2099 = vmatpush1.msra.mxu0 %v722
        %2100 = vmatprep.subr.mxu0 0.0
        %2101 = vmatpush1.msra.mxu0 %v723
        %2102 = vmatprep.subr.mxu0 0.0
        %2103 = vmatpush1.msra.mxu0 %v724
        %2104 = vmatprep.subr.mxu0 0.0
        %2105 = vmatpush1.msra.mxu0 %v725
        %2106 = vmatprep.subr.mxu0 0.0
        %2107 = vmatpush1.msra.mxu0 %v726
        %2108 = vmatprep.subr.mxu0 0.0
        %2109 = vmatpush1.msra.mxu0 %v727
        %2110 = vmatprep.subr.mxu0 0.0
        %2111 = vmatpush1.msra.mxu0 %v728
        %2112 = vmatprep.subr.mxu0 0.0
        %2113 = vmatpush1.msra.mxu0 %v729
        %2114 = vmatprep.subr.mxu0 0.0
        %2115 = vmatpush1.msra.mxu0 %v730
        %2116 = vmatprep.subr.mxu0 0.0
        %2117 = vmatpush1.msra.mxu0 %v731
        %2118 = vmatprep.subr.mxu0 0.0
        %2119 = vmatpush1.msra.mxu0 %v732
        %2120 = vmatprep.subr.mxu0 0.0
        %2121 = vmatpush1.msra.mxu0 %v733
        %2122 = vmatprep.subr.mxu0 0.0
        %2123 = vmatpush1.msra.mxu0 %v734
        %2124 = vmatprep.subr.mxu0 0.0
        %2125 = vmatpush1.msra.mxu0 %v735
        %2126 = vmatprep.subr.mxu0 0.0
        %2127 = vmatpush1.msra.mxu0 %v736
        %2128 = vmatprep.subr.mxu0 0.0
        %2129 = vmatpush1.msra.mxu0 %v737
        %2130 = vmatprep.subr.mxu0 0.0
        %2131 = vmatpush1.msra.mxu0 0.0
        %2132 = vmatprep.subr.mxu0 0.0
        %2133 = vmatpush1.msra.mxu0 0.0
        %2134 = vmatprep.subr.mxu0 0.0
        %2135 = vmatpush1.msra.mxu0 0.0
        %2136 = vmatprep.subr.mxu0 0.0
        %2137 = vmatpush1.msra.mxu0 0.0
        %2138 = vmatprep.subr.mxu0 0.0
        %2139 = vmatpush1.msra.mxu0 0.0
        %2140 = vmatprep.subr.mxu0 0.0
        %2141 = vmatpush1.msra.mxu0 0.0
        %2142 = vmatprep.subr.mxu0 0.0
        %2143 = vmatpush1.msra.mxu0 0.0
        %2144 = vmatprep.subr.mxu0 0.0
        %2145 = vmatpush1.msra.mxu0 0.0
        %2146 = vmatprep.subr.mxu0 0.0
        %2147 = vmatpush1.msra.mxu0 0.0
        %2148 = vmatprep.subr.mxu0 0.0
        %2149 = vmatpush1.msra.mxu0 0.0
        %2150 = vmatprep.subr.mxu0 0.0
        %2151 = vmatpush1.msra.mxu0 0.0
        %2152 = vmatprep.subr.mxu0 0.0
        %2153 = vmatpush1.msra.mxu0 0.0
        %2154 = vmatprep.subr.mxu0 0.0
        %2155 = vmatpush1.msra.mxu0 0.0
        %2156 = vmatprep.subr.mxu0 0.0
        %2157 = vmatpush1.msra.mxu0 0.0
        %2158 = vmatprep.subr.mxu0 0.0
        %2159 = vmatpush1.msra.mxu0 0.0
        %2160 = vmatprep.subr.mxu0 0.0
        %2161 = vmatpush1.msra.mxu0 0.0
        %2162 = vmatprep.mubr.f32.mxu0 0.0
        %2163 = vmatmul.mubr.f32.gmra.mrb[0].mxu0 %v2080
        %v2164 = vpop.f32.mrb[0].mxu0
        %v2165 = vadd.f32 0.0, %v2164
        %v2166 = vpop.f32.mrb[0].mxu0
        %2167 = vmatprep.mubr.f32.mxu0 0.0
        %2168 = vmatmul.mubr.f32.gmra.mrb[0].mxu0 %v2085
        %v2169 = vpop.f32.mrb[0].mxu0
        %v2170 = vadd.f32 0.0, %v2169
        %v2171 = vpop.f32.mrb[0].mxu0
        %2172 = vmatprep.mubr.f32.mxu0 0.0
        %2173 = vmatmul.mubr.f32.gmra.mrb[0].mxu0 %v2090
        %v2174 = vpop.f32.mrb[0].mxu0
        %v2175 = vadd.f32 0.0, %v2174
        %v2176 = vpop.f32.mrb[0].mxu0
        %2177 = vmatprep.mubr.f32.mxu0 0.0
        %2178 = vmatmul.mubr.f32.gmra.mrb[0].mxu0 %v2095
        %v2179 = vpop.f32.mrb[0].mxu0
        %v2180 = vadd.f32 0.0, %v2179
        %v2181 = vpop.f32.mrb[0].mxu0
        %2182 = vdwg.mxu0
        %2183 = vmatprep.subr.mxu0 0.0
        %2184 = vmatpush1.msra.mxu0 %v706
        %2185 = vmatprep.subr.mxu0 0.0
        %2186 = vmatpush1.msra.mxu0 %v707
        %2187 = vmatprep.subr.mxu0 0.0
        %2188 = vmatpush1.msra.mxu0 %v708
        %2189 = vmatprep.subr.mxu0 0.0
        %2190 = vmatpush1.msra.mxu0 %v709
        %2191 = vmatprep.subr.mxu0 0.0
        %2192 = vmatpush1.msra.mxu0 %v710
        %2193 = vmatprep.subr.mxu0 0.0
        %2194 = vmatpush1.msra.mxu0 %v711
        %2195 = vmatprep.subr.mxu0 0.0
        %2196 = vmatpush1.msra.mxu0 %v712
        %2197 = vmatprep.subr.mxu0 0.0
        %2198 = vmatpush1.msra.mxu0 %v713
        %2199 = vmatprep.subr.mxu0 0.0
        %2200 = vmatpush1.msra.mxu0 %v714
        %2201 = vmatprep.subr.mxu0 0.0
        %2202 = vmatpush1.msra.mxu0 %v715
        %2203 = vmatprep.subr.mxu0 0.0
        %2204 = vmatpush1.msra.mxu0 %v716
        %2205 = vmatprep.subr.mxu0 0.0
        %2206 = vmatpush1.msra.mxu0 %v717
        %2207 = vmatprep.subr.mxu0 0.0
        %2208 = vmatpush1.msra.mxu0 %v718
        %2209 = vmatprep.subr.mxu0 0.0
        %2210 = vmatpush1.msra.mxu0 %v719
        %2211 = vmatprep.subr.mxu0 0.0
        %2212 = vmatpush1.msra.mxu0 %v720
        %2213 = vmatprep.subr.mxu0 0.0
        %2214 = vmatpush1.msra.mxu0 %v721
        %2215 = vmatprep.subr.mxu0 0.0
        %2216 = vmatpush1.msra.mxu0 0.0
        %2217 = vmatprep.subr.mxu0 0.0
        %2218 = vmatpush1.msra.mxu0 0.0
        %2219 = vmatprep.subr.mxu0 0.0
        %2220 = vmatpush1.msra.mxu0 0.0
        %2221 = vmatprep.subr.mxu0 0.0
        %2222 = vmatpush1.msra.mxu0 0.0
        %2223 = vmatprep.subr.mxu0 0.0
        %2224 = vmatpush1.msra.mxu0 0.0
        %2225 = vmatprep.subr.mxu0 0.0
        %2226 = vmatpush1.msra.mxu0 0.0
        %2227 = vmatprep.subr.mxu0 0.0
        %2228 = vmatpush1.msra.mxu0 0.0
        %2229 = vmatprep.subr.mxu0 0.0
        %2230 = vmatpush1.msra.mxu0 0.0
        %2231 = vmatprep.subr.mxu0 0.0
        %2232 = vmatpush1.msra.mxu0 0.0
        %2233 = vmatprep.subr.mxu0 0.0
        %2234 = vmatpush1.msra.mxu0 0.0
        %2235 = vmatprep.subr.mxu0 0.0
        %2236 = vmatpush1.msra.mxu0 0.0
        %2237 = vmatprep.subr.mxu0 0.0
        %2238 = vmatpush1.msra.mxu0 0.0
        %2239 = vmatprep.subr.mxu0 0.0
        %2240 = vmatpush1.msra.mxu0 0.0
        %2241 = vmatprep.subr.mxu0 0.0
        %2242 = vmatpush1.msra.mxu0 0.0
        %2243 = vmatprep.subr.mxu0 0.0
        %2244 = vmatpush1.msra.mxu0 0.0
        %2245 = vmatprep.subr.mxu0 0.0
        %2246 = vmatpush1.msra.mxu0 0.0
        %2247 = vmatprep.mubr.f32.mxu0 0.0
        %2248 = vmatmul.mubr.f32.gmra.mrb[0].mxu0 %v628
        %v2249 = vpop.f32.mrb[0].mxu0
        %v2250 = vadd.f32 %v2165, %v2249
        %v2251 = vpop.f32.mrb[0].mxu0
        %2252 = vmatprep.mubr.f32.mxu0 0.0
        %2253 = vmatmul.mubr.f32.gmra.mrb[0].mxu0 %v633
        %v2254 = vpop.f32.mrb[0].mxu0
        %v2255 = vadd.f32 %v2170, %v2254
        %v2256 = vpop.f32.mrb[0].mxu0
        %2257 = vmatprep.mubr.f32.mxu0 0.0
        %2258 = vmatmul.mubr.f32.gmra.mrb[0].mxu0 %v638
        %v2259 = vpop.f32.mrb[0].mxu0
        %v2260 = vadd.f32 %v2175, %v2259
        %v2261 = vpop.f32.mrb[0].mxu0
        %2262 = vmatprep.mubr.f32.mxu0 0.0
        %2263 = vmatmul.mubr.f32.gmra.mrb[0].mxu0 %v643
        %v2264 = vpop.f32.mrb[0].mxu0
        %v2265 = vadd.f32 %v2180, %v2264
        %v2266 = vpop.f32.mrb[0].mxu0
        %2267 = vdwg.mxu0
        %v2269 = vlaneseq
        %v2270 = vshrl.u32 %v2269, 7
        %v2271 = vsub.s32 0, %v2270
        %v2272 = vrot.slane %v738, %v2271
        %v2274 = vadd.f32 %v2250, %v2272
        %v2275 = vadd.f32 %v2255, %v2272
        %v2276 = vadd.f32 %v2260, %v2272
        %v2277 = vadd.f32 %v2265, %v2272
        %v2278 = vlaneseq
        %v2279 = vshrl.u32 %v2278, 7
        %v2280 = vadd.s32 %v2279, 8
        %v2281 = vadd.s32 %v2279, 16
        %v2282 = vadd.s32 %v2279, 24
        %v2283 = vstv %s521
        %vm2284 = vcmp.lt.s32.totalorder %v2279, %v2283
        %vm2285 = vcmp.lt.s32.totalorder %v2280, %v2283
        %vm2286 = vcmp.lt.s32.totalorder %v2281, %v2283
        %vm2287 = vcmp.lt.s32.totalorder %v2282, %v2283
        %v2288 = vsel %vm2284, 1, 0
        %v2289 = vsel %vm2285, 1, 0
        %v2290 = vsel %vm2286, 1, 0
        %v2291 = vsel %vm2287, 1, 0
        %v2292 = vcvt.s32.f32 %v2288
        %v2293 = vcvt.s32.f32 %v2289
        %v2294 = vcvt.s32.f32 %v2290
        %v2295 = vcvt.s32.f32 %v2291
        %v2296 = vmul.f32 %v2274, %v2292
        %v2297 = vmul.f32 %v2275, %v2293
        %v2298 = vmul.f32 %v2276, %v2294
        %v2299 = vmul.f32 %v2277, %v2295
        %v2300 = vadd.f32 %v2296, %v2297
        %v2301 = vadd.f32 %v2300, %v2298
        %v2302 = vadd.f32 %v2301, %v2299
        %v2303 = vrot.slane %v2302, 4
        %v2304 = vadd.f32 %v2302, %v2303
        %v2305 = vrot.slane %v2304, 2
        %v2306 = vadd.f32 %v2304, %v2305
        %v2307 = vrot.slane %v2306, 1
        %v2308 = vadd.f32 %v2306, %v2307
        %v2309 = vadd.f32 %v2308, 0.0
        %v2310 = vld [vmem:[%s449 + $0x20] sm:$0xff]
        %v2311 = vld [vmem:[%s449 + $0x28] sm:$0xff]
        %v2312 = vld [vmem:[%s449 + $0x30] sm:$0xff]
        %v2313 = vld [vmem:[%s449 + $0x38] sm:$0xff]
        %v2314 = vld [vmem:[%s746 + $0x20] sm:$0xff]
        %v2315 = vld [vmem:[%s746 + $0x28] sm:$0xff]
        %v2316 = vld [vmem:[%s746 + $0x30] sm:$0xff]
        %v2317 = vld [vmem:[%s746 + $0x38] sm:$0xff]
        %v2318 = vadd.f32 %v2310, %v2314
        %v2319 = vadd.f32 %v2311, %v2315
        %v2320 = vadd.f32 %v2312, %v2316
        %v2321 = vadd.f32 %v2313, %v2317
        %v2322 = vld [vmem:[%s755 + $0x20] sm:$0xff]
        %v2323 = vld [vmem:[%s755 + $0x28] sm:$0xff]
        %v2324 = vld [vmem:[%s755 + $0x30] sm:$0xff]
        %v2325 = vld [vmem:[%s755 + $0x38] sm:$0xff]
        %v2326 = vadd.f32 %v2318, %v2322
        %v2327 = vadd.f32 %v2319, %v2323
        %v2328 = vadd.f32 %v2320, %v2324
        %v2329 = vadd.f32 %v2321, %v2325
        %v2330 = vld [vmem:[%s764 + $0x20] sm:$0xff]
        %v2331 = vld [vmem:[%s764 + $0x28] sm:$0xff]
        %v2332 = vld [vmem:[%s764 + $0x30] sm:$0xff]
        %v2333 = vld [vmem:[%s764 + $0x38] sm:$0xff]
        %v2334 = vadd.f32 %v2326, %v2330
        %v2335 = vadd.f32 %v2327, %v2331
        %v2336 = vadd.f32 %v2328, %v2332
        %v2337 = vadd.f32 %v2329, %v2333
        %v2342 = vshra.s32 %v2334, 31
        %v2343 = vshra.s32 %v2335, 31
        %v2344 = vshra.s32 %v2336, 31
        %v2345 = vshra.s32 %v2337, 31
        %v2346 = vand.u32 %v2342, 2147483647
        %v2347 = vand.u32 %v2343, 2147483647
        %v2348 = vand.u32 %v2344, 2147483647
        %v2349 = vand.u32 %v2345, 2147483647
        %v2350 = vxor.u32 %v2334, %v2346
        %v2351 = vxor.u32 %v2335, %v2347
        %v2352 = vxor.u32 %v2336, %v2348
        %v2353 = vxor.u32 %v2337, %v2349
        %v2354 = vand.u32 %v2350, 4294967168
        %v2355 = vand.u32 %v2351, 4294967168
        %v2356 = vand.u32 %v2352, 4294967168
        %v2357 = vand.u32 %v2353, 4294967168
        %v2358 = vor.u32 %v2354, %v741
        %v2359 = vor.u32 %v2355, %v741
        %v2360 = vor.u32 %v2356, %v741
        %v2361 = vor.u32 %v2357, %v741
        %v2362 = vand.u32 %v2358, 65535
        %v2363 = vshra.s32 %v2358, 16
        %v2364 = vcvt.s32.f32 %v2362
        %v2365 = vcvt.s32.f32 %v2363
        %2366 = vmax.xlane.f32.xlu0 %v2365
        %v2367 = vpop.xlane.xlu0 %2366
        %vm2368 = vcmp.eq.f32.partialorder %v2365, %v2367
        %v2369 = vsel %vm2368, %v2364, -inf
        %2370 = vmax.xlane.f32.xlu0 %v2369
        %v2371 = vpop.xlane.xlu0 %2370
        %v2372 = vcvt.f32.s32 %v2371
        %v2373 = vcvt.f32.s32 %v2367
        %v2374 = vshll.u32 %v2373, 16
        %v2375 = vadd.s32 %v2374, %v2372
        %v2376 = vand.u32 %v2359, 65535
        %v2377 = vshra.s32 %v2359, 16
        %v2378 = vcvt.s32.f32 %v2376
        %v2379 = vcvt.s32.f32 %v2377
        %2380 = vmax.xlane.f32.xlu0 %v2379
        %v2381 = vpop.xlane.xlu0 %2380
        %vm2382 = vcmp.eq.f32.partialorder %v2379, %v2381
        %v2383 = vsel %vm2382, %v2378, -inf
        %2384 = vmax.xlane.f32.xlu0 %v2383
        %v2385 = vpop.xlane.xlu0 %2384
        %v2386 = vcvt.f32.s32 %v2385
        %v2387 = vcvt.f32.s32 %v2381
        %v2388 = vshll.u32 %v2387, 16
        %v2389 = vadd.s32 %v2388, %v2386
        %v2390 = vand.u32 %v2360, 65535
        %v2391 = vshra.s32 %v2360, 16
        %v2392 = vcvt.s32.f32 %v2390
        %v2393 = vcvt.s32.f32 %v2391
        %2394 = vmax.xlane.f32.xlu0 %v2393
        %v2395 = vpop.xlane.xlu0 %2394
        %vm2396 = vcmp.eq.f32.partialorder %v2393, %v2395
        %v2397 = vsel %vm2396, %v2392, -inf
        %2398 = vmax.xlane.f32.xlu0 %v2397
        %v2399 = vpop.xlane.xlu0 %2398
        %v2400 = vcvt.f32.s32 %v2399
        %v2401 = vcvt.f32.s32 %v2395
        %v2402 = vshll.u32 %v2401, 16
        %v2403 = vadd.s32 %v2402, %v2400
        %v2404 = vand.u32 %v2361, 65535
        %v2405 = vshra.s32 %v2361, 16
        %v2406 = vcvt.s32.f32 %v2404
        %v2407 = vcvt.s32.f32 %v2405
        %2408 = vmax.xlane.f32.xlu0 %v2407
        %v2409 = vpop.xlane.xlu0 %2408
        %vm2410 = vcmp.eq.f32.partialorder %v2407, %v2409
        %v2411 = vsel %vm2410, %v2406, -inf
        %2412 = vmax.xlane.f32.xlu0 %v2411
        %v2413 = vpop.xlane.xlu0 %2412
        %v2414 = vcvt.f32.s32 %v2413
        %v2415 = vcvt.f32.s32 %v2409
        %v2416 = vshll.u32 %v2415, 16
        %v2417 = vadd.s32 %v2416, %v2414
        %v2418 = vand.u32 %v2375, 4294967168
        %v2419 = vand.u32 %v2389, 4294967168
        %v2420 = vand.u32 %v2403, 4294967168
        %v2421 = vand.u32 %v2417, 4294967168
        %vm2422 = vcmp.le.s32.totalorder %v2418, 0
        %vm2423 = vcmp.le.s32.totalorder %v2419, 0
        %vm2424 = vcmp.le.s32.totalorder %v2420, 0
        %vm2425 = vcmp.le.s32.totalorder %v2421, 0
        %vm2426 = vcmp.gt.s32.totalorder %v2418, 0
        %vm2427 = vcmp.gt.s32.totalorder %v2419, 0
        %vm2428 = vcmp.gt.s32.totalorder %v2420, 0
        %vm2429 = vcmp.gt.s32.totalorder %v2421, 0
        %vm2430 = vmor %vm2426, %vm2422
        %vm2431 = vmor %vm2427, %vm2423
        %vm2432 = vmor %vm2428, %vm2424
        %vm2433 = vmor %vm2429, %vm2425
        %vm2434 = vcmp.eq.s32.totalorder %v2358, %v2375
        %vm2435 = vcmp.eq.s32.totalorder %v2359, %v2389
        %vm2436 = vcmp.eq.s32.totalorder %v2360, %v2403
        %vm2437 = vcmp.eq.s32.totalorder %v2361, %v2417
        %v2438 = vsel %vm2430, 1, 0
        %v2439 = vsel %vm2431, 1, 0
        %v2440 = vsel %vm2432, 1, 0
        %v2441 = vsel %vm2433, 1, 0
        %vm2442 = vcmp.eq.s32.totalorder %v2438, 1
        %vm2443 = vcmp.eq.s32.totalorder %v2439, 1
        %vm2444 = vcmp.eq.s32.totalorder %v2440, 1
        %vm2445 = vcmp.eq.s32.totalorder %v2441, 1
        %vm2446 = vmand %vm2434, %vm2442
        %vm2447 = vmand %vm2435, %vm2443
        %vm2448 = vmand %vm2436, %vm2444
        %vm2449 = vmand %vm2437, %vm2445
        %v2450 = vsel %vm2446, 1.0, 0.0
        %v2451 = vsel %vm2447, 1.0, 0.0
        %v2452 = vsel %vm2448, 1.0, 0.0
        %v2453 = vsel %vm2449, 1.0, 0.0
        %v2454 = vsel %vm2434, 2147483648, %v2358
        %v2455 = vsel %vm2435, 2147483648, %v2359
        %v2456 = vsel %vm2436, 2147483648, %v2360
        %v2457 = vsel %vm2437, 2147483648, %v2361
        %v2458 = vand.u32 %v2454, 65535
        %v2459 = vshra.s32 %v2454, 16
        %v2460 = vcvt.s32.f32 %v2458
        %v2461 = vcvt.s32.f32 %v2459
        %2462 = vmax.xlane.f32.xlu0 %v2461
        %v2463 = vpop.xlane.xlu0 %2462
        %vm2464 = vcmp.eq.f32.partialorder %v2461, %v2463
        %v2465 = vsel %vm2464, %v2460, -inf
        %2466 = vmax.xlane.f32.xlu0 %v2465
        %v2467 = vpop.xlane.xlu0 %2466
        %v2468 = vcvt.f32.s32 %v2467
        %v2469 = vcvt.f32.s32 %v2463
        %v2470 = vshll.u32 %v2469, 16
        %v2471 = vadd.s32 %v2470, %v2468
        %v2472 = vand.u32 %v2455, 65535
        %v2473 = vshra.s32 %v2455, 16
        %v2474 = vcvt.s32.f32 %v2472
        %v2475 = vcvt.s32.f32 %v2473
        %2476 = vmax.xlane.f32.xlu0 %v2475
        %v2477 = vpop.xlane.xlu0 %2476
        %vm2478 = vcmp.eq.f32.partialorder %v2475, %v2477
        %v2479 = vsel %vm2478, %v2474, -inf
        %2480 = vmax.xlane.f32.xlu0 %v2479
        %v2481 = vpop.xlane.xlu0 %2480
        %v2482 = vcvt.f32.s32 %v2481
        %v2483 = vcvt.f32.s32 %v2477
        %v2484 = vshll.u32 %v2483, 16
        %v2485 = vadd.s32 %v2484, %v2482
        %v2486 = vand.u32 %v2456, 65535
        %v2487 = vshra.s32 %v2456, 16
        %v2488 = vcvt.s32.f32 %v2486
        %v2489 = vcvt.s32.f32 %v2487
        %2490 = vmax.xlane.f32.xlu0 %v2489
        %v2491 = vpop.xlane.xlu0 %2490
        %vm2492 = vcmp.eq.f32.partialorder %v2489, %v2491
        %v2493 = vsel %vm2492, %v2488, -inf
        %2494 = vmax.xlane.f32.xlu0 %v2493
        %v2495 = vpop.xlane.xlu0 %2494
        %v2496 = vcvt.f32.s32 %v2495
        %v2497 = vcvt.f32.s32 %v2491
        %v2498 = vshll.u32 %v2497, 16
        %v2499 = vadd.s32 %v2498, %v2496
        %v2500 = vand.u32 %v2457, 65535
        %v2501 = vshra.s32 %v2457, 16
        %v2502 = vcvt.s32.f32 %v2500
        %v2503 = vcvt.s32.f32 %v2501
        %2504 = vmax.xlane.f32.xlu0 %v2503
        %v2505 = vpop.xlane.xlu0 %2504
        %vm2506 = vcmp.eq.f32.partialorder %v2503, %v2505
        %v2507 = vsel %vm2506, %v2502, -inf
        %2508 = vmax.xlane.f32.xlu0 %v2507
        %v2509 = vpop.xlane.xlu0 %2508
        %v2510 = vcvt.f32.s32 %v2509
        %v2511 = vcvt.f32.s32 %v2505
        %v2512 = vshll.u32 %v2511, 16
        %v2513 = vadd.s32 %v2512, %v2510
        %v2514 = vand.u32 %v2471, 4294967168
        %v2515 = vand.u32 %v2485, 4294967168
        %v2516 = vand.u32 %v2499, 4294967168
        %v2517 = vand.u32 %v2513, 4294967168
        %vm2518 = vcmp.gt.s32.totalorder %v2514, 0
        %vm2519 = vcmp.gt.s32.totalorder %v2515, 0
        %vm2520 = vcmp.gt.s32.totalorder %v2516, 0
        %vm2521 = vcmp.gt.s32.totalorder %v2517, 0
        %vm2522 = vmor %vm2518, %vm2422
        %vm2523 = vmor %vm2519, %vm2423
        %vm2524 = vmor %vm2520, %vm2424
        %vm2525 = vmor %vm2521, %vm2425
        %vm2526 = vcmp.eq.s32.totalorder %v2454, %v2471
        %vm2527 = vcmp.eq.s32.totalorder %v2455, %v2485
        %vm2528 = vcmp.eq.s32.totalorder %v2456, %v2499
        %vm2529 = vcmp.eq.s32.totalorder %v2457, %v2513
        %v2530 = vsel %vm2522, 1, 0
        %v2531 = vsel %vm2523, 1, 0
        %v2532 = vsel %vm2524, 1, 0
        %v2533 = vsel %vm2525, 1, 0
        %vm2534 = vcmp.eq.s32.totalorder %v2530, 1
        %vm2535 = vcmp.eq.s32.totalorder %v2531, 1
        %vm2536 = vcmp.eq.s32.totalorder %v2532, 1
        %vm2537 = vcmp.eq.s32.totalorder %v2533, 1
        %vm2538 = vmand %vm2526, %vm2534
        %vm2539 = vmand %vm2527, %vm2535
        %vm2540 = vmand %vm2528, %vm2536
        %vm2541 = vmand %vm2529, %vm2537
        %v2542 = vsel %vm2538, 1.0, %v2450
        %v2543 = vsel %vm2539, 1.0, %v2451
        %v2544 = vsel %vm2540, 1.0, %v2452
        %v2545 = vsel %vm2541, 1.0, %v2453
        %v2546 = vsel %vm2526, 2147483648, %v2454
        %v2547 = vsel %vm2527, 2147483648, %v2455
        %v2548 = vsel %vm2528, 2147483648, %v2456
        %v2549 = vsel %vm2529, 2147483648, %v2457
        %v2550 = vand.u32 %v2546, 65535
        %v2551 = vshra.s32 %v2546, 16
        %v2552 = vcvt.s32.f32 %v2550
        %v2553 = vcvt.s32.f32 %v2551
        %2554 = vmax.xlane.f32.xlu0 %v2553
        %v2555 = vpop.xlane.xlu0 %2554
        %vm2556 = vcmp.eq.f32.partialorder %v2553, %v2555
        %v2557 = vsel %vm2556, %v2552, -inf
        %2558 = vmax.xlane.f32.xlu0 %v2557
        %v2559 = vpop.xlane.xlu0 %2558
        %v2560 = vcvt.f32.s32 %v2559
        %v2561 = vcvt.f32.s32 %v2555
        %v2562 = vshll.u32 %v2561, 16
        %v2563 = vadd.s32 %v2562, %v2560
        %v2564 = vand.u32 %v2547, 65535
        %v2565 = vshra.s32 %v2547, 16
        %v2566 = vcvt.s32.f32 %v2564
        %v2567 = vcvt.s32.f32 %v2565
        %2568 = vmax.xlane.f32.xlu0 %v2567
        %v2569 = vpop.xlane.xlu0 %2568
        %vm2570 = vcmp.eq.f32.partialorder %v2567, %v2569
        %v2571 = vsel %vm2570, %v2566, -inf
        %2572 = vmax.xlane.f32.xlu0 %v2571
        %v2573 = vpop.xlane.xlu0 %2572
        %v2574 = vcvt.f32.s32 %v2573
        %v2575 = vcvt.f32.s32 %v2569
        %v2576 = vshll.u32 %v2575, 16
        %v2577 = vadd.s32 %v2576, %v2574
        %v2578 = vand.u32 %v2548, 65535
        %v2579 = vshra.s32 %v2548, 16
        %v2580 = vcvt.s32.f32 %v2578
        %v2581 = vcvt.s32.f32 %v2579
        %2582 = vmax.xlane.f32.xlu0 %v2581
        %v2583 = vpop.xlane.xlu0 %2582
        %vm2584 = vcmp.eq.f32.partialorder %v2581, %v2583
        %v2585 = vsel %vm2584, %v2580, -inf
        %2586 = vmax.xlane.f32.xlu0 %v2585
        %v2587 = vpop.xlane.xlu0 %2586
        %v2588 = vcvt.f32.s32 %v2587
        %v2589 = vcvt.f32.s32 %v2583
        %v2590 = vshll.u32 %v2589, 16
        %v2591 = vadd.s32 %v2590, %v2588
        %v2592 = vand.u32 %v2549, 65535
        %v2593 = vshra.s32 %v2549, 16
        %v2594 = vcvt.s32.f32 %v2592
        %v2595 = vcvt.s32.f32 %v2593
        %2596 = vmax.xlane.f32.xlu0 %v2595
        %v2597 = vpop.xlane.xlu0 %2596
        %vm2598 = vcmp.eq.f32.partialorder %v2595, %v2597
        %v2599 = vsel %vm2598, %v2594, -inf
        %2600 = vmax.xlane.f32.xlu0 %v2599
        %v2601 = vpop.xlane.xlu0 %2600
        %v2602 = vcvt.f32.s32 %v2601
        %v2603 = vcvt.f32.s32 %v2597
        %v2604 = vshll.u32 %v2603, 16
        %v2605 = vadd.s32 %v2604, %v2602
        %v2606 = vand.u32 %v2563, 4294967168
        %v2607 = vand.u32 %v2577, 4294967168
        %v2608 = vand.u32 %v2591, 4294967168
        %v2609 = vand.u32 %v2605, 4294967168
        %vm2610 = vcmp.gt.s32.totalorder %v2606, 0
        %vm2611 = vcmp.gt.s32.totalorder %v2607, 0
        %vm2612 = vcmp.gt.s32.totalorder %v2608, 0
        %vm2613 = vcmp.gt.s32.totalorder %v2609, 0
        %vm2614 = vmor %vm2610, %vm2422
        %vm2615 = vmor %vm2611, %vm2423
        %vm2616 = vmor %vm2612, %vm2424
        %vm2617 = vmor %vm2613, %vm2425
        %vm2618 = vcmp.eq.s32.totalorder %v2546, %v2563
        %vm2619 = vcmp.eq.s32.totalorder %v2547, %v2577
        %vm2620 = vcmp.eq.s32.totalorder %v2548, %v2591
        %vm2621 = vcmp.eq.s32.totalorder %v2549, %v2605
        %v2622 = vsel %vm2614, 1, 0
        %v2623 = vsel %vm2615, 1, 0
        %v2624 = vsel %vm2616, 1, 0
        %v2625 = vsel %vm2617, 1, 0
        %vm2626 = vcmp.eq.s32.totalorder %v2622, 1
        %vm2627 = vcmp.eq.s32.totalorder %v2623, 1
        %vm2628 = vcmp.eq.s32.totalorder %v2624, 1
        %vm2629 = vcmp.eq.s32.totalorder %v2625, 1
        %vm2630 = vmand %vm2618, %vm2626
        %vm2631 = vmand %vm2619, %vm2627
        %vm2632 = vmand %vm2620, %vm2628
        %vm2633 = vmand %vm2621, %vm2629
        %v2634 = vsel %vm2630, 1.0, %v2542
        %v2635 = vsel %vm2631, 1.0, %v2543
        %v2636 = vsel %vm2632, 1.0, %v2544
        %v2637 = vsel %vm2633, 1.0, %v2545
        %v2638 = vsel %vm2618, 2147483648, %v2546
        %v2639 = vsel %vm2619, 2147483648, %v2547
        %v2640 = vsel %vm2620, 2147483648, %v2548
        %v2641 = vsel %vm2621, 2147483648, %v2549
        %v2642 = vand.u32 %v2638, 65535
        %v2643 = vshra.s32 %v2638, 16
        %v2644 = vcvt.s32.f32 %v2642
        %v2645 = vcvt.s32.f32 %v2643
        %2646 = vmax.xlane.f32.xlu0 %v2645
        %v2647 = vpop.xlane.xlu0 %2646
        %vm2648 = vcmp.eq.f32.partialorder %v2645, %v2647
        %v2649 = vsel %vm2648, %v2644, -inf
        %2650 = vmax.xlane.f32.xlu0 %v2649
        %v2651 = vpop.xlane.xlu0 %2650
        %v2652 = vcvt.f32.s32 %v2651
        %v2653 = vcvt.f32.s32 %v2647
        %v2654 = vshll.u32 %v2653, 16
        %v2655 = vadd.s32 %v2654, %v2652
        %v2656 = vand.u32 %v2639, 65535
        %v2657 = vshra.s32 %v2639, 16
        %v2658 = vcvt.s32.f32 %v2656
        %v2659 = vcvt.s32.f32 %v2657
        %2660 = vmax.xlane.f32.xlu0 %v2659
        %v2661 = vpop.xlane.xlu0 %2660
        %vm2662 = vcmp.eq.f32.partialorder %v2659, %v2661
        %v2663 = vsel %vm2662, %v2658, -inf
        %2664 = vmax.xlane.f32.xlu0 %v2663
        %v2665 = vpop.xlane.xlu0 %2664
        %v2666 = vcvt.f32.s32 %v2665
        %v2667 = vcvt.f32.s32 %v2661
        %v2668 = vshll.u32 %v2667, 16
        %v2669 = vadd.s32 %v2668, %v2666
        %v2670 = vand.u32 %v2640, 65535
        %v2671 = vshra.s32 %v2640, 16
        %v2672 = vcvt.s32.f32 %v2670
        %v2673 = vcvt.s32.f32 %v2671
        %2674 = vmax.xlane.f32.xlu0 %v2673
        %v2675 = vpop.xlane.xlu0 %2674
        %vm2676 = vcmp.eq.f32.partialorder %v2673, %v2675
        %v2677 = vsel %vm2676, %v2672, -inf
        %2678 = vmax.xlane.f32.xlu0 %v2677
        %v2679 = vpop.xlane.xlu0 %2678
        %v2680 = vcvt.f32.s32 %v2679
        %v2681 = vcvt.f32.s32 %v2675
        %v2682 = vshll.u32 %v2681, 16
        %v2683 = vadd.s32 %v2682, %v2680
        %v2684 = vand.u32 %v2641, 65535
        %v2685 = vshra.s32 %v2641, 16
        %v2686 = vcvt.s32.f32 %v2684
        %v2687 = vcvt.s32.f32 %v2685
        %2688 = vmax.xlane.f32.xlu0 %v2687
        %v2689 = vpop.xlane.xlu0 %2688
        %vm2690 = vcmp.eq.f32.partialorder %v2687, %v2689
        %v2691 = vsel %vm2690, %v2686, -inf
        %2692 = vmax.xlane.f32.xlu0 %v2691
        %v2693 = vpop.xlane.xlu0 %2692
        %v2694 = vcvt.f32.s32 %v2693
        %v2695 = vcvt.f32.s32 %v2689
        %v2696 = vshll.u32 %v2695, 16
        %v2697 = vadd.s32 %v2696, %v2694
        %v2698 = vand.u32 %v2655, 4294967168
        %v2699 = vand.u32 %v2669, 4294967168
        %v2700 = vand.u32 %v2683, 4294967168
        %v2701 = vand.u32 %v2697, 4294967168
        %vm2702 = vcmp.gt.s32.totalorder %v2698, 0
        %vm2703 = vcmp.gt.s32.totalorder %v2699, 0
        %vm2704 = vcmp.gt.s32.totalorder %v2700, 0
        %vm2705 = vcmp.gt.s32.totalorder %v2701, 0
        %vm2706 = vmor %vm2702, %vm2422
        %vm2707 = vmor %vm2703, %vm2423
        %vm2708 = vmor %vm2704, %vm2424
        %vm2709 = vmor %vm2705, %vm2425
        %vm2710 = vcmp.eq.s32.totalorder %v2638, %v2655
        %vm2711 = vcmp.eq.s32.totalorder %v2639, %v2669
        %vm2712 = vcmp.eq.s32.totalorder %v2640, %v2683
        %vm2713 = vcmp.eq.s32.totalorder %v2641, %v2697
        %v2714 = vsel %vm2706, 1, 0
        %v2715 = vsel %vm2707, 1, 0
        %v2716 = vsel %vm2708, 1, 0
        %v2717 = vsel %vm2709, 1, 0
        %vm2718 = vcmp.eq.s32.totalorder %v2714, 1
        %vm2719 = vcmp.eq.s32.totalorder %v2715, 1
        %vm2720 = vcmp.eq.s32.totalorder %v2716, 1
        %vm2721 = vcmp.eq.s32.totalorder %v2717, 1
        %vm2722 = vmand %vm2710, %vm2718
        %vm2723 = vmand %vm2711, %vm2719
        %vm2724 = vmand %vm2712, %vm2720
        %vm2725 = vmand %vm2713, %vm2721
        %v2726 = vsel %vm2722, 1.0, %v2634
        %v2727 = vsel %vm2723, 1.0, %v2635
        %v2728 = vsel %vm2724, 1.0, %v2636
        %v2729 = vsel %vm2725, 1.0, %v2637
        %v2730 = vsel %vm2710, 2147483648, %v2638
        %v2731 = vsel %vm2711, 2147483648, %v2639
        %v2732 = vsel %vm2712, 2147483648, %v2640
        %v2733 = vsel %vm2713, 2147483648, %v2641
        %v2734 = vand.u32 %v2730, 65535
        %v2735 = vshra.s32 %v2730, 16
        %v2736 = vcvt.s32.f32 %v2734
        %v2737 = vcvt.s32.f32 %v2735
        %2738 = vmax.xlane.f32.xlu0 %v2737
        %v2739 = vpop.xlane.xlu0 %2738
        %vm2740 = vcmp.eq.f32.partialorder %v2737, %v2739
        %v2741 = vsel %vm2740, %v2736, -inf
        %2742 = vmax.xlane.f32.xlu0 %v2741
        %v2743 = vpop.xlane.xlu0 %2742
        %v2744 = vcvt.f32.s32 %v2743
        %v2745 = vcvt.f32.s32 %v2739
        %v2746 = vshll.u32 %v2745, 16
        %v2747 = vadd.s32 %v2746, %v2744
        %v2748 = vand.u32 %v2731, 65535
        %v2749 = vshra.s32 %v2731, 16
        %v2750 = vcvt.s32.f32 %v2748
        %v2751 = vcvt.s32.f32 %v2749
        %2752 = vmax.xlane.f32.xlu0 %v2751
        %v2753 = vpop.xlane.xlu0 %2752
        %vm2754 = vcmp.eq.f32.partialorder %v2751, %v2753
        %v2755 = vsel %vm2754, %v2750, -inf
        %2756 = vmax.xlane.f32.xlu0 %v2755
        %v2757 = vpop.xlane.xlu0 %2756
        %v2758 = vcvt.f32.s32 %v2757
        %v2759 = vcvt.f32.s32 %v2753
        %v2760 = vshll.u32 %v2759, 16
        %v2761 = vadd.s32 %v2760, %v2758
        %v2762 = vand.u32 %v2732, 65535
        %v2763 = vshra.s32 %v2732, 16
        %v2764 = vcvt.s32.f32 %v2762
        %v2765 = vcvt.s32.f32 %v2763
        %2766 = vmax.xlane.f32.xlu0 %v2765
        %v2767 = vpop.xlane.xlu0 %2766
        %vm2768 = vcmp.eq.f32.partialorder %v2765, %v2767
        %v2769 = vsel %vm2768, %v2764, -inf
        %2770 = vmax.xlane.f32.xlu0 %v2769
        %v2771 = vpop.xlane.xlu0 %2770
        %v2772 = vcvt.f32.s32 %v2771
        %v2773 = vcvt.f32.s32 %v2767
        %v2774 = vshll.u32 %v2773, 16
        %v2775 = vadd.s32 %v2774, %v2772
        %v2776 = vand.u32 %v2733, 65535
        %v2777 = vshra.s32 %v2733, 16
        %v2778 = vcvt.s32.f32 %v2776
        %v2779 = vcvt.s32.f32 %v2777
        %2780 = vmax.xlane.f32.xlu0 %v2779
        %v2781 = vpop.xlane.xlu0 %2780
        %vm2782 = vcmp.eq.f32.partialorder %v2779, %v2781
        %v2783 = vsel %vm2782, %v2778, -inf
        %2784 = vmax.xlane.f32.xlu0 %v2783
        %v2785 = vpop.xlane.xlu0 %2784
        %v2786 = vcvt.f32.s32 %v2785
        %v2787 = vcvt.f32.s32 %v2781
        %v2788 = vshll.u32 %v2787, 16
        %v2789 = vadd.s32 %v2788, %v2786
        %v2790 = vand.u32 %v2747, 4294967168
        %v2791 = vand.u32 %v2761, 4294967168
        %v2792 = vand.u32 %v2775, 4294967168
        %v2793 = vand.u32 %v2789, 4294967168
        %vm2794 = vcmp.gt.s32.totalorder %v2790, 0
        %vm2795 = vcmp.gt.s32.totalorder %v2791, 0
        %vm2796 = vcmp.gt.s32.totalorder %v2792, 0
        %vm2797 = vcmp.gt.s32.totalorder %v2793, 0
        %vm2798 = vmor %vm2794, %vm2422
        %vm2799 = vmor %vm2795, %vm2423
        %vm2800 = vmor %vm2796, %vm2424
        %vm2801 = vmor %vm2797, %vm2425
        %vm2802 = vcmp.eq.s32.totalorder %v2730, %v2747
        %vm2803 = vcmp.eq.s32.totalorder %v2731, %v2761
        %vm2804 = vcmp.eq.s32.totalorder %v2732, %v2775
        %vm2805 = vcmp.eq.s32.totalorder %v2733, %v2789
        %v2806 = vsel %vm2798, 1, 0
        %v2807 = vsel %vm2799, 1, 0
        %v2808 = vsel %vm2800, 1, 0
        %v2809 = vsel %vm2801, 1, 0
        %vm2810 = vcmp.eq.s32.totalorder %v2806, 1
        %vm2811 = vcmp.eq.s32.totalorder %v2807, 1
        %vm2812 = vcmp.eq.s32.totalorder %v2808, 1
        %vm2813 = vcmp.eq.s32.totalorder %v2809, 1
        %vm2814 = vmand %vm2802, %vm2810
        %vm2815 = vmand %vm2803, %vm2811
        %vm2816 = vmand %vm2804, %vm2812
        %vm2817 = vmand %vm2805, %vm2813
        %v2818 = vsel %vm2814, 1.0, %v2726
        %v2819 = vsel %vm2815, 1.0, %v2727
        %v2820 = vsel %vm2816, 1.0, %v2728
        %v2821 = vsel %vm2817, 1.0, %v2729
        %v2822 = vsel %vm2802, 2147483648, %v2730
        %v2823 = vsel %vm2803, 2147483648, %v2731
        %v2824 = vsel %vm2804, 2147483648, %v2732
        %v2825 = vsel %vm2805, 2147483648, %v2733
        %v2826 = vand.u32 %v2822, 65535
        %v2827 = vshra.s32 %v2822, 16
        %v2828 = vcvt.s32.f32 %v2826
        %v2829 = vcvt.s32.f32 %v2827
        %2830 = vmax.xlane.f32.xlu0 %v2829
        %v2831 = vpop.xlane.xlu0 %2830
        %vm2832 = vcmp.eq.f32.partialorder %v2829, %v2831
        %v2833 = vsel %vm2832, %v2828, -inf
        %2834 = vmax.xlane.f32.xlu0 %v2833
        %v2835 = vpop.xlane.xlu0 %2834
        %v2836 = vcvt.f32.s32 %v2835
        %v2837 = vcvt.f32.s32 %v2831
        %v2838 = vshll.u32 %v2837, 16
        %v2839 = vadd.s32 %v2838, %v2836
        %v2840 = vand.u32 %v2823, 65535
        %v2841 = vshra.s32 %v2823, 16
        %v2842 = vcvt.s32.f32 %v2840
        %v2843 = vcvt.s32.f32 %v2841
        %2844 = vmax.xlane.f32.xlu0 %v2843
        %v2845 = vpop.xlane.xlu0 %2844
        %vm2846 = vcmp.eq.f32.partialorder %v2843, %v2845
        %v2847 = vsel %vm2846, %v2842, -inf
        %2848 = vmax.xlane.f32.xlu0 %v2847
        %v2849 = vpop.xlane.xlu0 %2848
        %v2850 = vcvt.f32.s32 %v2849
        %v2851 = vcvt.f32.s32 %v2845
        %v2852 = vshll.u32 %v2851, 16
        %v2853 = vadd.s32 %v2852, %v2850
        %v2854 = vand.u32 %v2824, 65535
        %v2855 = vshra.s32 %v2824, 16
        %v2856 = vcvt.s32.f32 %v2854
        %v2857 = vcvt.s32.f32 %v2855
        %2858 = vmax.xlane.f32.xlu0 %v2857
        %v2859 = vpop.xlane.xlu0 %2858
        %vm2860 = vcmp.eq.f32.partialorder %v2857, %v2859
        %v2861 = vsel %vm2860, %v2856, -inf
        %2862 = vmax.xlane.f32.xlu0 %v2861
        %v2863 = vpop.xlane.xlu0 %2862
        %v2864 = vcvt.f32.s32 %v2863
        %v2865 = vcvt.f32.s32 %v2859
        %v2866 = vshll.u32 %v2865, 16
        %v2867 = vadd.s32 %v2866, %v2864
        %v2868 = vand.u32 %v2825, 65535
        %v2869 = vshra.s32 %v2825, 16
        %v2870 = vcvt.s32.f32 %v2868
        %v2871 = vcvt.s32.f32 %v2869
        %2872 = vmax.xlane.f32.xlu0 %v2871
        %v2873 = vpop.xlane.xlu0 %2872
        %vm2874 = vcmp.eq.f32.partialorder %v2871, %v2873
        %v2875 = vsel %vm2874, %v2870, -inf
        %2876 = vmax.xlane.f32.xlu0 %v2875
        %v2877 = vpop.xlane.xlu0 %2876
        %v2878 = vcvt.f32.s32 %v2877
        %v2879 = vcvt.f32.s32 %v2873
        %v2880 = vshll.u32 %v2879, 16
        %v2881 = vadd.s32 %v2880, %v2878
        %v2882 = vand.u32 %v2839, 4294967168
        %v2883 = vand.u32 %v2853, 4294967168
        %v2884 = vand.u32 %v2867, 4294967168
        %v2885 = vand.u32 %v2881, 4294967168
        %vm2886 = vcmp.gt.s32.totalorder %v2882, 0
        %vm2887 = vcmp.gt.s32.totalorder %v2883, 0
        %vm2888 = vcmp.gt.s32.totalorder %v2884, 0
        %vm2889 = vcmp.gt.s32.totalorder %v2885, 0
        %vm2890 = vmor %vm2886, %vm2422
        %vm2891 = vmor %vm2887, %vm2423
        %vm2892 = vmor %vm2888, %vm2424
        %vm2893 = vmor %vm2889, %vm2425
        %vm2894 = vcmp.eq.s32.totalorder %v2822, %v2839
        %vm2895 = vcmp.eq.s32.totalorder %v2823, %v2853
        %vm2896 = vcmp.eq.s32.totalorder %v2824, %v2867
        %vm2897 = vcmp.eq.s32.totalorder %v2825, %v2881
        %v2898 = vsel %vm2890, 1, 0
        %v2899 = vsel %vm2891, 1, 0
        %v2900 = vsel %vm2892, 1, 0
        %v2901 = vsel %vm2893, 1, 0
        %vm2902 = vcmp.eq.s32.totalorder %v2898, 1
        %vm2903 = vcmp.eq.s32.totalorder %v2899, 1
        %vm2904 = vcmp.eq.s32.totalorder %v2900, 1
        %vm2905 = vcmp.eq.s32.totalorder %v2901, 1
        %vm2906 = vmand %vm2894, %vm2902
        %vm2907 = vmand %vm2895, %vm2903
        %vm2908 = vmand %vm2896, %vm2904
        %vm2909 = vmand %vm2897, %vm2905
        %v2910 = vsel %vm2906, 1.0, %v2818
        %v2911 = vsel %vm2907, 1.0, %v2819
        %v2912 = vsel %vm2908, 1.0, %v2820
        %v2913 = vsel %vm2909, 1.0, %v2821
        %v2914 = vsel %vm2894, 2147483648, %v2822
        %v2915 = vsel %vm2895, 2147483648, %v2823
        %v2916 = vsel %vm2896, 2147483648, %v2824
        %v2917 = vsel %vm2897, 2147483648, %v2825
        %v2918 = vand.u32 %v2914, 65535
        %v2919 = vshra.s32 %v2914, 16
        %v2920 = vcvt.s32.f32 %v2918
        %v2921 = vcvt.s32.f32 %v2919
        %2922 = vmax.xlane.f32.xlu0 %v2921
        %v2923 = vpop.xlane.xlu0 %2922
        %vm2924 = vcmp.eq.f32.partialorder %v2921, %v2923
        %v2925 = vsel %vm2924, %v2920, -inf
        %2926 = vmax.xlane.f32.xlu0 %v2925
        %v2927 = vpop.xlane.xlu0 %2926
        %v2928 = vcvt.f32.s32 %v2927
        %v2929 = vcvt.f32.s32 %v2923
        %v2930 = vshll.u32 %v2929, 16
        %v2931 = vadd.s32 %v2930, %v2928
        %v2932 = vand.u32 %v2915, 65535
        %v2933 = vshra.s32 %v2915, 16
        %v2934 = vcvt.s32.f32 %v2932
        %v2935 = vcvt.s32.f32 %v2933
        %2936 = vmax.xlane.f32.xlu0 %v2935
        %v2937 = vpop.xlane.xlu0 %2936
        %vm2938 = vcmp.eq.f32.partialorder %v2935, %v2937
        %v2939 = vsel %vm2938, %v2934, -inf
        %2940 = vmax.xlane.f32.xlu0 %v2939
        %v2941 = vpop.xlane.xlu0 %2940
        %v2942 = vcvt.f32.s32 %v2941
        %v2943 = vcvt.f32.s32 %v2937
        %v2944 = vshll.u32 %v2943, 16
        %v2945 = vadd.s32 %v2944, %v2942
        %v2946 = vand.u32 %v2916, 65535
        %v2947 = vshra.s32 %v2916, 16
        %v2948 = vcvt.s32.f32 %v2946
        %v2949 = vcvt.s32.f32 %v2947
        %2950 = vmax.xlane.f32.xlu0 %v2949
        %v2951 = vpop.xlane.xlu0 %2950
        %vm2952 = vcmp.eq.f32.partialorder %v2949, %v2951
        %v2953 = vsel %vm2952, %v2948, -inf
        %2954 = vmax.xlane.f32.xlu0 %v2953
        %v2955 = vpop.xlane.xlu0 %2954
        %v2956 = vcvt.f32.s32 %v2955
        %v2957 = vcvt.f32.s32 %v2951
        %v2958 = vshll.u32 %v2957, 16
        %v2959 = vadd.s32 %v2958, %v2956
        %v2960 = vand.u32 %v2917, 65535
        %v2961 = vshra.s32 %v2917, 16
        %v2962 = vcvt.s32.f32 %v2960
        %v2963 = vcvt.s32.f32 %v2961
        %2964 = vmax.xlane.f32.xlu0 %v2963
        %v2965 = vpop.xlane.xlu0 %2964
        %vm2966 = vcmp.eq.f32.partialorder %v2963, %v2965
        %v2967 = vsel %vm2966, %v2962, -inf
        %2968 = vmax.xlane.f32.xlu0 %v2967
        %v2969 = vpop.xlane.xlu0 %2968
        %v2970 = vcvt.f32.s32 %v2969
        %v2971 = vcvt.f32.s32 %v2965
        %v2972 = vshll.u32 %v2971, 16
        %v2973 = vadd.s32 %v2972, %v2970
        %v2974 = vand.u32 %v2931, 4294967168
        %v2975 = vand.u32 %v2945, 4294967168
        %v2976 = vand.u32 %v2959, 4294967168
        %v2977 = vand.u32 %v2973, 4294967168
        %vm2978 = vcmp.gt.s32.totalorder %v2974, 0
        %vm2979 = vcmp.gt.s32.totalorder %v2975, 0
        %vm2980 = vcmp.gt.s32.totalorder %v2976, 0
        %vm2981 = vcmp.gt.s32.totalorder %v2977, 0
        %vm2982 = vmor %vm2978, %vm2422
        %vm2983 = vmor %vm2979, %vm2423
        %vm2984 = vmor %vm2980, %vm2424
        %vm2985 = vmor %vm2981, %vm2425
        %vm2986 = vcmp.eq.s32.totalorder %v2914, %v2931
        %vm2987 = vcmp.eq.s32.totalorder %v2915, %v2945
        %vm2988 = vcmp.eq.s32.totalorder %v2916, %v2959
        %vm2989 = vcmp.eq.s32.totalorder %v2917, %v2973
        %v2990 = vsel %vm2982, 1, 0
        %v2991 = vsel %vm2983, 1, 0
        %v2992 = vsel %vm2984, 1, 0
        %v2993 = vsel %vm2985, 1, 0
        %vm2994 = vcmp.eq.s32.totalorder %v2990, 1
        %vm2995 = vcmp.eq.s32.totalorder %v2991, 1
        %vm2996 = vcmp.eq.s32.totalorder %v2992, 1
        %vm2997 = vcmp.eq.s32.totalorder %v2993, 1
        %vm2998 = vmand %vm2986, %vm2994
        %vm2999 = vmand %vm2987, %vm2995
        %vm3000 = vmand %vm2988, %vm2996
        %vm3001 = vmand %vm2989, %vm2997
        %v3002 = vsel %vm2998, 1.0, %v2910
        %v3003 = vsel %vm2999, 1.0, %v2911
        %v3004 = vsel %vm3000, 1.0, %v2912
        %v3005 = vsel %vm3001, 1.0, %v2913
        %v3006 = vsel %vm2986, 2147483648, %v2914
        %v3007 = vsel %vm2987, 2147483648, %v2915
        %v3008 = vsel %vm2988, 2147483648, %v2916
        %v3009 = vsel %vm2989, 2147483648, %v2917
        %v3010 = vand.u32 %v3006, 65535
        %v3011 = vshra.s32 %v3006, 16
        %v3012 = vcvt.s32.f32 %v3010
        %v3013 = vcvt.s32.f32 %v3011
        %3014 = vmax.xlane.f32.xlu0 %v3013
        %v3015 = vpop.xlane.xlu0 %3014
        %vm3016 = vcmp.eq.f32.partialorder %v3013, %v3015
        %v3017 = vsel %vm3016, %v3012, -inf
        %3018 = vmax.xlane.f32.xlu0 %v3017
        %v3019 = vpop.xlane.xlu0 %3018
        %v3020 = vcvt.f32.s32 %v3019
        %v3021 = vcvt.f32.s32 %v3015
        %v3022 = vshll.u32 %v3021, 16
        %v3023 = vadd.s32 %v3022, %v3020
        %v3024 = vand.u32 %v3007, 65535
        %v3025 = vshra.s32 %v3007, 16
        %v3026 = vcvt.s32.f32 %v3024
        %v3027 = vcvt.s32.f32 %v3025
        %3028 = vmax.xlane.f32.xlu0 %v3027
        %v3029 = vpop.xlane.xlu0 %3028
        %vm3030 = vcmp.eq.f32.partialorder %v3027, %v3029
        %v3031 = vsel %vm3030, %v3026, -inf
        %3032 = vmax.xlane.f32.xlu0 %v3031
        %v3033 = vpop.xlane.xlu0 %3032
        %v3034 = vcvt.f32.s32 %v3033
        %v3035 = vcvt.f32.s32 %v3029
        %v3036 = vshll.u32 %v3035, 16
        %v3037 = vadd.s32 %v3036, %v3034
        %v3038 = vand.u32 %v3008, 65535
        %v3039 = vshra.s32 %v3008, 16
        %v3040 = vcvt.s32.f32 %v3038
        %v3041 = vcvt.s32.f32 %v3039
        %3042 = vmax.xlane.f32.xlu0 %v3041
        %v3043 = vpop.xlane.xlu0 %3042
        %vm3044 = vcmp.eq.f32.partialorder %v3041, %v3043
        %v3045 = vsel %vm3044, %v3040, -inf
        %3046 = vmax.xlane.f32.xlu0 %v3045
        %v3047 = vpop.xlane.xlu0 %3046
        %v3048 = vcvt.f32.s32 %v3047
        %v3049 = vcvt.f32.s32 %v3043
        %v3050 = vshll.u32 %v3049, 16
        %v3051 = vadd.s32 %v3050, %v3048
        %v3052 = vand.u32 %v3009, 65535
        %v3053 = vshra.s32 %v3009, 16
        %v3054 = vcvt.s32.f32 %v3052
        %v3055 = vcvt.s32.f32 %v3053
        %3056 = vmax.xlane.f32.xlu0 %v3055
        %v3057 = vpop.xlane.xlu0 %3056
        %vm3058 = vcmp.eq.f32.partialorder %v3055, %v3057
        %v3059 = vsel %vm3058, %v3054, -inf
        %3060 = vmax.xlane.f32.xlu0 %v3059
        %v3061 = vpop.xlane.xlu0 %3060
        %v3062 = vcvt.f32.s32 %v3061
        %v3063 = vcvt.f32.s32 %v3057
        %v3064 = vshll.u32 %v3063, 16
        %v3065 = vadd.s32 %v3064, %v3062
        %v3066 = vand.u32 %v3023, 4294967168
        %v3067 = vand.u32 %v3037, 4294967168
        %v3068 = vand.u32 %v3051, 4294967168
        %v3069 = vand.u32 %v3065, 4294967168
        %vm3070 = vcmp.gt.s32.totalorder %v3066, 0
        %vm3071 = vcmp.gt.s32.totalorder %v3067, 0
        %vm3072 = vcmp.gt.s32.totalorder %v3068, 0
        %vm3073 = vcmp.gt.s32.totalorder %v3069, 0
        %vm3074 = vmor %vm3070, %vm2422
        %vm3075 = vmor %vm3071, %vm2423
        %vm3076 = vmor %vm3072, %vm2424
        %vm3077 = vmor %vm3073, %vm2425
        %vm3078 = vcmp.eq.s32.totalorder %v3006, %v3023
        %vm3079 = vcmp.eq.s32.totalorder %v3007, %v3037
        %vm3080 = vcmp.eq.s32.totalorder %v3008, %v3051
        %vm3081 = vcmp.eq.s32.totalorder %v3009, %v3065
        %v3082 = vsel %vm3074, 1, 0
        %v3083 = vsel %vm3075, 1, 0
        %v3084 = vsel %vm3076, 1, 0
        %v3085 = vsel %vm3077, 1, 0
        %vm3086 = vcmp.eq.s32.totalorder %v3082, 1
        %vm3087 = vcmp.eq.s32.totalorder %v3083, 1
        %vm3088 = vcmp.eq.s32.totalorder %v3084, 1
        %vm3089 = vcmp.eq.s32.totalorder %v3085, 1
        %vm3090 = vmand %vm3078, %vm3086
        %vm3091 = vmand %vm3079, %vm3087
        %vm3092 = vmand %vm3080, %vm3088
        %vm3093 = vmand %vm3081, %vm3089
        %v3094 = vsel %vm3090, 1.0, %v3002
        %v3095 = vsel %vm3091, 1.0, %v3003
        %v3096 = vsel %vm3092, 1.0, %v3004
        %v3097 = vsel %vm3093, 1.0, %v3005
        %v3098 = vsel %vm3078, 2147483648, %v3006
        %v3099 = vsel %vm3079, 2147483648, %v3007
        %v3100 = vsel %vm3080, 2147483648, %v3008
        %v3101 = vsel %vm3081, 2147483648, %v3009
        %v3102 = vand.u32 %v3098, 65535
        %v3103 = vshra.s32 %v3098, 16
        %v3104 = vcvt.s32.f32 %v3102
        %v3105 = vcvt.s32.f32 %v3103
        %3106 = vmax.xlane.f32.xlu0 %v3105
        %v3107 = vpop.xlane.xlu0 %3106
        %vm3108 = vcmp.eq.f32.partialorder %v3105, %v3107
        %v3109 = vsel %vm3108, %v3104, -inf
        %3110 = vmax.xlane.f32.xlu0 %v3109
        %v3111 = vpop.xlane.xlu0 %3110
        %v3112 = vcvt.f32.s32 %v3111
        %v3113 = vcvt.f32.s32 %v3107
        %v3114 = vshll.u32 %v3113, 16
        %v3115 = vadd.s32 %v3114, %v3112
        %v3116 = vand.u32 %v3099, 65535
        %v3117 = vshra.s32 %v3099, 16
        %v3118 = vcvt.s32.f32 %v3116
        %v3119 = vcvt.s32.f32 %v3117
        %3120 = vmax.xlane.f32.xlu0 %v3119
        %v3121 = vpop.xlane.xlu0 %3120
        %vm3122 = vcmp.eq.f32.partialorder %v3119, %v3121
        %v3123 = vsel %vm3122, %v3118, -inf
        %3124 = vmax.xlane.f32.xlu0 %v3123
        %v3125 = vpop.xlane.xlu0 %3124
        %v3126 = vcvt.f32.s32 %v3125
        %v3127 = vcvt.f32.s32 %v3121
        %v3128 = vshll.u32 %v3127, 16
        %v3129 = vadd.s32 %v3128, %v3126
        %v3130 = vand.u32 %v3100, 65535
        %v3131 = vshra.s32 %v3100, 16
        %v3132 = vcvt.s32.f32 %v3130
        %v3133 = vcvt.s32.f32 %v3131
        %3134 = vmax.xlane.f32.xlu0 %v3133
        %v3135 = vpop.xlane.xlu0 %3134
        %vm3136 = vcmp.eq.f32.partialorder %v3133, %v3135
        %v3137 = vsel %vm3136, %v3132, -inf
        %3138 = vmax.xlane.f32.xlu0 %v3137
        %v3139 = vpop.xlane.xlu0 %3138
        %v3140 = vcvt.f32.s32 %v3139
        %v3141 = vcvt.f32.s32 %v3135
        %v3142 = vshll.u32 %v3141, 16
        %v3143 = vadd.s32 %v3142, %v3140
        %v3144 = vand.u32 %v3101, 65535
        %v3145 = vshra.s32 %v3101, 16
        %v3146 = vcvt.s32.f32 %v3144
        %v3147 = vcvt.s32.f32 %v3145
        %3148 = vmax.xlane.f32.xlu0 %v3147
        %v3149 = vpop.xlane.xlu0 %3148
        %vm3150 = vcmp.eq.f32.partialorder %v3147, %v3149
        %v3151 = vsel %vm3150, %v3146, -inf
        %3152 = vmax.xlane.f32.xlu0 %v3151
        %v3153 = vpop.xlane.xlu0 %3152
        %v3154 = vcvt.f32.s32 %v3153
        %v3155 = vcvt.f32.s32 %v3149
        %v3156 = vshll.u32 %v3155, 16
        %v3157 = vadd.s32 %v3156, %v3154
        %v3158 = vand.u32 %v3115, 4294967168
        %v3159 = vand.u32 %v3129, 4294967168
        %v3160 = vand.u32 %v3143, 4294967168
        %v3161 = vand.u32 %v3157, 4294967168
        %vm3162 = vcmp.gt.s32.totalorder %v3158, 0
        %vm3163 = vcmp.gt.s32.totalorder %v3159, 0
        %vm3164 = vcmp.gt.s32.totalorder %v3160, 0
        %vm3165 = vcmp.gt.s32.totalorder %v3161, 0
        %vm3166 = vmor %vm3162, %vm2422
        %vm3167 = vmor %vm3163, %vm2423
        %vm3168 = vmor %vm3164, %vm2424
        %vm3169 = vmor %vm3165, %vm2425
        %vm3170 = vcmp.eq.s32.totalorder %v3098, %v3115
        %vm3171 = vcmp.eq.s32.totalorder %v3099, %v3129
        %vm3172 = vcmp.eq.s32.totalorder %v3100, %v3143
        %vm3173 = vcmp.eq.s32.totalorder %v3101, %v3157
        %v3174 = vsel %vm3166, 1, 0
        %v3175 = vsel %vm3167, 1, 0
        %v3176 = vsel %vm3168, 1, 0
        %v3177 = vsel %vm3169, 1, 0
        %vm3178 = vcmp.eq.s32.totalorder %v3174, 1
        %vm3179 = vcmp.eq.s32.totalorder %v3175, 1
        %vm3180 = vcmp.eq.s32.totalorder %v3176, 1
        %vm3181 = vcmp.eq.s32.totalorder %v3177, 1
        %vm3182 = vmand %vm3170, %vm3178
        %vm3183 = vmand %vm3171, %vm3179
        %vm3184 = vmand %vm3172, %vm3180
        %vm3185 = vmand %vm3173, %vm3181
        %v3186 = vsel %vm3182, 1.0, %v3094
        %v3187 = vsel %vm3183, 1.0, %v3095
        %v3188 = vsel %vm3184, 1.0, %v3096
        %v3189 = vsel %vm3185, 1.0, %v3097
        %v3190 = vsel %vm3170, 2147483648, %v3098
        %v3191 = vsel %vm3171, 2147483648, %v3099
        %v3192 = vsel %vm3172, 2147483648, %v3100
        %v3193 = vsel %vm3173, 2147483648, %v3101
        %v3194 = vand.u32 %v3190, 65535
        %v3195 = vshra.s32 %v3190, 16
        %v3196 = vcvt.s32.f32 %v3194
        %v3197 = vcvt.s32.f32 %v3195
        %3198 = vmax.xlane.f32.xlu0 %v3197
        %v3199 = vpop.xlane.xlu0 %3198
        %vm3200 = vcmp.eq.f32.partialorder %v3197, %v3199
        %v3201 = vsel %vm3200, %v3196, -inf
        %3202 = vmax.xlane.f32.xlu0 %v3201
        %v3203 = vpop.xlane.xlu0 %3202
        %v3204 = vcvt.f32.s32 %v3203
        %v3205 = vcvt.f32.s32 %v3199
        %v3206 = vshll.u32 %v3205, 16
        %v3207 = vadd.s32 %v3206, %v3204
        %v3208 = vand.u32 %v3191, 65535
        %v3209 = vshra.s32 %v3191, 16
        %v3210 = vcvt.s32.f32 %v3208
        %v3211 = vcvt.s32.f32 %v3209
        %3212 = vmax.xlane.f32.xlu0 %v3211
        %v3213 = vpop.xlane.xlu0 %3212
        %vm3214 = vcmp.eq.f32.partialorder %v3211, %v3213
        %v3215 = vsel %vm3214, %v3210, -inf
        %3216 = vmax.xlane.f32.xlu0 %v3215
        %v3217 = vpop.xlane.xlu0 %3216
        %v3218 = vcvt.f32.s32 %v3217
        %v3219 = vcvt.f32.s32 %v3213
        %v3220 = vshll.u32 %v3219, 16
        %v3221 = vadd.s32 %v3220, %v3218
        %v3222 = vand.u32 %v3192, 65535
        %v3223 = vshra.s32 %v3192, 16
        %v3224 = vcvt.s32.f32 %v3222
        %v3225 = vcvt.s32.f32 %v3223
        %3226 = vmax.xlane.f32.xlu0 %v3225
        %v3227 = vpop.xlane.xlu0 %3226
        %vm3228 = vcmp.eq.f32.partialorder %v3225, %v3227
        %v3229 = vsel %vm3228, %v3224, -inf
        %3230 = vmax.xlane.f32.xlu0 %v3229
        %v3231 = vpop.xlane.xlu0 %3230
        %v3232 = vcvt.f32.s32 %v3231
        %v3233 = vcvt.f32.s32 %v3227
        %v3234 = vshll.u32 %v3233, 16
        %v3235 = vadd.s32 %v3234, %v3232
        %v3236 = vand.u32 %v3193, 65535
        %v3237 = vshra.s32 %v3193, 16
        %v3238 = vcvt.s32.f32 %v3236
        %v3239 = vcvt.s32.f32 %v3237
        %3240 = vmax.xlane.f32.xlu0 %v3239
        %v3241 = vpop.xlane.xlu0 %3240
        %vm3242 = vcmp.eq.f32.partialorder %v3239, %v3241
        %v3243 = vsel %vm3242, %v3238, -inf
        %3244 = vmax.xlane.f32.xlu0 %v3243
        %v3245 = vpop.xlane.xlu0 %3244
        %v3246 = vcvt.f32.s32 %v3245
        %v3247 = vcvt.f32.s32 %v3241
        %v3248 = vshll.u32 %v3247, 16
        %v3249 = vadd.s32 %v3248, %v3246
        %v3250 = vand.u32 %v3207, 4294967168
        %v3251 = vand.u32 %v3221, 4294967168
        %v3252 = vand.u32 %v3235, 4294967168
        %v3253 = vand.u32 %v3249, 4294967168
        %vm3254 = vcmp.gt.s32.totalorder %v3250, 0
        %vm3255 = vcmp.gt.s32.totalorder %v3251, 0
        %vm3256 = vcmp.gt.s32.totalorder %v3252, 0
        %vm3257 = vcmp.gt.s32.totalorder %v3253, 0
        %vm3258 = vmor %vm3254, %vm2422
        %vm3259 = vmor %vm3255, %vm2423
        %vm3260 = vmor %vm3256, %vm2424
        %vm3261 = vmor %vm3257, %vm2425
        %vm3262 = vcmp.eq.s32.totalorder %v3190, %v3207
        %vm3263 = vcmp.eq.s32.totalorder %v3191, %v3221
        %vm3264 = vcmp.eq.s32.totalorder %v3192, %v3235
        %vm3265 = vcmp.eq.s32.totalorder %v3193, %v3249
        %v3266 = vsel %vm3258, 1, 0
        %v3267 = vsel %vm3259, 1, 0
        %v3268 = vsel %vm3260, 1, 0
        %v3269 = vsel %vm3261, 1, 0
        %vm3270 = vcmp.eq.s32.totalorder %v3266, 1
        %vm3271 = vcmp.eq.s32.totalorder %v3267, 1
        %vm3272 = vcmp.eq.s32.totalorder %v3268, 1
        %vm3273 = vcmp.eq.s32.totalorder %v3269, 1
        %vm3274 = vmand %vm3262, %vm3270
        %vm3275 = vmand %vm3263, %vm3271
        %vm3276 = vmand %vm3264, %vm3272
        %vm3277 = vmand %vm3265, %vm3273
        %v3278 = vsel %vm3274, 1.0, %v3186
        %v3279 = vsel %vm3275, 1.0, %v3187
        %v3280 = vsel %vm3276, 1.0, %v3188
        %v3281 = vsel %vm3277, 1.0, %v3189
        %v3282 = vsel %vm3262, 2147483648, %v3190
        %v3283 = vsel %vm3263, 2147483648, %v3191
        %v3284 = vsel %vm3264, 2147483648, %v3192
        %v3285 = vsel %vm3265, 2147483648, %v3193
        %v3286 = vand.u32 %v3282, 65535
        %v3287 = vshra.s32 %v3282, 16
        %v3288 = vcvt.s32.f32 %v3286
        %v3289 = vcvt.s32.f32 %v3287
        %3290 = vmax.xlane.f32.xlu0 %v3289
        %v3291 = vpop.xlane.xlu0 %3290
        %vm3292 = vcmp.eq.f32.partialorder %v3289, %v3291
        %v3293 = vsel %vm3292, %v3288, -inf
        %3294 = vmax.xlane.f32.xlu0 %v3293
        %v3295 = vpop.xlane.xlu0 %3294
        %v3296 = vcvt.f32.s32 %v3295
        %v3297 = vcvt.f32.s32 %v3291
        %v3298 = vshll.u32 %v3297, 16
        %v3299 = vadd.s32 %v3298, %v3296
        %v3300 = vand.u32 %v3283, 65535
        %v3301 = vshra.s32 %v3283, 16
        %v3302 = vcvt.s32.f32 %v3300
        %v3303 = vcvt.s32.f32 %v3301
        %3304 = vmax.xlane.f32.xlu0 %v3303
        %v3305 = vpop.xlane.xlu0 %3304
        %vm3306 = vcmp.eq.f32.partialorder %v3303, %v3305
        %v3307 = vsel %vm3306, %v3302, -inf
        %3308 = vmax.xlane.f32.xlu0 %v3307
        %v3309 = vpop.xlane.xlu0 %3308
        %v3310 = vcvt.f32.s32 %v3309
        %v3311 = vcvt.f32.s32 %v3305
        %v3312 = vshll.u32 %v3311, 16
        %v3313 = vadd.s32 %v3312, %v3310
        %v3314 = vand.u32 %v3284, 65535
        %v3315 = vshra.s32 %v3284, 16
        %v3316 = vcvt.s32.f32 %v3314
        %v3317 = vcvt.s32.f32 %v3315
        %3318 = vmax.xlane.f32.xlu0 %v3317
        %v3319 = vpop.xlane.xlu0 %3318
        %vm3320 = vcmp.eq.f32.partialorder %v3317, %v3319
        %v3321 = vsel %vm3320, %v3316, -inf
        %3322 = vmax.xlane.f32.xlu0 %v3321
        %v3323 = vpop.xlane.xlu0 %3322
        %v3324 = vcvt.f32.s32 %v3323
        %v3325 = vcvt.f32.s32 %v3319
        %v3326 = vshll.u32 %v3325, 16
        %v3327 = vadd.s32 %v3326, %v3324
        %v3328 = vand.u32 %v3285, 65535
        %v3329 = vshra.s32 %v3285, 16
        %v3330 = vcvt.s32.f32 %v3328
        %v3331 = vcvt.s32.f32 %v3329
        %3332 = vmax.xlane.f32.xlu0 %v3331
        %v3333 = vpop.xlane.xlu0 %3332
        %vm3334 = vcmp.eq.f32.partialorder %v3331, %v3333
        %v3335 = vsel %vm3334, %v3330, -inf
        %3336 = vmax.xlane.f32.xlu0 %v3335
        %v3337 = vpop.xlane.xlu0 %3336
        %v3338 = vcvt.f32.s32 %v3337
        %v3339 = vcvt.f32.s32 %v3333
        %v3340 = vshll.u32 %v3339, 16
        %v3341 = vadd.s32 %v3340, %v3338
        %v3342 = vand.u32 %v3299, 4294967168
        %v3343 = vand.u32 %v3313, 4294967168
        %v3344 = vand.u32 %v3327, 4294967168
        %v3345 = vand.u32 %v3341, 4294967168
        %vm3346 = vcmp.gt.s32.totalorder %v3342, 0
        %vm3347 = vcmp.gt.s32.totalorder %v3343, 0
        %vm3348 = vcmp.gt.s32.totalorder %v3344, 0
        %vm3349 = vcmp.gt.s32.totalorder %v3345, 0
        %vm3350 = vmor %vm3346, %vm2422
        %vm3351 = vmor %vm3347, %vm2423
        %vm3352 = vmor %vm3348, %vm2424
        %vm3353 = vmor %vm3349, %vm2425
        %vm3354 = vcmp.eq.s32.totalorder %v3282, %v3299
        %vm3355 = vcmp.eq.s32.totalorder %v3283, %v3313
        %vm3356 = vcmp.eq.s32.totalorder %v3284, %v3327
        %vm3357 = vcmp.eq.s32.totalorder %v3285, %v3341
        %v3358 = vsel %vm3350, 1, 0
        %v3359 = vsel %vm3351, 1, 0
        %v3360 = vsel %vm3352, 1, 0
        %v3361 = vsel %vm3353, 1, 0
        %vm3362 = vcmp.eq.s32.totalorder %v3358, 1
        %vm3363 = vcmp.eq.s32.totalorder %v3359, 1
        %vm3364 = vcmp.eq.s32.totalorder %v3360, 1
        %vm3365 = vcmp.eq.s32.totalorder %v3361, 1
        %vm3366 = vmand %vm3354, %vm3362
        %vm3367 = vmand %vm3355, %vm3363
        %vm3368 = vmand %vm3356, %vm3364
        %vm3369 = vmand %vm3357, %vm3365
        %v3370 = vsel %vm3366, 1.0, %v3278
        %v3371 = vsel %vm3367, 1.0, %v3279
        %v3372 = vsel %vm3368, 1.0, %v3280
        %v3373 = vsel %vm3369, 1.0, %v3281
        %v3374 = vsel %vm3354, 2147483648, %v3282
        %v3375 = vsel %vm3355, 2147483648, %v3283
        %v3376 = vsel %vm3356, 2147483648, %v3284
        %v3377 = vsel %vm3357, 2147483648, %v3285
        %v3378 = vand.u32 %v3374, 65535
        %v3379 = vshra.s32 %v3374, 16
        %v3380 = vcvt.s32.f32 %v3378
        %v3381 = vcvt.s32.f32 %v3379
        %3382 = vmax.xlane.f32.xlu0 %v3381
        %v3383 = vpop.xlane.xlu0 %3382
        %vm3384 = vcmp.eq.f32.partialorder %v3381, %v3383
        %v3385 = vsel %vm3384, %v3380, -inf
        %3386 = vmax.xlane.f32.xlu0 %v3385
        %v3387 = vpop.xlane.xlu0 %3386
        %v3388 = vcvt.f32.s32 %v3387
        %v3389 = vcvt.f32.s32 %v3383
        %v3390 = vshll.u32 %v3389, 16
        %v3391 = vadd.s32 %v3390, %v3388
        %v3392 = vand.u32 %v3375, 65535
        %v3393 = vshra.s32 %v3375, 16
        %v3394 = vcvt.s32.f32 %v3392
        %v3395 = vcvt.s32.f32 %v3393
        %3396 = vmax.xlane.f32.xlu0 %v3395
        %v3397 = vpop.xlane.xlu0 %3396
        %vm3398 = vcmp.eq.f32.partialorder %v3395, %v3397
        %v3399 = vsel %vm3398, %v3394, -inf
        %3400 = vmax.xlane.f32.xlu0 %v3399
        %v3401 = vpop.xlane.xlu0 %3400
        %v3402 = vcvt.f32.s32 %v3401
        %v3403 = vcvt.f32.s32 %v3397
        %v3404 = vshll.u32 %v3403, 16
        %v3405 = vadd.s32 %v3404, %v3402
        %v3406 = vand.u32 %v3376, 65535
        %v3407 = vshra.s32 %v3376, 16
        %v3408 = vcvt.s32.f32 %v3406
        %v3409 = vcvt.s32.f32 %v3407
        %3410 = vmax.xlane.f32.xlu0 %v3409
        %v3411 = vpop.xlane.xlu0 %3410
        %vm3412 = vcmp.eq.f32.partialorder %v3409, %v3411
        %v3413 = vsel %vm3412, %v3408, -inf
        %3414 = vmax.xlane.f32.xlu0 %v3413
        %v3415 = vpop.xlane.xlu0 %3414
        %v3416 = vcvt.f32.s32 %v3415
        %v3417 = vcvt.f32.s32 %v3411
        %v3418 = vshll.u32 %v3417, 16
        %v3419 = vadd.s32 %v3418, %v3416
        %v3420 = vand.u32 %v3377, 65535
        %v3421 = vshra.s32 %v3377, 16
        %v3422 = vcvt.s32.f32 %v3420
        %v3423 = vcvt.s32.f32 %v3421
        %3424 = vmax.xlane.f32.xlu0 %v3423
        %v3425 = vpop.xlane.xlu0 %3424
        %vm3426 = vcmp.eq.f32.partialorder %v3423, %v3425
        %v3427 = vsel %vm3426, %v3422, -inf
        %3428 = vmax.xlane.f32.xlu0 %v3427
        %v3429 = vpop.xlane.xlu0 %3428
        %v3430 = vcvt.f32.s32 %v3429
        %v3431 = vcvt.f32.s32 %v3425
        %v3432 = vshll.u32 %v3431, 16
        %v3433 = vadd.s32 %v3432, %v3430
        %v3434 = vand.u32 %v3391, 4294967168
        %v3435 = vand.u32 %v3405, 4294967168
        %v3436 = vand.u32 %v3419, 4294967168
        %v3437 = vand.u32 %v3433, 4294967168
        %vm3438 = vcmp.gt.s32.totalorder %v3434, 0
        %vm3439 = vcmp.gt.s32.totalorder %v3435, 0
        %vm3440 = vcmp.gt.s32.totalorder %v3436, 0
        %vm3441 = vcmp.gt.s32.totalorder %v3437, 0
        %vm3442 = vmor %vm3438, %vm2422
        %vm3443 = vmor %vm3439, %vm2423
        %vm3444 = vmor %vm3440, %vm2424
        %vm3445 = vmor %vm3441, %vm2425
        %vm3446 = vcmp.eq.s32.totalorder %v3374, %v3391
        %vm3447 = vcmp.eq.s32.totalorder %v3375, %v3405
        %vm3448 = vcmp.eq.s32.totalorder %v3376, %v3419
        %vm3449 = vcmp.eq.s32.totalorder %v3377, %v3433
        %v3450 = vsel %vm3442, 1, 0
        %v3451 = vsel %vm3443, 1, 0
        %v3452 = vsel %vm3444, 1, 0
        %v3453 = vsel %vm3445, 1, 0
        %vm3454 = vcmp.eq.s32.totalorder %v3450, 1
        %vm3455 = vcmp.eq.s32.totalorder %v3451, 1
        %vm3456 = vcmp.eq.s32.totalorder %v3452, 1
        %vm3457 = vcmp.eq.s32.totalorder %v3453, 1
        %vm3458 = vmand %vm3446, %vm3454
        %vm3459 = vmand %vm3447, %vm3455
        %vm3460 = vmand %vm3448, %vm3456
        %vm3461 = vmand %vm3449, %vm3457
        %v3462 = vsel %vm3458, 1.0, %v3370
        %v3463 = vsel %vm3459, 1.0, %v3371
        %v3464 = vsel %vm3460, 1.0, %v3372
        %v3465 = vsel %vm3461, 1.0, %v3373
        %v3466 = vsel %vm3446, 2147483648, %v3374
        %v3467 = vsel %vm3447, 2147483648, %v3375
        %v3468 = vsel %vm3448, 2147483648, %v3376
        %v3469 = vsel %vm3449, 2147483648, %v3377
        %v3470 = vand.u32 %v3466, 65535
        %v3471 = vshra.s32 %v3466, 16
        %v3472 = vcvt.s32.f32 %v3470
        %v3473 = vcvt.s32.f32 %v3471
        %3474 = vmax.xlane.f32.xlu0 %v3473
        %v3475 = vpop.xlane.xlu0 %3474
        %vm3476 = vcmp.eq.f32.partialorder %v3473, %v3475
        %v3477 = vsel %vm3476, %v3472, -inf
        %3478 = vmax.xlane.f32.xlu0 %v3477
        %v3479 = vpop.xlane.xlu0 %3478
        %v3480 = vcvt.f32.s32 %v3479
        %v3481 = vcvt.f32.s32 %v3475
        %v3482 = vshll.u32 %v3481, 16
        %v3483 = vadd.s32 %v3482, %v3480
        %v3484 = vand.u32 %v3467, 65535
        %v3485 = vshra.s32 %v3467, 16
        %v3486 = vcvt.s32.f32 %v3484
        %v3487 = vcvt.s32.f32 %v3485
        %3488 = vmax.xlane.f32.xlu0 %v3487
        %v3489 = vpop.xlane.xlu0 %3488
        %vm3490 = vcmp.eq.f32.partialorder %v3487, %v3489
        %v3491 = vsel %vm3490, %v3486, -inf
        %3492 = vmax.xlane.f32.xlu0 %v3491
        %v3493 = vpop.xlane.xlu0 %3492
        %v3494 = vcvt.f32.s32 %v3493
        %v3495 = vcvt.f32.s32 %v3489
        %v3496 = vshll.u32 %v3495, 16
        %v3497 = vadd.s32 %v3496, %v3494
        %v3498 = vand.u32 %v3468, 65535
        %v3499 = vshra.s32 %v3468, 16
        %v3500 = vcvt.s32.f32 %v3498
        %v3501 = vcvt.s32.f32 %v3499
        %3502 = vmax.xlane.f32.xlu0 %v3501
        %v3503 = vpop.xlane.xlu0 %3502
        %vm3504 = vcmp.eq.f32.partialorder %v3501, %v3503
        %v3505 = vsel %vm3504, %v3500, -inf
        %3506 = vmax.xlane.f32.xlu0 %v3505
        %v3507 = vpop.xlane.xlu0 %3506
        %v3508 = vcvt.f32.s32 %v3507
        %v3509 = vcvt.f32.s32 %v3503
        %v3510 = vshll.u32 %v3509, 16
        %v3511 = vadd.s32 %v3510, %v3508
        %v3512 = vand.u32 %v3469, 65535
        %v3513 = vshra.s32 %v3469, 16
        %v3514 = vcvt.s32.f32 %v3512
        %v3515 = vcvt.s32.f32 %v3513
        %3516 = vmax.xlane.f32.xlu0 %v3515
        %v3517 = vpop.xlane.xlu0 %3516
        %vm3518 = vcmp.eq.f32.partialorder %v3515, %v3517
        %v3519 = vsel %vm3518, %v3514, -inf
        %3520 = vmax.xlane.f32.xlu0 %v3519
        %v3521 = vpop.xlane.xlu0 %3520
        %v3522 = vcvt.f32.s32 %v3521
        %v3523 = vcvt.f32.s32 %v3517
        %v3524 = vshll.u32 %v3523, 16
        %v3525 = vadd.s32 %v3524, %v3522
        %v3526 = vand.u32 %v3483, 4294967168
        %v3527 = vand.u32 %v3497, 4294967168
        %v3528 = vand.u32 %v3511, 4294967168
        %v3529 = vand.u32 %v3525, 4294967168
        %vm3530 = vcmp.gt.s32.totalorder %v3526, 0
        %vm3531 = vcmp.gt.s32.totalorder %v3527, 0
        %vm3532 = vcmp.gt.s32.totalorder %v3528, 0
        %vm3533 = vcmp.gt.s32.totalorder %v3529, 0
        %vm3534 = vmor %vm3530, %vm2422
        %vm3535 = vmor %vm3531, %vm2423
        %vm3536 = vmor %vm3532, %vm2424
        %vm3537 = vmor %vm3533, %vm2425
        %vm3538 = vcmp.eq.s32.totalorder %v3466, %v3483
        %vm3539 = vcmp.eq.s32.totalorder %v3467, %v3497
        %vm3540 = vcmp.eq.s32.totalorder %v3468, %v3511
        %vm3541 = vcmp.eq.s32.totalorder %v3469, %v3525
        %v3542 = vsel %vm3534, 1, 0
        %v3543 = vsel %vm3535, 1, 0
        %v3544 = vsel %vm3536, 1, 0
        %v3545 = vsel %vm3537, 1, 0
        %vm3546 = vcmp.eq.s32.totalorder %v3542, 1
        %vm3547 = vcmp.eq.s32.totalorder %v3543, 1
        %vm3548 = vcmp.eq.s32.totalorder %v3544, 1
        %vm3549 = vcmp.eq.s32.totalorder %v3545, 1
        %vm3550 = vmand %vm3538, %vm3546
        %vm3551 = vmand %vm3539, %vm3547
        %vm3552 = vmand %vm3540, %vm3548
        %vm3553 = vmand %vm3541, %vm3549
        %v3554 = vsel %vm3550, 1.0, %v3462
        %v3555 = vsel %vm3551, 1.0, %v3463
        %v3556 = vsel %vm3552, 1.0, %v3464
        %v3557 = vsel %vm3553, 1.0, %v3465
        %3558 = vadd.xlane.f32.xlu0 %v3554
        %v3559 = vpop.xlane.xlu0 %3558
        %3560 = vadd.xlane.f32.xlu0 %v3555
        %v3561 = vpop.xlane.xlu0 %3560
        %3562 = vadd.xlane.f32.xlu0 %v3556
        %v3563 = vpop.xlane.xlu0 %3562
        %3564 = vadd.xlane.f32.xlu0 %v3557
        %v3565 = vpop.xlane.xlu0 %3564
        %v3566 = vrcp.pop %v3559
        %v3567 = vmul.f32 1.0, %v3566
        %v3568 = vrcp.pop %v3561
        %v3569 = vmul.f32 1.0, %v3568
        %v3570 = vrcp.pop %v3563
        %v3571 = vmul.f32 1.0, %v3570
        %v3572 = vrcp.pop %v3565
        %v3573 = vmul.f32 1.0, %v3572
        %v3574 = vmul.f32 %v3554, %v3567
        %v3575 = vmul.f32 %v3555, %v3569
        %v3576 = vmul.f32 %v3556, %v3571
        %v3577 = vmul.f32 %v3557, %v3573
        %3578 = vmatprep.subr.mxu0 0.0
        %3579 = vmatpush1.msra.mxu0 %v628
        %3580 = vmatprep.subr.mxu0 0.0
        %3581 = vmatpush1.msra.mxu0 %v633
        %3582 = vmatprep.subr.mxu0 0.0
        %3583 = vmatpush1.msra.mxu0 %v638
        %3584 = vmatprep.subr.mxu0 0.0
        %3585 = vmatpush1.msra.mxu0 %v643
        %3586 = vmatprep.subr.mxu0 0.0
        %3587 = vmatpush1.msra.mxu0 %v648
        %3588 = vmatprep.subr.mxu0 0.0
        %3589 = vmatpush1.msra.mxu0 %v653
        %3590 = vmatprep.subr.mxu0 0.0
        %3591 = vmatpush1.msra.mxu0 %v658
        %3592 = vmatprep.subr.mxu0 0.0
        %3593 = vmatpush1.msra.mxu0 %v663
        %3594 = vmatprep.subr.mxu0 0.0
        %3595 = vmatpush1.msra.mxu0 %v668
        %3596 = vmatprep.subr.mxu0 0.0
        %3597 = vmatpush1.msra.mxu0 %v673
        %3598 = vmatprep.subr.mxu0 0.0
        %3599 = vmatpush1.msra.mxu0 %v678
        %3600 = vmatprep.subr.mxu0 0.0
        %3601 = vmatpush1.msra.mxu0 %v683
        %3602 = vmatprep.subr.mxu0 0.0
        %3603 = vmatpush1.msra.mxu0 %v688
        %3604 = vmatprep.subr.mxu0 0.0
        %3605 = vmatpush1.msra.mxu0 %v693
        %3606 = vmatprep.subr.mxu0 0.0
        %3607 = vmatpush1.msra.mxu0 %v698
        %3608 = vmatprep.subr.mxu0 0.0
        %3609 = vmatpush1.msra.mxu0 %v703
        %3610 = vmatprep.subr.mxu0 0.0
        %3611 = vmatpush1.msra.mxu0 0.0
        %3612 = vmatprep.subr.mxu0 0.0
        %3613 = vmatpush1.msra.mxu0 0.0
        %3614 = vmatprep.subr.mxu0 0.0
        %3615 = vmatpush1.msra.mxu0 0.0
        %3616 = vmatprep.subr.mxu0 0.0
        %3617 = vmatpush1.msra.mxu0 0.0
        %3618 = vmatprep.subr.mxu0 0.0
        %3619 = vmatpush1.msra.mxu0 0.0
        %3620 = vmatprep.subr.mxu0 0.0
        %3621 = vmatpush1.msra.mxu0 0.0
        %3622 = vmatprep.subr.mxu0 0.0
        %3623 = vmatpush1.msra.mxu0 0.0
        %3624 = vmatprep.subr.mxu0 0.0
        %3625 = vmatpush1.msra.mxu0 0.0
        %3626 = vmatprep.subr.mxu0 0.0
        %3627 = vmatpush1.msra.mxu0 0.0
        %3628 = vmatprep.subr.mxu0 0.0
        %3629 = vmatpush1.msra.mxu0 0.0
        %3630 = vmatprep.subr.mxu0 0.0
        %3631 = vmatpush1.msra.mxu0 0.0
        %3632 = vmatprep.subr.mxu0 0.0
        %3633 = vmatpush1.msra.mxu0 0.0
        %3634 = vmatprep.subr.mxu0 0.0
        %3635 = vmatpush1.msra.mxu0 0.0
        %3636 = vmatprep.subr.mxu0 0.0
        %3637 = vmatpush1.msra.mxu0 0.0
        %3638 = vmatprep.subr.mxu0 0.0
        %3639 = vmatpush1.msra.mxu0 0.0
        %3640 = vmatprep.subr.mxu0 0.0
        %3641 = vmatpush1.msra.mxu0 0.0
        %3642 = vmatprep.mubr.f32.mxu0 0.0
        %3643 = vmatmul.mubr.f32.gmra.mrb[0].mxu0 %v3574
        %v3644 = vpop.f32.mrb[0].mxu0
        %v3645 = vadd.f32 0.0, %v3644
        %v3646 = vpop.f32.mrb[0].mxu0
        %3647 = vmatprep.mubr.f32.mxu0 0.0
        %3648 = vmatmul.mubr.f32.gmra.mrb[0].mxu0 %v3575
        %v3649 = vpop.f32.mrb[0].mxu0
        %v3650 = vadd.f32 0.0, %v3649
        %v3651 = vpop.f32.mrb[0].mxu0
        %3652 = vmatprep.mubr.f32.mxu0 0.0
        %3653 = vmatmul.mubr.f32.gmra.mrb[0].mxu0 %v3576
        %v3654 = vpop.f32.mrb[0].mxu0
        %v3655 = vadd.f32 0.0, %v3654
        %v3656 = vpop.f32.mrb[0].mxu0
        %3657 = vmatprep.mubr.f32.mxu0 0.0
        %3658 = vmatmul.mubr.f32.gmra.mrb[0].mxu0 %v3577
        %v3659 = vpop.f32.mrb[0].mxu0
        %v3660 = vadd.f32 0.0, %v3659
        %v3661 = vpop.f32.mrb[0].mxu0
        %3662 = vdwg.mxu0
        %3663 = vmatprep.subr.mxu0 0.0
        %3664 = vmatpush1.msra.mxu0 %v722
        %3665 = vmatprep.subr.mxu0 0.0
        %3666 = vmatpush1.msra.mxu0 %v723
        %3667 = vmatprep.subr.mxu0 0.0
        %3668 = vmatpush1.msra.mxu0 %v724
        %3669 = vmatprep.subr.mxu0 0.0
        %3670 = vmatpush1.msra.mxu0 %v725
        %3671 = vmatprep.subr.mxu0 0.0
        %3672 = vmatpush1.msra.mxu0 %v726
        %3673 = vmatprep.subr.mxu0 0.0
        %3674 = vmatpush1.msra.mxu0 %v727
        %3675 = vmatprep.subr.mxu0 0.0
        %3676 = vmatpush1.msra.mxu0 %v728
        %3677 = vmatprep.subr.mxu0 0.0
        %3678 = vmatpush1.msra.mxu0 %v729
        %3679 = vmatprep.subr.mxu0 0.0
        %3680 = vmatpush1.msra.mxu0 %v730
        %3681 = vmatprep.subr.mxu0 0.0
        %3682 = vmatpush1.msra.mxu0 %v731
        %3683 = vmatprep.subr.mxu0 0.0
        %3684 = vmatpush1.msra.mxu0 %v732
        %3685 = vmatprep.subr.mxu0 0.0
        %3686 = vmatpush1.msra.mxu0 %v733
        %3687 = vmatprep.subr.mxu0 0.0
        %3688 = vmatpush1.msra.mxu0 %v734
        %3689 = vmatprep.subr.mxu0 0.0
        %3690 = vmatpush1.msra.mxu0 %v735
        %3691 = vmatprep.subr.mxu0 0.0
        %3692 = vmatpush1.msra.mxu0 %v736
        %3693 = vmatprep.subr.mxu0 0.0
        %3694 = vmatpush1.msra.mxu0 %v737
        %3695 = vmatprep.subr.mxu0 0.0
        %3696 = vmatpush1.msra.mxu0 0.0
        %3697 = vmatprep.subr.mxu0 0.0
        %3698 = vmatpush1.msra.mxu0 0.0
        %3699 = vmatprep.subr.mxu0 0.0
        %3700 = vmatpush1.msra.mxu0 0.0
        %3701 = vmatprep.subr.mxu0 0.0
        %3702 = vmatpush1.msra.mxu0 0.0
        %3703 = vmatprep.subr.mxu0 0.0
        %3704 = vmatpush1.msra.mxu0 0.0
        %3705 = vmatprep.subr.mxu0 0.0
        %3706 = vmatpush1.msra.mxu0 0.0
        %3707 = vmatprep.subr.mxu0 0.0
        %3708 = vmatpush1.msra.mxu0 0.0
        %3709 = vmatprep.subr.mxu0 0.0
        %3710 = vmatpush1.msra.mxu0 0.0
        %3711 = vmatprep.subr.mxu0 0.0
        %3712 = vmatpush1.msra.mxu0 0.0
        %3713 = vmatprep.subr.mxu0 0.0
        %3714 = vmatpush1.msra.mxu0 0.0
        %3715 = vmatprep.subr.mxu0 0.0
        %3716 = vmatpush1.msra.mxu0 0.0
        %3717 = vmatprep.subr.mxu0 0.0
        %3718 = vmatpush1.msra.mxu0 0.0
        %3719 = vmatprep.subr.mxu0 0.0
        %3720 = vmatpush1.msra.mxu0 0.0
        %3721 = vmatprep.subr.mxu0 0.0
        %3722 = vmatpush1.msra.mxu0 0.0
        %3723 = vmatprep.subr.mxu0 0.0
        %3724 = vmatpush1.msra.mxu0 0.0
        %3725 = vmatprep.subr.mxu0 0.0
        %3726 = vmatpush1.msra.mxu0 0.0
        %3727 = vmatprep.mubr.f32.mxu0 0.0
        %3728 = vmatmul.mubr.f32.gmra.mrb[0].mxu0 %v3645
        %v3729 = vpop.f32.mrb[0].mxu0
        %v3730 = vadd.f32 0.0, %v3729
        %v3731 = vpop.f32.mrb[0].mxu0
        %3732 = vmatprep.mubr.f32.mxu0 0.0
        %3733 = vmatmul.mubr.f32.gmra.mrb[0].mxu0 %v3650
        %v3734 = vpop.f32.mrb[0].mxu0
        %v3735 = vadd.f32 0.0, %v3734
        %v3736 = vpop.f32.mrb[0].mxu0
        %3737 = vmatprep.mubr.f32.mxu0 0.0
        %3738 = vmatmul.mubr.f32.gmra.mrb[0].mxu0 %v3655
        %v3739 = vpop.f32.mrb[0].mxu0
        %v3740 = vadd.f32 0.0, %v3739
        %v3741 = vpop.f32.mrb[0].mxu0
        %3742 = vmatprep.mubr.f32.mxu0 0.0
        %3743 = vmatmul.mubr.f32.gmra.mrb[0].mxu0 %v3660
        %v3744 = vpop.f32.mrb[0].mxu0
        %v3745 = vadd.f32 0.0, %v3744
        %v3746 = vpop.f32.mrb[0].mxu0
        %3747 = vdwg.mxu0
        %3748 = vmatprep.subr.mxu0 0.0
        %3749 = vmatpush1.msra.mxu0 %v706
        %3750 = vmatprep.subr.mxu0 0.0
        %3751 = vmatpush1.msra.mxu0 %v707
        %3752 = vmatprep.subr.mxu0 0.0
        %3753 = vmatpush1.msra.mxu0 %v708
        %3754 = vmatprep.subr.mxu0 0.0
        %3755 = vmatpush1.msra.mxu0 %v709
        %3756 = vmatprep.subr.mxu0 0.0
        %3757 = vmatpush1.msra.mxu0 %v710
        %3758 = vmatprep.subr.mxu0 0.0
        %3759 = vmatpush1.msra.mxu0 %v711
        %3760 = vmatprep.subr.mxu0 0.0
        %3761 = vmatpush1.msra.mxu0 %v712
        %3762 = vmatprep.subr.mxu0 0.0
        %3763 = vmatpush1.msra.mxu0 %v713
        %3764 = vmatprep.subr.mxu0 0.0
        %3765 = vmatpush1.msra.mxu0 %v714
        %3766 = vmatprep.subr.mxu0 0.0
        %3767 = vmatpush1.msra.mxu0 %v715
        %3768 = vmatprep.subr.mxu0 0.0
        %3769 = vmatpush1.msra.mxu0 %v716
        %3770 = vmatprep.subr.mxu0 0.0
        %3771 = vmatpush1.msra.mxu0 %v717
        %3772 = vmatprep.subr.mxu0 0.0
        %3773 = vmatpush1.msra.mxu0 %v718
        %3774 = vmatprep.subr.mxu0 0.0
        %3775 = vmatpush1.msra.mxu0 %v719
        %3776 = vmatprep.subr.mxu0 0.0
        %3777 = vmatpush1.msra.mxu0 %v720
        %3778 = vmatprep.subr.mxu0 0.0
        %3779 = vmatpush1.msra.mxu0 %v721
        %3780 = vmatprep.subr.mxu0 0.0
        %3781 = vmatpush1.msra.mxu0 0.0
        %3782 = vmatprep.subr.mxu0 0.0
        %3783 = vmatpush1.msra.mxu0 0.0
        %3784 = vmatprep.subr.mxu0 0.0
        %3785 = vmatpush1.msra.mxu0 0.0
        %3786 = vmatprep.subr.mxu0 0.0
        %3787 = vmatpush1.msra.mxu0 0.0
        %3788 = vmatprep.subr.mxu0 0.0
        %3789 = vmatpush1.msra.mxu0 0.0
        %3790 = vmatprep.subr.mxu0 0.0
        %3791 = vmatpush1.msra.mxu0 0.0
        %3792 = vmatprep.subr.mxu0 0.0
        %3793 = vmatpush1.msra.mxu0 0.0
        %3794 = vmatprep.subr.mxu0 0.0
        %3795 = vmatpush1.msra.mxu0 0.0
        %3796 = vmatprep.subr.mxu0 0.0
        %3797 = vmatpush1.msra.mxu0 0.0
        %3798 = vmatprep.subr.mxu0 0.0
        %3799 = vmatpush1.msra.mxu0 0.0
        %3800 = vmatprep.subr.mxu0 0.0
        %3801 = vmatpush1.msra.mxu0 0.0
        %3802 = vmatprep.subr.mxu0 0.0
        %3803 = vmatpush1.msra.mxu0 0.0
        %3804 = vmatprep.subr.mxu0 0.0
        %3805 = vmatpush1.msra.mxu0 0.0
        %3806 = vmatprep.subr.mxu0 0.0
        %3807 = vmatpush1.msra.mxu0 0.0
        %3808 = vmatprep.subr.mxu0 0.0
        %3809 = vmatpush1.msra.mxu0 0.0
        %3810 = vmatprep.subr.mxu0 0.0
        %3811 = vmatpush1.msra.mxu0 0.0
        %3812 = vmatprep.mubr.f32.mxu0 0.0
        %3813 = vmatmul.mubr.f32.gmra.mrb[0].mxu0 %v648
        %v3814 = vpop.f32.mrb[0].mxu0
        %v3815 = vadd.f32 %v3730, %v3814
        %v3816 = vpop.f32.mrb[0].mxu0
        %3817 = vmatprep.mubr.f32.mxu0 0.0
        %3818 = vmatmul.mubr.f32.gmra.mrb[0].mxu0 %v653
        %v3819 = vpop.f32.mrb[0].mxu0
        %v3820 = vadd.f32 %v3735, %v3819
        %v3821 = vpop.f32.mrb[0].mxu0
        %3822 = vmatprep.mubr.f32.mxu0 0.0
        %3823 = vmatmul.mubr.f32.gmra.mrb[0].mxu0 %v658
        %v3824 = vpop.f32.mrb[0].mxu0
        %v3825 = vadd.f32 %v3740, %v3824
        %v3826 = vpop.f32.mrb[0].mxu0
        %3827 = vmatprep.mubr.f32.mxu0 0.0
        %3828 = vmatmul.mubr.f32.gmra.mrb[0].mxu0 %v663
        %v3829 = vpop.f32.mrb[0].mxu0
        %v3830 = vadd.f32 %v3745, %v3829
        %v3831 = vpop.f32.mrb[0].mxu0
        %3832 = vdwg.mxu0
        %v3833 = vadd.f32 %v3815, %v2272
        %v3834 = vadd.f32 %v3820, %v2272
        %v3835 = vadd.f32 %v3825, %v2272
        %v3836 = vadd.f32 %v3830, %v2272
        %v3837 = vadd.s32 %v2279, 32
        %v3838 = vadd.s32 %v2280, 32
        %v3839 = vadd.s32 %v2281, 32
        %v3840 = vadd.s32 %v2282, 32
        %vm3841 = vcmp.lt.s32.totalorder %v3837, %v2283
        %vm3842 = vcmp.lt.s32.totalorder %v3838, %v2283
        %vm3843 = vcmp.lt.s32.totalorder %v3839, %v2283
        %vm3844 = vcmp.lt.s32.totalorder %v3840, %v2283
        %v3845 = vsel %vm3841, 1, 0
        %v3846 = vsel %vm3842, 1, 0
        %v3847 = vsel %vm3843, 1, 0
        %v3848 = vsel %vm3844, 1, 0
        %v3849 = vcvt.s32.f32 %v3845
        %v3850 = vcvt.s32.f32 %v3846
        %v3851 = vcvt.s32.f32 %v3847
        %v3852 = vcvt.s32.f32 %v3848
        %v3853 = vmul.f32 %v3833, %v3849
        %v3854 = vmul.f32 %v3834, %v3850
        %v3855 = vmul.f32 %v3835, %v3851
        %v3856 = vmul.f32 %v3836, %v3852
        %v3857 = vadd.f32 %v3853, %v3854
        %v3858 = vadd.f32 %v3857, %v3855
        %v3859 = vadd.f32 %v3858, %v3856
        %v3860 = vrot.slane %v3859, 4
        %v3861 = vadd.f32 %v3859, %v3860
        %v3862 = vrot.slane %v3861, 2
        %v3863 = vadd.f32 %v3861, %v3862
        %v3864 = vrot.slane %v3863, 1
        %v3865 = vadd.f32 %v3863, %v3864
        %v3866 = vadd.f32 %v2309, %v3865
        %v3867 = vld [vmem:[%s449 + $0x40] sm:$0xff]
        %v3868 = vld [vmem:[%s449 + $0x48] sm:$0xff]
        %v3869 = vld [vmem:[%s449 + $0x50] sm:$0xff]
        %v3870 = vld [vmem:[%s449 + $0x58] sm:$0xff]
        %v3871 = vld [vmem:[%s746 + $0x40] sm:$0xff]
        %v3872 = vld [vmem:[%s746 + $0x48] sm:$0xff]
        %v3873 = vld [vmem:[%s746 + $0x50] sm:$0xff]
        %v3874 = vld [vmem:[%s746 + $0x58] sm:$0xff]
        %v3875 = vadd.f32 %v3867, %v3871
        %v3876 = vadd.f32 %v3868, %v3872
        %v3877 = vadd.f32 %v3869, %v3873
        %v3878 = vadd.f32 %v3870, %v3874
        %v3879 = vld [vmem:[%s755 + $0x40] sm:$0xff]
        %v3880 = vld [vmem:[%s755 + $0x48] sm:$0xff]
        %v3881 = vld [vmem:[%s755 + $0x50] sm:$0xff]
        %v3882 = vld [vmem:[%s755 + $0x58] sm:$0xff]
        %v3883 = vadd.f32 %v3875, %v3879
        %v3884 = vadd.f32 %v3876, %v3880
        %v3885 = vadd.f32 %v3877, %v3881
        %v3886 = vadd.f32 %v3878, %v3882
        %v3887 = vld [vmem:[%s764 + $0x40] sm:$0xff]
        %v3888 = vld [vmem:[%s764 + $0x48] sm:$0xff]
        %v3889 = vld [vmem:[%s764 + $0x50] sm:$0xff]
        %v3890 = vld [vmem:[%s764 + $0x58] sm:$0xff]
        %v3891 = vadd.f32 %v3883, %v3887
        %v3892 = vadd.f32 %v3884, %v3888
        %v3893 = vadd.f32 %v3885, %v3889
        %v3894 = vadd.f32 %v3886, %v3890
        %v3899 = vshra.s32 %v3891, 31
        %v3900 = vshra.s32 %v3892, 31
        %v3901 = vshra.s32 %v3893, 31
        %v3902 = vshra.s32 %v3894, 31
        %v3903 = vand.u32 %v3899, 2147483647
        %v3904 = vand.u32 %v3900, 2147483647
        %v3905 = vand.u32 %v3901, 2147483647
        %v3906 = vand.u32 %v3902, 2147483647
        %v3907 = vxor.u32 %v3891, %v3903
        %v3908 = vxor.u32 %v3892, %v3904
        %v3909 = vxor.u32 %v3893, %v3905
        %v3910 = vxor.u32 %v3894, %v3906
        %v3911 = vand.u32 %v3907, 4294967168
        %v3912 = vand.u32 %v3908, 4294967168
        %v3913 = vand.u32 %v3909, 4294967168
        %v3914 = vand.u32 %v3910, 4294967168
        %v3915 = vor.u32 %v3911, %v741
        %v3916 = vor.u32 %v3912, %v741
        %v3917 = vor.u32 %v3913, %v741
        %v3918 = vor.u32 %v3914, %v741
        %v3919 = vand.u32 %v3915, 65535
        %v3920 = vshra.s32 %v3915, 16
        %v3921 = vcvt.s32.f32 %v3919
        %v3922 = vcvt.s32.f32 %v3920
        %3923 = vmax.xlane.f32.xlu0 %v3922
        %v3924 = vpop.xlane.xlu0 %3923
        %vm3925 = vcmp.eq.f32.partialorder %v3922, %v3924
        %v3926 = vsel %vm3925, %v3921, -inf
        %3927 = vmax.xlane.f32.xlu0 %v3926
        %v3928 = vpop.xlane.xlu0 %3927
        %v3929 = vcvt.f32.s32 %v3928
        %v3930 = vcvt.f32.s32 %v3924
        %v3931 = vshll.u32 %v3930, 16
        %v3932 = vadd.s32 %v3931, %v3929
        %v3933 = vand.u32 %v3916, 65535
        %v3934 = vshra.s32 %v3916, 16
        %v3935 = vcvt.s32.f32 %v3933
        %v3936 = vcvt.s32.f32 %v3934
        %3937 = vmax.xlane.f32.xlu0 %v3936
        %v3938 = vpop.xlane.xlu0 %3937
        %vm3939 = vcmp.eq.f32.partialorder %v3936, %v3938
        %v3940 = vsel %vm3939, %v3935, -inf
        %3941 = vmax.xlane.f32.xlu0 %v3940
        %v3942 = vpop.xlane.xlu0 %3941
        %v3943 = vcvt.f32.s32 %v3942
        %v3944 = vcvt.f32.s32 %v3938
        %v3945 = vshll.u32 %v3944, 16
        %v3946 = vadd.s32 %v3945, %v3943
        %v3947 = vand.u32 %v3917, 65535
        %v3948 = vshra.s32 %v3917, 16
        %v3949 = vcvt.s32.f32 %v3947
        %v3950 = vcvt.s32.f32 %v3948
        %3951 = vmax.xlane.f32.xlu0 %v3950
        %v3952 = vpop.xlane.xlu0 %3951
        %vm3953 = vcmp.eq.f32.partialorder %v3950, %v3952
        %v3954 = vsel %vm3953, %v3949, -inf
        %3955 = vmax.xlane.f32.xlu0 %v3954
        %v3956 = vpop.xlane.xlu0 %3955
        %v3957 = vcvt.f32.s32 %v3956
        %v3958 = vcvt.f32.s32 %v3952
        %v3959 = vshll.u32 %v3958, 16
        %v3960 = vadd.s32 %v3959, %v3957
        %v3961 = vand.u32 %v3918, 65535
        %v3962 = vshra.s32 %v3918, 16
        %v3963 = vcvt.s32.f32 %v3961
        %v3964 = vcvt.s32.f32 %v3962
        %3965 = vmax.xlane.f32.xlu0 %v3964
        %v3966 = vpop.xlane.xlu0 %3965
        %vm3967 = vcmp.eq.f32.partialorder %v3964, %v3966
        %v3968 = vsel %vm3967, %v3963, -inf
        %3969 = vmax.xlane.f32.xlu0 %v3968
        %v3970 = vpop.xlane.xlu0 %3969
        %v3971 = vcvt.f32.s32 %v3970
        %v3972 = vcvt.f32.s32 %v3966
        %v3973 = vshll.u32 %v3972, 16
        %v3974 = vadd.s32 %v3973, %v3971
        %v3975 = vand.u32 %v3932, 4294967168
        %v3976 = vand.u32 %v3946, 4294967168
        %v3977 = vand.u32 %v3960, 4294967168
        %v3978 = vand.u32 %v3974, 4294967168
        %vm3979 = vcmp.le.s32.totalorder %v3975, 0
        %vm3980 = vcmp.le.s32.totalorder %v3976, 0
        %vm3981 = vcmp.le.s32.totalorder %v3977, 0
        %vm3982 = vcmp.le.s32.totalorder %v3978, 0
        %vm3983 = vcmp.gt.s32.totalorder %v3975, 0
        %vm3984 = vcmp.gt.s32.totalorder %v3976, 0
        %vm3985 = vcmp.gt.s32.totalorder %v3977, 0
        %vm3986 = vcmp.gt.s32.totalorder %v3978, 0
        %vm3987 = vmor %vm3983, %vm3979
        %vm3988 = vmor %vm3984, %vm3980
        %vm3989 = vmor %vm3985, %vm3981
        %vm3990 = vmor %vm3986, %vm3982
        %vm3991 = vcmp.eq.s32.totalorder %v3915, %v3932
        %vm3992 = vcmp.eq.s32.totalorder %v3916, %v3946
        %vm3993 = vcmp.eq.s32.totalorder %v3917, %v3960
        %vm3994 = vcmp.eq.s32.totalorder %v3918, %v3974
        %v3995 = vsel %vm3987, 1, 0
        %v3996 = vsel %vm3988, 1, 0
        %v3997 = vsel %vm3989, 1, 0
        %v3998 = vsel %vm3990, 1, 0
        %vm3999 = vcmp.eq.s32.totalorder %v3995, 1
        %vm4000 = vcmp.eq.s32.totalorder %v3996, 1
        %vm4001 = vcmp.eq.s32.totalorder %v3997, 1
        %vm4002 = vcmp.eq.s32.totalorder %v3998, 1
        %vm4003 = vmand %vm3991, %vm3999
        %vm4004 = vmand %vm3992, %vm4000
        %vm4005 = vmand %vm3993, %vm4001
        %vm4006 = vmand %vm3994, %vm4002
        %v4007 = vsel %vm4003, 1.0, 0.0
        %v4008 = vsel %vm4004, 1.0, 0.0
        %v4009 = vsel %vm4005, 1.0, 0.0
        %v4010 = vsel %vm4006, 1.0, 0.0
        %v4011 = vsel %vm3991, 2147483648, %v3915
        %v4012 = vsel %vm3992, 2147483648, %v3916
        %v4013 = vsel %vm3993, 2147483648, %v3917
        %v4014 = vsel %vm3994, 2147483648, %v3918
        %v4015 = vand.u32 %v4011, 65535
        %v4016 = vshra.s32 %v4011, 16
        %v4017 = vcvt.s32.f32 %v4015
        %v4018 = vcvt.s32.f32 %v4016
        %4019 = vmax.xlane.f32.xlu0 %v4018
        %v4020 = vpop.xlane.xlu0 %4019
        %vm4021 = vcmp.eq.f32.partialorder %v4018, %v4020
        %v4022 = vsel %vm4021, %v4017, -inf
        %4023 = vmax.xlane.f32.xlu0 %v4022
        %v4024 = vpop.xlane.xlu0 %4023
        %v4025 = vcvt.f32.s32 %v4024
        %v4026 = vcvt.f32.s32 %v4020
        %v4027 = vshll.u32 %v4026, 16
        %v4028 = vadd.s32 %v4027, %v4025
        %v4029 = vand.u32 %v4012, 65535
        %v4030 = vshra.s32 %v4012, 16
        %v4031 = vcvt.s32.f32 %v4029
        %v4032 = vcvt.s32.f32 %v4030
        %4033 = vmax.xlane.f32.xlu0 %v4032
        %v4034 = vpop.xlane.xlu0 %4033
        %vm4035 = vcmp.eq.f32.partialorder %v4032, %v4034
        %v4036 = vsel %vm4035, %v4031, -inf
        %4037 = vmax.xlane.f32.xlu0 %v4036
        %v4038 = vpop.xlane.xlu0 %4037
        %v4039 = vcvt.f32.s32 %v4038
        %v4040 = vcvt.f32.s32 %v4034
        %v4041 = vshll.u32 %v4040, 16
        %v4042 = vadd.s32 %v4041, %v4039
        %v4043 = vand.u32 %v4013, 65535
        %v4044 = vshra.s32 %v4013, 16
        %v4045 = vcvt.s32.f32 %v4043
        %v4046 = vcvt.s32.f32 %v4044
        %4047 = vmax.xlane.f32.xlu0 %v4046
        %v4048 = vpop.xlane.xlu0 %4047
        %vm4049 = vcmp.eq.f32.partialorder %v4046, %v4048
        %v4050 = vsel %vm4049, %v4045, -inf
        %4051 = vmax.xlane.f32.xlu0 %v4050
        %v4052 = vpop.xlane.xlu0 %4051
        %v4053 = vcvt.f32.s32 %v4052
        %v4054 = vcvt.f32.s32 %v4048
        %v4055 = vshll.u32 %v4054, 16
        %v4056 = vadd.s32 %v4055, %v4053
        %v4057 = vand.u32 %v4014, 65535
        %v4058 = vshra.s32 %v4014, 16
        %v4059 = vcvt.s32.f32 %v4057
        %v4060 = vcvt.s32.f32 %v4058
        %4061 = vmax.xlane.f32.xlu0 %v4060
        %v4062 = vpop.xlane.xlu0 %4061
        %vm4063 = vcmp.eq.f32.partialorder %v4060, %v4062
        %v4064 = vsel %vm4063, %v4059, -inf
        %4065 = vmax.xlane.f32.xlu0 %v4064
        %v4066 = vpop.xlane.xlu0 %4065
        %v4067 = vcvt.f32.s32 %v4066
        %v4068 = vcvt.f32.s32 %v4062
        %v4069 = vshll.u32 %v4068, 16
        %v4070 = vadd.s32 %v4069, %v4067
        %v4071 = vand.u32 %v4028, 4294967168
        %v4072 = vand.u32 %v4042, 4294967168
        %v4073 = vand.u32 %v4056, 4294967168
        %v4074 = vand.u32 %v4070, 4294967168
        %vm4075 = vcmp.gt.s32.totalorder %v4071, 0
        %vm4076 = vcmp.gt.s32.totalorder %v4072, 0
        %vm4077 = vcmp.gt.s32.totalorder %v4073, 0
        %vm4078 = vcmp.gt.s32.totalorder %v4074, 0
        %vm4079 = vmor %vm4075, %vm3979
        %vm4080 = vmor %vm4076, %vm3980
        %vm4081 = vmor %vm4077, %vm3981
        %vm4082 = vmor %vm4078, %vm3982
        %vm4083 = vcmp.eq.s32.totalorder %v4011, %v4028
        %vm4084 = vcmp.eq.s32.totalorder %v4012, %v4042
        %vm4085 = vcmp.eq.s32.totalorder %v4013, %v4056
        %vm4086 = vcmp.eq.s32.totalorder %v4014, %v4070
        %v4087 = vsel %vm4079, 1, 0
        %v4088 = vsel %vm4080, 1, 0
        %v4089 = vsel %vm4081, 1, 0
        %v4090 = vsel %vm4082, 1, 0
        %vm4091 = vcmp.eq.s32.totalorder %v4087, 1
        %vm4092 = vcmp.eq.s32.totalorder %v4088, 1
        %vm4093 = vcmp.eq.s32.totalorder %v4089, 1
        %vm4094 = vcmp.eq.s32.totalorder %v4090, 1
        %vm4095 = vmand %vm4083, %vm4091
        %vm4096 = vmand %vm4084, %vm4092
        %vm4097 = vmand %vm4085, %vm4093
        %vm4098 = vmand %vm4086, %vm4094
        %v4099 = vsel %vm4095, 1.0, %v4007
        %v4100 = vsel %vm4096, 1.0, %v4008
        %v4101 = vsel %vm4097, 1.0, %v4009
        %v4102 = vsel %vm4098, 1.0, %v4010
        %v4103 = vsel %vm4083, 2147483648, %v4011
        %v4104 = vsel %vm4084, 2147483648, %v4012
        %v4105 = vsel %vm4085, 2147483648, %v4013
        %v4106 = vsel %vm4086, 2147483648, %v4014
        %v4107 = vand.u32 %v4103, 65535
        %v4108 = vshra.s32 %v4103, 16
        %v4109 = vcvt.s32.f32 %v4107
        %v4110 = vcvt.s32.f32 %v4108
        %4111 = vmax.xlane.f32.xlu0 %v4110
        %v4112 = vpop.xlane.xlu0 %4111
        %vm4113 = vcmp.eq.f32.partialorder %v4110, %v4112
        %v4114 = vsel %vm4113, %v4109, -inf
        %4115 = vmax.xlane.f32.xlu0 %v4114
        %v4116 = vpop.xlane.xlu0 %4115
        %v4117 = vcvt.f32.s32 %v4116
        %v4118 = vcvt.f32.s32 %v4112
        %v4119 = vshll.u32 %v4118, 16
        %v4120 = vadd.s32 %v4119, %v4117
        %v4121 = vand.u32 %v4104, 65535
        %v4122 = vshra.s32 %v4104, 16
        %v4123 = vcvt.s32.f32 %v4121
        %v4124 = vcvt.s32.f32 %v4122
        %4125 = vmax.xlane.f32.xlu0 %v4124
        %v4126 = vpop.xlane.xlu0 %4125
        %vm4127 = vcmp.eq.f32.partialorder %v4124, %v4126
        %v4128 = vsel %vm4127, %v4123, -inf
        %4129 = vmax.xlane.f32.xlu0 %v4128
        %v4130 = vpop.xlane.xlu0 %4129
        %v4131 = vcvt.f32.s32 %v4130
        %v4132 = vcvt.f32.s32 %v4126
        %v4133 = vshll.u32 %v4132, 16
        %v4134 = vadd.s32 %v4133, %v4131
        %v4135 = vand.u32 %v4105, 65535
        %v4136 = vshra.s32 %v4105, 16
        %v4137 = vcvt.s32.f32 %v4135
        %v4138 = vcvt.s32.f32 %v4136
        %4139 = vmax.xlane.f32.xlu0 %v4138
        %v4140 = vpop.xlane.xlu0 %4139
        %vm4141 = vcmp.eq.f32.partialorder %v4138, %v4140
        %v4142 = vsel %vm4141, %v4137, -inf
        %4143 = vmax.xlane.f32.xlu0 %v4142
        %v4144 = vpop.xlane.xlu0 %4143
        %v4145 = vcvt.f32.s32 %v4144
        %v4146 = vcvt.f32.s32 %v4140
        %v4147 = vshll.u32 %v4146, 16
        %v4148 = vadd.s32 %v4147, %v4145
        %v4149 = vand.u32 %v4106, 65535
        %v4150 = vshra.s32 %v4106, 16
        %v4151 = vcvt.s32.f32 %v4149
        %v4152 = vcvt.s32.f32 %v4150
        %4153 = vmax.xlane.f32.xlu0 %v4152
        %v4154 = vpop.xlane.xlu0 %4153
        %vm4155 = vcmp.eq.f32.partialorder %v4152, %v4154
        %v4156 = vsel %vm4155, %v4151, -inf
        %4157 = vmax.xlane.f32.xlu0 %v4156
        %v4158 = vpop.xlane.xlu0 %4157
        %v4159 = vcvt.f32.s32 %v4158
        %v4160 = vcvt.f32.s32 %v4154
        %v4161 = vshll.u32 %v4160, 16
        %v4162 = vadd.s32 %v4161, %v4159
        %v4163 = vand.u32 %v4120, 4294967168
        %v4164 = vand.u32 %v4134, 4294967168
        %v4165 = vand.u32 %v4148, 4294967168
        %v4166 = vand.u32 %v4162, 4294967168
        %vm4167 = vcmp.gt.s32.totalorder %v4163, 0
        %vm4168 = vcmp.gt.s32.totalorder %v4164, 0
        %vm4169 = vcmp.gt.s32.totalorder %v4165, 0
        %vm4170 = vcmp.gt.s32.totalorder %v4166, 0
        %vm4171 = vmor %vm4167, %vm3979
        %vm4172 = vmor %vm4168, %vm3980
        %vm4173 = vmor %vm4169, %vm3981
        %vm4174 = vmor %vm4170, %vm3982
        %vm4175 = vcmp.eq.s32.totalorder %v4103, %v4120
        %vm4176 = vcmp.eq.s32.totalorder %v4104, %v4134
        %vm4177 = vcmp.eq.s32.totalorder %v4105, %v4148
        %vm4178 = vcmp.eq.s32.totalorder %v4106, %v4162
        %v4179 = vsel %vm4171, 1, 0
        %v4180 = vsel %vm4172, 1, 0
        %v4181 = vsel %vm4173, 1, 0
        %v4182 = vsel %vm4174, 1, 0
        %vm4183 = vcmp.eq.s32.totalorder %v4179, 1
        %vm4184 = vcmp.eq.s32.totalorder %v4180, 1
        %vm4185 = vcmp.eq.s32.totalorder %v4181, 1
        %vm4186 = vcmp.eq.s32.totalorder %v4182, 1
        %vm4187 = vmand %vm4175, %vm4183
        %vm4188 = vmand %vm4176, %vm4184
        %vm4189 = vmand %vm4177, %vm4185
        %vm4190 = vmand %vm4178, %vm4186
        %v4191 = vsel %vm4187, 1.0, %v4099
        %v4192 = vsel %vm4188, 1.0, %v4100
        %v4193 = vsel %vm4189, 1.0, %v4101
        %v4194 = vsel %vm4190, 1.0, %v4102
        %v4195 = vsel %vm4175, 2147483648, %v4103
        %v4196 = vsel %vm4176, 2147483648, %v4104
        %v4197 = vsel %vm4177, 2147483648, %v4105
        %v4198 = vsel %vm4178, 2147483648, %v4106
        %v4199 = vand.u32 %v4195, 65535
        %v4200 = vshra.s32 %v4195, 16
        %v4201 = vcvt.s32.f32 %v4199
        %v4202 = vcvt.s32.f32 %v4200
        %4203 = vmax.xlane.f32.xlu0 %v4202
        %v4204 = vpop.xlane.xlu0 %4203
        %vm4205 = vcmp.eq.f32.partialorder %v4202, %v4204
        %v4206 = vsel %vm4205, %v4201, -inf
        %4207 = vmax.xlane.f32.xlu0 %v4206
        %v4208 = vpop.xlane.xlu0 %4207
        %v4209 = vcvt.f32.s32 %v4208
        %v4210 = vcvt.f32.s32 %v4204
        %v4211 = vshll.u32 %v4210, 16
        %v4212 = vadd.s32 %v4211, %v4209
        %v4213 = vand.u32 %v4196, 65535
        %v4214 = vshra.s32 %v4196, 16
        %v4215 = vcvt.s32.f32 %v4213
        %v4216 = vcvt.s32.f32 %v4214
        %4217 = vmax.xlane.f32.xlu0 %v4216
        %v4218 = vpop.xlane.xlu0 %4217
        %vm4219 = vcmp.eq.f32.partialorder %v4216, %v4218
        %v4220 = vsel %vm4219, %v4215, -inf
        %4221 = vmax.xlane.f32.xlu0 %v4220
        %v4222 = vpop.xlane.xlu0 %4221
        %v4223 = vcvt.f32.s32 %v4222
        %v4224 = vcvt.f32.s32 %v4218
        %v4225 = vshll.u32 %v4224, 16
        %v4226 = vadd.s32 %v4225, %v4223
        %v4227 = vand.u32 %v4197, 65535
        %v4228 = vshra.s32 %v4197, 16
        %v4229 = vcvt.s32.f32 %v4227
        %v4230 = vcvt.s32.f32 %v4228
        %4231 = vmax.xlane.f32.xlu0 %v4230
        %v4232 = vpop.xlane.xlu0 %4231
        %vm4233 = vcmp.eq.f32.partialorder %v4230, %v4232
        %v4234 = vsel %vm4233, %v4229, -inf
        %4235 = vmax.xlane.f32.xlu0 %v4234
        %v4236 = vpop.xlane.xlu0 %4235
        %v4237 = vcvt.f32.s32 %v4236
        %v4238 = vcvt.f32.s32 %v4232
        %v4239 = vshll.u32 %v4238, 16
        %v4240 = vadd.s32 %v4239, %v4237
        %v4241 = vand.u32 %v4198, 65535
        %v4242 = vshra.s32 %v4198, 16
        %v4243 = vcvt.s32.f32 %v4241
        %v4244 = vcvt.s32.f32 %v4242
        %4245 = vmax.xlane.f32.xlu0 %v4244
        %v4246 = vpop.xlane.xlu0 %4245
        %vm4247 = vcmp.eq.f32.partialorder %v4244, %v4246
        %v4248 = vsel %vm4247, %v4243, -inf
        %4249 = vmax.xlane.f32.xlu0 %v4248
        %v4250 = vpop.xlane.xlu0 %4249
        %v4251 = vcvt.f32.s32 %v4250
        %v4252 = vcvt.f32.s32 %v4246
        %v4253 = vshll.u32 %v4252, 16
        %v4254 = vadd.s32 %v4253, %v4251
        %v4255 = vand.u32 %v4212, 4294967168
        %v4256 = vand.u32 %v4226, 4294967168
        %v4257 = vand.u32 %v4240, 4294967168
        %v4258 = vand.u32 %v4254, 4294967168
        %vm4259 = vcmp.gt.s32.totalorder %v4255, 0
        %vm4260 = vcmp.gt.s32.totalorder %v4256, 0
        %vm4261 = vcmp.gt.s32.totalorder %v4257, 0
        %vm4262 = vcmp.gt.s32.totalorder %v4258, 0
        %vm4263 = vmor %vm4259, %vm3979
        %vm4264 = vmor %vm4260, %vm3980
        %vm4265 = vmor %vm4261, %vm3981
        %vm4266 = vmor %vm4262, %vm3982
        %vm4267 = vcmp.eq.s32.totalorder %v4195, %v4212
        %vm4268 = vcmp.eq.s32.totalorder %v4196, %v4226
        %vm4269 = vcmp.eq.s32.totalorder %v4197, %v4240
        %vm4270 = vcmp.eq.s32.totalorder %v4198, %v4254
        %v4271 = vsel %vm4263, 1, 0
        %v4272 = vsel %vm4264, 1, 0
        %v4273 = vsel %vm4265, 1, 0
        %v4274 = vsel %vm4266, 1, 0
        %vm4275 = vcmp.eq.s32.totalorder %v4271, 1
        %vm4276 = vcmp.eq.s32.totalorder %v4272, 1
        %vm4277 = vcmp.eq.s32.totalorder %v4273, 1
        %vm4278 = vcmp.eq.s32.totalorder %v4274, 1
        %vm4279 = vmand %vm4267, %vm4275
        %vm4280 = vmand %vm4268, %vm4276
        %vm4281 = vmand %vm4269, %vm4277
        %vm4282 = vmand %vm4270, %vm4278
        %v4283 = vsel %vm4279, 1.0, %v4191
        %v4284 = vsel %vm4280, 1.0, %v4192
        %v4285 = vsel %vm4281, 1.0, %v4193
        %v4286 = vsel %vm4282, 1.0, %v4194
        %v4287 = vsel %vm4267, 2147483648, %v4195
        %v4288 = vsel %vm4268, 2147483648, %v4196
        %v4289 = vsel %vm4269, 2147483648, %v4197
        %v4290 = vsel %vm4270, 2147483648, %v4198
        %v4291 = vand.u32 %v4287, 65535
        %v4292 = vshra.s32 %v4287, 16
        %v4293 = vcvt.s32.f32 %v4291
        %v4294 = vcvt.s32.f32 %v4292
        %4295 = vmax.xlane.f32.xlu0 %v4294
        %v4296 = vpop.xlane.xlu0 %4295
        %vm4297 = vcmp.eq.f32.partialorder %v4294, %v4296
        %v4298 = vsel %vm4297, %v4293, -inf
        %4299 = vmax.xlane.f32.xlu0 %v4298
        %v4300 = vpop.xlane.xlu0 %4299
        %v4301 = vcvt.f32.s32 %v4300
        %v4302 = vcvt.f32.s32 %v4296
        %v4303 = vshll.u32 %v4302, 16
        %v4304 = vadd.s32 %v4303, %v4301
        %v4305 = vand.u32 %v4288, 65535
        %v4306 = vshra.s32 %v4288, 16
        %v4307 = vcvt.s32.f32 %v4305
        %v4308 = vcvt.s32.f32 %v4306
        %4309 = vmax.xlane.f32.xlu0 %v4308
        %v4310 = vpop.xlane.xlu0 %4309
        %vm4311 = vcmp.eq.f32.partialorder %v4308, %v4310
        %v4312 = vsel %vm4311, %v4307, -inf
        %4313 = vmax.xlane.f32.xlu0 %v4312
        %v4314 = vpop.xlane.xlu0 %4313
        %v4315 = vcvt.f32.s32 %v4314
        %v4316 = vcvt.f32.s32 %v4310
        %v4317 = vshll.u32 %v4316, 16
        %v4318 = vadd.s32 %v4317, %v4315
        %v4319 = vand.u32 %v4289, 65535
        %v4320 = vshra.s32 %v4289, 16
        %v4321 = vcvt.s32.f32 %v4319
        %v4322 = vcvt.s32.f32 %v4320
        %4323 = vmax.xlane.f32.xlu0 %v4322
        %v4324 = vpop.xlane.xlu0 %4323
        %vm4325 = vcmp.eq.f32.partialorder %v4322, %v4324
        %v4326 = vsel %vm4325, %v4321, -inf
        %4327 = vmax.xlane.f32.xlu0 %v4326
        %v4328 = vpop.xlane.xlu0 %4327
        %v4329 = vcvt.f32.s32 %v4328
        %v4330 = vcvt.f32.s32 %v4324
        %v4331 = vshll.u32 %v4330, 16
        %v4332 = vadd.s32 %v4331, %v4329
        %v4333 = vand.u32 %v4290, 65535
        %v4334 = vshra.s32 %v4290, 16
        %v4335 = vcvt.s32.f32 %v4333
        %v4336 = vcvt.s32.f32 %v4334
        %4337 = vmax.xlane.f32.xlu0 %v4336
        %v4338 = vpop.xlane.xlu0 %4337
        %vm4339 = vcmp.eq.f32.partialorder %v4336, %v4338
        %v4340 = vsel %vm4339, %v4335, -inf
        %4341 = vmax.xlane.f32.xlu0 %v4340
        %v4342 = vpop.xlane.xlu0 %4341
        %v4343 = vcvt.f32.s32 %v4342
        %v4344 = vcvt.f32.s32 %v4338
        %v4345 = vshll.u32 %v4344, 16
        %v4346 = vadd.s32 %v4345, %v4343
        %v4347 = vand.u32 %v4304, 4294967168
        %v4348 = vand.u32 %v4318, 4294967168
        %v4349 = vand.u32 %v4332, 4294967168
        %v4350 = vand.u32 %v4346, 4294967168
        %vm4351 = vcmp.gt.s32.totalorder %v4347, 0
        %vm4352 = vcmp.gt.s32.totalorder %v4348, 0
        %vm4353 = vcmp.gt.s32.totalorder %v4349, 0
        %vm4354 = vcmp.gt.s32.totalorder %v4350, 0
        %vm4355 = vmor %vm4351, %vm3979
        %vm4356 = vmor %vm4352, %vm3980
        %vm4357 = vmor %vm4353, %vm3981
        %vm4358 = vmor %vm4354, %vm3982
        %vm4359 = vcmp.eq.s32.totalorder %v4287, %v4304
        %vm4360 = vcmp.eq.s32.totalorder %v4288, %v4318
        %vm4361 = vcmp.eq.s32.totalorder %v4289, %v4332
        %vm4362 = vcmp.eq.s32.totalorder %v4290, %v4346
        %v4363 = vsel %vm4355, 1, 0
        %v4364 = vsel %vm4356, 1, 0
        %v4365 = vsel %vm4357, 1, 0
        %v4366 = vsel %vm4358, 1, 0
        %vm4367 = vcmp.eq.s32.totalorder %v4363, 1
        %vm4368 = vcmp.eq.s32.totalorder %v4364, 1
        %vm4369 = vcmp.eq.s32.totalorder %v4365, 1
        %vm4370 = vcmp.eq.s32.totalorder %v4366, 1
        %vm4371 = vmand %vm4359, %vm4367
        %vm4372 = vmand %vm4360, %vm4368
        %vm4373 = vmand %vm4361, %vm4369
        %vm4374 = vmand %vm4362, %vm4370
        %v4375 = vsel %vm4371, 1.0, %v4283
        %v4376 = vsel %vm4372, 1.0, %v4284
        %v4377 = vsel %vm4373, 1.0, %v4285
        %v4378 = vsel %vm4374, 1.0, %v4286
        %v4379 = vsel %vm4359, 2147483648, %v4287
        %v4380 = vsel %vm4360, 2147483648, %v4288
        %v4381 = vsel %vm4361, 2147483648, %v4289
        %v4382 = vsel %vm4362, 2147483648, %v4290
        %v4383 = vand.u32 %v4379, 65535
        %v4384 = vshra.s32 %v4379, 16
        %v4385 = vcvt.s32.f32 %v4383
        %v4386 = vcvt.s32.f32 %v4384
        %4387 = vmax.xlane.f32.xlu0 %v4386
        %v4388 = vpop.xlane.xlu0 %4387
        %vm4389 = vcmp.eq.f32.partialorder %v4386, %v4388
        %v4390 = vsel %vm4389, %v4385, -inf
        %4391 = vmax.xlane.f32.xlu0 %v4390
        %v4392 = vpop.xlane.xlu0 %4391
        %v4393 = vcvt.f32.s32 %v4392
        %v4394 = vcvt.f32.s32 %v4388
        %v4395 = vshll.u32 %v4394, 16
        %v4396 = vadd.s32 %v4395, %v4393
        %v4397 = vand.u32 %v4380, 65535
        %v4398 = vshra.s32 %v4380, 16
        %v4399 = vcvt.s32.f32 %v4397
        %v4400 = vcvt.s32.f32 %v4398
        %4401 = vmax.xlane.f32.xlu0 %v4400
        %v4402 = vpop.xlane.xlu0 %4401
        %vm4403 = vcmp.eq.f32.partialorder %v4400, %v4402
        %v4404 = vsel %vm4403, %v4399, -inf
        %4405 = vmax.xlane.f32.xlu0 %v4404
        %v4406 = vpop.xlane.xlu0 %4405
        %v4407 = vcvt.f32.s32 %v4406
        %v4408 = vcvt.f32.s32 %v4402
        %v4409 = vshll.u32 %v4408, 16
        %v4410 = vadd.s32 %v4409, %v4407
        %v4411 = vand.u32 %v4381, 65535
        %v4412 = vshra.s32 %v4381, 16
        %v4413 = vcvt.s32.f32 %v4411
        %v4414 = vcvt.s32.f32 %v4412
        %4415 = vmax.xlane.f32.xlu0 %v4414
        %v4416 = vpop.xlane.xlu0 %4415
        %vm4417 = vcmp.eq.f32.partialorder %v4414, %v4416
        %v4418 = vsel %vm4417, %v4413, -inf
        %4419 = vmax.xlane.f32.xlu0 %v4418
        %v4420 = vpop.xlane.xlu0 %4419
        %v4421 = vcvt.f32.s32 %v4420
        %v4422 = vcvt.f32.s32 %v4416
        %v4423 = vshll.u32 %v4422, 16
        %v4424 = vadd.s32 %v4423, %v4421
        %v4425 = vand.u32 %v4382, 65535
        %v4426 = vshra.s32 %v4382, 16
        %v4427 = vcvt.s32.f32 %v4425
        %v4428 = vcvt.s32.f32 %v4426
        %4429 = vmax.xlane.f32.xlu0 %v4428
        %v4430 = vpop.xlane.xlu0 %4429
        %vm4431 = vcmp.eq.f32.partialorder %v4428, %v4430
        %v4432 = vsel %vm4431, %v4427, -inf
        %4433 = vmax.xlane.f32.xlu0 %v4432
        %v4434 = vpop.xlane.xlu0 %4433
        %v4435 = vcvt.f32.s32 %v4434
        %v4436 = vcvt.f32.s32 %v4430
        %v4437 = vshll.u32 %v4436, 16
        %v4438 = vadd.s32 %v4437, %v4435
        %v4439 = vand.u32 %v4396, 4294967168
        %v4440 = vand.u32 %v4410, 4294967168
        %v4441 = vand.u32 %v4424, 4294967168
        %v4442 = vand.u32 %v4438, 4294967168
        %vm4443 = vcmp.gt.s32.totalorder %v4439, 0
        %vm4444 = vcmp.gt.s32.totalorder %v4440, 0
        %vm4445 = vcmp.gt.s32.totalorder %v4441, 0
        %vm4446 = vcmp.gt.s32.totalorder %v4442, 0
        %vm4447 = vmor %vm4443, %vm3979
        %vm4448 = vmor %vm4444, %vm3980
        %vm4449 = vmor %vm4445, %vm3981
        %vm4450 = vmor %vm4446, %vm3982
        %vm4451 = vcmp.eq.s32.totalorder %v4379, %v4396
        %vm4452 = vcmp.eq.s32.totalorder %v4380, %v4410
        %vm4453 = vcmp.eq.s32.totalorder %v4381, %v4424
        %vm4454 = vcmp.eq.s32.totalorder %v4382, %v4438
        %v4455 = vsel %vm4447, 1, 0
        %v4456 = vsel %vm4448, 1, 0
        %v4457 = vsel %vm4449, 1, 0
        %v4458 = vsel %vm4450, 1, 0
        %vm4459 = vcmp.eq.s32.totalorder %v4455, 1
        %vm4460 = vcmp.eq.s32.totalorder %v4456, 1
        %vm4461 = vcmp.eq.s32.totalorder %v4457, 1
        %vm4462 = vcmp.eq.s32.totalorder %v4458, 1
        %vm4463 = vmand %vm4451, %vm4459
        %vm4464 = vmand %vm4452, %vm4460
        %vm4465 = vmand %vm4453, %vm4461
        %vm4466 = vmand %vm4454, %vm4462
        %v4467 = vsel %vm4463, 1.0, %v4375
        %v4468 = vsel %vm4464, 1.0, %v4376
        %v4469 = vsel %vm4465, 1.0, %v4377
        %v4470 = vsel %vm4466, 1.0, %v4378
        %v4471 = vsel %vm4451, 2147483648, %v4379
        %v4472 = vsel %vm4452, 2147483648, %v4380
        %v4473 = vsel %vm4453, 2147483648, %v4381
        %v4474 = vsel %vm4454, 2147483648, %v4382
        %v4475 = vand.u32 %v4471, 65535
        %v4476 = vshra.s32 %v4471, 16
        %v4477 = vcvt.s32.f32 %v4475
        %v4478 = vcvt.s32.f32 %v4476
        %4479 = vmax.xlane.f32.xlu0 %v4478
        %v4480 = vpop.xlane.xlu0 %4479
        %vm4481 = vcmp.eq.f32.partialorder %v4478, %v4480
        %v4482 = vsel %vm4481, %v4477, -inf
        %4483 = vmax.xlane.f32.xlu0 %v4482
        %v4484 = vpop.xlane.xlu0 %4483
        %v4485 = vcvt.f32.s32 %v4484
        %v4486 = vcvt.f32.s32 %v4480
        %v4487 = vshll.u32 %v4486, 16
        %v4488 = vadd.s32 %v4487, %v4485
        %v4489 = vand.u32 %v4472, 65535
        %v4490 = vshra.s32 %v4472, 16
        %v4491 = vcvt.s32.f32 %v4489
        %v4492 = vcvt.s32.f32 %v4490
        %4493 = vmax.xlane.f32.xlu0 %v4492
        %v4494 = vpop.xlane.xlu0 %4493
        %vm4495 = vcmp.eq.f32.partialorder %v4492, %v4494
        %v4496 = vsel %vm4495, %v4491, -inf
        %4497 = vmax.xlane.f32.xlu0 %v4496
        %v4498 = vpop.xlane.xlu0 %4497
        %v4499 = vcvt.f32.s32 %v4498
        %v4500 = vcvt.f32.s32 %v4494
        %v4501 = vshll.u32 %v4500, 16
        %v4502 = vadd.s32 %v4501, %v4499
        %v4503 = vand.u32 %v4473, 65535
        %v4504 = vshra.s32 %v4473, 16
        %v4505 = vcvt.s32.f32 %v4503
        %v4506 = vcvt.s32.f32 %v4504
        %4507 = vmax.xlane.f32.xlu0 %v4506
        %v4508 = vpop.xlane.xlu0 %4507
        %vm4509 = vcmp.eq.f32.partialorder %v4506, %v4508
        %v4510 = vsel %vm4509, %v4505, -inf
        %4511 = vmax.xlane.f32.xlu0 %v4510
        %v4512 = vpop.xlane.xlu0 %4511
        %v4513 = vcvt.f32.s32 %v4512
        %v4514 = vcvt.f32.s32 %v4508
        %v4515 = vshll.u32 %v4514, 16
        %v4516 = vadd.s32 %v4515, %v4513
        %v4517 = vand.u32 %v4474, 65535
        %v4518 = vshra.s32 %v4474, 16
        %v4519 = vcvt.s32.f32 %v4517
        %v4520 = vcvt.s32.f32 %v4518
        %4521 = vmax.xlane.f32.xlu0 %v4520
        %v4522 = vpop.xlane.xlu0 %4521
        %vm4523 = vcmp.eq.f32.partialorder %v4520, %v4522
        %v4524 = vsel %vm4523, %v4519, -inf
        %4525 = vmax.xlane.f32.xlu0 %v4524
        %v4526 = vpop.xlane.xlu0 %4525
        %v4527 = vcvt.f32.s32 %v4526
        %v4528 = vcvt.f32.s32 %v4522
        %v4529 = vshll.u32 %v4528, 16
        %v4530 = vadd.s32 %v4529, %v4527
        %v4531 = vand.u32 %v4488, 4294967168
        %v4532 = vand.u32 %v4502, 4294967168
        %v4533 = vand.u32 %v4516, 4294967168
        %v4534 = vand.u32 %v4530, 4294967168
        %vm4535 = vcmp.gt.s32.totalorder %v4531, 0
        %vm4536 = vcmp.gt.s32.totalorder %v4532, 0
        %vm4537 = vcmp.gt.s32.totalorder %v4533, 0
        %vm4538 = vcmp.gt.s32.totalorder %v4534, 0
        %vm4539 = vmor %vm4535, %vm3979
        %vm4540 = vmor %vm4536, %vm3980
        %vm4541 = vmor %vm4537, %vm3981
        %vm4542 = vmor %vm4538, %vm3982
        %vm4543 = vcmp.eq.s32.totalorder %v4471, %v4488
        %vm4544 = vcmp.eq.s32.totalorder %v4472, %v4502
        %vm4545 = vcmp.eq.s32.totalorder %v4473, %v4516
        %vm4546 = vcmp.eq.s32.totalorder %v4474, %v4530
        %v4547 = vsel %vm4539, 1, 0
        %v4548 = vsel %vm4540, 1, 0
        %v4549 = vsel %vm4541, 1, 0
        %v4550 = vsel %vm4542, 1, 0
        %vm4551 = vcmp.eq.s32.totalorder %v4547, 1
        %vm4552 = vcmp.eq.s32.totalorder %v4548, 1
        %vm4553 = vcmp.eq.s32.totalorder %v4549, 1
        %vm4554 = vcmp.eq.s32.totalorder %v4550, 1
        %vm4555 = vmand %vm4543, %vm4551
        %vm4556 = vmand %vm4544, %vm4552
        %vm4557 = vmand %vm4545, %vm4553
        %vm4558 = vmand %vm4546, %vm4554
        %v4559 = vsel %vm4555, 1.0, %v4467
        %v4560 = vsel %vm4556, 1.0, %v4468
        %v4561 = vsel %vm4557, 1.0, %v4469
        %v4562 = vsel %vm4558, 1.0, %v4470
        %v4563 = vsel %vm4543, 2147483648, %v4471
        %v4564 = vsel %vm4544, 2147483648, %v4472
        %v4565 = vsel %vm4545, 2147483648, %v4473
        %v4566 = vsel %vm4546, 2147483648, %v4474
        %v4567 = vand.u32 %v4563, 65535
        %v4568 = vshra.s32 %v4563, 16
        %v4569 = vcvt.s32.f32 %v4567
        %v4570 = vcvt.s32.f32 %v4568
        %4571 = vmax.xlane.f32.xlu0 %v4570
        %v4572 = vpop.xlane.xlu0 %4571
        %vm4573 = vcmp.eq.f32.partialorder %v4570, %v4572
        %v4574 = vsel %vm4573, %v4569, -inf
        %4575 = vmax.xlane.f32.xlu0 %v4574
        %v4576 = vpop.xlane.xlu0 %4575
        %v4577 = vcvt.f32.s32 %v4576
        %v4578 = vcvt.f32.s32 %v4572
        %v4579 = vshll.u32 %v4578, 16
        %v4580 = vadd.s32 %v4579, %v4577
        %v4581 = vand.u32 %v4564, 65535
        %v4582 = vshra.s32 %v4564, 16
        %v4583 = vcvt.s32.f32 %v4581
        %v4584 = vcvt.s32.f32 %v4582
        %4585 = vmax.xlane.f32.xlu0 %v4584
        %v4586 = vpop.xlane.xlu0 %4585
        %vm4587 = vcmp.eq.f32.partialorder %v4584, %v4586
        %v4588 = vsel %vm4587, %v4583, -inf
        %4589 = vmax.xlane.f32.xlu0 %v4588
        %v4590 = vpop.xlane.xlu0 %4589
        %v4591 = vcvt.f32.s32 %v4590
        %v4592 = vcvt.f32.s32 %v4586
        %v4593 = vshll.u32 %v4592, 16
        %v4594 = vadd.s32 %v4593, %v4591
        %v4595 = vand.u32 %v4565, 65535
        %v4596 = vshra.s32 %v4565, 16
        %v4597 = vcvt.s32.f32 %v4595
        %v4598 = vcvt.s32.f32 %v4596
        %4599 = vmax.xlane.f32.xlu0 %v4598
        %v4600 = vpop.xlane.xlu0 %4599
        %vm4601 = vcmp.eq.f32.partialorder %v4598, %v4600
        %v4602 = vsel %vm4601, %v4597, -inf
        %4603 = vmax.xlane.f32.xlu0 %v4602
        %v4604 = vpop.xlane.xlu0 %4603
        %v4605 = vcvt.f32.s32 %v4604
        %v4606 = vcvt.f32.s32 %v4600
        %v4607 = vshll.u32 %v4606, 16
        %v4608 = vadd.s32 %v4607, %v4605
        %v4609 = vand.u32 %v4566, 65535
        %v4610 = vshra.s32 %v4566, 16
        %v4611 = vcvt.s32.f32 %v4609
        %v4612 = vcvt.s32.f32 %v4610
        %4613 = vmax.xlane.f32.xlu0 %v4612
        %v4614 = vpop.xlane.xlu0 %4613
        %vm4615 = vcmp.eq.f32.partialorder %v4612, %v4614
        %v4616 = vsel %vm4615, %v4611, -inf
        %4617 = vmax.xlane.f32.xlu0 %v4616
        %v4618 = vpop.xlane.xlu0 %4617
        %v4619 = vcvt.f32.s32 %v4618
        %v4620 = vcvt.f32.s32 %v4614
        %v4621 = vshll.u32 %v4620, 16
        %v4622 = vadd.s32 %v4621, %v4619
        %v4623 = vand.u32 %v4580, 4294967168
        %v4624 = vand.u32 %v4594, 4294967168
        %v4625 = vand.u32 %v4608, 4294967168
        %v4626 = vand.u32 %v4622, 4294967168
        %vm4627 = vcmp.gt.s32.totalorder %v4623, 0
        %vm4628 = vcmp.gt.s32.totalorder %v4624, 0
        %vm4629 = vcmp.gt.s32.totalorder %v4625, 0
        %vm4630 = vcmp.gt.s32.totalorder %v4626, 0
        %vm4631 = vmor %vm4627, %vm3979
        %vm4632 = vmor %vm4628, %vm3980
        %vm4633 = vmor %vm4629, %vm3981
        %vm4634 = vmor %vm4630, %vm3982
        %vm4635 = vcmp.eq.s32.totalorder %v4563, %v4580
        %vm4636 = vcmp.eq.s32.totalorder %v4564, %v4594
        %vm4637 = vcmp.eq.s32.totalorder %v4565, %v4608
        %vm4638 = vcmp.eq.s32.totalorder %v4566, %v4622
        %v4639 = vsel %vm4631, 1, 0
        %v4640 = vsel %vm4632, 1, 0
        %v4641 = vsel %vm4633, 1, 0
        %v4642 = vsel %vm4634, 1, 0
        %vm4643 = vcmp.eq.s32.totalorder %v4639, 1
        %vm4644 = vcmp.eq.s32.totalorder %v4640, 1
        %vm4645 = vcmp.eq.s32.totalorder %v4641, 1
        %vm4646 = vcmp.eq.s32.totalorder %v4642, 1
        %vm4647 = vmand %vm4635, %vm4643
        %vm4648 = vmand %vm4636, %vm4644
        %vm4649 = vmand %vm4637, %vm4645
        %vm4650 = vmand %vm4638, %vm4646
        %v4651 = vsel %vm4647, 1.0, %v4559
        %v4652 = vsel %vm4648, 1.0, %v4560
        %v4653 = vsel %vm4649, 1.0, %v4561
        %v4654 = vsel %vm4650, 1.0, %v4562
        %v4655 = vsel %vm4635, 2147483648, %v4563
        %v4656 = vsel %vm4636, 2147483648, %v4564
        %v4657 = vsel %vm4637, 2147483648, %v4565
        %v4658 = vsel %vm4638, 2147483648, %v4566
        %v4659 = vand.u32 %v4655, 65535
        %v4660 = vshra.s32 %v4655, 16
        %v4661 = vcvt.s32.f32 %v4659
        %v4662 = vcvt.s32.f32 %v4660
        %4663 = vmax.xlane.f32.xlu0 %v4662
        %v4664 = vpop.xlane.xlu0 %4663
        %vm4665 = vcmp.eq.f32.partialorder %v4662, %v4664
        %v4666 = vsel %vm4665, %v4661, -inf
        %4667 = vmax.xlane.f32.xlu0 %v4666
        %v4668 = vpop.xlane.xlu0 %4667
        %v4669 = vcvt.f32.s32 %v4668
        %v4670 = vcvt.f32.s32 %v4664
        %v4671 = vshll.u32 %v4670, 16
        %v4672 = vadd.s32 %v4671, %v4669
        %v4673 = vand.u32 %v4656, 65535
        %v4674 = vshra.s32 %v4656, 16
        %v4675 = vcvt.s32.f32 %v4673
        %v4676 = vcvt.s32.f32 %v4674
        %4677 = vmax.xlane.f32.xlu0 %v4676
        %v4678 = vpop.xlane.xlu0 %4677
        %vm4679 = vcmp.eq.f32.partialorder %v4676, %v4678
        %v4680 = vsel %vm4679, %v4675, -inf
        %4681 = vmax.xlane.f32.xlu0 %v4680
        %v4682 = vpop.xlane.xlu0 %4681
        %v4683 = vcvt.f32.s32 %v4682
        %v4684 = vcvt.f32.s32 %v4678
        %v4685 = vshll.u32 %v4684, 16
        %v4686 = vadd.s32 %v4685, %v4683
        %v4687 = vand.u32 %v4657, 65535
        %v4688 = vshra.s32 %v4657, 16
        %v4689 = vcvt.s32.f32 %v4687
        %v4690 = vcvt.s32.f32 %v4688
        %4691 = vmax.xlane.f32.xlu0 %v4690
        %v4692 = vpop.xlane.xlu0 %4691
        %vm4693 = vcmp.eq.f32.partialorder %v4690, %v4692
        %v4694 = vsel %vm4693, %v4689, -inf
        %4695 = vmax.xlane.f32.xlu0 %v4694
        %v4696 = vpop.xlane.xlu0 %4695
        %v4697 = vcvt.f32.s32 %v4696
        %v4698 = vcvt.f32.s32 %v4692
        %v4699 = vshll.u32 %v4698, 16
        %v4700 = vadd.s32 %v4699, %v4697
        %v4701 = vand.u32 %v4658, 65535
        %v4702 = vshra.s32 %v4658, 16
        %v4703 = vcvt.s32.f32 %v4701
        %v4704 = vcvt.s32.f32 %v4702
        %4705 = vmax.xlane.f32.xlu0 %v4704
        %v4706 = vpop.xlane.xlu0 %4705
        %vm4707 = vcmp.eq.f32.partialorder %v4704, %v4706
        %v4708 = vsel %vm4707, %v4703, -inf
        %4709 = vmax.xlane.f32.xlu0 %v4708
        %v4710 = vpop.xlane.xlu0 %4709
        %v4711 = vcvt.f32.s32 %v4710
        %v4712 = vcvt.f32.s32 %v4706
        %v4713 = vshll.u32 %v4712, 16
        %v4714 = vadd.s32 %v4713, %v4711
        %v4715 = vand.u32 %v4672, 4294967168
        %v4716 = vand.u32 %v4686, 4294967168
        %v4717 = vand.u32 %v4700, 4294967168
        %v4718 = vand.u32 %v4714, 4294967168
        %vm4719 = vcmp.gt.s32.totalorder %v4715, 0
        %vm4720 = vcmp.gt.s32.totalorder %v4716, 0
        %vm4721 = vcmp.gt.s32.totalorder %v4717, 0
        %vm4722 = vcmp.gt.s32.totalorder %v4718, 0
        %vm4723 = vmor %vm4719, %vm3979
        %vm4724 = vmor %vm4720, %vm3980
        %vm4725 = vmor %vm4721, %vm3981
        %vm4726 = vmor %vm4722, %vm3982
        %vm4727 = vcmp.eq.s32.totalorder %v4655, %v4672
        %vm4728 = vcmp.eq.s32.totalorder %v4656, %v4686
        %vm4729 = vcmp.eq.s32.totalorder %v4657, %v4700
        %vm4730 = vcmp.eq.s32.totalorder %v4658, %v4714
        %v4731 = vsel %vm4723, 1, 0
        %v4732 = vsel %vm4724, 1, 0
        %v4733 = vsel %vm4725, 1, 0
        %v4734 = vsel %vm4726, 1, 0
        %vm4735 = vcmp.eq.s32.totalorder %v4731, 1
        %vm4736 = vcmp.eq.s32.totalorder %v4732, 1
        %vm4737 = vcmp.eq.s32.totalorder %v4733, 1
        %vm4738 = vcmp.eq.s32.totalorder %v4734, 1
        %vm4739 = vmand %vm4727, %vm4735
        %vm4740 = vmand %vm4728, %vm4736
        %vm4741 = vmand %vm4729, %vm4737
        %vm4742 = vmand %vm4730, %vm4738
        %v4743 = vsel %vm4739, 1.0, %v4651
        %v4744 = vsel %vm4740, 1.0, %v4652
        %v4745 = vsel %vm4741, 1.0, %v4653
        %v4746 = vsel %vm4742, 1.0, %v4654
        %v4747 = vsel %vm4727, 2147483648, %v4655
        %v4748 = vsel %vm4728, 2147483648, %v4656
        %v4749 = vsel %vm4729, 2147483648, %v4657
        %v4750 = vsel %vm4730, 2147483648, %v4658
        %v4751 = vand.u32 %v4747, 65535
        %v4752 = vshra.s32 %v4747, 16
        %v4753 = vcvt.s32.f32 %v4751
        %v4754 = vcvt.s32.f32 %v4752
        %4755 = vmax.xlane.f32.xlu0 %v4754
        %v4756 = vpop.xlane.xlu0 %4755
        %vm4757 = vcmp.eq.f32.partialorder %v4754, %v4756
        %v4758 = vsel %vm4757, %v4753, -inf
        %4759 = vmax.xlane.f32.xlu0 %v4758
        %v4760 = vpop.xlane.xlu0 %4759
        %v4761 = vcvt.f32.s32 %v4760
        %v4762 = vcvt.f32.s32 %v4756
        %v4763 = vshll.u32 %v4762, 16
        %v4764 = vadd.s32 %v4763, %v4761
        %v4765 = vand.u32 %v4748, 65535
        %v4766 = vshra.s32 %v4748, 16
        %v4767 = vcvt.s32.f32 %v4765
        %v4768 = vcvt.s32.f32 %v4766
        %4769 = vmax.xlane.f32.xlu0 %v4768
        %v4770 = vpop.xlane.xlu0 %4769
        %vm4771 = vcmp.eq.f32.partialorder %v4768, %v4770
        %v4772 = vsel %vm4771, %v4767, -inf
        %4773 = vmax.xlane.f32.xlu0 %v4772
        %v4774 = vpop.xlane.xlu0 %4773
        %v4775 = vcvt.f32.s32 %v4774
        %v4776 = vcvt.f32.s32 %v4770
        %v4777 = vshll.u32 %v4776, 16
        %v4778 = vadd.s32 %v4777, %v4775
        %v4779 = vand.u32 %v4749, 65535
        %v4780 = vshra.s32 %v4749, 16
        %v4781 = vcvt.s32.f32 %v4779
        %v4782 = vcvt.s32.f32 %v4780
        %4783 = vmax.xlane.f32.xlu0 %v4782
        %v4784 = vpop.xlane.xlu0 %4783
        %vm4785 = vcmp.eq.f32.partialorder %v4782, %v4784
        %v4786 = vsel %vm4785, %v4781, -inf
        %4787 = vmax.xlane.f32.xlu0 %v4786
        %v4788 = vpop.xlane.xlu0 %4787
        %v4789 = vcvt.f32.s32 %v4788
        %v4790 = vcvt.f32.s32 %v4784
        %v4791 = vshll.u32 %v4790, 16
        %v4792 = vadd.s32 %v4791, %v4789
        %v4793 = vand.u32 %v4750, 65535
        %v4794 = vshra.s32 %v4750, 16
        %v4795 = vcvt.s32.f32 %v4793
        %v4796 = vcvt.s32.f32 %v4794
        %4797 = vmax.xlane.f32.xlu0 %v4796
        %v4798 = vpop.xlane.xlu0 %4797
        %vm4799 = vcmp.eq.f32.partialorder %v4796, %v4798
        %v4800 = vsel %vm4799, %v4795, -inf
        %4801 = vmax.xlane.f32.xlu0 %v4800
        %v4802 = vpop.xlane.xlu0 %4801
        %v4803 = vcvt.f32.s32 %v4802
        %v4804 = vcvt.f32.s32 %v4798
        %v4805 = vshll.u32 %v4804, 16
        %v4806 = vadd.s32 %v4805, %v4803
        %v4807 = vand.u32 %v4764, 4294967168
        %v4808 = vand.u32 %v4778, 4294967168
        %v4809 = vand.u32 %v4792, 4294967168
        %v4810 = vand.u32 %v4806, 4294967168
        %vm4811 = vcmp.gt.s32.totalorder %v4807, 0
        %vm4812 = vcmp.gt.s32.totalorder %v4808, 0
        %vm4813 = vcmp.gt.s32.totalorder %v4809, 0
        %vm4814 = vcmp.gt.s32.totalorder %v4810, 0
        %vm4815 = vmor %vm4811, %vm3979
        %vm4816 = vmor %vm4812, %vm3980
        %vm4817 = vmor %vm4813, %vm3981
        %vm4818 = vmor %vm4814, %vm3982
        %vm4819 = vcmp.eq.s32.totalorder %v4747, %v4764
        %vm4820 = vcmp.eq.s32.totalorder %v4748, %v4778
        %vm4821 = vcmp.eq.s32.totalorder %v4749, %v4792
        %vm4822 = vcmp.eq.s32.totalorder %v4750, %v4806
        %v4823 = vsel %vm4815, 1, 0
        %v4824 = vsel %vm4816, 1, 0
        %v4825 = vsel %vm4817, 1, 0
        %v4826 = vsel %vm4818, 1, 0
        %vm4827 = vcmp.eq.s32.totalorder %v4823, 1
        %vm4828 = vcmp.eq.s32.totalorder %v4824, 1
        %vm4829 = vcmp.eq.s32.totalorder %v4825, 1
        %vm4830 = vcmp.eq.s32.totalorder %v4826, 1
        %vm4831 = vmand %vm4819, %vm4827
        %vm4832 = vmand %vm4820, %vm4828
        %vm4833 = vmand %vm4821, %vm4829
        %vm4834 = vmand %vm4822, %vm4830
        %v4835 = vsel %vm4831, 1.0, %v4743
        %v4836 = vsel %vm4832, 1.0, %v4744
        %v4837 = vsel %vm4833, 1.0, %v4745
        %v4838 = vsel %vm4834, 1.0, %v4746
        %v4839 = vsel %vm4819, 2147483648, %v4747
        %v4840 = vsel %vm4820, 2147483648, %v4748
        %v4841 = vsel %vm4821, 2147483648, %v4749
        %v4842 = vsel %vm4822, 2147483648, %v4750
        %v4843 = vand.u32 %v4839, 65535
        %v4844 = vshra.s32 %v4839, 16
        %v4845 = vcvt.s32.f32 %v4843
        %v4846 = vcvt.s32.f32 %v4844
        %4847 = vmax.xlane.f32.xlu0 %v4846
        %v4848 = vpop.xlane.xlu0 %4847
        %vm4849 = vcmp.eq.f32.partialorder %v4846, %v4848
        %v4850 = vsel %vm4849, %v4845, -inf
        %4851 = vmax.xlane.f32.xlu0 %v4850
        %v4852 = vpop.xlane.xlu0 %4851
        %v4853 = vcvt.f32.s32 %v4852
        %v4854 = vcvt.f32.s32 %v4848
        %v4855 = vshll.u32 %v4854, 16
        %v4856 = vadd.s32 %v4855, %v4853
        %v4857 = vand.u32 %v4840, 65535
        %v4858 = vshra.s32 %v4840, 16
        %v4859 = vcvt.s32.f32 %v4857
        %v4860 = vcvt.s32.f32 %v4858
        %4861 = vmax.xlane.f32.xlu0 %v4860
        %v4862 = vpop.xlane.xlu0 %4861
        %vm4863 = vcmp.eq.f32.partialorder %v4860, %v4862
        %v4864 = vsel %vm4863, %v4859, -inf
        %4865 = vmax.xlane.f32.xlu0 %v4864
        %v4866 = vpop.xlane.xlu0 %4865
        %v4867 = vcvt.f32.s32 %v4866
        %v4868 = vcvt.f32.s32 %v4862
        %v4869 = vshll.u32 %v4868, 16
        %v4870 = vadd.s32 %v4869, %v4867
        %v4871 = vand.u32 %v4841, 65535
        %v4872 = vshra.s32 %v4841, 16
        %v4873 = vcvt.s32.f32 %v4871
        %v4874 = vcvt.s32.f32 %v4872
        %4875 = vmax.xlane.f32.xlu0 %v4874
        %v4876 = vpop.xlane.xlu0 %4875
        %vm4877 = vcmp.eq.f32.partialorder %v4874, %v4876
        %v4878 = vsel %vm4877, %v4873, -inf
        %4879 = vmax.xlane.f32.xlu0 %v4878
        %v4880 = vpop.xlane.xlu0 %4879
        %v4881 = vcvt.f32.s32 %v4880
        %v4882 = vcvt.f32.s32 %v4876
        %v4883 = vshll.u32 %v4882, 16
        %v4884 = vadd.s32 %v4883, %v4881
        %v4885 = vand.u32 %v4842, 65535
        %v4886 = vshra.s32 %v4842, 16
        %v4887 = vcvt.s32.f32 %v4885
        %v4888 = vcvt.s32.f32 %v4886
        %4889 = vmax.xlane.f32.xlu0 %v4888
        %v4890 = vpop.xlane.xlu0 %4889
        %vm4891 = vcmp.eq.f32.partialorder %v4888, %v4890
        %v4892 = vsel %vm4891, %v4887, -inf
        %4893 = vmax.xlane.f32.xlu0 %v4892
        %v4894 = vpop.xlane.xlu0 %4893
        %v4895 = vcvt.f32.s32 %v4894
        %v4896 = vcvt.f32.s32 %v4890
        %v4897 = vshll.u32 %v4896, 16
        %v4898 = vadd.s32 %v4897, %v4895
        %v4899 = vand.u32 %v4856, 4294967168
        %v4900 = vand.u32 %v4870, 4294967168
        %v4901 = vand.u32 %v4884, 4294967168
        %v4902 = vand.u32 %v4898, 4294967168
        %vm4903 = vcmp.gt.s32.totalorder %v4899, 0
        %vm4904 = vcmp.gt.s32.totalorder %v4900, 0
        %vm4905 = vcmp.gt.s32.totalorder %v4901, 0
        %vm4906 = vcmp.gt.s32.totalorder %v4902, 0
        %vm4907 = vmor %vm4903, %vm3979
        %vm4908 = vmor %vm4904, %vm3980
        %vm4909 = vmor %vm4905, %vm3981
        %vm4910 = vmor %vm4906, %vm3982
        %vm4911 = vcmp.eq.s32.totalorder %v4839, %v4856
        %vm4912 = vcmp.eq.s32.totalorder %v4840, %v4870
        %vm4913 = vcmp.eq.s32.totalorder %v4841, %v4884
        %vm4914 = vcmp.eq.s32.totalorder %v4842, %v4898
        %v4915 = vsel %vm4907, 1, 0
        %v4916 = vsel %vm4908, 1, 0
        %v4917 = vsel %vm4909, 1, 0
        %v4918 = vsel %vm4910, 1, 0
        %vm4919 = vcmp.eq.s32.totalorder %v4915, 1
        %vm4920 = vcmp.eq.s32.totalorder %v4916, 1
        %vm4921 = vcmp.eq.s32.totalorder %v4917, 1
        %vm4922 = vcmp.eq.s32.totalorder %v4918, 1
        %vm4923 = vmand %vm4911, %vm4919
        %vm4924 = vmand %vm4912, %vm4920
        %vm4925 = vmand %vm4913, %vm4921
        %vm4926 = vmand %vm4914, %vm4922
        %v4927 = vsel %vm4923, 1.0, %v4835
        %v4928 = vsel %vm4924, 1.0, %v4836
        %v4929 = vsel %vm4925, 1.0, %v4837
        %v4930 = vsel %vm4926, 1.0, %v4838
        %v4931 = vsel %vm4911, 2147483648, %v4839
        %v4932 = vsel %vm4912, 2147483648, %v4840
        %v4933 = vsel %vm4913, 2147483648, %v4841
        %v4934 = vsel %vm4914, 2147483648, %v4842
        %v4935 = vand.u32 %v4931, 65535
        %v4936 = vshra.s32 %v4931, 16
        %v4937 = vcvt.s32.f32 %v4935
        %v4938 = vcvt.s32.f32 %v4936
        %4939 = vmax.xlane.f32.xlu0 %v4938
        %v4940 = vpop.xlane.xlu0 %4939
        %vm4941 = vcmp.eq.f32.partialorder %v4938, %v4940
        %v4942 = vsel %vm4941, %v4937, -inf
        %4943 = vmax.xlane.f32.xlu0 %v4942
        %v4944 = vpop.xlane.xlu0 %4943
        %v4945 = vcvt.f32.s32 %v4944
        %v4946 = vcvt.f32.s32 %v4940
        %v4947 = vshll.u32 %v4946, 16
        %v4948 = vadd.s32 %v4947, %v4945
        %v4949 = vand.u32 %v4932, 65535
        %v4950 = vshra.s32 %v4932, 16
        %v4951 = vcvt.s32.f32 %v4949
        %v4952 = vcvt.s32.f32 %v4950
        %4953 = vmax.xlane.f32.xlu0 %v4952
        %v4954 = vpop.xlane.xlu0 %4953
        %vm4955 = vcmp.eq.f32.partialorder %v4952, %v4954
        %v4956 = vsel %vm4955, %v4951, -inf
        %4957 = vmax.xlane.f32.xlu0 %v4956
        %v4958 = vpop.xlane.xlu0 %4957
        %v4959 = vcvt.f32.s32 %v4958
        %v4960 = vcvt.f32.s32 %v4954
        %v4961 = vshll.u32 %v4960, 16
        %v4962 = vadd.s32 %v4961, %v4959
        %v4963 = vand.u32 %v4933, 65535
        %v4964 = vshra.s32 %v4933, 16
        %v4965 = vcvt.s32.f32 %v4963
        %v4966 = vcvt.s32.f32 %v4964
        %4967 = vmax.xlane.f32.xlu0 %v4966
        %v4968 = vpop.xlane.xlu0 %4967
        %vm4969 = vcmp.eq.f32.partialorder %v4966, %v4968
        %v4970 = vsel %vm4969, %v4965, -inf
        %4971 = vmax.xlane.f32.xlu0 %v4970
        %v4972 = vpop.xlane.xlu0 %4971
        %v4973 = vcvt.f32.s32 %v4972
        %v4974 = vcvt.f32.s32 %v4968
        %v4975 = vshll.u32 %v4974, 16
        %v4976 = vadd.s32 %v4975, %v4973
        %v4977 = vand.u32 %v4934, 65535
        %v4978 = vshra.s32 %v4934, 16
        %v4979 = vcvt.s32.f32 %v4977
        %v4980 = vcvt.s32.f32 %v4978
        %4981 = vmax.xlane.f32.xlu0 %v4980
        %v4982 = vpop.xlane.xlu0 %4981
        %vm4983 = vcmp.eq.f32.partialorder %v4980, %v4982
        %v4984 = vsel %vm4983, %v4979, -inf
        %4985 = vmax.xlane.f32.xlu0 %v4984
        %v4986 = vpop.xlane.xlu0 %4985
        %v4987 = vcvt.f32.s32 %v4986
        %v4988 = vcvt.f32.s32 %v4982
        %v4989 = vshll.u32 %v4988, 16
        %v4990 = vadd.s32 %v4989, %v4987
        %v4991 = vand.u32 %v4948, 4294967168
        %v4992 = vand.u32 %v4962, 4294967168
        %v4993 = vand.u32 %v4976, 4294967168
        %v4994 = vand.u32 %v4990, 4294967168
        %vm4995 = vcmp.gt.s32.totalorder %v4991, 0
        %vm4996 = vcmp.gt.s32.totalorder %v4992, 0
        %vm4997 = vcmp.gt.s32.totalorder %v4993, 0
        %vm4998 = vcmp.gt.s32.totalorder %v4994, 0
        %vm4999 = vmor %vm4995, %vm3979
        %vm5000 = vmor %vm4996, %vm3980
        %vm5001 = vmor %vm4997, %vm3981
        %vm5002 = vmor %vm4998, %vm3982
        %vm5003 = vcmp.eq.s32.totalorder %v4931, %v4948
        %vm5004 = vcmp.eq.s32.totalorder %v4932, %v4962
        %vm5005 = vcmp.eq.s32.totalorder %v4933, %v4976
        %vm5006 = vcmp.eq.s32.totalorder %v4934, %v4990
        %v5007 = vsel %vm4999, 1, 0
        %v5008 = vsel %vm5000, 1, 0
        %v5009 = vsel %vm5001, 1, 0
        %v5010 = vsel %vm5002, 1, 0
        %vm5011 = vcmp.eq.s32.totalorder %v5007, 1
        %vm5012 = vcmp.eq.s32.totalorder %v5008, 1
        %vm5013 = vcmp.eq.s32.totalorder %v5009, 1
        %vm5014 = vcmp.eq.s32.totalorder %v5010, 1
        %vm5015 = vmand %vm5003, %vm5011
        %vm5016 = vmand %vm5004, %vm5012
        %vm5017 = vmand %vm5005, %vm5013
        %vm5018 = vmand %vm5006, %vm5014
        %v5019 = vsel %vm5015, 1.0, %v4927
        %v5020 = vsel %vm5016, 1.0, %v4928
        %v5021 = vsel %vm5017, 1.0, %v4929
        %v5022 = vsel %vm5018, 1.0, %v4930
        %v5023 = vsel %vm5003, 2147483648, %v4931
        %v5024 = vsel %vm5004, 2147483648, %v4932
        %v5025 = vsel %vm5005, 2147483648, %v4933
        %v5026 = vsel %vm5006, 2147483648, %v4934
        %v5027 = vand.u32 %v5023, 65535
        %v5028 = vshra.s32 %v5023, 16
        %v5029 = vcvt.s32.f32 %v5027
        %v5030 = vcvt.s32.f32 %v5028
        %5031 = vmax.xlane.f32.xlu0 %v5030
        %v5032 = vpop.xlane.xlu0 %5031
        %vm5033 = vcmp.eq.f32.partialorder %v5030, %v5032
        %v5034 = vsel %vm5033, %v5029, -inf
        %5035 = vmax.xlane.f32.xlu0 %v5034
        %v5036 = vpop.xlane.xlu0 %5035
        %v5037 = vcvt.f32.s32 %v5036
        %v5038 = vcvt.f32.s32 %v5032
        %v5039 = vshll.u32 %v5038, 16
        %v5040 = vadd.s32 %v5039, %v5037
        %v5041 = vand.u32 %v5024, 65535
        %v5042 = vshra.s32 %v5024, 16
        %v5043 = vcvt.s32.f32 %v5041
        %v5044 = vcvt.s32.f32 %v5042
        %5045 = vmax.xlane.f32.xlu0 %v5044
        %v5046 = vpop.xlane.xlu0 %5045
        %vm5047 = vcmp.eq.f32.partialorder %v5044, %v5046
        %v5048 = vsel %vm5047, %v5043, -inf
        %5049 = vmax.xlane.f32.xlu0 %v5048
        %v5050 = vpop.xlane.xlu0 %5049
        %v5051 = vcvt.f32.s32 %v5050
        %v5052 = vcvt.f32.s32 %v5046
        %v5053 = vshll.u32 %v5052, 16
        %v5054 = vadd.s32 %v5053, %v5051
        %v5055 = vand.u32 %v5025, 65535
        %v5056 = vshra.s32 %v5025, 16
        %v5057 = vcvt.s32.f32 %v5055
        %v5058 = vcvt.s32.f32 %v5056
        %5059 = vmax.xlane.f32.xlu0 %v5058
        %v5060 = vpop.xlane.xlu0 %5059
        %vm5061 = vcmp.eq.f32.partialorder %v5058, %v5060
        %v5062 = vsel %vm5061, %v5057, -inf
        %5063 = vmax.xlane.f32.xlu0 %v5062
        %v5064 = vpop.xlane.xlu0 %5063
        %v5065 = vcvt.f32.s32 %v5064
        %v5066 = vcvt.f32.s32 %v5060
        %v5067 = vshll.u32 %v5066, 16
        %v5068 = vadd.s32 %v5067, %v5065
        %v5069 = vand.u32 %v5026, 65535
        %v5070 = vshra.s32 %v5026, 16
        %v5071 = vcvt.s32.f32 %v5069
        %v5072 = vcvt.s32.f32 %v5070
        %5073 = vmax.xlane.f32.xlu0 %v5072
        %v5074 = vpop.xlane.xlu0 %5073
        %vm5075 = vcmp.eq.f32.partialorder %v5072, %v5074
        %v5076 = vsel %vm5075, %v5071, -inf
        %5077 = vmax.xlane.f32.xlu0 %v5076
        %v5078 = vpop.xlane.xlu0 %5077
        %v5079 = vcvt.f32.s32 %v5078
        %v5080 = vcvt.f32.s32 %v5074
        %v5081 = vshll.u32 %v5080, 16
        %v5082 = vadd.s32 %v5081, %v5079
        %v5083 = vand.u32 %v5040, 4294967168
        %v5084 = vand.u32 %v5054, 4294967168
        %v5085 = vand.u32 %v5068, 4294967168
        %v5086 = vand.u32 %v5082, 4294967168
        %vm5087 = vcmp.gt.s32.totalorder %v5083, 0
        %vm5088 = vcmp.gt.s32.totalorder %v5084, 0
        %vm5089 = vcmp.gt.s32.totalorder %v5085, 0
        %vm5090 = vcmp.gt.s32.totalorder %v5086, 0
        %vm5091 = vmor %vm5087, %vm3979
        %vm5092 = vmor %vm5088, %vm3980
        %vm5093 = vmor %vm5089, %vm3981
        %vm5094 = vmor %vm5090, %vm3982
        %vm5095 = vcmp.eq.s32.totalorder %v5023, %v5040
        %vm5096 = vcmp.eq.s32.totalorder %v5024, %v5054
        %vm5097 = vcmp.eq.s32.totalorder %v5025, %v5068
        %vm5098 = vcmp.eq.s32.totalorder %v5026, %v5082
        %v5099 = vsel %vm5091, 1, 0
        %v5100 = vsel %vm5092, 1, 0
        %v5101 = vsel %vm5093, 1, 0
        %v5102 = vsel %vm5094, 1, 0
        %vm5103 = vcmp.eq.s32.totalorder %v5099, 1
        %vm5104 = vcmp.eq.s32.totalorder %v5100, 1
        %vm5105 = vcmp.eq.s32.totalorder %v5101, 1
        %vm5106 = vcmp.eq.s32.totalorder %v5102, 1
        %vm5107 = vmand %vm5095, %vm5103
        %vm5108 = vmand %vm5096, %vm5104
        %vm5109 = vmand %vm5097, %vm5105
        %vm5110 = vmand %vm5098, %vm5106
        %v5111 = vsel %vm5107, 1.0, %v5019
        %v5112 = vsel %vm5108, 1.0, %v5020
        %v5113 = vsel %vm5109, 1.0, %v5021
        %v5114 = vsel %vm5110, 1.0, %v5022
        %5115 = vadd.xlane.f32.xlu0 %v5111
        %v5116 = vpop.xlane.xlu0 %5115
        %5117 = vadd.xlane.f32.xlu0 %v5112
        %v5118 = vpop.xlane.xlu0 %5117
        %5119 = vadd.xlane.f32.xlu0 %v5113
        %v5120 = vpop.xlane.xlu0 %5119
        %5121 = vadd.xlane.f32.xlu0 %v5114
        %v5122 = vpop.xlane.xlu0 %5121
        %v5123 = vrcp.pop %v5116
        %v5124 = vmul.f32 1.0, %v5123
        %v5125 = vrcp.pop %v5118
        %v5126 = vmul.f32 1.0, %v5125
        %v5127 = vrcp.pop %v5120
        %v5128 = vmul.f32 1.0, %v5127
        %v5129 = vrcp.pop %v5122
        %v5130 = vmul.f32 1.0, %v5129
        %v5131 = vmul.f32 %v5111, %v5124
        %v5132 = vmul.f32 %v5112, %v5126
        %v5133 = vmul.f32 %v5113, %v5128
        %v5134 = vmul.f32 %v5114, %v5130
        %5135 = vmatprep.subr.mxu0 0.0
        %5136 = vmatpush1.msra.mxu0 %v628
        %5137 = vmatprep.subr.mxu0 0.0
        %5138 = vmatpush1.msra.mxu0 %v633
        %5139 = vmatprep.subr.mxu0 0.0
        %5140 = vmatpush1.msra.mxu0 %v638
        %5141 = vmatprep.subr.mxu0 0.0
        %5142 = vmatpush1.msra.mxu0 %v643
        %5143 = vmatprep.subr.mxu0 0.0
        %5144 = vmatpush1.msra.mxu0 %v648
        %5145 = vmatprep.subr.mxu0 0.0
        %5146 = vmatpush1.msra.mxu0 %v653
        %5147 = vmatprep.subr.mxu0 0.0
        %5148 = vmatpush1.msra.mxu0 %v658
        %5149 = vmatprep.subr.mxu0 0.0
        %5150 = vmatpush1.msra.mxu0 %v663
        %5151 = vmatprep.subr.mxu0 0.0
        %5152 = vmatpush1.msra.mxu0 %v668
        %5153 = vmatprep.subr.mxu0 0.0
        %5154 = vmatpush1.msra.mxu0 %v673
        %5155 = vmatprep.subr.mxu0 0.0
        %5156 = vmatpush1.msra.mxu0 %v678
        %5157 = vmatprep.subr.mxu0 0.0
        %5158 = vmatpush1.msra.mxu0 %v683
        %5159 = vmatprep.subr.mxu0 0.0
        %5160 = vmatpush1.msra.mxu0 %v688
        %5161 = vmatprep.subr.mxu0 0.0
        %5162 = vmatpush1.msra.mxu0 %v693
        %5163 = vmatprep.subr.mxu0 0.0
        %5164 = vmatpush1.msra.mxu0 %v698
        %5165 = vmatprep.subr.mxu0 0.0
        %5166 = vmatpush1.msra.mxu0 %v703
        %5167 = vmatprep.subr.mxu0 0.0
        %5168 = vmatpush1.msra.mxu0 0.0
        %5169 = vmatprep.subr.mxu0 0.0
        %5170 = vmatpush1.msra.mxu0 0.0
        %5171 = vmatprep.subr.mxu0 0.0
        %5172 = vmatpush1.msra.mxu0 0.0
        %5173 = vmatprep.subr.mxu0 0.0
        %5174 = vmatpush1.msra.mxu0 0.0
        %5175 = vmatprep.subr.mxu0 0.0
        %5176 = vmatpush1.msra.mxu0 0.0
        %5177 = vmatprep.subr.mxu0 0.0
        %5178 = vmatpush1.msra.mxu0 0.0
        %5179 = vmatprep.subr.mxu0 0.0
        %5180 = vmatpush1.msra.mxu0 0.0
        %5181 = vmatprep.subr.mxu0 0.0
        %5182 = vmatpush1.msra.mxu0 0.0
        %5183 = vmatprep.subr.mxu0 0.0
        %5184 = vmatpush1.msra.mxu0 0.0
        %5185 = vmatprep.subr.mxu0 0.0
        %5186 = vmatpush1.msra.mxu0 0.0
        %5187 = vmatprep.subr.mxu0 0.0
        %5188 = vmatpush1.msra.mxu0 0.0
        %5189 = vmatprep.subr.mxu0 0.0
        %5190 = vmatpush1.msra.mxu0 0.0
        %5191 = vmatprep.subr.mxu0 0.0
        %5192 = vmatpush1.msra.mxu0 0.0
        %5193 = vmatprep.subr.mxu0 0.0
        %5194 = vmatpush1.msra.mxu0 0.0
        %5195 = vmatprep.subr.mxu0 0.0
        %5196 = vmatpush1.msra.mxu0 0.0
        %5197 = vmatprep.subr.mxu0 0.0
        %5198 = vmatpush1.msra.mxu0 0.0
        %5199 = vmatprep.mubr.f32.mxu0 0.0
        %5200 = vmatmul.mubr.f32.gmra.mrb[0].mxu0 %v5131
        %v5201 = vpop.f32.mrb[0].mxu0
        %v5202 = vadd.f32 0.0, %v5201
        %v5203 = vpop.f32.mrb[0].mxu0
        %5204 = vmatprep.mubr.f32.mxu0 0.0
        %5205 = vmatmul.mubr.f32.gmra.mrb[0].mxu0 %v5132
        %v5206 = vpop.f32.mrb[0].mxu0
        %v5207 = vadd.f32 0.0, %v5206
        %v5208 = vpop.f32.mrb[0].mxu0
        %5209 = vmatprep.mubr.f32.mxu0 0.0
        %5210 = vmatmul.mubr.f32.gmra.mrb[0].mxu0 %v5133
        %v5211 = vpop.f32.mrb[0].mxu0
        %v5212 = vadd.f32 0.0, %v5211
        %v5213 = vpop.f32.mrb[0].mxu0
        %5214 = vmatprep.mubr.f32.mxu0 0.0
        %5215 = vmatmul.mubr.f32.gmra.mrb[0].mxu0 %v5134
        %v5216 = vpop.f32.mrb[0].mxu0
        %v5217 = vadd.f32 0.0, %v5216
        %v5218 = vpop.f32.mrb[0].mxu0
        %5219 = vdwg.mxu0
        %5220 = vmatprep.subr.mxu0 0.0
        %5221 = vmatpush1.msra.mxu0 %v722
        %5222 = vmatprep.subr.mxu0 0.0
        %5223 = vmatpush1.msra.mxu0 %v723
        %5224 = vmatprep.subr.mxu0 0.0
        %5225 = vmatpush1.msra.mxu0 %v724
        %5226 = vmatprep.subr.mxu0 0.0
        %5227 = vmatpush1.msra.mxu0 %v725
        %5228 = vmatprep.subr.mxu0 0.0
        %5229 = vmatpush1.msra.mxu0 %v726
        %5230 = vmatprep.subr.mxu0 0.0
        %5231 = vmatpush1.msra.mxu0 %v727
        %5232 = vmatprep.subr.mxu0 0.0
        %5233 = vmatpush1.msra.mxu0 %v728
        %5234 = vmatprep.subr.mxu0 0.0
        %5235 = vmatpush1.msra.mxu0 %v729
        %5236 = vmatprep.subr.mxu0 0.0
        %5237 = vmatpush1.msra.mxu0 %v730
        %5238 = vmatprep.subr.mxu0 0.0
        %5239 = vmatpush1.msra.mxu0 %v731
        %5240 = vmatprep.subr.mxu0 0.0
        %5241 = vmatpush1.msra.mxu0 %v732
        %5242 = vmatprep.subr.mxu0 0.0
        %5243 = vmatpush1.msra.mxu0 %v733
        %5244 = vmatprep.subr.mxu0 0.0
        %5245 = vmatpush1.msra.mxu0 %v734
        %5246 = vmatprep.subr.mxu0 0.0
        %5247 = vmatpush1.msra.mxu0 %v735
        %5248 = vmatprep.subr.mxu0 0.0
        %5249 = vmatpush1.msra.mxu0 %v736
        %5250 = vmatprep.subr.mxu0 0.0
        %5251 = vmatpush1.msra.mxu0 %v737
        %5252 = vmatprep.subr.mxu0 0.0
        %5253 = vmatpush1.msra.mxu0 0.0
        %5254 = vmatprep.subr.mxu0 0.0
        %5255 = vmatpush1.msra.mxu0 0.0
        %5256 = vmatprep.subr.mxu0 0.0
        %5257 = vmatpush1.msra.mxu0 0.0
        %5258 = vmatprep.subr.mxu0 0.0
        %5259 = vmatpush1.msra.mxu0 0.0
        %5260 = vmatprep.subr.mxu0 0.0
        %5261 = vmatpush1.msra.mxu0 0.0
        %5262 = vmatprep.subr.mxu0 0.0
        %5263 = vmatpush1.msra.mxu0 0.0
        %5264 = vmatprep.subr.mxu0 0.0
        %5265 = vmatpush1.msra.mxu0 0.0
        %5266 = vmatprep.subr.mxu0 0.0
        %5267 = vmatpush1.msra.mxu0 0.0
        %5268 = vmatprep.subr.mxu0 0.0
        %5269 = vmatpush1.msra.mxu0 0.0
        %5270 = vmatprep.subr.mxu0 0.0
        %5271 = vmatpush1.msra.mxu0 0.0
        %5272 = vmatprep.subr.mxu0 0.0
        %5273 = vmatpush1.msra.mxu0 0.0
        %5274 = vmatprep.subr.mxu0 0.0
        %5275 = vmatpush1.msra.mxu0 0.0
        %5276 = vmatprep.subr.mxu0 0.0
        %5277 = vmatpush1.msra.mxu0 0.0
        %5278 = vmatprep.subr.mxu0 0.0
        %5279 = vmatpush1.msra.mxu0 0.0
        %5280 = vmatprep.subr.mxu0 0.0
        %5281 = vmatpush1.msra.mxu0 0.0
        %5282 = vmatprep.subr.mxu0 0.0
        %5283 = vmatpush1.msra.mxu0 0.0
        %5284 = vmatprep.mubr.f32.mxu0 0.0
        %5285 = vmatmul.mubr.f32.gmra.mrb[0].mxu0 %v5202
        %v5286 = vpop.f32.mrb[0].mxu0
        %v5287 = vadd.f32 0.0, %v5286
        %v5288 = vpop.f32.mrb[0].mxu0
        %5289 = vmatprep.mubr.f32.mxu0 0.0
        %5290 = vmatmul.mubr.f32.gmra.mrb[0].mxu0 %v5207
        %v5291 = vpop.f32.mrb[0].mxu0
        %v5292 = vadd.f32 0.0, %v5291
        %v5293 = vpop.f32.mrb[0].mxu0
        %5294 = vmatprep.mubr.f32.mxu0 0.0
        %5295 = vmatmul.mubr.f32.gmra.mrb[0].mxu0 %v5212
        %v5296 = vpop.f32.mrb[0].mxu0
        %v5297 = vadd.f32 0.0, %v5296
        %v5298 = vpop.f32.mrb[0].mxu0
        %5299 = vmatprep.mubr.f32.mxu0 0.0
        %5300 = vmatmul.mubr.f32.gmra.mrb[0].mxu0 %v5217
        %v5301 = vpop.f32.mrb[0].mxu0
        %v5302 = vadd.f32 0.0, %v5301
        %v5303 = vpop.f32.mrb[0].mxu0
        %5304 = vdwg.mxu0
        %5305 = vmatprep.subr.mxu0 0.0
        %5306 = vmatpush1.msra.mxu0 %v706
        %5307 = vmatprep.subr.mxu0 0.0
        %5308 = vmatpush1.msra.mxu0 %v707
        %5309 = vmatprep.subr.mxu0 0.0
        %5310 = vmatpush1.msra.mxu0 %v708
        %5311 = vmatprep.subr.mxu0 0.0
        %5312 = vmatpush1.msra.mxu0 %v709
        %5313 = vmatprep.subr.mxu0 0.0
        %5314 = vmatpush1.msra.mxu0 %v710
        %5315 = vmatprep.subr.mxu0 0.0
        %5316 = vmatpush1.msra.mxu0 %v711
        %5317 = vmatprep.subr.mxu0 0.0
        %5318 = vmatpush1.msra.mxu0 %v712
        %5319 = vmatprep.subr.mxu0 0.0
        %5320 = vmatpush1.msra.mxu0 %v713
        %5321 = vmatprep.subr.mxu0 0.0
        %5322 = vmatpush1.msra.mxu0 %v714
        %5323 = vmatprep.subr.mxu0 0.0
        %5324 = vmatpush1.msra.mxu0 %v715
        %5325 = vmatprep.subr.mxu0 0.0
        %5326 = vmatpush1.msra.mxu0 %v716
        %5327 = vmatprep.subr.mxu0 0.0
        %5328 = vmatpush1.msra.mxu0 %v717
        %5329 = vmatprep.subr.mxu0 0.0
        %5330 = vmatpush1.msra.mxu0 %v718
        %5331 = vmatprep.subr.mxu0 0.0
        %5332 = vmatpush1.msra.mxu0 %v719
        %5333 = vmatprep.subr.mxu0 0.0
        %5334 = vmatpush1.msra.mxu0 %v720
        %5335 = vmatprep.subr.mxu0 0.0
        %5336 = vmatpush1.msra.mxu0 %v721
        %5337 = vmatprep.subr.mxu0 0.0
        %5338 = vmatpush1.msra.mxu0 0.0
        %5339 = vmatprep.subr.mxu0 0.0
        %5340 = vmatpush1.msra.mxu0 0.0
        %5341 = vmatprep.subr.mxu0 0.0
        %5342 = vmatpush1.msra.mxu0 0.0
        %5343 = vmatprep.subr.mxu0 0.0
        %5344 = vmatpush1.msra.mxu0 0.0
        %5345 = vmatprep.subr.mxu0 0.0
        %5346 = vmatpush1.msra.mxu0 0.0
        %5347 = vmatprep.subr.mxu0 0.0
        %5348 = vmatpush1.msra.mxu0 0.0
        %5349 = vmatprep.subr.mxu0 0.0
        %5350 = vmatpush1.msra.mxu0 0.0
        %5351 = vmatprep.subr.mxu0 0.0
        %5352 = vmatpush1.msra.mxu0 0.0
        %5353 = vmatprep.subr.mxu0 0.0
        %5354 = vmatpush1.msra.mxu0 0.0
        %5355 = vmatprep.subr.mxu0 0.0
        %5356 = vmatpush1.msra.mxu0 0.0
        %5357 = vmatprep.subr.mxu0 0.0
        %5358 = vmatpush1.msra.mxu0 0.0
        %5359 = vmatprep.subr.mxu0 0.0
        %5360 = vmatpush1.msra.mxu0 0.0
        %5361 = vmatprep.subr.mxu0 0.0
        %5362 = vmatpush1.msra.mxu0 0.0
        %5363 = vmatprep.subr.mxu0 0.0
        %5364 = vmatpush1.msra.mxu0 0.0
        %5365 = vmatprep.subr.mxu0 0.0
        %5366 = vmatpush1.msra.mxu0 0.0
        %5367 = vmatprep.subr.mxu0 0.0
        %5368 = vmatpush1.msra.mxu0 0.0
        %5369 = vmatprep.mubr.f32.mxu0 0.0
        %5370 = vmatmul.mubr.f32.gmra.mrb[0].mxu0 %v668
        %v5371 = vpop.f32.mrb[0].mxu0
        %v5372 = vadd.f32 %v5287, %v5371
        %v5373 = vpop.f32.mrb[0].mxu0
        %5374 = vmatprep.mubr.f32.mxu0 0.0
        %5375 = vmatmul.mubr.f32.gmra.mrb[0].mxu0 %v673
        %v5376 = vpop.f32.mrb[0].mxu0
        %v5377 = vadd.f32 %v5292, %v5376
        %v5378 = vpop.f32.mrb[0].mxu0
        %5379 = vmatprep.mubr.f32.mxu0 0.0
        %5380 = vmatmul.mubr.f32.gmra.mrb[0].mxu0 %v678
        %v5381 = vpop.f32.mrb[0].mxu0
        %v5382 = vadd.f32 %v5297, %v5381
        %v5383 = vpop.f32.mrb[0].mxu0
        %5384 = vmatprep.mubr.f32.mxu0 0.0
        %5385 = vmatmul.mubr.f32.gmra.mrb[0].mxu0 %v683
        %v5386 = vpop.f32.mrb[0].mxu0
        %v5387 = vadd.f32 %v5302, %v5386
        %v5388 = vpop.f32.mrb[0].mxu0
        %5389 = vdwg.mxu0
        %v5390 = vadd.f32 %v5372, %v2272
        %v5391 = vadd.f32 %v5377, %v2272
        %v5392 = vadd.f32 %v5382, %v2272
        %v5393 = vadd.f32 %v5387, %v2272
        %v5394 = vadd.s32 %v2279, 64
        %v5395 = vadd.s32 %v2280, 64
        %v5396 = vadd.s32 %v2281, 64
        %v5397 = vadd.s32 %v2282, 64
        %vm5398 = vcmp.lt.s32.totalorder %v5394, %v2283
        %vm5399 = vcmp.lt.s32.totalorder %v5395, %v2283
        %vm5400 = vcmp.lt.s32.totalorder %v5396, %v2283
        %vm5401 = vcmp.lt.s32.totalorder %v5397, %v2283
        %v5402 = vsel %vm5398, 1, 0
        %v5403 = vsel %vm5399, 1, 0
        %v5404 = vsel %vm5400, 1, 0
        %v5405 = vsel %vm5401, 1, 0
        %v5406 = vcvt.s32.f32 %v5402
        %v5407 = vcvt.s32.f32 %v5403
        %v5408 = vcvt.s32.f32 %v5404
        %v5409 = vcvt.s32.f32 %v5405
        %v5410 = vmul.f32 %v5390, %v5406
        %v5411 = vmul.f32 %v5391, %v5407
        %v5412 = vmul.f32 %v5392, %v5408
        %v5413 = vmul.f32 %v5393, %v5409
        %v5414 = vadd.f32 %v5410, %v5411
        %v5415 = vadd.f32 %v5414, %v5412
        %v5416 = vadd.f32 %v5415, %v5413
        %v5417 = vrot.slane %v5416, 4
        %v5418 = vadd.f32 %v5416, %v5417
        %v5419 = vrot.slane %v5418, 2
        %v5420 = vadd.f32 %v5418, %v5419
        %v5421 = vrot.slane %v5420, 1
        %v5422 = vadd.f32 %v5420, %v5421
        %v5423 = vadd.f32 %v3866, %v5422
        %v5424 = vld [vmem:[%s449 + $0x60] sm:$0xff]
        %v5425 = vld [vmem:[%s449 + $0x68] sm:$0xff]
        %v5426 = vld [vmem:[%s449 + $0x70] sm:$0xff]
        %v5427 = vld [vmem:[%s449 + $0x78] sm:$0xff]
        %v5428 = vld [vmem:[%s746 + $0x60] sm:$0xff]
        %v5429 = vld [vmem:[%s746 + $0x68] sm:$0xff]
        %v5430 = vld [vmem:[%s746 + $0x70] sm:$0xff]
        %v5431 = vld [vmem:[%s746 + $0x78] sm:$0xff]
        %v5432 = vadd.f32 %v5424, %v5428
        %v5433 = vadd.f32 %v5425, %v5429
        %v5434 = vadd.f32 %v5426, %v5430
        %v5435 = vadd.f32 %v5427, %v5431
        %v5436 = vld [vmem:[%s755 + $0x60] sm:$0xff]
        %v5437 = vld [vmem:[%s755 + $0x68] sm:$0xff]
        %v5438 = vld [vmem:[%s755 + $0x70] sm:$0xff]
        %v5439 = vld [vmem:[%s755 + $0x78] sm:$0xff]
        %v5440 = vadd.f32 %v5432, %v5436
        %v5441 = vadd.f32 %v5433, %v5437
        %v5442 = vadd.f32 %v5434, %v5438
        %v5443 = vadd.f32 %v5435, %v5439
        %v5444 = vld [vmem:[%s764 + $0x60] sm:$0xff]
        %v5445 = vld [vmem:[%s764 + $0x68] sm:$0xff]
        %v5446 = vld [vmem:[%s764 + $0x70] sm:$0xff]
        %v5447 = vld [vmem:[%s764 + $0x78] sm:$0xff]
        %v5448 = vadd.f32 %v5440, %v5444
        %v5449 = vadd.f32 %v5441, %v5445
        %v5450 = vadd.f32 %v5442, %v5446
        %v5451 = vadd.f32 %v5443, %v5447
        %v5456 = vshra.s32 %v5448, 31
        %v5457 = vshra.s32 %v5449, 31
        %v5458 = vshra.s32 %v5450, 31
        %v5459 = vshra.s32 %v5451, 31
        %v5460 = vand.u32 %v5456, 2147483647
        %v5461 = vand.u32 %v5457, 2147483647
        %v5462 = vand.u32 %v5458, 2147483647
        %v5463 = vand.u32 %v5459, 2147483647
        %v5464 = vxor.u32 %v5448, %v5460
        %v5465 = vxor.u32 %v5449, %v5461
        %v5466 = vxor.u32 %v5450, %v5462
        %v5467 = vxor.u32 %v5451, %v5463
        %v5468 = vand.u32 %v5464, 4294967168
        %v5469 = vand.u32 %v5465, 4294967168
        %v5470 = vand.u32 %v5466, 4294967168
        %v5471 = vand.u32 %v5467, 4294967168
        %v5472 = vor.u32 %v5468, %v741
        %v5473 = vor.u32 %v5469, %v741
        %v5474 = vor.u32 %v5470, %v741
        %v5475 = vor.u32 %v5471, %v741
        %v5476 = vand.u32 %v5472, 65535
        %v5477 = vshra.s32 %v5472, 16
        %v5478 = vcvt.s32.f32 %v5476
        %v5479 = vcvt.s32.f32 %v5477
        %5480 = vmax.xlane.f32.xlu0 %v5479
        %v5481 = vpop.xlane.xlu0 %5480
        %vm5482 = vcmp.eq.f32.partialorder %v5479, %v5481
        %v5483 = vsel %vm5482, %v5478, -inf
        %5484 = vmax.xlane.f32.xlu0 %v5483
        %v5485 = vpop.xlane.xlu0 %5484
        %v5486 = vcvt.f32.s32 %v5485
        %v5487 = vcvt.f32.s32 %v5481
        %v5488 = vshll.u32 %v5487, 16
        %v5489 = vadd.s32 %v5488, %v5486
        %v5490 = vand.u32 %v5473, 65535
        %v5491 = vshra.s32 %v5473, 16
        %v5492 = vcvt.s32.f32 %v5490
        %v5493 = vcvt.s32.f32 %v5491
        %5494 = vmax.xlane.f32.xlu0 %v5493
        %v5495 = vpop.xlane.xlu0 %5494
        %vm5496 = vcmp.eq.f32.partialorder %v5493, %v5495
        %v5497 = vsel %vm5496, %v5492, -inf
        %5498 = vmax.xlane.f32.xlu0 %v5497
        %v5499 = vpop.xlane.xlu0 %5498
        %v5500 = vcvt.f32.s32 %v5499
        %v5501 = vcvt.f32.s32 %v5495
        %v5502 = vshll.u32 %v5501, 16
        %v5503 = vadd.s32 %v5502, %v5500
        %v5504 = vand.u32 %v5474, 65535
        %v5505 = vshra.s32 %v5474, 16
        %v5506 = vcvt.s32.f32 %v5504
        %v5507 = vcvt.s32.f32 %v5505
        %5508 = vmax.xlane.f32.xlu0 %v5507
        %v5509 = vpop.xlane.xlu0 %5508
        %vm5510 = vcmp.eq.f32.partialorder %v5507, %v5509
        %v5511 = vsel %vm5510, %v5506, -inf
        %5512 = vmax.xlane.f32.xlu0 %v5511
        %v5513 = vpop.xlane.xlu0 %5512
        %v5514 = vcvt.f32.s32 %v5513
        %v5515 = vcvt.f32.s32 %v5509
        %v5516 = vshll.u32 %v5515, 16
        %v5517 = vadd.s32 %v5516, %v5514
        %v5518 = vand.u32 %v5475, 65535
        %v5519 = vshra.s32 %v5475, 16
        %v5520 = vcvt.s32.f32 %v5518
        %v5521 = vcvt.s32.f32 %v5519
        %5522 = vmax.xlane.f32.xlu0 %v5521
        %v5523 = vpop.xlane.xlu0 %5522
        %vm5524 = vcmp.eq.f32.partialorder %v5521, %v5523
        %v5525 = vsel %vm5524, %v5520, -inf
        %5526 = vmax.xlane.f32.xlu0 %v5525
        %v5527 = vpop.xlane.xlu0 %5526
        %v5528 = vcvt.f32.s32 %v5527
        %v5529 = vcvt.f32.s32 %v5523
        %v5530 = vshll.u32 %v5529, 16
        %v5531 = vadd.s32 %v5530, %v5528
        %v5532 = vand.u32 %v5489, 4294967168
        %v5533 = vand.u32 %v5503, 4294967168
        %v5534 = vand.u32 %v5517, 4294967168
        %v5535 = vand.u32 %v5531, 4294967168
        %vm5536 = vcmp.le.s32.totalorder %v5532, 0
        %vm5537 = vcmp.le.s32.totalorder %v5533, 0
        %vm5538 = vcmp.le.s32.totalorder %v5534, 0
        %vm5539 = vcmp.le.s32.totalorder %v5535, 0
        %vm5540 = vcmp.gt.s32.totalorder %v5532, 0
        %vm5541 = vcmp.gt.s32.totalorder %v5533, 0
        %vm5542 = vcmp.gt.s32.totalorder %v5534, 0
        %vm5543 = vcmp.gt.s32.totalorder %v5535, 0
        %vm5544 = vmor %vm5540, %vm5536
        %vm5545 = vmor %vm5541, %vm5537
        %vm5546 = vmor %vm5542, %vm5538
        %vm5547 = vmor %vm5543, %vm5539
        %vm5548 = vcmp.eq.s32.totalorder %v5472, %v5489
        %vm5549 = vcmp.eq.s32.totalorder %v5473, %v5503
        %vm5550 = vcmp.eq.s32.totalorder %v5474, %v5517
        %vm5551 = vcmp.eq.s32.totalorder %v5475, %v5531
        %v5552 = vsel %vm5544, 1, 0
        %v5553 = vsel %vm5545, 1, 0
        %v5554 = vsel %vm5546, 1, 0
        %v5555 = vsel %vm5547, 1, 0
        %vm5556 = vcmp.eq.s32.totalorder %v5552, 1
        %vm5557 = vcmp.eq.s32.totalorder %v5553, 1
        %vm5558 = vcmp.eq.s32.totalorder %v5554, 1
        %vm5559 = vcmp.eq.s32.totalorder %v5555, 1
        %vm5560 = vmand %vm5548, %vm5556
        %vm5561 = vmand %vm5549, %vm5557
        %vm5562 = vmand %vm5550, %vm5558
        %vm5563 = vmand %vm5551, %vm5559
        %v5564 = vsel %vm5560, 1.0, 0.0
        %v5565 = vsel %vm5561, 1.0, 0.0
        %v5566 = vsel %vm5562, 1.0, 0.0
        %v5567 = vsel %vm5563, 1.0, 0.0
        %v5568 = vsel %vm5548, 2147483648, %v5472
        %v5569 = vsel %vm5549, 2147483648, %v5473
        %v5570 = vsel %vm5550, 2147483648, %v5474
        %v5571 = vsel %vm5551, 2147483648, %v5475
        %v5572 = vand.u32 %v5568, 65535
        %v5573 = vshra.s32 %v5568, 16
        %v5574 = vcvt.s32.f32 %v5572
        %v5575 = vcvt.s32.f32 %v5573
        %5576 = vmax.xlane.f32.xlu0 %v5575
        %v5577 = vpop.xlane.xlu0 %5576
        %vm5578 = vcmp.eq.f32.partialorder %v5575, %v5577
        %v5579 = vsel %vm5578, %v5574, -inf
        %5580 = vmax.xlane.f32.xlu0 %v5579
        %v5581 = vpop.xlane.xlu0 %5580
        %v5582 = vcvt.f32.s32 %v5581
        %v5583 = vcvt.f32.s32 %v5577
        %v5584 = vshll.u32 %v5583, 16
        %v5585 = vadd.s32 %v5584, %v5582
        %v5586 = vand.u32 %v5569, 65535
        %v5587 = vshra.s32 %v5569, 16
        %v5588 = vcvt.s32.f32 %v5586
        %v5589 = vcvt.s32.f32 %v5587
        %5590 = vmax.xlane.f32.xlu0 %v5589
        %v5591 = vpop.xlane.xlu0 %5590
        %vm5592 = vcmp.eq.f32.partialorder %v5589, %v5591
        %v5593 = vsel %vm5592, %v5588, -inf
        %5594 = vmax.xlane.f32.xlu0 %v5593
        %v5595 = vpop.xlane.xlu0 %5594
        %v5596 = vcvt.f32.s32 %v5595
        %v5597 = vcvt.f32.s32 %v5591
        %v5598 = vshll.u32 %v5597, 16
        %v5599 = vadd.s32 %v5598, %v5596
        %v5600 = vand.u32 %v5570, 65535
        %v5601 = vshra.s32 %v5570, 16
        %v5602 = vcvt.s32.f32 %v5600
        %v5603 = vcvt.s32.f32 %v5601
        %5604 = vmax.xlane.f32.xlu0 %v5603
        %v5605 = vpop.xlane.xlu0 %5604
        %vm5606 = vcmp.eq.f32.partialorder %v5603, %v5605
        %v5607 = vsel %vm5606, %v5602, -inf
        %5608 = vmax.xlane.f32.xlu0 %v5607
        %v5609 = vpop.xlane.xlu0 %5608
        %v5610 = vcvt.f32.s32 %v5609
        %v5611 = vcvt.f32.s32 %v5605
        %v5612 = vshll.u32 %v5611, 16
        %v5613 = vadd.s32 %v5612, %v5610
        %v5614 = vand.u32 %v5571, 65535
        %v5615 = vshra.s32 %v5571, 16
        %v5616 = vcvt.s32.f32 %v5614
        %v5617 = vcvt.s32.f32 %v5615
        %5618 = vmax.xlane.f32.xlu0 %v5617
        %v5619 = vpop.xlane.xlu0 %5618
        %vm5620 = vcmp.eq.f32.partialorder %v5617, %v5619
        %v5621 = vsel %vm5620, %v5616, -inf
        %5622 = vmax.xlane.f32.xlu0 %v5621
        %v5623 = vpop.xlane.xlu0 %5622
        %v5624 = vcvt.f32.s32 %v5623
        %v5625 = vcvt.f32.s32 %v5619
        %v5626 = vshll.u32 %v5625, 16
        %v5627 = vadd.s32 %v5626, %v5624
        %v5628 = vand.u32 %v5585, 4294967168
        %v5629 = vand.u32 %v5599, 4294967168
        %v5630 = vand.u32 %v5613, 4294967168
        %v5631 = vand.u32 %v5627, 4294967168
        %vm5632 = vcmp.gt.s32.totalorder %v5628, 0
        %vm5633 = vcmp.gt.s32.totalorder %v5629, 0
        %vm5634 = vcmp.gt.s32.totalorder %v5630, 0
        %vm5635 = vcmp.gt.s32.totalorder %v5631, 0
        %vm5636 = vmor %vm5632, %vm5536
        %vm5637 = vmor %vm5633, %vm5537
        %vm5638 = vmor %vm5634, %vm5538
        %vm5639 = vmor %vm5635, %vm5539
        %vm5640 = vcmp.eq.s32.totalorder %v5568, %v5585
        %vm5641 = vcmp.eq.s32.totalorder %v5569, %v5599
        %vm5642 = vcmp.eq.s32.totalorder %v5570, %v5613
        %vm5643 = vcmp.eq.s32.totalorder %v5571, %v5627
        %v5644 = vsel %vm5636, 1, 0
        %v5645 = vsel %vm5637, 1, 0
        %v5646 = vsel %vm5638, 1, 0
        %v5647 = vsel %vm5639, 1, 0
        %vm5648 = vcmp.eq.s32.totalorder %v5644, 1
        %vm5649 = vcmp.eq.s32.totalorder %v5645, 1
        %vm5650 = vcmp.eq.s32.totalorder %v5646, 1
        %vm5651 = vcmp.eq.s32.totalorder %v5647, 1
        %vm5652 = vmand %vm5640, %vm5648
        %vm5653 = vmand %vm5641, %vm5649
        %vm5654 = vmand %vm5642, %vm5650
        %vm5655 = vmand %vm5643, %vm5651
        %v5656 = vsel %vm5652, 1.0, %v5564
        %v5657 = vsel %vm5653, 1.0, %v5565
        %v5658 = vsel %vm5654, 1.0, %v5566
        %v5659 = vsel %vm5655, 1.0, %v5567
        %v5660 = vsel %vm5640, 2147483648, %v5568
        %v5661 = vsel %vm5641, 2147483648, %v5569
        %v5662 = vsel %vm5642, 2147483648, %v5570
        %v5663 = vsel %vm5643, 2147483648, %v5571
        %v5664 = vand.u32 %v5660, 65535
        %v5665 = vshra.s32 %v5660, 16
        %v5666 = vcvt.s32.f32 %v5664
        %v5667 = vcvt.s32.f32 %v5665
        %5668 = vmax.xlane.f32.xlu0 %v5667
        %v5669 = vpop.xlane.xlu0 %5668
        %vm5670 = vcmp.eq.f32.partialorder %v5667, %v5669
        %v5671 = vsel %vm5670, %v5666, -inf
        %5672 = vmax.xlane.f32.xlu0 %v5671
        %v5673 = vpop.xlane.xlu0 %5672
        %v5674 = vcvt.f32.s32 %v5673
        %v5675 = vcvt.f32.s32 %v5669
        %v5676 = vshll.u32 %v5675, 16
        %v5677 = vadd.s32 %v5676, %v5674
        %v5678 = vand.u32 %v5661, 65535
        %v5679 = vshra.s32 %v5661, 16
        %v5680 = vcvt.s32.f32 %v5678
        %v5681 = vcvt.s32.f32 %v5679
        %5682 = vmax.xlane.f32.xlu0 %v5681
        %v5683 = vpop.xlane.xlu0 %5682
        %vm5684 = vcmp.eq.f32.partialorder %v5681, %v5683
        %v5685 = vsel %vm5684, %v5680, -inf
        %5686 = vmax.xlane.f32.xlu0 %v5685
        %v5687 = vpop.xlane.xlu0 %5686
        %v5688 = vcvt.f32.s32 %v5687
        %v5689 = vcvt.f32.s32 %v5683
        %v5690 = vshll.u32 %v5689, 16
        %v5691 = vadd.s32 %v5690, %v5688
        %v5692 = vand.u32 %v5662, 65535
        %v5693 = vshra.s32 %v5662, 16
        %v5694 = vcvt.s32.f32 %v5692
        %v5695 = vcvt.s32.f32 %v5693
        %5696 = vmax.xlane.f32.xlu0 %v5695
        %v5697 = vpop.xlane.xlu0 %5696
        %vm5698 = vcmp.eq.f32.partialorder %v5695, %v5697
        %v5699 = vsel %vm5698, %v5694, -inf
        %5700 = vmax.xlane.f32.xlu0 %v5699
        %v5701 = vpop.xlane.xlu0 %5700
        %v5702 = vcvt.f32.s32 %v5701
        %v5703 = vcvt.f32.s32 %v5697
        %v5704 = vshll.u32 %v5703, 16
        %v5705 = vadd.s32 %v5704, %v5702
        %v5706 = vand.u32 %v5663, 65535
        %v5707 = vshra.s32 %v5663, 16
        %v5708 = vcvt.s32.f32 %v5706
        %v5709 = vcvt.s32.f32 %v5707
        %5710 = vmax.xlane.f32.xlu0 %v5709
        %v5711 = vpop.xlane.xlu0 %5710
        %vm5712 = vcmp.eq.f32.partialorder %v5709, %v5711
        %v5713 = vsel %vm5712, %v5708, -inf
        %5714 = vmax.xlane.f32.xlu0 %v5713
        %v5715 = vpop.xlane.xlu0 %5714
        %v5716 = vcvt.f32.s32 %v5715
        %v5717 = vcvt.f32.s32 %v5711
        %v5718 = vshll.u32 %v5717, 16
        %v5719 = vadd.s32 %v5718, %v5716
        %v5720 = vand.u32 %v5677, 4294967168
        %v5721 = vand.u32 %v5691, 4294967168
        %v5722 = vand.u32 %v5705, 4294967168
        %v5723 = vand.u32 %v5719, 4294967168
        %vm5724 = vcmp.gt.s32.totalorder %v5720, 0
        %vm5725 = vcmp.gt.s32.totalorder %v5721, 0
        %vm5726 = vcmp.gt.s32.totalorder %v5722, 0
        %vm5727 = vcmp.gt.s32.totalorder %v5723, 0
        %vm5728 = vmor %vm5724, %vm5536
        %vm5729 = vmor %vm5725, %vm5537
        %vm5730 = vmor %vm5726, %vm5538
        %vm5731 = vmor %vm5727, %vm5539
        %vm5732 = vcmp.eq.s32.totalorder %v5660, %v5677
        %vm5733 = vcmp.eq.s32.totalorder %v5661, %v5691
        %vm5734 = vcmp.eq.s32.totalorder %v5662, %v5705
        %vm5735 = vcmp.eq.s32.totalorder %v5663, %v5719
        %v5736 = vsel %vm5728, 1, 0
        %v5737 = vsel %vm5729, 1, 0
        %v5738 = vsel %vm5730, 1, 0
        %v5739 = vsel %vm5731, 1, 0
        %vm5740 = vcmp.eq.s32.totalorder %v5736, 1
        %vm5741 = vcmp.eq.s32.totalorder %v5737, 1
        %vm5742 = vcmp.eq.s32.totalorder %v5738, 1
        %vm5743 = vcmp.eq.s32.totalorder %v5739, 1
        %vm5744 = vmand %vm5732, %vm5740
        %vm5745 = vmand %vm5733, %vm5741
        %vm5746 = vmand %vm5734, %vm5742
        %vm5747 = vmand %vm5735, %vm5743
        %v5748 = vsel %vm5744, 1.0, %v5656
        %v5749 = vsel %vm5745, 1.0, %v5657
        %v5750 = vsel %vm5746, 1.0, %v5658
        %v5751 = vsel %vm5747, 1.0, %v5659
        %v5752 = vsel %vm5732, 2147483648, %v5660
        %v5753 = vsel %vm5733, 2147483648, %v5661
        %v5754 = vsel %vm5734, 2147483648, %v5662
        %v5755 = vsel %vm5735, 2147483648, %v5663
        %v5756 = vand.u32 %v5752, 65535
        %v5757 = vshra.s32 %v5752, 16
        %v5758 = vcvt.s32.f32 %v5756
        %v5759 = vcvt.s32.f32 %v5757
        %5760 = vmax.xlane.f32.xlu0 %v5759
        %v5761 = vpop.xlane.xlu0 %5760
        %vm5762 = vcmp.eq.f32.partialorder %v5759, %v5761
        %v5763 = vsel %vm5762, %v5758, -inf
        %5764 = vmax.xlane.f32.xlu0 %v5763
        %v5765 = vpop.xlane.xlu0 %5764
        %v5766 = vcvt.f32.s32 %v5765
        %v5767 = vcvt.f32.s32 %v5761
        %v5768 = vshll.u32 %v5767, 16
        %v5769 = vadd.s32 %v5768, %v5766
        %v5770 = vand.u32 %v5753, 65535
        %v5771 = vshra.s32 %v5753, 16
        %v5772 = vcvt.s32.f32 %v5770
        %v5773 = vcvt.s32.f32 %v5771
        %5774 = vmax.xlane.f32.xlu0 %v5773
        %v5775 = vpop.xlane.xlu0 %5774
        %vm5776 = vcmp.eq.f32.partialorder %v5773, %v5775
        %v5777 = vsel %vm5776, %v5772, -inf
        %5778 = vmax.xlane.f32.xlu0 %v5777
        %v5779 = vpop.xlane.xlu0 %5778
        %v5780 = vcvt.f32.s32 %v5779
        %v5781 = vcvt.f32.s32 %v5775
        %v5782 = vshll.u32 %v5781, 16
        %v5783 = vadd.s32 %v5782, %v5780
        %v5784 = vand.u32 %v5754, 65535
        %v5785 = vshra.s32 %v5754, 16
        %v5786 = vcvt.s32.f32 %v5784
        %v5787 = vcvt.s32.f32 %v5785
        %5788 = vmax.xlane.f32.xlu0 %v5787
        %v5789 = vpop.xlane.xlu0 %5788
        %vm5790 = vcmp.eq.f32.partialorder %v5787, %v5789
        %v5791 = vsel %vm5790, %v5786, -inf
        %5792 = vmax.xlane.f32.xlu0 %v5791
        %v5793 = vpop.xlane.xlu0 %5792
        %v5794 = vcvt.f32.s32 %v5793
        %v5795 = vcvt.f32.s32 %v5789
        %v5796 = vshll.u32 %v5795, 16
        %v5797 = vadd.s32 %v5796, %v5794
        %v5798 = vand.u32 %v5755, 65535
        %v5799 = vshra.s32 %v5755, 16
        %v5800 = vcvt.s32.f32 %v5798
        %v5801 = vcvt.s32.f32 %v5799
        %5802 = vmax.xlane.f32.xlu0 %v5801
        %v5803 = vpop.xlane.xlu0 %5802
        %vm5804 = vcmp.eq.f32.partialorder %v5801, %v5803
        %v5805 = vsel %vm5804, %v5800, -inf
        %5806 = vmax.xlane.f32.xlu0 %v5805
        %v5807 = vpop.xlane.xlu0 %5806
        %v5808 = vcvt.f32.s32 %v5807
        %v5809 = vcvt.f32.s32 %v5803
        %v5810 = vshll.u32 %v5809, 16
        %v5811 = vadd.s32 %v5810, %v5808
        %v5812 = vand.u32 %v5769, 4294967168
        %v5813 = vand.u32 %v5783, 4294967168
        %v5814 = vand.u32 %v5797, 4294967168
        %v5815 = vand.u32 %v5811, 4294967168
        %vm5816 = vcmp.gt.s32.totalorder %v5812, 0
        %vm5817 = vcmp.gt.s32.totalorder %v5813, 0
        %vm5818 = vcmp.gt.s32.totalorder %v5814, 0
        %vm5819 = vcmp.gt.s32.totalorder %v5815, 0
        %vm5820 = vmor %vm5816, %vm5536
        %vm5821 = vmor %vm5817, %vm5537
        %vm5822 = vmor %vm5818, %vm5538
        %vm5823 = vmor %vm5819, %vm5539
        %vm5824 = vcmp.eq.s32.totalorder %v5752, %v5769
        %vm5825 = vcmp.eq.s32.totalorder %v5753, %v5783
        %vm5826 = vcmp.eq.s32.totalorder %v5754, %v5797
        %vm5827 = vcmp.eq.s32.totalorder %v5755, %v5811
        %v5828 = vsel %vm5820, 1, 0
        %v5829 = vsel %vm5821, 1, 0
        %v5830 = vsel %vm5822, 1, 0
        %v5831 = vsel %vm5823, 1, 0
        %vm5832 = vcmp.eq.s32.totalorder %v5828, 1
        %vm5833 = vcmp.eq.s32.totalorder %v5829, 1
        %vm5834 = vcmp.eq.s32.totalorder %v5830, 1
        %vm5835 = vcmp.eq.s32.totalorder %v5831, 1
        %vm5836 = vmand %vm5824, %vm5832
        %vm5837 = vmand %vm5825, %vm5833
        %vm5838 = vmand %vm5826, %vm5834
        %vm5839 = vmand %vm5827, %vm5835
        %v5840 = vsel %vm5836, 1.0, %v5748
        %v5841 = vsel %vm5837, 1.0, %v5749
        %v5842 = vsel %vm5838, 1.0, %v5750
        %v5843 = vsel %vm5839, 1.0, %v5751
        %v5844 = vsel %vm5824, 2147483648, %v5752
        %v5845 = vsel %vm5825, 2147483648, %v5753
        %v5846 = vsel %vm5826, 2147483648, %v5754
        %v5847 = vsel %vm5827, 2147483648, %v5755
        %v5848 = vand.u32 %v5844, 65535
        %v5849 = vshra.s32 %v5844, 16
        %v5850 = vcvt.s32.f32 %v5848
        %v5851 = vcvt.s32.f32 %v5849
        %5852 = vmax.xlane.f32.xlu0 %v5851
        %v5853 = vpop.xlane.xlu0 %5852
        %vm5854 = vcmp.eq.f32.partialorder %v5851, %v5853
        %v5855 = vsel %vm5854, %v5850, -inf
        %5856 = vmax.xlane.f32.xlu0 %v5855
        %v5857 = vpop.xlane.xlu0 %5856
        %v5858 = vcvt.f32.s32 %v5857
        %v5859 = vcvt.f32.s32 %v5853
        %v5860 = vshll.u32 %v5859, 16
        %v5861 = vadd.s32 %v5860, %v5858
        %v5862 = vand.u32 %v5845, 65535
        %v5863 = vshra.s32 %v5845, 16
        %v5864 = vcvt.s32.f32 %v5862
        %v5865 = vcvt.s32.f32 %v5863
        %5866 = vmax.xlane.f32.xlu0 %v5865
        %v5867 = vpop.xlane.xlu0 %5866
        %vm5868 = vcmp.eq.f32.partialorder %v5865, %v5867
        %v5869 = vsel %vm5868, %v5864, -inf
        %5870 = vmax.xlane.f32.xlu0 %v5869
        %v5871 = vpop.xlane.xlu0 %5870
        %v5872 = vcvt.f32.s32 %v5871
        %v5873 = vcvt.f32.s32 %v5867
        %v5874 = vshll.u32 %v5873, 16
        %v5875 = vadd.s32 %v5874, %v5872
        %v5876 = vand.u32 %v5846, 65535
        %v5877 = vshra.s32 %v5846, 16
        %v5878 = vcvt.s32.f32 %v5876
        %v5879 = vcvt.s32.f32 %v5877
        %5880 = vmax.xlane.f32.xlu0 %v5879
        %v5881 = vpop.xlane.xlu0 %5880
        %vm5882 = vcmp.eq.f32.partialorder %v5879, %v5881
        %v5883 = vsel %vm5882, %v5878, -inf
        %5884 = vmax.xlane.f32.xlu0 %v5883
        %v5885 = vpop.xlane.xlu0 %5884
        %v5886 = vcvt.f32.s32 %v5885
        %v5887 = vcvt.f32.s32 %v5881
        %v5888 = vshll.u32 %v5887, 16
        %v5889 = vadd.s32 %v5888, %v5886
        %v5890 = vand.u32 %v5847, 65535
        %v5891 = vshra.s32 %v5847, 16
        %v5892 = vcvt.s32.f32 %v5890
        %v5893 = vcvt.s32.f32 %v5891
        %5894 = vmax.xlane.f32.xlu0 %v5893
        %v5895 = vpop.xlane.xlu0 %5894
        %vm5896 = vcmp.eq.f32.partialorder %v5893, %v5895
        %v5897 = vsel %vm5896, %v5892, -inf
        %5898 = vmax.xlane.f32.xlu0 %v5897
        %v5899 = vpop.xlane.xlu0 %5898
        %v5900 = vcvt.f32.s32 %v5899
        %v5901 = vcvt.f32.s32 %v5895
        %v5902 = vshll.u32 %v5901, 16
        %v5903 = vadd.s32 %v5902, %v5900
        %v5904 = vand.u32 %v5861, 4294967168
        %v5905 = vand.u32 %v5875, 4294967168
        %v5906 = vand.u32 %v5889, 4294967168
        %v5907 = vand.u32 %v5903, 4294967168
        %vm5908 = vcmp.gt.s32.totalorder %v5904, 0
        %vm5909 = vcmp.gt.s32.totalorder %v5905, 0
        %vm5910 = vcmp.gt.s32.totalorder %v5906, 0
        %vm5911 = vcmp.gt.s32.totalorder %v5907, 0
        %vm5912 = vmor %vm5908, %vm5536
        %vm5913 = vmor %vm5909, %vm5537
        %vm5914 = vmor %vm5910, %vm5538
        %vm5915 = vmor %vm5911, %vm5539
        %vm5916 = vcmp.eq.s32.totalorder %v5844, %v5861
        %vm5917 = vcmp.eq.s32.totalorder %v5845, %v5875
        %vm5918 = vcmp.eq.s32.totalorder %v5846, %v5889
        %vm5919 = vcmp.eq.s32.totalorder %v5847, %v5903
        %v5920 = vsel %vm5912, 1, 0
        %v5921 = vsel %vm5913, 1, 0
        %v5922 = vsel %vm5914, 1, 0
        %v5923 = vsel %vm5915, 1, 0
        %vm5924 = vcmp.eq.s32.totalorder %v5920, 1
        %vm5925 = vcmp.eq.s32.totalorder %v5921, 1
        %vm5926 = vcmp.eq.s32.totalorder %v5922, 1
        %vm5927 = vcmp.eq.s32.totalorder %v5923, 1
        %vm5928 = vmand %vm5916, %vm5924
        %vm5929 = vmand %vm5917, %vm5925
        %vm5930 = vmand %vm5918, %vm5926
        %vm5931 = vmand %vm5919, %vm5927
        %v5932 = vsel %vm5928, 1.0, %v5840
        %v5933 = vsel %vm5929, 1.0, %v5841
        %v5934 = vsel %vm5930, 1.0, %v5842
        %v5935 = vsel %vm5931, 1.0, %v5843
        %v5936 = vsel %vm5916, 2147483648, %v5844
        %v5937 = vsel %vm5917, 2147483648, %v5845
        %v5938 = vsel %vm5918, 2147483648, %v5846
        %v5939 = vsel %vm5919, 2147483648, %v5847
        %v5940 = vand.u32 %v5936, 65535
        %v5941 = vshra.s32 %v5936, 16
        %v5942 = vcvt.s32.f32 %v5940
        %v5943 = vcvt.s32.f32 %v5941
        %5944 = vmax.xlane.f32.xlu0 %v5943
        %v5945 = vpop.xlane.xlu0 %5944
        %vm5946 = vcmp.eq.f32.partialorder %v5943, %v5945
        %v5947 = vsel %vm5946, %v5942, -inf
        %5948 = vmax.xlane.f32.xlu0 %v5947
        %v5949 = vpop.xlane.xlu0 %5948
        %v5950 = vcvt.f32.s32 %v5949
        %v5951 = vcvt.f32.s32 %v5945
        %v5952 = vshll.u32 %v5951, 16
        %v5953 = vadd.s32 %v5952, %v5950
        %v5954 = vand.u32 %v5937, 65535
        %v5955 = vshra.s32 %v5937, 16
        %v5956 = vcvt.s32.f32 %v5954
        %v5957 = vcvt.s32.f32 %v5955
        %5958 = vmax.xlane.f32.xlu0 %v5957
        %v5959 = vpop.xlane.xlu0 %5958
        %vm5960 = vcmp.eq.f32.partialorder %v5957, %v5959
        %v5961 = vsel %vm5960, %v5956, -inf
        %5962 = vmax.xlane.f32.xlu0 %v5961
        %v5963 = vpop.xlane.xlu0 %5962
        %v5964 = vcvt.f32.s32 %v5963
        %v5965 = vcvt.f32.s32 %v5959
        %v5966 = vshll.u32 %v5965, 16
        %v5967 = vadd.s32 %v5966, %v5964
        %v5968 = vand.u32 %v5938, 65535
        %v5969 = vshra.s32 %v5938, 16
        %v5970 = vcvt.s32.f32 %v5968
        %v5971 = vcvt.s32.f32 %v5969
        %5972 = vmax.xlane.f32.xlu0 %v5971
        %v5973 = vpop.xlane.xlu0 %5972
        %vm5974 = vcmp.eq.f32.partialorder %v5971, %v5973
        %v5975 = vsel %vm5974, %v5970, -inf
        %5976 = vmax.xlane.f32.xlu0 %v5975
        %v5977 = vpop.xlane.xlu0 %5976
        %v5978 = vcvt.f32.s32 %v5977
        %v5979 = vcvt.f32.s32 %v5973
        %v5980 = vshll.u32 %v5979, 16
        %v5981 = vadd.s32 %v5980, %v5978
        %v5982 = vand.u32 %v5939, 65535
        %v5983 = vshra.s32 %v5939, 16
        %v5984 = vcvt.s32.f32 %v5982
        %v5985 = vcvt.s32.f32 %v5983
        %5986 = vmax.xlane.f32.xlu0 %v5985
        %v5987 = vpop.xlane.xlu0 %5986
        %vm5988 = vcmp.eq.f32.partialorder %v5985, %v5987
        %v5989 = vsel %vm5988, %v5984, -inf
        %5990 = vmax.xlane.f32.xlu0 %v5989
        %v5991 = vpop.xlane.xlu0 %5990
        %v5992 = vcvt.f32.s32 %v5991
        %v5993 = vcvt.f32.s32 %v5987
        %v5994 = vshll.u32 %v5993, 16
        %v5995 = vadd.s32 %v5994, %v5992
        %v5996 = vand.u32 %v5953, 4294967168
        %v5997 = vand.u32 %v5967, 4294967168
        %v5998 = vand.u32 %v5981, 4294967168
        %v5999 = vand.u32 %v5995, 4294967168
        %vm6000 = vcmp.gt.s32.totalorder %v5996, 0
        %vm6001 = vcmp.gt.s32.totalorder %v5997, 0
        %vm6002 = vcmp.gt.s32.totalorder %v5998, 0
        %vm6003 = vcmp.gt.s32.totalorder %v5999, 0
        %vm6004 = vmor %vm6000, %vm5536
        %vm6005 = vmor %vm6001, %vm5537
        %vm6006 = vmor %vm6002, %vm5538
        %vm6007 = vmor %vm6003, %vm5539
        %vm6008 = vcmp.eq.s32.totalorder %v5936, %v5953
        %vm6009 = vcmp.eq.s32.totalorder %v5937, %v5967
        %vm6010 = vcmp.eq.s32.totalorder %v5938, %v5981
        %vm6011 = vcmp.eq.s32.totalorder %v5939, %v5995
        %v6012 = vsel %vm6004, 1, 0
        %v6013 = vsel %vm6005, 1, 0
        %v6014 = vsel %vm6006, 1, 0
        %v6015 = vsel %vm6007, 1, 0
        %vm6016 = vcmp.eq.s32.totalorder %v6012, 1
        %vm6017 = vcmp.eq.s32.totalorder %v6013, 1
        %vm6018 = vcmp.eq.s32.totalorder %v6014, 1
        %vm6019 = vcmp.eq.s32.totalorder %v6015, 1
        %vm6020 = vmand %vm6008, %vm6016
        %vm6021 = vmand %vm6009, %vm6017
        %vm6022 = vmand %vm6010, %vm6018
        %vm6023 = vmand %vm6011, %vm6019
        %v6024 = vsel %vm6020, 1.0, %v5932
        %v6025 = vsel %vm6021, 1.0, %v5933
        %v6026 = vsel %vm6022, 1.0, %v5934
        %v6027 = vsel %vm6023, 1.0, %v5935
        %v6028 = vsel %vm6008, 2147483648, %v5936
        %v6029 = vsel %vm6009, 2147483648, %v5937
        %v6030 = vsel %vm6010, 2147483648, %v5938
        %v6031 = vsel %vm6011, 2147483648, %v5939
        %v6032 = vand.u32 %v6028, 65535
        %v6033 = vshra.s32 %v6028, 16
        %v6034 = vcvt.s32.f32 %v6032
        %v6035 = vcvt.s32.f32 %v6033
        %6036 = vmax.xlane.f32.xlu0 %v6035
        %v6037 = vpop.xlane.xlu0 %6036
        %vm6038 = vcmp.eq.f32.partialorder %v6035, %v6037
        %v6039 = vsel %vm6038, %v6034, -inf
        %6040 = vmax.xlane.f32.xlu0 %v6039
        %v6041 = vpop.xlane.xlu0 %6040
        %v6042 = vcvt.f32.s32 %v6041
        %v6043 = vcvt.f32.s32 %v6037
        %v6044 = vshll.u32 %v6043, 16
        %v6045 = vadd.s32 %v6044, %v6042
        %v6046 = vand.u32 %v6029, 65535
        %v6047 = vshra.s32 %v6029, 16
        %v6048 = vcvt.s32.f32 %v6046
        %v6049 = vcvt.s32.f32 %v6047
        %6050 = vmax.xlane.f32.xlu0 %v6049
        %v6051 = vpop.xlane.xlu0 %6050
        %vm6052 = vcmp.eq.f32.partialorder %v6049, %v6051
        %v6053 = vsel %vm6052, %v6048, -inf
        %6054 = vmax.xlane.f32.xlu0 %v6053
        %v6055 = vpop.xlane.xlu0 %6054
        %v6056 = vcvt.f32.s32 %v6055
        %v6057 = vcvt.f32.s32 %v6051
        %v6058 = vshll.u32 %v6057, 16
        %v6059 = vadd.s32 %v6058, %v6056
        %v6060 = vand.u32 %v6030, 65535
        %v6061 = vshra.s32 %v6030, 16
        %v6062 = vcvt.s32.f32 %v6060
        %v6063 = vcvt.s32.f32 %v6061
        %6064 = vmax.xlane.f32.xlu0 %v6063
        %v6065 = vpop.xlane.xlu0 %6064
        %vm6066 = vcmp.eq.f32.partialorder %v6063, %v6065
        %v6067 = vsel %vm6066, %v6062, -inf
        %6068 = vmax.xlane.f32.xlu0 %v6067
        %v6069 = vpop.xlane.xlu0 %6068
        %v6070 = vcvt.f32.s32 %v6069
        %v6071 = vcvt.f32.s32 %v6065
        %v6072 = vshll.u32 %v6071, 16
        %v6073 = vadd.s32 %v6072, %v6070
        %v6074 = vand.u32 %v6031, 65535
        %v6075 = vshra.s32 %v6031, 16
        %v6076 = vcvt.s32.f32 %v6074
        %v6077 = vcvt.s32.f32 %v6075
        %6078 = vmax.xlane.f32.xlu0 %v6077
        %v6079 = vpop.xlane.xlu0 %6078
        %vm6080 = vcmp.eq.f32.partialorder %v6077, %v6079
        %v6081 = vsel %vm6080, %v6076, -inf
        %6082 = vmax.xlane.f32.xlu0 %v6081
        %v6083 = vpop.xlane.xlu0 %6082
        %v6084 = vcvt.f32.s32 %v6083
        %v6085 = vcvt.f32.s32 %v6079
        %v6086 = vshll.u32 %v6085, 16
        %v6087 = vadd.s32 %v6086, %v6084
        %v6088 = vand.u32 %v6045, 4294967168
        %v6089 = vand.u32 %v6059, 4294967168
        %v6090 = vand.u32 %v6073, 4294967168
        %v6091 = vand.u32 %v6087, 4294967168
        %vm6092 = vcmp.gt.s32.totalorder %v6088, 0
        %vm6093 = vcmp.gt.s32.totalorder %v6089, 0
        %vm6094 = vcmp.gt.s32.totalorder %v6090, 0
        %vm6095 = vcmp.gt.s32.totalorder %v6091, 0
        %vm6096 = vmor %vm6092, %vm5536
        %vm6097 = vmor %vm6093, %vm5537
        %vm6098 = vmor %vm6094, %vm5538
        %vm6099 = vmor %vm6095, %vm5539
        %vm6100 = vcmp.eq.s32.totalorder %v6028, %v6045
        %vm6101 = vcmp.eq.s32.totalorder %v6029, %v6059
        %vm6102 = vcmp.eq.s32.totalorder %v6030, %v6073
        %vm6103 = vcmp.eq.s32.totalorder %v6031, %v6087
        %v6104 = vsel %vm6096, 1, 0
        %v6105 = vsel %vm6097, 1, 0
        %v6106 = vsel %vm6098, 1, 0
        %v6107 = vsel %vm6099, 1, 0
        %vm6108 = vcmp.eq.s32.totalorder %v6104, 1
        %vm6109 = vcmp.eq.s32.totalorder %v6105, 1
        %vm6110 = vcmp.eq.s32.totalorder %v6106, 1
        %vm6111 = vcmp.eq.s32.totalorder %v6107, 1
        %vm6112 = vmand %vm6100, %vm6108
        %vm6113 = vmand %vm6101, %vm6109
        %vm6114 = vmand %vm6102, %vm6110
        %vm6115 = vmand %vm6103, %vm6111
        %v6116 = vsel %vm6112, 1.0, %v6024
        %v6117 = vsel %vm6113, 1.0, %v6025
        %v6118 = vsel %vm6114, 1.0, %v6026
        %v6119 = vsel %vm6115, 1.0, %v6027
        %v6120 = vsel %vm6100, 2147483648, %v6028
        %v6121 = vsel %vm6101, 2147483648, %v6029
        %v6122 = vsel %vm6102, 2147483648, %v6030
        %v6123 = vsel %vm6103, 2147483648, %v6031
        %v6124 = vand.u32 %v6120, 65535
        %v6125 = vshra.s32 %v6120, 16
        %v6126 = vcvt.s32.f32 %v6124
        %v6127 = vcvt.s32.f32 %v6125
        %6128 = vmax.xlane.f32.xlu0 %v6127
        %v6129 = vpop.xlane.xlu0 %6128
        %vm6130 = vcmp.eq.f32.partialorder %v6127, %v6129
        %v6131 = vsel %vm6130, %v6126, -inf
        %6132 = vmax.xlane.f32.xlu0 %v6131
        %v6133 = vpop.xlane.xlu0 %6132
        %v6134 = vcvt.f32.s32 %v6133
        %v6135 = vcvt.f32.s32 %v6129
        %v6136 = vshll.u32 %v6135, 16
        %v6137 = vadd.s32 %v6136, %v6134
        %v6138 = vand.u32 %v6121, 65535
        %v6139 = vshra.s32 %v6121, 16
        %v6140 = vcvt.s32.f32 %v6138
        %v6141 = vcvt.s32.f32 %v6139
        %6142 = vmax.xlane.f32.xlu0 %v6141
        %v6143 = vpop.xlane.xlu0 %6142
        %vm6144 = vcmp.eq.f32.partialorder %v6141, %v6143
        %v6145 = vsel %vm6144, %v6140, -inf
        %6146 = vmax.xlane.f32.xlu0 %v6145
        %v6147 = vpop.xlane.xlu0 %6146
        %v6148 = vcvt.f32.s32 %v6147
        %v6149 = vcvt.f32.s32 %v6143
        %v6150 = vshll.u32 %v6149, 16
        %v6151 = vadd.s32 %v6150, %v6148
        %v6152 = vand.u32 %v6122, 65535
        %v6153 = vshra.s32 %v6122, 16
        %v6154 = vcvt.s32.f32 %v6152
        %v6155 = vcvt.s32.f32 %v6153
        %6156 = vmax.xlane.f32.xlu0 %v6155
        %v6157 = vpop.xlane.xlu0 %6156
        %vm6158 = vcmp.eq.f32.partialorder %v6155, %v6157
        %v6159 = vsel %vm6158, %v6154, -inf
        %6160 = vmax.xlane.f32.xlu0 %v6159
        %v6161 = vpop.xlane.xlu0 %6160
        %v6162 = vcvt.f32.s32 %v6161
        %v6163 = vcvt.f32.s32 %v6157
        %v6164 = vshll.u32 %v6163, 16
        %v6165 = vadd.s32 %v6164, %v6162
        %v6166 = vand.u32 %v6123, 65535
        %v6167 = vshra.s32 %v6123, 16
        %v6168 = vcvt.s32.f32 %v6166
        %v6169 = vcvt.s32.f32 %v6167
        %6170 = vmax.xlane.f32.xlu0 %v6169
        %v6171 = vpop.xlane.xlu0 %6170
        %vm6172 = vcmp.eq.f32.partialorder %v6169, %v6171
        %v6173 = vsel %vm6172, %v6168, -inf
        %6174 = vmax.xlane.f32.xlu0 %v6173
        %v6175 = vpop.xlane.xlu0 %6174
        %v6176 = vcvt.f32.s32 %v6175
        %v6177 = vcvt.f32.s32 %v6171
        %v6178 = vshll.u32 %v6177, 16
        %v6179 = vadd.s32 %v6178, %v6176
        %v6180 = vand.u32 %v6137, 4294967168
        %v6181 = vand.u32 %v6151, 4294967168
        %v6182 = vand.u32 %v6165, 4294967168
        %v6183 = vand.u32 %v6179, 4294967168
        %vm6184 = vcmp.gt.s32.totalorder %v6180, 0
        %vm6185 = vcmp.gt.s32.totalorder %v6181, 0
        %vm6186 = vcmp.gt.s32.totalorder %v6182, 0
        %vm6187 = vcmp.gt.s32.totalorder %v6183, 0
        %vm6188 = vmor %vm6184, %vm5536
        %vm6189 = vmor %vm6185, %vm5537
        %vm6190 = vmor %vm6186, %vm5538
        %vm6191 = vmor %vm6187, %vm5539
        %vm6192 = vcmp.eq.s32.totalorder %v6120, %v6137
        %vm6193 = vcmp.eq.s32.totalorder %v6121, %v6151
        %vm6194 = vcmp.eq.s32.totalorder %v6122, %v6165
        %vm6195 = vcmp.eq.s32.totalorder %v6123, %v6179
        %v6196 = vsel %vm6188, 1, 0
        %v6197 = vsel %vm6189, 1, 0
        %v6198 = vsel %vm6190, 1, 0
        %v6199 = vsel %vm6191, 1, 0
        %vm6200 = vcmp.eq.s32.totalorder %v6196, 1
        %vm6201 = vcmp.eq.s32.totalorder %v6197, 1
        %vm6202 = vcmp.eq.s32.totalorder %v6198, 1
        %vm6203 = vcmp.eq.s32.totalorder %v6199, 1
        %vm6204 = vmand %vm6192, %vm6200
        %vm6205 = vmand %vm6193, %vm6201
        %vm6206 = vmand %vm6194, %vm6202
        %vm6207 = vmand %vm6195, %vm6203
        %v6208 = vsel %vm6204, 1.0, %v6116
        %v6209 = vsel %vm6205, 1.0, %v6117
        %v6210 = vsel %vm6206, 1.0, %v6118
        %v6211 = vsel %vm6207, 1.0, %v6119
        %v6212 = vsel %vm6192, 2147483648, %v6120
        %v6213 = vsel %vm6193, 2147483648, %v6121
        %v6214 = vsel %vm6194, 2147483648, %v6122
        %v6215 = vsel %vm6195, 2147483648, %v6123
        %v6216 = vand.u32 %v6212, 65535
        %v6217 = vshra.s32 %v6212, 16
        %v6218 = vcvt.s32.f32 %v6216
        %v6219 = vcvt.s32.f32 %v6217
        %6220 = vmax.xlane.f32.xlu0 %v6219
        %v6221 = vpop.xlane.xlu0 %6220
        %vm6222 = vcmp.eq.f32.partialorder %v6219, %v6221
        %v6223 = vsel %vm6222, %v6218, -inf
        %6224 = vmax.xlane.f32.xlu0 %v6223
        %v6225 = vpop.xlane.xlu0 %6224
        %v6226 = vcvt.f32.s32 %v6225
        %v6227 = vcvt.f32.s32 %v6221
        %v6228 = vshll.u32 %v6227, 16
        %v6229 = vadd.s32 %v6228, %v6226
        %v6230 = vand.u32 %v6213, 65535
        %v6231 = vshra.s32 %v6213, 16
        %v6232 = vcvt.s32.f32 %v6230
        %v6233 = vcvt.s32.f32 %v6231
        %6234 = vmax.xlane.f32.xlu0 %v6233
        %v6235 = vpop.xlane.xlu0 %6234
        %vm6236 = vcmp.eq.f32.partialorder %v6233, %v6235
        %v6237 = vsel %vm6236, %v6232, -inf
        %6238 = vmax.xlane.f32.xlu0 %v6237
        %v6239 = vpop.xlane.xlu0 %6238
        %v6240 = vcvt.f32.s32 %v6239
        %v6241 = vcvt.f32.s32 %v6235
        %v6242 = vshll.u32 %v6241, 16
        %v6243 = vadd.s32 %v6242, %v6240
        %v6244 = vand.u32 %v6214, 65535
        %v6245 = vshra.s32 %v6214, 16
        %v6246 = vcvt.s32.f32 %v6244
        %v6247 = vcvt.s32.f32 %v6245
        %6248 = vmax.xlane.f32.xlu0 %v6247
        %v6249 = vpop.xlane.xlu0 %6248
        %vm6250 = vcmp.eq.f32.partialorder %v6247, %v6249
        %v6251 = vsel %vm6250, %v6246, -inf
        %6252 = vmax.xlane.f32.xlu0 %v6251
        %v6253 = vpop.xlane.xlu0 %6252
        %v6254 = vcvt.f32.s32 %v6253
        %v6255 = vcvt.f32.s32 %v6249
        %v6256 = vshll.u32 %v6255, 16
        %v6257 = vadd.s32 %v6256, %v6254
        %v6258 = vand.u32 %v6215, 65535
        %v6259 = vshra.s32 %v6215, 16
        %v6260 = vcvt.s32.f32 %v6258
        %v6261 = vcvt.s32.f32 %v6259
        %6262 = vmax.xlane.f32.xlu0 %v6261
        %v6263 = vpop.xlane.xlu0 %6262
        %vm6264 = vcmp.eq.f32.partialorder %v6261, %v6263
        %v6265 = vsel %vm6264, %v6260, -inf
        %6266 = vmax.xlane.f32.xlu0 %v6265
        %v6267 = vpop.xlane.xlu0 %6266
        %v6268 = vcvt.f32.s32 %v6267
        %v6269 = vcvt.f32.s32 %v6263
        %v6270 = vshll.u32 %v6269, 16
        %v6271 = vadd.s32 %v6270, %v6268
        %v6272 = vand.u32 %v6229, 4294967168
        %v6273 = vand.u32 %v6243, 4294967168
        %v6274 = vand.u32 %v6257, 4294967168
        %v6275 = vand.u32 %v6271, 4294967168
        %vm6276 = vcmp.gt.s32.totalorder %v6272, 0
        %vm6277 = vcmp.gt.s32.totalorder %v6273, 0
        %vm6278 = vcmp.gt.s32.totalorder %v6274, 0
        %vm6279 = vcmp.gt.s32.totalorder %v6275, 0
        %vm6280 = vmor %vm6276, %vm5536
        %vm6281 = vmor %vm6277, %vm5537
        %vm6282 = vmor %vm6278, %vm5538
        %vm6283 = vmor %vm6279, %vm5539
        %vm6284 = vcmp.eq.s32.totalorder %v6212, %v6229
        %vm6285 = vcmp.eq.s32.totalorder %v6213, %v6243
        %vm6286 = vcmp.eq.s32.totalorder %v6214, %v6257
        %vm6287 = vcmp.eq.s32.totalorder %v6215, %v6271
        %v6288 = vsel %vm6280, 1, 0
        %v6289 = vsel %vm6281, 1, 0
        %v6290 = vsel %vm6282, 1, 0
        %v6291 = vsel %vm6283, 1, 0
        %vm6292 = vcmp.eq.s32.totalorder %v6288, 1
        %vm6293 = vcmp.eq.s32.totalorder %v6289, 1
        %vm6294 = vcmp.eq.s32.totalorder %v6290, 1
        %vm6295 = vcmp.eq.s32.totalorder %v6291, 1
        %vm6296 = vmand %vm6284, %vm6292
        %vm6297 = vmand %vm6285, %vm6293
        %vm6298 = vmand %vm6286, %vm6294
        %vm6299 = vmand %vm6287, %vm6295
        %v6300 = vsel %vm6296, 1.0, %v6208
        %v6301 = vsel %vm6297, 1.0, %v6209
        %v6302 = vsel %vm6298, 1.0, %v6210
        %v6303 = vsel %vm6299, 1.0, %v6211
        %v6304 = vsel %vm6284, 2147483648, %v6212
        %v6305 = vsel %vm6285, 2147483648, %v6213
        %v6306 = vsel %vm6286, 2147483648, %v6214
        %v6307 = vsel %vm6287, 2147483648, %v6215
        %v6308 = vand.u32 %v6304, 65535
        %v6309 = vshra.s32 %v6304, 16
        %v6310 = vcvt.s32.f32 %v6308
        %v6311 = vcvt.s32.f32 %v6309
        %6312 = vmax.xlane.f32.xlu0 %v6311
        %v6313 = vpop.xlane.xlu0 %6312
        %vm6314 = vcmp.eq.f32.partialorder %v6311, %v6313
        %v6315 = vsel %vm6314, %v6310, -inf
        %6316 = vmax.xlane.f32.xlu0 %v6315
        %v6317 = vpop.xlane.xlu0 %6316
        %v6318 = vcvt.f32.s32 %v6317
        %v6319 = vcvt.f32.s32 %v6313
        %v6320 = vshll.u32 %v6319, 16
        %v6321 = vadd.s32 %v6320, %v6318
        %v6322 = vand.u32 %v6305, 65535
        %v6323 = vshra.s32 %v6305, 16
        %v6324 = vcvt.s32.f32 %v6322
        %v6325 = vcvt.s32.f32 %v6323
        %6326 = vmax.xlane.f32.xlu0 %v6325
        %v6327 = vpop.xlane.xlu0 %6326
        %vm6328 = vcmp.eq.f32.partialorder %v6325, %v6327
        %v6329 = vsel %vm6328, %v6324, -inf
        %6330 = vmax.xlane.f32.xlu0 %v6329
        %v6331 = vpop.xlane.xlu0 %6330
        %v6332 = vcvt.f32.s32 %v6331
        %v6333 = vcvt.f32.s32 %v6327
        %v6334 = vshll.u32 %v6333, 16
        %v6335 = vadd.s32 %v6334, %v6332
        %v6336 = vand.u32 %v6306, 65535
        %v6337 = vshra.s32 %v6306, 16
        %v6338 = vcvt.s32.f32 %v6336
        %v6339 = vcvt.s32.f32 %v6337
        %6340 = vmax.xlane.f32.xlu0 %v6339
        %v6341 = vpop.xlane.xlu0 %6340
        %vm6342 = vcmp.eq.f32.partialorder %v6339, %v6341
        %v6343 = vsel %vm6342, %v6338, -inf
        %6344 = vmax.xlane.f32.xlu0 %v6343
        %v6345 = vpop.xlane.xlu0 %6344
        %v6346 = vcvt.f32.s32 %v6345
        %v6347 = vcvt.f32.s32 %v6341
        %v6348 = vshll.u32 %v6347, 16
        %v6349 = vadd.s32 %v6348, %v6346
        %v6350 = vand.u32 %v6307, 65535
        %v6351 = vshra.s32 %v6307, 16
        %v6352 = vcvt.s32.f32 %v6350
        %v6353 = vcvt.s32.f32 %v6351
        %6354 = vmax.xlane.f32.xlu0 %v6353
        %v6355 = vpop.xlane.xlu0 %6354
        %vm6356 = vcmp.eq.f32.partialorder %v6353, %v6355
        %v6357 = vsel %vm6356, %v6352, -inf
        %6358 = vmax.xlane.f32.xlu0 %v6357
        %v6359 = vpop.xlane.xlu0 %6358
        %v6360 = vcvt.f32.s32 %v6359
        %v6361 = vcvt.f32.s32 %v6355
        %v6362 = vshll.u32 %v6361, 16
        %v6363 = vadd.s32 %v6362, %v6360
        %v6364 = vand.u32 %v6321, 4294967168
        %v6365 = vand.u32 %v6335, 4294967168
        %v6366 = vand.u32 %v6349, 4294967168
        %v6367 = vand.u32 %v6363, 4294967168
        %vm6368 = vcmp.gt.s32.totalorder %v6364, 0
        %vm6369 = vcmp.gt.s32.totalorder %v6365, 0
        %vm6370 = vcmp.gt.s32.totalorder %v6366, 0
        %vm6371 = vcmp.gt.s32.totalorder %v6367, 0
        %vm6372 = vmor %vm6368, %vm5536
        %vm6373 = vmor %vm6369, %vm5537
        %vm6374 = vmor %vm6370, %vm5538
        %vm6375 = vmor %vm6371, %vm5539
        %vm6376 = vcmp.eq.s32.totalorder %v6304, %v6321
        %vm6377 = vcmp.eq.s32.totalorder %v6305, %v6335
        %vm6378 = vcmp.eq.s32.totalorder %v6306, %v6349
        %vm6379 = vcmp.eq.s32.totalorder %v6307, %v6363
        %v6380 = vsel %vm6372, 1, 0
        %v6381 = vsel %vm6373, 1, 0
        %v6382 = vsel %vm6374, 1, 0
        %v6383 = vsel %vm6375, 1, 0
        %vm6384 = vcmp.eq.s32.totalorder %v6380, 1
        %vm6385 = vcmp.eq.s32.totalorder %v6381, 1
        %vm6386 = vcmp.eq.s32.totalorder %v6382, 1
        %vm6387 = vcmp.eq.s32.totalorder %v6383, 1
        %vm6388 = vmand %vm6376, %vm6384
        %vm6389 = vmand %vm6377, %vm6385
        %vm6390 = vmand %vm6378, %vm6386
        %vm6391 = vmand %vm6379, %vm6387
        %v6392 = vsel %vm6388, 1.0, %v6300
        %v6393 = vsel %vm6389, 1.0, %v6301
        %v6394 = vsel %vm6390, 1.0, %v6302
        %v6395 = vsel %vm6391, 1.0, %v6303
        %v6396 = vsel %vm6376, 2147483648, %v6304
        %v6397 = vsel %vm6377, 2147483648, %v6305
        %v6398 = vsel %vm6378, 2147483648, %v6306
        %v6399 = vsel %vm6379, 2147483648, %v6307
        %v6400 = vand.u32 %v6396, 65535
        %v6401 = vshra.s32 %v6396, 16
        %v6402 = vcvt.s32.f32 %v6400
        %v6403 = vcvt.s32.f32 %v6401
        %6404 = vmax.xlane.f32.xlu0 %v6403
        %v6405 = vpop.xlane.xlu0 %6404
        %vm6406 = vcmp.eq.f32.partialorder %v6403, %v6405
        %v6407 = vsel %vm6406, %v6402, -inf
        %6408 = vmax.xlane.f32.xlu0 %v6407
        %v6409 = vpop.xlane.xlu0 %6408
        %v6410 = vcvt.f32.s32 %v6409
        %v6411 = vcvt.f32.s32 %v6405
        %v6412 = vshll.u32 %v6411, 16
        %v6413 = vadd.s32 %v6412, %v6410
        %v6414 = vand.u32 %v6397, 65535
        %v6415 = vshra.s32 %v6397, 16
        %v6416 = vcvt.s32.f32 %v6414
        %v6417 = vcvt.s32.f32 %v6415
        %6418 = vmax.xlane.f32.xlu0 %v6417
        %v6419 = vpop.xlane.xlu0 %6418
        %vm6420 = vcmp.eq.f32.partialorder %v6417, %v6419
        %v6421 = vsel %vm6420, %v6416, -inf
        %6422 = vmax.xlane.f32.xlu0 %v6421
        %v6423 = vpop.xlane.xlu0 %6422
        %v6424 = vcvt.f32.s32 %v6423
        %v6425 = vcvt.f32.s32 %v6419
        %v6426 = vshll.u32 %v6425, 16
        %v6427 = vadd.s32 %v6426, %v6424
        %v6428 = vand.u32 %v6398, 65535
        %v6429 = vshra.s32 %v6398, 16
        %v6430 = vcvt.s32.f32 %v6428
        %v6431 = vcvt.s32.f32 %v6429
        %6432 = vmax.xlane.f32.xlu0 %v6431
        %v6433 = vpop.xlane.xlu0 %6432
        %vm6434 = vcmp.eq.f32.partialorder %v6431, %v6433
        %v6435 = vsel %vm6434, %v6430, -inf
        %6436 = vmax.xlane.f32.xlu0 %v6435
        %v6437 = vpop.xlane.xlu0 %6436
        %v6438 = vcvt.f32.s32 %v6437
        %v6439 = vcvt.f32.s32 %v6433
        %v6440 = vshll.u32 %v6439, 16
        %v6441 = vadd.s32 %v6440, %v6438
        %v6442 = vand.u32 %v6399, 65535
        %v6443 = vshra.s32 %v6399, 16
        %v6444 = vcvt.s32.f32 %v6442
        %v6445 = vcvt.s32.f32 %v6443
        %6446 = vmax.xlane.f32.xlu0 %v6445
        %v6447 = vpop.xlane.xlu0 %6446
        %vm6448 = vcmp.eq.f32.partialorder %v6445, %v6447
        %v6449 = vsel %vm6448, %v6444, -inf
        %6450 = vmax.xlane.f32.xlu0 %v6449
        %v6451 = vpop.xlane.xlu0 %6450
        %v6452 = vcvt.f32.s32 %v6451
        %v6453 = vcvt.f32.s32 %v6447
        %v6454 = vshll.u32 %v6453, 16
        %v6455 = vadd.s32 %v6454, %v6452
        %v6456 = vand.u32 %v6413, 4294967168
        %v6457 = vand.u32 %v6427, 4294967168
        %v6458 = vand.u32 %v6441, 4294967168
        %v6459 = vand.u32 %v6455, 4294967168
        %vm6460 = vcmp.gt.s32.totalorder %v6456, 0
        %vm6461 = vcmp.gt.s32.totalorder %v6457, 0
        %vm6462 = vcmp.gt.s32.totalorder %v6458, 0
        %vm6463 = vcmp.gt.s32.totalorder %v6459, 0
        %vm6464 = vmor %vm6460, %vm5536
        %vm6465 = vmor %vm6461, %vm5537
        %vm6466 = vmor %vm6462, %vm5538
        %vm6467 = vmor %vm6463, %vm5539
        %vm6468 = vcmp.eq.s32.totalorder %v6396, %v6413
        %vm6469 = vcmp.eq.s32.totalorder %v6397, %v6427
        %vm6470 = vcmp.eq.s32.totalorder %v6398, %v6441
        %vm6471 = vcmp.eq.s32.totalorder %v6399, %v6455
        %v6472 = vsel %vm6464, 1, 0
        %v6473 = vsel %vm6465, 1, 0
        %v6474 = vsel %vm6466, 1, 0
        %v6475 = vsel %vm6467, 1, 0
        %vm6476 = vcmp.eq.s32.totalorder %v6472, 1
        %vm6477 = vcmp.eq.s32.totalorder %v6473, 1
        %vm6478 = vcmp.eq.s32.totalorder %v6474, 1
        %vm6479 = vcmp.eq.s32.totalorder %v6475, 1
        %vm6480 = vmand %vm6468, %vm6476
        %vm6481 = vmand %vm6469, %vm6477
        %vm6482 = vmand %vm6470, %vm6478
        %vm6483 = vmand %vm6471, %vm6479
        %v6484 = vsel %vm6480, 1.0, %v6392
        %v6485 = vsel %vm6481, 1.0, %v6393
        %v6486 = vsel %vm6482, 1.0, %v6394
        %v6487 = vsel %vm6483, 1.0, %v6395
        %v6488 = vsel %vm6468, 2147483648, %v6396
        %v6489 = vsel %vm6469, 2147483648, %v6397
        %v6490 = vsel %vm6470, 2147483648, %v6398
        %v6491 = vsel %vm6471, 2147483648, %v6399
        %v6492 = vand.u32 %v6488, 65535
        %v6493 = vshra.s32 %v6488, 16
        %v6494 = vcvt.s32.f32 %v6492
        %v6495 = vcvt.s32.f32 %v6493
        %6496 = vmax.xlane.f32.xlu0 %v6495
        %v6497 = vpop.xlane.xlu0 %6496
        %vm6498 = vcmp.eq.f32.partialorder %v6495, %v6497
        %v6499 = vsel %vm6498, %v6494, -inf
        %6500 = vmax.xlane.f32.xlu0 %v6499
        %v6501 = vpop.xlane.xlu0 %6500
        %v6502 = vcvt.f32.s32 %v6501
        %v6503 = vcvt.f32.s32 %v6497
        %v6504 = vshll.u32 %v6503, 16
        %v6505 = vadd.s32 %v6504, %v6502
        %v6506 = vand.u32 %v6489, 65535
        %v6507 = vshra.s32 %v6489, 16
        %v6508 = vcvt.s32.f32 %v6506
        %v6509 = vcvt.s32.f32 %v6507
        %6510 = vmax.xlane.f32.xlu0 %v6509
        %v6511 = vpop.xlane.xlu0 %6510
        %vm6512 = vcmp.eq.f32.partialorder %v6509, %v6511
        %v6513 = vsel %vm6512, %v6508, -inf
        %6514 = vmax.xlane.f32.xlu0 %v6513
        %v6515 = vpop.xlane.xlu0 %6514
        %v6516 = vcvt.f32.s32 %v6515
        %v6517 = vcvt.f32.s32 %v6511
        %v6518 = vshll.u32 %v6517, 16
        %v6519 = vadd.s32 %v6518, %v6516
        %v6520 = vand.u32 %v6490, 65535
        %v6521 = vshra.s32 %v6490, 16
        %v6522 = vcvt.s32.f32 %v6520
        %v6523 = vcvt.s32.f32 %v6521
        %6524 = vmax.xlane.f32.xlu0 %v6523
        %v6525 = vpop.xlane.xlu0 %6524
        %vm6526 = vcmp.eq.f32.partialorder %v6523, %v6525
        %v6527 = vsel %vm6526, %v6522, -inf
        %6528 = vmax.xlane.f32.xlu0 %v6527
        %v6529 = vpop.xlane.xlu0 %6528
        %v6530 = vcvt.f32.s32 %v6529
        %v6531 = vcvt.f32.s32 %v6525
        %v6532 = vshll.u32 %v6531, 16
        %v6533 = vadd.s32 %v6532, %v6530
        %v6534 = vand.u32 %v6491, 65535
        %v6535 = vshra.s32 %v6491, 16
        %v6536 = vcvt.s32.f32 %v6534
        %v6537 = vcvt.s32.f32 %v6535
        %6538 = vmax.xlane.f32.xlu0 %v6537
        %v6539 = vpop.xlane.xlu0 %6538
        %vm6540 = vcmp.eq.f32.partialorder %v6537, %v6539
        %v6541 = vsel %vm6540, %v6536, -inf
        %6542 = vmax.xlane.f32.xlu0 %v6541
        %v6543 = vpop.xlane.xlu0 %6542
        %v6544 = vcvt.f32.s32 %v6543
        %v6545 = vcvt.f32.s32 %v6539
        %v6546 = vshll.u32 %v6545, 16
        %v6547 = vadd.s32 %v6546, %v6544
        %v6548 = vand.u32 %v6505, 4294967168
        %v6549 = vand.u32 %v6519, 4294967168
        %v6550 = vand.u32 %v6533, 4294967168
        %v6551 = vand.u32 %v6547, 4294967168
        %vm6552 = vcmp.gt.s32.totalorder %v6548, 0
        %vm6553 = vcmp.gt.s32.totalorder %v6549, 0
        %vm6554 = vcmp.gt.s32.totalorder %v6550, 0
        %vm6555 = vcmp.gt.s32.totalorder %v6551, 0
        %vm6556 = vmor %vm6552, %vm5536
        %vm6557 = vmor %vm6553, %vm5537
        %vm6558 = vmor %vm6554, %vm5538
        %vm6559 = vmor %vm6555, %vm5539
        %vm6560 = vcmp.eq.s32.totalorder %v6488, %v6505
        %vm6561 = vcmp.eq.s32.totalorder %v6489, %v6519
        %vm6562 = vcmp.eq.s32.totalorder %v6490, %v6533
        %vm6563 = vcmp.eq.s32.totalorder %v6491, %v6547
        %v6564 = vsel %vm6556, 1, 0
        %v6565 = vsel %vm6557, 1, 0
        %v6566 = vsel %vm6558, 1, 0
        %v6567 = vsel %vm6559, 1, 0
        %vm6568 = vcmp.eq.s32.totalorder %v6564, 1
        %vm6569 = vcmp.eq.s32.totalorder %v6565, 1
        %vm6570 = vcmp.eq.s32.totalorder %v6566, 1
        %vm6571 = vcmp.eq.s32.totalorder %v6567, 1
        %vm6572 = vmand %vm6560, %vm6568
        %vm6573 = vmand %vm6561, %vm6569
        %vm6574 = vmand %vm6562, %vm6570
        %vm6575 = vmand %vm6563, %vm6571
        %v6576 = vsel %vm6572, 1.0, %v6484
        %v6577 = vsel %vm6573, 1.0, %v6485
        %v6578 = vsel %vm6574, 1.0, %v6486
        %v6579 = vsel %vm6575, 1.0, %v6487
        %v6580 = vsel %vm6560, 2147483648, %v6488
        %v6581 = vsel %vm6561, 2147483648, %v6489
        %v6582 = vsel %vm6562, 2147483648, %v6490
        %v6583 = vsel %vm6563, 2147483648, %v6491
        %v6584 = vand.u32 %v6580, 65535
        %v6585 = vshra.s32 %v6580, 16
        %v6586 = vcvt.s32.f32 %v6584
        %v6587 = vcvt.s32.f32 %v6585
        %6588 = vmax.xlane.f32.xlu0 %v6587
        %v6589 = vpop.xlane.xlu0 %6588
        %vm6590 = vcmp.eq.f32.partialorder %v6587, %v6589
        %v6591 = vsel %vm6590, %v6586, -inf
        %6592 = vmax.xlane.f32.xlu0 %v6591
        %v6593 = vpop.xlane.xlu0 %6592
        %v6594 = vcvt.f32.s32 %v6593
        %v6595 = vcvt.f32.s32 %v6589
        %v6596 = vshll.u32 %v6595, 16
        %v6597 = vadd.s32 %v6596, %v6594
        %v6598 = vand.u32 %v6581, 65535
        %v6599 = vshra.s32 %v6581, 16
        %v6600 = vcvt.s32.f32 %v6598
        %v6601 = vcvt.s32.f32 %v6599
        %6602 = vmax.xlane.f32.xlu0 %v6601
        %v6603 = vpop.xlane.xlu0 %6602
        %vm6604 = vcmp.eq.f32.partialorder %v6601, %v6603
        %v6605 = vsel %vm6604, %v6600, -inf
        %6606 = vmax.xlane.f32.xlu0 %v6605
        %v6607 = vpop.xlane.xlu0 %6606
        %v6608 = vcvt.f32.s32 %v6607
        %v6609 = vcvt.f32.s32 %v6603
        %v6610 = vshll.u32 %v6609, 16
        %v6611 = vadd.s32 %v6610, %v6608
        %v6612 = vand.u32 %v6582, 65535
        %v6613 = vshra.s32 %v6582, 16
        %v6614 = vcvt.s32.f32 %v6612
        %v6615 = vcvt.s32.f32 %v6613
        %6616 = vmax.xlane.f32.xlu0 %v6615
        %v6617 = vpop.xlane.xlu0 %6616
        %vm6618 = vcmp.eq.f32.partialorder %v6615, %v6617
        %v6619 = vsel %vm6618, %v6614, -inf
        %6620 = vmax.xlane.f32.xlu0 %v6619
        %v6621 = vpop.xlane.xlu0 %6620
        %v6622 = vcvt.f32.s32 %v6621
        %v6623 = vcvt.f32.s32 %v6617
        %v6624 = vshll.u32 %v6623, 16
        %v6625 = vadd.s32 %v6624, %v6622
        %v6626 = vand.u32 %v6583, 65535
        %v6627 = vshra.s32 %v6583, 16
        %v6628 = vcvt.s32.f32 %v6626
        %v6629 = vcvt.s32.f32 %v6627
        %6630 = vmax.xlane.f32.xlu0 %v6629
        %v6631 = vpop.xlane.xlu0 %6630
        %vm6632 = vcmp.eq.f32.partialorder %v6629, %v6631
        %v6633 = vsel %vm6632, %v6628, -inf
        %6634 = vmax.xlane.f32.xlu0 %v6633
        %v6635 = vpop.xlane.xlu0 %6634
        %v6636 = vcvt.f32.s32 %v6635
        %v6637 = vcvt.f32.s32 %v6631
        %v6638 = vshll.u32 %v6637, 16
        %v6639 = vadd.s32 %v6638, %v6636
        %v6640 = vand.u32 %v6597, 4294967168
        %v6641 = vand.u32 %v6611, 4294967168
        %v6642 = vand.u32 %v6625, 4294967168
        %v6643 = vand.u32 %v6639, 4294967168
        %vm6644 = vcmp.gt.s32.totalorder %v6640, 0
        %vm6645 = vcmp.gt.s32.totalorder %v6641, 0
        %vm6646 = vcmp.gt.s32.totalorder %v6642, 0
        %vm6647 = vcmp.gt.s32.totalorder %v6643, 0
        %vm6648 = vmor %vm6644, %vm5536
        %vm6649 = vmor %vm6645, %vm5537
        %vm6650 = vmor %vm6646, %vm5538
        %vm6651 = vmor %vm6647, %vm5539
        %vm6652 = vcmp.eq.s32.totalorder %v6580, %v6597
        %vm6653 = vcmp.eq.s32.totalorder %v6581, %v6611
        %vm6654 = vcmp.eq.s32.totalorder %v6582, %v6625
        %vm6655 = vcmp.eq.s32.totalorder %v6583, %v6639
        %v6656 = vsel %vm6648, 1, 0
        %v6657 = vsel %vm6649, 1, 0
        %v6658 = vsel %vm6650, 1, 0
        %v6659 = vsel %vm6651, 1, 0
        %vm6660 = vcmp.eq.s32.totalorder %v6656, 1
        %vm6661 = vcmp.eq.s32.totalorder %v6657, 1
        %vm6662 = vcmp.eq.s32.totalorder %v6658, 1
        %vm6663 = vcmp.eq.s32.totalorder %v6659, 1
        %vm6664 = vmand %vm6652, %vm6660
        %vm6665 = vmand %vm6653, %vm6661
        %vm6666 = vmand %vm6654, %vm6662
        %vm6667 = vmand %vm6655, %vm6663
        %v6668 = vsel %vm6664, 1.0, %v6576
        %v6669 = vsel %vm6665, 1.0, %v6577
        %v6670 = vsel %vm6666, 1.0, %v6578
        %v6671 = vsel %vm6667, 1.0, %v6579
        %6672 = vadd.xlane.f32.xlu0 %v6668
        %v6673 = vpop.xlane.xlu0 %6672
        %6674 = vadd.xlane.f32.xlu0 %v6669
        %v6675 = vpop.xlane.xlu0 %6674
        %6676 = vadd.xlane.f32.xlu0 %v6670
        %v6677 = vpop.xlane.xlu0 %6676
        %6678 = vadd.xlane.f32.xlu0 %v6671
        %v6679 = vpop.xlane.xlu0 %6678
        %v6680 = vrcp.pop %v6673
        %v6681 = vmul.f32 1.0, %v6680
        %v6682 = vrcp.pop %v6675
        %v6683 = vmul.f32 1.0, %v6682
        %v6684 = vrcp.pop %v6677
        %v6685 = vmul.f32 1.0, %v6684
        %v6686 = vrcp.pop %v6679
        %v6687 = vmul.f32 1.0, %v6686
        %v6688 = vmul.f32 %v6668, %v6681
        %v6689 = vmul.f32 %v6669, %v6683
        %v6690 = vmul.f32 %v6670, %v6685
        %v6691 = vmul.f32 %v6671, %v6687
        %6692 = vmatprep.subr.mxu0 0.0
        %6693 = vmatpush1.msra.mxu0 %v628
        %6694 = vmatprep.subr.mxu0 0.0
        %6695 = vmatpush1.msra.mxu0 %v633
        %6696 = vmatprep.subr.mxu0 0.0
        %6697 = vmatpush1.msra.mxu0 %v638
        %6698 = vmatprep.subr.mxu0 0.0
        %6699 = vmatpush1.msra.mxu0 %v643
        %6700 = vmatprep.subr.mxu0 0.0
        %6701 = vmatpush1.msra.mxu0 %v648
        %6702 = vmatprep.subr.mxu0 0.0
        %6703 = vmatpush1.msra.mxu0 %v653
        %6704 = vmatprep.subr.mxu0 0.0
        %6705 = vmatpush1.msra.mxu0 %v658
        %6706 = vmatprep.subr.mxu0 0.0
        %6707 = vmatpush1.msra.mxu0 %v663
        %6708 = vmatprep.subr.mxu0 0.0
        %6709 = vmatpush1.msra.mxu0 %v668
        %6710 = vmatprep.subr.mxu0 0.0
        %6711 = vmatpush1.msra.mxu0 %v673
        %6712 = vmatprep.subr.mxu0 0.0
        %6713 = vmatpush1.msra.mxu0 %v678
        %6714 = vmatprep.subr.mxu0 0.0
        %6715 = vmatpush1.msra.mxu0 %v683
        %6716 = vmatprep.subr.mxu0 0.0
        %6717 = vmatpush1.msra.mxu0 %v688
        %6718 = vmatprep.subr.mxu0 0.0
        %6719 = vmatpush1.msra.mxu0 %v693
        %6720 = vmatprep.subr.mxu0 0.0
        %6721 = vmatpush1.msra.mxu0 %v698
        %6722 = vmatprep.subr.mxu0 0.0
        %6723 = vmatpush1.msra.mxu0 %v703
        %6724 = vmatprep.subr.mxu0 0.0
        %6725 = vmatpush1.msra.mxu0 0.0
        %6726 = vmatprep.subr.mxu0 0.0
        %6727 = vmatpush1.msra.mxu0 0.0
        %6728 = vmatprep.subr.mxu0 0.0
        %6729 = vmatpush1.msra.mxu0 0.0
        %6730 = vmatprep.subr.mxu0 0.0
        %6731 = vmatpush1.msra.mxu0 0.0
        %6732 = vmatprep.subr.mxu0 0.0
        %6733 = vmatpush1.msra.mxu0 0.0
        %6734 = vmatprep.subr.mxu0 0.0
        %6735 = vmatpush1.msra.mxu0 0.0
        %6736 = vmatprep.subr.mxu0 0.0
        %6737 = vmatpush1.msra.mxu0 0.0
        %6738 = vmatprep.subr.mxu0 0.0
        %6739 = vmatpush1.msra.mxu0 0.0
        %6740 = vmatprep.subr.mxu0 0.0
        %6741 = vmatpush1.msra.mxu0 0.0
        %6742 = vmatprep.subr.mxu0 0.0
        %6743 = vmatpush1.msra.mxu0 0.0
        %6744 = vmatprep.subr.mxu0 0.0
        %6745 = vmatpush1.msra.mxu0 0.0
        %6746 = vmatprep.subr.mxu0 0.0
        %6747 = vmatpush1.msra.mxu0 0.0
        %6748 = vmatprep.subr.mxu0 0.0
        %6749 = vmatpush1.msra.mxu0 0.0
        %6750 = vmatprep.subr.mxu0 0.0
        %6751 = vmatpush1.msra.mxu0 0.0
        %6752 = vmatprep.subr.mxu0 0.0
        %6753 = vmatpush1.msra.mxu0 0.0
        %6754 = vmatprep.subr.mxu0 0.0
        %6755 = vmatpush1.msra.mxu0 0.0
        %6756 = vmatprep.mubr.f32.mxu0 0.0
        %6757 = vmatmul.mubr.f32.gmra.mrb[0].mxu0 %v6688
        %v6758 = vpop.f32.mrb[0].mxu0
        %v6759 = vadd.f32 0.0, %v6758
        %v6760 = vpop.f32.mrb[0].mxu0
        %6761 = vmatprep.mubr.f32.mxu0 0.0
        %6762 = vmatmul.mubr.f32.gmra.mrb[0].mxu0 %v6689
        %v6763 = vpop.f32.mrb[0].mxu0
        %v6764 = vadd.f32 0.0, %v6763
        %v6765 = vpop.f32.mrb[0].mxu0
        %6766 = vmatprep.mubr.f32.mxu0 0.0
        %6767 = vmatmul.mubr.f32.gmra.mrb[0].mxu0 %v6690
        %v6768 = vpop.f32.mrb[0].mxu0
        %v6769 = vadd.f32 0.0, %v6768
        %v6770 = vpop.f32.mrb[0].mxu0
        %6771 = vmatprep.mubr.f32.mxu0 0.0
        %6772 = vmatmul.mubr.f32.gmra.mrb[0].mxu0 %v6691
        %v6773 = vpop.f32.mrb[0].mxu0
        %v6774 = vadd.f32 0.0, %v6773
        %v6775 = vpop.f32.mrb[0].mxu0
        %6776 = vdwg.mxu0
        %6777 = vmatprep.subr.mxu0 0.0
        %6778 = vmatpush1.msra.mxu0 %v722
        %6779 = vmatprep.subr.mxu0 0.0
        %6780 = vmatpush1.msra.mxu0 %v723
        %6781 = vmatprep.subr.mxu0 0.0
        %6782 = vmatpush1.msra.mxu0 %v724
        %6783 = vmatprep.subr.mxu0 0.0
        %6784 = vmatpush1.msra.mxu0 %v725
        %6785 = vmatprep.subr.mxu0 0.0
        %6786 = vmatpush1.msra.mxu0 %v726
        %6787 = vmatprep.subr.mxu0 0.0
        %6788 = vmatpush1.msra.mxu0 %v727
        %6789 = vmatprep.subr.mxu0 0.0
        %6790 = vmatpush1.msra.mxu0 %v728
        %6791 = vmatprep.subr.mxu0 0.0
        %6792 = vmatpush1.msra.mxu0 %v729
        %6793 = vmatprep.subr.mxu0 0.0
        %6794 = vmatpush1.msra.mxu0 %v730
        %6795 = vmatprep.subr.mxu0 0.0
        %6796 = vmatpush1.msra.mxu0 %v731
        %6797 = vmatprep.subr.mxu0 0.0
        %6798 = vmatpush1.msra.mxu0 %v732
        %6799 = vmatprep.subr.mxu0 0.0
        %6800 = vmatpush1.msra.mxu0 %v733
        %6801 = vmatprep.subr.mxu0 0.0
        %6802 = vmatpush1.msra.mxu0 %v734
        %6803 = vmatprep.subr.mxu0 0.0
        %6804 = vmatpush1.msra.mxu0 %v735
        %6805 = vmatprep.subr.mxu0 0.0
        %6806 = vmatpush1.msra.mxu0 %v736
        %6807 = vmatprep.subr.mxu0 0.0
        %6808 = vmatpush1.msra.mxu0 %v737
        %6809 = vmatprep.subr.mxu0 0.0
        %6810 = vmatpush1.msra.mxu0 0.0
        %6811 = vmatprep.subr.mxu0 0.0
        %6812 = vmatpush1.msra.mxu0 0.0
        %6813 = vmatprep.subr.mxu0 0.0
        %6814 = vmatpush1.msra.mxu0 0.0
        %6815 = vmatprep.subr.mxu0 0.0
        %6816 = vmatpush1.msra.mxu0 0.0
        %6817 = vmatprep.subr.mxu0 0.0
        %6818 = vmatpush1.msra.mxu0 0.0
        %6819 = vmatprep.subr.mxu0 0.0
        %6820 = vmatpush1.msra.mxu0 0.0
        %6821 = vmatprep.subr.mxu0 0.0
        %6822 = vmatpush1.msra.mxu0 0.0
        %6823 = vmatprep.subr.mxu0 0.0
        %6824 = vmatpush1.msra.mxu0 0.0
        %6825 = vmatprep.subr.mxu0 0.0
        %6826 = vmatpush1.msra.mxu0 0.0
        %6827 = vmatprep.subr.mxu0 0.0
        %6828 = vmatpush1.msra.mxu0 0.0
        %6829 = vmatprep.subr.mxu0 0.0
        %6830 = vmatpush1.msra.mxu0 0.0
        %6831 = vmatprep.subr.mxu0 0.0
        %6832 = vmatpush1.msra.mxu0 0.0
        %6833 = vmatprep.subr.mxu0 0.0
        %6834 = vmatpush1.msra.mxu0 0.0
        %6835 = vmatprep.subr.mxu0 0.0
        %6836 = vmatpush1.msra.mxu0 0.0
        %6837 = vmatprep.subr.mxu0 0.0
        %6838 = vmatpush1.msra.mxu0 0.0
        %6839 = vmatprep.subr.mxu0 0.0
        %6840 = vmatpush1.msra.mxu0 0.0
        %6841 = vmatprep.mubr.f32.mxu0 0.0
        %6842 = vmatmul.mubr.f32.gmra.mrb[0].mxu0 %v6759
        %v6843 = vpop.f32.mrb[0].mxu0
        %v6844 = vadd.f32 0.0, %v6843
        %v6845 = vpop.f32.mrb[0].mxu0
        %6846 = vmatprep.mubr.f32.mxu0 0.0
        %6847 = vmatmul.mubr.f32.gmra.mrb[0].mxu0 %v6764
        %v6848 = vpop.f32.mrb[0].mxu0
        %v6849 = vadd.f32 0.0, %v6848
        %v6850 = vpop.f32.mrb[0].mxu0
        %6851 = vmatprep.mubr.f32.mxu0 0.0
        %6852 = vmatmul.mubr.f32.gmra.mrb[0].mxu0 %v6769
        %v6853 = vpop.f32.mrb[0].mxu0
        %v6854 = vadd.f32 0.0, %v6853
        %v6855 = vpop.f32.mrb[0].mxu0
        %6856 = vmatprep.mubr.f32.mxu0 0.0
        %6857 = vmatmul.mubr.f32.gmra.mrb[0].mxu0 %v6774
        %v6858 = vpop.f32.mrb[0].mxu0
        %v6859 = vadd.f32 0.0, %v6858
        %v6860 = vpop.f32.mrb[0].mxu0
        %6861 = vdwg.mxu0
        %6862 = vmatprep.subr.mxu0 0.0
        %6863 = vmatpush1.msra.mxu0 %v706
        %6864 = vmatprep.subr.mxu0 0.0
        %6865 = vmatpush1.msra.mxu0 %v707
        %6866 = vmatprep.subr.mxu0 0.0
        %6867 = vmatpush1.msra.mxu0 %v708
        %6868 = vmatprep.subr.mxu0 0.0
        %6869 = vmatpush1.msra.mxu0 %v709
        %6870 = vmatprep.subr.mxu0 0.0
        %6871 = vmatpush1.msra.mxu0 %v710
        %6872 = vmatprep.subr.mxu0 0.0
        %6873 = vmatpush1.msra.mxu0 %v711
        %6874 = vmatprep.subr.mxu0 0.0
        %6875 = vmatpush1.msra.mxu0 %v712
        %6876 = vmatprep.subr.mxu0 0.0
        %6877 = vmatpush1.msra.mxu0 %v713
        %6878 = vmatprep.subr.mxu0 0.0
        %6879 = vmatpush1.msra.mxu0 %v714
        %6880 = vmatprep.subr.mxu0 0.0
        %6881 = vmatpush1.msra.mxu0 %v715
        %6882 = vmatprep.subr.mxu0 0.0
        %6883 = vmatpush1.msra.mxu0 %v716
        %6884 = vmatprep.subr.mxu0 0.0
        %6885 = vmatpush1.msra.mxu0 %v717
        %6886 = vmatprep.subr.mxu0 0.0
        %6887 = vmatpush1.msra.mxu0 %v718
        %6888 = vmatprep.subr.mxu0 0.0
        %6889 = vmatpush1.msra.mxu0 %v719
        %6890 = vmatprep.subr.mxu0 0.0
        %6891 = vmatpush1.msra.mxu0 %v720
        %6892 = vmatprep.subr.mxu0 0.0
        %6893 = vmatpush1.msra.mxu0 %v721
        %6894 = vmatprep.subr.mxu0 0.0
        %6895 = vmatpush1.msra.mxu0 0.0
        %6896 = vmatprep.subr.mxu0 0.0
        %6897 = vmatpush1.msra.mxu0 0.0
        %6898 = vmatprep.subr.mxu0 0.0
        %6899 = vmatpush1.msra.mxu0 0.0
        %6900 = vmatprep.subr.mxu0 0.0
        %6901 = vmatpush1.msra.mxu0 0.0
        %6902 = vmatprep.subr.mxu0 0.0
        %6903 = vmatpush1.msra.mxu0 0.0
        %6904 = vmatprep.subr.mxu0 0.0
        %6905 = vmatpush1.msra.mxu0 0.0
        %6906 = vmatprep.subr.mxu0 0.0
        %6907 = vmatpush1.msra.mxu0 0.0
        %6908 = vmatprep.subr.mxu0 0.0
        %6909 = vmatpush1.msra.mxu0 0.0
        %6910 = vmatprep.subr.mxu0 0.0
        %6911 = vmatpush1.msra.mxu0 0.0
        %6912 = vmatprep.subr.mxu0 0.0
        %6913 = vmatpush1.msra.mxu0 0.0
        %6914 = vmatprep.subr.mxu0 0.0
        %6915 = vmatpush1.msra.mxu0 0.0
        %6916 = vmatprep.subr.mxu0 0.0
        %6917 = vmatpush1.msra.mxu0 0.0
        %6918 = vmatprep.subr.mxu0 0.0
        %6919 = vmatpush1.msra.mxu0 0.0
        %6920 = vmatprep.subr.mxu0 0.0
        %6921 = vmatpush1.msra.mxu0 0.0
        %6922 = vmatprep.subr.mxu0 0.0
        %6923 = vmatpush1.msra.mxu0 0.0
        %6924 = vmatprep.subr.mxu0 0.0
        %6925 = vmatpush1.msra.mxu0 0.0
        %6926 = vmatprep.mubr.f32.mxu0 0.0
        %6927 = vmatmul.mubr.f32.gmra.mrb[0].mxu0 %v688
        %v6928 = vpop.f32.mrb[0].mxu0
        %v6929 = vadd.f32 %v6844, %v6928
        %v6930 = vpop.f32.mrb[0].mxu0
        %6931 = vmatprep.mubr.f32.mxu0 0.0
        %6932 = vmatmul.mubr.f32.gmra.mrb[0].mxu0 %v693
        %v6933 = vpop.f32.mrb[0].mxu0
        %v6934 = vadd.f32 %v6849, %v6933
        %v6935 = vpop.f32.mrb[0].mxu0
        %6936 = vmatprep.mubr.f32.mxu0 0.0
        %6937 = vmatmul.mubr.f32.gmra.mrb[0].mxu0 %v698
        %v6938 = vpop.f32.mrb[0].mxu0
        %v6939 = vadd.f32 %v6854, %v6938
        %v6940 = vpop.f32.mrb[0].mxu0
        %6941 = vmatprep.mubr.f32.mxu0 0.0
        %6942 = vmatmul.mubr.f32.gmra.mrb[0].mxu0 %v703
        %v6943 = vpop.f32.mrb[0].mxu0
        %v6944 = vadd.f32 %v6859, %v6943
        %v6945 = vpop.f32.mrb[0].mxu0
        %6946 = vdwg.mxu0
        %v6947 = vadd.f32 %v6929, %v2272
        %v6948 = vadd.f32 %v6934, %v2272
        %v6949 = vadd.f32 %v6939, %v2272
        %v6950 = vadd.f32 %v6944, %v2272
        %v6951 = vadd.s32 %v2279, 96
        %v6952 = vadd.s32 %v2280, 96
        %v6953 = vadd.s32 %v2281, 96
        %v6954 = vadd.s32 %v2282, 96
        %vm6955 = vcmp.lt.s32.totalorder %v6951, %v2283
        %vm6956 = vcmp.lt.s32.totalorder %v6952, %v2283
        %vm6957 = vcmp.lt.s32.totalorder %v6953, %v2283
        %vm6958 = vcmp.lt.s32.totalorder %v6954, %v2283
        %v6959 = vsel %vm6955, 1, 0
        %v6960 = vsel %vm6956, 1, 0
        %v6961 = vsel %vm6957, 1, 0
        %v6962 = vsel %vm6958, 1, 0
        %v6963 = vcvt.s32.f32 %v6959
        %v6964 = vcvt.s32.f32 %v6960
        %v6965 = vcvt.s32.f32 %v6961
        %v6966 = vcvt.s32.f32 %v6962
        %v6967 = vmul.f32 %v6947, %v6963
        %v6968 = vmul.f32 %v6948, %v6964
        %v6969 = vmul.f32 %v6949, %v6965
        %v6970 = vmul.f32 %v6950, %v6966
        %v6971 = vadd.f32 %v6967, %v6968
        %v6972 = vadd.f32 %v6971, %v6969
        %v6973 = vadd.f32 %v6972, %v6970
        %v6974 = vrot.slane %v6973, 4
        %v6975 = vadd.f32 %v6973, %v6974
        %v6976 = vrot.slane %v6975, 2
        %v6977 = vadd.f32 %v6975, %v6976
        %v6978 = vrot.slane %v6977, 1
        %v6979 = vadd.f32 %v6977, %v6978
        %v6980 = vadd.f32 %v5423, %v6979
        %p6981 = scmp.gt.s32.totalorder %s521, 1
        %s6982 = scalar_select %p6981, %s521, 1
        %s6983 = scvt.s32.f32 %s6982
        %v6984 = vstv %s6983
        %v6985 = vrcp.pop %v6984
        %s6986 = vtos %v6985
        %v6987 = vstv %s6986
        %v6988 = vmul.f32 %v6980, %v6987
        %v6989 = vtanh.pop %v6988
        %v6990 = vld [vmem:[#allocation13] sm:$0xff]
        %v6991 = vld [vmem:[#allocation13 + $0x8] sm:$0xff]
        %v6992 = vld [vmem:[#allocation13 + $0x10] sm:$0xff]
        %v6993 = vld [vmem:[#allocation13 + $0x18] sm:$0xff]
        %v6994 = vld [vmem:[#allocation13 + $0x20] sm:$0xff]
        %v6995 = vld [vmem:[#allocation13 + $0x28] sm:$0xff]
        %v6996 = vld [vmem:[#allocation13 + $0x30] sm:$0xff]
        %v6997 = vld [vmem:[#allocation13 + $0x38] sm:$0xff]
        %v6998 = vld [vmem:[#allocation13 + $0x40] sm:$0xff]
        %v6999 = vld [vmem:[#allocation13 + $0x48] sm:$0xff]
        %v7000 = vld [vmem:[#allocation13 + $0x50] sm:$0xff]
        %v7001 = vld [vmem:[#allocation13 + $0x58] sm:$0xff]
        %v7002 = vld [vmem:[#allocation13 + $0x60] sm:$0xff]
        %v7003 = vld [vmem:[#allocation13 + $0x68] sm:$0xff]
        %v7004 = vld [vmem:[#allocation13 + $0x70] sm:$0xff]
        %v7005 = vld [vmem:[#allocation13 + $0x78] sm:$0xff]
        %v7006 = vld [vmem:[#allocation15] sm:$0x1]
        %7007 = vmatprep.subr.mxu0 0.0
        %7008 = vmatpush1.msra.mxu0 %v6990
        %7009 = vmatprep.subr.mxu0 0.0
        %7010 = vmatpush1.msra.mxu0 %v6991
        %7011 = vmatprep.subr.mxu0 0.0
        %7012 = vmatpush1.msra.mxu0 %v6992
        %7013 = vmatprep.subr.mxu0 0.0
        %7014 = vmatpush1.msra.mxu0 %v6993
        %7015 = vmatprep.subr.mxu0 0.0
        %7016 = vmatpush1.msra.mxu0 %v6994
        %7017 = vmatprep.subr.mxu0 0.0
        %7018 = vmatpush1.msra.mxu0 %v6995
        %7019 = vmatprep.subr.mxu0 0.0
        %7020 = vmatpush1.msra.mxu0 %v6996
        %7021 = vmatprep.subr.mxu0 0.0
        %7022 = vmatpush1.msra.mxu0 %v6997
        %7023 = vmatprep.subr.mxu0 0.0
        %7024 = vmatpush1.msra.mxu0 %v6998
        %7025 = vmatprep.subr.mxu0 0.0
        %7026 = vmatpush1.msra.mxu0 %v6999
        %7027 = vmatprep.subr.mxu0 0.0
        %7028 = vmatpush1.msra.mxu0 %v7000
        %7029 = vmatprep.subr.mxu0 0.0
        %7030 = vmatpush1.msra.mxu0 %v7001
        %7031 = vmatprep.subr.mxu0 0.0
        %7032 = vmatpush1.msra.mxu0 %v7002
        %7033 = vmatprep.subr.mxu0 0.0
        %7034 = vmatpush1.msra.mxu0 %v7003
        %7035 = vmatprep.subr.mxu0 0.0
        %7036 = vmatpush1.msra.mxu0 %v7004
        %7037 = vmatprep.subr.mxu0 0.0
        %7038 = vmatpush1.msra.mxu0 %v7005
        %7039 = vmatprep.subr.mxu0 0.0
        %7040 = vmatpush1.msra.mxu0 0.0
        %7041 = vmatprep.subr.mxu0 0.0
        %7042 = vmatpush1.msra.mxu0 0.0
        %7043 = vmatprep.subr.mxu0 0.0
        %7044 = vmatpush1.msra.mxu0 0.0
        %7045 = vmatprep.subr.mxu0 0.0
        %7046 = vmatpush1.msra.mxu0 0.0
        %7047 = vmatprep.subr.mxu0 0.0
        %7048 = vmatpush1.msra.mxu0 0.0
        %7049 = vmatprep.subr.mxu0 0.0
        %7050 = vmatpush1.msra.mxu0 0.0
        %7051 = vmatprep.subr.mxu0 0.0
        %7052 = vmatpush1.msra.mxu0 0.0
        %7053 = vmatprep.subr.mxu0 0.0
        %7054 = vmatpush1.msra.mxu0 0.0
        %7055 = vmatprep.subr.mxu0 0.0
        %7056 = vmatpush1.msra.mxu0 0.0
        %7057 = vmatprep.subr.mxu0 0.0
        %7058 = vmatpush1.msra.mxu0 0.0
        %7059 = vmatprep.subr.mxu0 0.0
        %7060 = vmatpush1.msra.mxu0 0.0
        %7061 = vmatprep.subr.mxu0 0.0
        %7062 = vmatpush1.msra.mxu0 0.0
        %7063 = vmatprep.subr.mxu0 0.0
        %7064 = vmatpush1.msra.mxu0 0.0
        %7065 = vmatprep.subr.mxu0 0.0
        %7066 = vmatpush1.msra.mxu0 0.0
        %7067 = vmatprep.subr.mxu0 0.0
        %7068 = vmatpush1.msra.mxu0 0.0
        %7069 = vmatprep.subr.mxu0 0.0
        %7070 = vmatpush1.msra.mxu0 0.0
        %7071 = vmatprep.mubr.f32.mxu0 0.0
        %7072 = vmatmul.mubr.f32.gmra.mrb[0].mxu0 %v6989
        %v7073 = vpop.f32.mrb[0].mxu0
        %v7074 = vadd.f32 %v7006, %v7073
        %v7075 = vpop.f32.mrb[0].mxu0
        %7076 = vdwg.mxu0
        %vm7077 = vcmask 1040384
        %v7078 = vsel %vm7077, %v7074, 0.0
        %7079 = vadd.xlane.f32.xlu0 %v7078
        %v7080 = vpop.xlane.xlu0 %7079
        %v7081 = vrcp.pop 128.0
        %v7082 = vmul.f32 %v7080, %v7081
        %v7083 = vsub.f32 %v7074, %v7082
        %v7084 = vmul.f32 %v7083, %v7083
        %v7085 = vsel %vm7077, %v7084, 0.0
        %7086 = vadd.xlane.f32.xlu0 %v7085
        %v7087 = vpop.xlane.xlu0 %7086
        %v7088 = vmul.f32 %v7087, %v7081
        %v7089 = vadd.f32 %v7088, 1e-05
        %v7090 = vrsqrt.pop %v7089
        %v7091 = vmul.f32 %v7083, %v7090
        %v7092 = vld [vmem:[%s10] sm:$0x1]
        %v7093 = vmul.f32 %v7091, %v7092
        %v7094 = vld [vmem:[%s11] sm:$0x1]
        %v7095 = vadd.f32 %v7093, %v7094
        %7096 = vst [vmem:[%s520] sm:$0x1] %v7095
        %s7097 = sand.u32 %s289, 1
        %s7098 = scalar_lea.sflag [#allocation6], %s7097
        %s7099 = sand.u32 %s289, 1
        %s7100 = scalar_lea.vmem [#allocation16], %s7099
        // Predicated region
        $region93: #{forward.1} parent=63 // pred_check
          %p7101 = pneg %p299
        $region94: #{forward.1} parent=63 // pred_check_branch
          %7103 = sbr.rel (%p7101) target = $region96
        $region95: #{forward.1} parent=63 // pred_region
          %s7105 = ssub.s32 16, 16
          %7106 = vsyncadd %s7098, %s7105
          %s7107 = smul.addr %s40, 16
          %s7108 = scalar_lea.hbm %s12, %s7107
          %s7110 = sshll.u32 %s7100, 4
          %s7111 = int_to_ptr.vmem [resolvable:$true] %s7110
          %7113 = dma.vmem_to_hbm [thread:$0]  %s7111, 16, %s7108, %s7098
        $region96: #{forward.1} parent=63 // pred_fallthru
          _
      $region64: #{forward.1} parent=5 // pred_fallthru
        _
      %p7114 = scmp.le.s32.totalorder 2, %s35
      // Predicated region
      $region97: #{forward.1} parent=5 // pred_check
        %p7115 = pneg %p7114
      $region98: #{forward.1} parent=5 // pred_check_branch
        %7117 = sbr.rel (%p7115) target = $region100
      $region99: #{forward.1} parent=5 // pred_region
        %s7118 = ssub.s32 %s35, 2
        // Predicated region
        $region101: #{forward.1} parent=99 // pred_check
          %p7119 = pneg %p305
        $region102: #{forward.1} parent=99 // pred_check_branch
          %7121 = sbr.rel (%p7119) target = $region104
        $region103: #{forward.1} parent=99 // pred_region
          %s7122 = sand.u32 %s290, 1
          %s7123 = scalar_lea.sflag [#allocation6], %s7122
          %s7124 = sand.u32 %s290, 1
          %s7125 = scalar_lea.vmem [#allocation16], %s7124
          %7126 = dma.done %s7123, 16
        $region104: #{forward.1} parent=99 // pred_fallthru
          _
      $region100: #{forward.1} parent=5 // pred_fallthru
        _
    $region6: #{forward.1} parent=1 // loop_footer
      %s39 = sadd.s32 1, %s35
    $region7: #{forward.1} parent=1 // loop_footer_branch
      %34 = sbr.rel target = $region3
    $region8: #{forward.1} parent=1 // loop_exit
      _
    %7127 = vsyncpa [#allocation5], 1
    %s7128 = scalar_lea.sflag [#allocation5], 1
    %7129 = vsyncpa %s7128, 1
    %7130 = vsyncpa [#allocation8], 1
    %s7131 = scalar_lea.sflag [#allocation8], 1
    %7132 = vsyncpa %s7131, 1
    %7133 = vsyncpa [#allocation11], 1
    %7134 = vsyncpa [#allocation14], 1
    %7135 = vsyncpa [#allocation6], 1
    %s7136 = scalar_lea.sflag [#allocation6], 1
    %7137 = vsyncpa %s7136, 1

</llo_original>
